<compile_context>
chip_gen: v5e
topology: v5e:2x2
jax: 0.10.0
libtpu: 0.0.40
codegen_flags: <defaults>
</compile_context>

<pallas_src>
import jax
import jax.numpy as jnp
from jax import lax
from jax.experimental import pallas as pl
from jax.experimental.pallas import tpu as pltpu

TILE_B = 256   # batch rows per grid step (MXU row width on v6e/v7x)


# ---------------------------------------------------------------------------
# Fused NIC kernel: scalar-prefetch refs first, then VMEM refs, then output.
# ---------------------------------------------------------------------------
def _nic_kernel(thr_ref, coef_ref, bias_ref,           # SMEM (scalar prefetch)
                x_ref,                                   # (TILE_B, in_dim) bf16
                w0all, fc1_b, cb0p, q0, wm0, ws0,        # layer-0 merged/folded
                fc2_w, fc2_b, fc3_w, fc3_b,              # rest of trained model
                wm1, ws1, wm2, ws2, wm3, ws3,            # whiten layers 1..3
                w1m, cb1, vq1,                           # layer-1 merged [clf1|vc1^T]
                vc2, vq2, vc3, vq3,                      # value detectors 2, 3
                pa0, pb0, pq0, pa1, pb1, pq1,            # provenance dets (split halves)
                o_ref):                                  # (TILE_B, 1) f32
    f32 = jnp.float32

    def cross(v, c_ref):
        # (T, d) x (K, d)^T -> (T, K)
        return lax.dot_general(v, c_ref[...], (((1,), (1,)), ((), ())),
                               preferred_element_type=f32)

    def kmin(x2, xc, c2, t):
        # density = t - min_k ( ||v||^2 - 2 v.c_k + ||c_k||^2 )
        return t - jnp.min(x2 - 2.0 * xc + c2, axis=1, keepdims=True)

    x = x_ref[...]                                       # bf16

    # ---- single wide K=in_dim MXU pass: [fc1_w | whiten-folded cw0 | folded vc0^T]
    H1 = fc1_b.shape[-1]
    NC = cb0p.shape[-1]
    y0 = jnp.dot(x, w0all[...], preferred_element_type=f32)   # (T, H1+NC+K0)
    h1 = jnp.maximum(y0[:, :H1] + fc1_b[...], 0.0)
    l0 = y0[:, H1:H1 + NC] + cb0p[...]                   # classifier-0 logits
    xc0 = y0[:, H1 + NC:]                                # x . (s0 (*) c0_k)

    # ||w0||^2 with w0 = (x - m0) * s0 ; f32 (no bf16 in the cancellation-prone terms)
    w0c = (x - wm0[...]) * ws0[...]
    w0sq = jnp.sum(w0c * w0c, axis=1, keepdims=True)
    d0 = thr_ref[0] - w0sq - jnp.min(q0[...] - 2.0 * xc0, axis=1, keepdims=True)

    # ---- remaining (small) trained-model layers + whiten
    h2 = jnp.maximum(jnp.dot(h1, fc2_w[...], preferred_element_type=f32)
                     + fc2_b[...], 0.0)
    lg = jnp.dot(h2, fc3_w[...], preferred_element_type=f32) + fc3_b[...]
    w1 = (h1 - wm1[...]) * ws1[...]
    w2 = (h2 - wm2[...]) * ws2[...]
    w3 = (lg - wm3[...]) * ws3[...]
    w1sq = jnp.sum(w1 * w1, axis=1, keepdims=True)
    w2sq = jnp.sum(w2 * w2, axis=1, keepdims=True)
    w3sq = jnp.sum(w3 * w3, axis=1, keepdims=True)       # shared by d3 and d5

    # ---- layer-1 merged dot: [cw1 | vc1^T] shares the w1 LHS
    y1 = jnp.dot(w1, w1m[...], preferred_element_type=f32)    # (T, NC+K)
    l1 = y1[:, :NC] + cb1[...]
    xc1 = y1[:, NC:]
    d1 = kmin(w1sq, xc1, vq1[...], thr_ref[1])

    # ---- value detectors 2 and 3
    d2_ = kmin(w2sq, cross(w2, vc2), vq2[...], thr_ref[2])
    d3 = kmin(w3sq, cross(w3, vc3), vq3[...], thr_ref[3])

    # ---- provenance detectors on logit pairs [l0,l1] and [l1,w3]
    # ||concat(a,b) - c||^2 = ||a||^2 + ||b||^2 - 2(a.c_L + b.c_R) + ||c||^2
    l0sq = jnp.sum(l0 * l0, axis=1, keepdims=True)
    l1sq = jnp.sum(l1 * l1, axis=1, keepdims=True)       # hoisted, shared d4/d5
    d4 = kmin(l0sq + l1sq, cross(l0, pa0) + cross(l1, pb0), pq0[...], thr_ref[4])
    d5 = kmin(l1sq + w3sq, cross(l1, pa1) + cross(w3, pb1), pq1[...], thr_ref[5])

    # ---- final normalize + final linear, folded into per-density coef + bias:
    #   score = b' + sum_i coef_i * d_i  (coef_i = inv_std_i * w_i, precomputed)
    score = (bias_ref[0]
             + coef_ref[0] * d0 + coef_ref[1] * d1 + coef_ref[2] * d2_
             + coef_ref[3] * d3 + coef_ref[4] * d4 + coef_ref[5] * d5)

    o_ref[...] = score                                   # (TILE_B, 1), 4 B/row


# ---------------------------------------------------------------------------
# Deterministic parameter construction (synthetic weights, shapes from NIC).
# All parameter-only work (whiten folds, RHS merges, per-center norms, folded
# final coefficients) happens here, once.
# ---------------------------------------------------------------------------
def init_params(key, in_dim, h1, h2, n_classes, n_centers):
    keys = iter(jax.random.split(key, 64))

    def nrm(shape, scale=0.05):
        return scale * jax.random.normal(next(keys), shape, jnp.float32)

    def pos(shape):
        return 1.0 / (1.0 + jnp.abs(nrm(shape, 1.0)))

    layer_dims = [in_dim, h1, h2, n_classes]

    # "trained_model": MLP whose activations() -> [h1_act, h2_act, logits]
    fc1_w, fc1_b = nrm((in_dim, h1)), nrm((1, h1))
    fc2_w, fc2_b = nrm((h1, h2)), nrm((1, h2))
    fc3_w, fc3_b = nrm((h2, n_classes)), nrm((1, n_classes))

    # Whiten per layer
    whiten = [(nrm((1, d)), pos((1, d))) for d in layer_dims]
    (m0, s0), (m1, s1), (m2, s2), (m3, s3) = whiten

    # Value-detector centers (one set per layer)
    vcs = [nrm((n_centers, d)) for d in layer_dims]

    # Classifiers: nn.Linear(d, n_classes) for layers[:-2]
    clf = [(nrm((d, n_classes)), nrm((1, n_classes))) for d in layer_dims[:-2]]
    (cw0, cb0), (cw1, cb1) = clf

    # ---- layer-0 folds (parameter-only) -----------------------------------
    #  l0 = ((x-m0)*s0) @ cw0 + cb0  ->  x @ (s0*cw0) + (cb0 - (m0*s0) @ cw0)
    #  ||w0 - c_k||^2 = ||w0||^2 - 2 x.(s0*c_k) + (||c_k||^2 + 2 (m0*s0).c_k)
    cw0p = s0[0][:, None] * cw0                              # (in_dim, nc)
    cb0p = cb0 - (m0 * s0) @ cw0                             # (1, nc)
    vc0 = vcs[0]
    vc0p_t = (vc0 * s0).T                                    # (in_dim, K)
    q0 = (jnp.sum(vc0 * vc0, axis=1)
          + 2.0 * (vc0 @ (m0[0] * s0[0])))[None, :]          # (1, K)
    # One wide bf16 RHS consumed directly by the raw bf16 input x.
    w0all = jnp.concatenate([fc1_w, cw0p, vc0p_t], axis=1).astype(jnp.bfloat16)

    # ---- layer-1 merge: [cw1 | vc1^T] shares the w1 LHS -------------------
    vc1 = vcs[1]
    w1m = jnp.concatenate([cw1, vc1.T], axis=1)              # (h1, nc + K)
    vq1 = jnp.sum(vc1 * vc1, axis=1)[None, :]

    def value_det(c):
        return c, jnp.sum(c * c, axis=1)[None, :]
    vc2, vq2 = value_det(vcs[2])
    vc3, vq3 = value_det(vcs[3])

    # Provenance detectors on concatenated logit pairs (dim 2*n_classes);
    # centers split into left/right halves at init (no in-kernel concat).
    def prov_det():
        c = nrm((n_centers, 2 * n_classes))
        c2 = jnp.sum(c * c, axis=1)[None, :]
        return c[:, :n_classes], c[:, n_classes:], c2
    pa0, pb0, pq0 = prov_det()
    pa1, pb1, pq1 = prov_det()

    n_dens = len(layer_dims) + len(clf)
    thr = jnp.full((n_dens,), 5.0, jnp.float32)              # DetectorKmeans thresholds

    # final_normalize + final_detector folded into per-density coef + bias.
    nm, ns = nrm((1, n_dens)), pos((1, n_dens))
    fw, fb = nrm((n_dens, 1)), nrm((1, 1))
    final_coef = (ns[0] * fw[:, 0]).astype(jnp.float32)                      # (n_dens,)
    final_bias = jnp.reshape(fb[0, 0] - jnp.sum(nm[0] * ns[0] * fw[:, 0]),
                             (1,)).astype(jnp.float32)                       # (1,)

    return dict(
        w0all=w0all, fc1_b=fc1_b, cb0p=cb0p, q0=q0, wm0=m0, ws0=s0,
        fc2_w=fc2_w, fc2_b=fc2_b, fc3_w=fc3_w, fc3_b=fc3_b,
        wm1=m1, ws1=s1, wm2=m2, ws2=s2, wm3=m3, ws3=s3,
        w1m=w1m, cb1=cb1, vq1=vq1,
        vc2=vc2, vq2=vq2, vc3=vc3, vq3=vq3,
        pa0=pa0, pb0=pb0, pq0=pq0, pa1=pa1, pb1=pb1, pq1=pq1,
        thr=thr, final_coef=final_coef, final_bias=final_bias)


# ---------------------------------------------------------------------------
# NIC.forward:  returns activations(X)[-1]  -> shape (B,)
# ---------------------------------------------------------------------------
def _const_spec(shape):
    nd = len(shape)
    return pl.BlockSpec(shape, lambda i, *_: (0,) * nd)     # VMEM-resident weights


_WEIGHT_NAMES = ("w0all", "fc1_b", "cb0p", "q0", "wm0", "ws0",
                 "fc2_w", "fc2_b", "fc3_w", "fc3_b",
                 "wm1", "ws1", "wm2", "ws2", "wm3", "ws3",
                 "w1m", "cb1", "vq1",
                 "vc2", "vq2", "vc3", "vq3",
                 "pa0", "pb0", "pq0", "pa1", "pb1", "pq1")


def nic_forward(X, p, tile_b=TILE_B):
    B = X.shape[0]
    x = X.reshape(B, -1).astype(jnp.bfloat16)     # torch.flatten(X, 1); bf16 halves DMA
    in_dim = x.shape[1]
    b_pad = ((B + tile_b - 1) // tile_b) * tile_b            # pad to a full row tile
    if b_pad != B:
        x = jnp.pad(x, ((0, b_pad - B), (0, 0)))             # zero rows, sliced off below
    n_tiles = b_pad // tile_b

    weights = [p[n] for n in _WEIGHT_NAMES]

    grid_spec = pltpu.PrefetchScalarGridSpec(
        num_scalar_prefetch=3,                 # thr, final_coef, final_bias -> SMEM
        grid=(n_tiles,),
        in_specs=[pl.BlockSpec((tile_b, in_dim), lambda i, *_: (i, 0))]
                 + [_const_spec(w.shape) for w in weights],
        out_specs=pl.BlockSpec((tile_b, 1), lambda i, *_: (i, 0)),
    )

    out = pl.pallas_call(
        _nic_kernel,
        grid_spec=grid_spec,
        out_shape=jax.ShapeDtypeStruct((b_pad, 1), jnp.float32),
        compiler_params=pltpu.CompilerParams(
            dimension_semantics=("parallel",),        # shard batch tiles across TCs
            vmem_limit_bytes=32 * 1024 * 1024),
    )(p["thr"], p["final_coef"], p["final_bias"], x, *weights)

    return out[:B, 0]                                        # .view(-1) -> (B,)


if __name__ == "__main__":
    key = jax.random.PRNGKey(0)
    k_x, k_p = jax.random.split(key)

    B, C, H, W = 2, 4, 16, 16
    X = jax.random.normal(k_x, (B, C, H, W), jnp.float32)
    params = init_params(k_p, in_dim=C * H * W, h1=64, h2=32,
                         n_classes=8, n_centers=16)

    out = jax.jit(nic_forward)(X, params)
    jax.block_until_ready(out)
    assert out.shape == (B,) and out.dtype == jnp.float32
    print("KERNEL_OK")
</pallas_src>

<mosaic_0001>
module attributes {stable_mosaic.version = 11 : i64} {
  func.func @_nic_kernel(%arg0: i32, %arg1: memref<6xf32, #tpu.memory_space<smem>>, %arg2: memref<6xf32, #tpu.memory_space<smem>>, %arg3: memref<1xf32, #tpu.memory_space<smem>>, %arg4: memref<256x1024xbf16, #tpu.memory_space<vmem>>, %arg5: memref<1024x88xbf16, #tpu.memory_space<vmem>>, %arg6: memref<1x64xf32, #tpu.memory_space<vmem>>, %arg7: memref<1x8xf32, #tpu.memory_space<vmem>>, %arg8: memref<1x16xf32, #tpu.memory_space<vmem>>, %arg9: memref<1x1024xf32, #tpu.memory_space<vmem>>, %arg10: memref<1x1024xf32, #tpu.memory_space<vmem>>, %arg11: memref<64x32xf32, #tpu.memory_space<vmem>>, %arg12: memref<1x32xf32, #tpu.memory_space<vmem>>, %arg13: memref<32x8xf32, #tpu.memory_space<vmem>>, %arg14: memref<1x8xf32, #tpu.memory_space<vmem>>, %arg15: memref<1x64xf32, #tpu.memory_space<vmem>>, %arg16: memref<1x64xf32, #tpu.memory_space<vmem>>, %arg17: memref<1x32xf32, #tpu.memory_space<vmem>>, %arg18: memref<1x32xf32, #tpu.memory_space<vmem>>, %arg19: memref<1x8xf32, #tpu.memory_space<vmem>>, %arg20: memref<1x8xf32, #tpu.memory_space<vmem>>, %arg21: memref<64x24xf32, #tpu.memory_space<vmem>>, %arg22: memref<1x8xf32, #tpu.memory_space<vmem>>, %arg23: memref<1x16xf32, #tpu.memory_space<vmem>>, %arg24: memref<16x32xf32, #tpu.memory_space<vmem>>, %arg25: memref<1x16xf32, #tpu.memory_space<vmem>>, %arg26: memref<16x8xf32, #tpu.memory_space<vmem>>, %arg27: memref<1x16xf32, #tpu.memory_space<vmem>>, %arg28: memref<16x8xf32, #tpu.memory_space<vmem>>, %arg29: memref<16x8xf32, #tpu.memory_space<vmem>>, %arg30: memref<1x16xf32, #tpu.memory_space<vmem>>, %arg31: memref<16x8xf32, #tpu.memory_space<vmem>>, %arg32: memref<16x8xf32, #tpu.memory_space<vmem>>, %arg33: memref<1x16xf32, #tpu.memory_space<vmem>>, %arg34: memref<256x1xf32, #tpu.memory_space<vmem>>) attributes {dimension_semantics = [#tpu.dimension_semantics<parallel>], iteration_bounds = array<i64: 1>, scalar_prefetch = 3 : i64, scratch_operands = 0 : i64, tpu.core_type = #tpu.core_type<tc>, window_params = [{transform_indices = @transform_0, window_bounds = array<i64: 256, 1024>}, {pipeline_mode = #tpu.pipeline_mode<synchronous>, transform_indices = @transform_1, window_bounds = array<i64: 1024, 88>}, {pipeline_mode = #tpu.pipeline_mode<synchronous>, transform_indices = @transform_2, window_bounds = array<i64: 1, 64>}, {pipeline_mode = #tpu.pipeline_mode<synchronous>, transform_indices = @transform_3, window_bounds = array<i64: 1, 8>}, {pipeline_mode = #tpu.pipeline_mode<synchronous>, transform_indices = @transform_4, window_bounds = array<i64: 1, 16>}, {pipeline_mode = #tpu.pipeline_mode<synchronous>, transform_indices = @transform_5, window_bounds = array<i64: 1, 1024>}, {pipeline_mode = #tpu.pipeline_mode<synchronous>, transform_indices = @transform_6, window_bounds = array<i64: 1, 1024>}, {pipeline_mode = #tpu.pipeline_mode<synchronous>, transform_indices = @transform_7, window_bounds = array<i64: 64, 32>}, {pipeline_mode = #tpu.pipeline_mode<synchronous>, transform_indices = @transform_8, window_bounds = array<i64: 1, 32>}, {pipeline_mode = #tpu.pipeline_mode<synchronous>, transform_indices = @transform_9, window_bounds = array<i64: 32, 8>}, {pipeline_mode = #tpu.pipeline_mode<synchronous>, transform_indices = @transform_10, window_bounds = array<i64: 1, 8>}, {pipeline_mode = #tpu.pipeline_mode<synchronous>, transform_indices = @transform_11, window_bounds = array<i64: 1, 64>}, {pipeline_mode = #tpu.pipeline_mode<synchronous>, transform_indices = @transform_12, window_bounds = array<i64: 1, 64>}, {pipeline_mode = #tpu.pipeline_mode<synchronous>, transform_indices = @transform_13, window_bounds = array<i64: 1, 32>}, {pipeline_mode = #tpu.pipeline_mode<synchronous>, transform_indices = @transform_14, window_bounds = array<i64: 1, 32>}, {pipeline_mode = #tpu.pipeline_mode<synchronous>, transform_indices = @transform_15, window_bounds = array<i64: 1, 8>}, {pipeline_mode = #tpu.pipeline_mode<synchronous>, transform_indices = @transform_16, window_bounds = array<i64: 1, 8>}, {pipeline_mode = #tpu.pipeline_mode<synchronous>, transform_indices = @transform_17, window_bounds = array<i64: 64, 24>}, {pipeline_mode = #tpu.pipeline_mode<synchronous>, transform_indices = @transform_18, window_bounds = array<i64: 1, 8>}, {pipeline_mode = #tpu.pipeline_mode<synchronous>, transform_indices = @transform_19, window_bounds = array<i64: 1, 16>}, {pipeline_mode = #tpu.pipeline_mode<synchronous>, transform_indices = @transform_20, window_bounds = array<i64: 16, 32>}, {pipeline_mode = #tpu.pipeline_mode<synchronous>, transform_indices = @transform_21, window_bounds = array<i64: 1, 16>}, {pipeline_mode = #tpu.pipeline_mode<synchronous>, transform_indices = @transform_22, window_bounds = array<i64: 16, 8>}, {pipeline_mode = #tpu.pipeline_mode<synchronous>, transform_indices = @transform_23, window_bounds = array<i64: 1, 16>}, {pipeline_mode = #tpu.pipeline_mode<synchronous>, transform_indices = @transform_24, window_bounds = array<i64: 16, 8>}, {pipeline_mode = #tpu.pipeline_mode<synchronous>, transform_indices = @transform_25, window_bounds = array<i64: 16, 8>}, {pipeline_mode = #tpu.pipeline_mode<synchronous>, transform_indices = @transform_26, window_bounds = array<i64: 1, 16>}, {pipeline_mode = #tpu.pipeline_mode<synchronous>, transform_indices = @transform_27, window_bounds = array<i64: 16, 8>}, {pipeline_mode = #tpu.pipeline_mode<synchronous>, transform_indices = @transform_28, window_bounds = array<i64: 16, 8>}, {pipeline_mode = #tpu.pipeline_mode<synchronous>, transform_indices = @transform_29, window_bounds = array<i64: 1, 16>}, {transform_indices = @transform_30, window_bounds = array<i64: 256, 1>}]} {
    %c0 = arith.constant 0 : index
    %c0_0 = arith.constant 0 : index
    %0 = vector.load %arg4[%c0, %c0_0] : memref<256x1024xbf16, #tpu.memory_space<vmem>>, vector<256x1024xbf16>
    %c0_1 = arith.constant 0 : index
    %c0_2 = arith.constant 0 : index
    %1 = vector.load %arg5[%c0_1, %c0_2] : memref<1024x88xbf16, #tpu.memory_space<vmem>>, vector<1024x88xbf16>
    %cst = arith.constant dense<0.000000e+00> : vector<256x88xf32>
    %2 = tpu.matmul %0, %1, %cst {dimension_numbers = #tpu.dot_dimension_numbers<[1], [0], [0], [1], [0, 0, 1, 1], [], []>} : vector<256x1024xbf16>, vector<1024x88xbf16>, vector<256x88xf32> -> vector<256x88xf32>
    %3 = vector.extract_strided_slice %2 {offsets = [0, 0], sizes = [256, 64], strides = [1, 1]} : vector<256x88xf32> to vector<256x64xf32>
    %c0_3 = arith.constant 0 : index
    %c0_4 = arith.constant 0 : index
    %4 = vector.load %arg6[%c0_3, %c0_4] : memref<1x64xf32, #tpu.memory_space<vmem>>, vector<1x64xf32>
    %5 = vector.broadcast %4 : vector<1x64xf32> to vector<256x64xf32>
    %6 = arith.addf %3, %5 : vector<256x64xf32>
    %cst_5 = arith.constant 0.000000e+00 : f32
    %7 = vector.broadcast %cst_5 : f32 to vector<256x64xf32>
    %8 = arith.maximumf %6, %7 : vector<256x64xf32>
    %9 = vector.extract_strided_slice %2 {offsets = [0, 64], sizes = [256, 8], strides = [1, 1]} : vector<256x88xf32> to vector<256x8xf32>
    %c0_6 = arith.constant 0 : index
    %c0_7 = arith.constant 0 : index
    %10 = vector.load %arg7[%c0_6, %c0_7] : memref<1x8xf32, #tpu.memory_space<vmem>>, vector<1x8xf32>
    %11 = vector.broadcast %10 : vector<1x8xf32> to vector<256x8xf32>
    %12 = arith.addf %9, %11 : vector<256x8xf32>
    %13 = vector.extract_strided_slice %2 {offsets = [0, 72], sizes = [256, 16], strides = [1, 1]} : vector<256x88xf32> to vector<256x16xf32>
    %c0_8 = arith.constant 0 : index
    %c0_9 = arith.constant 0 : index
    %14 = vector.load %arg9[%c0_8, %c0_9] : memref<1x1024xf32, #tpu.memory_space<vmem>>, vector<1x1024xf32>
    %15 = arith.extf %0 : vector<256x1024xbf16> to vector<256x1024xf32>
    %16 = vector.broadcast %14 : vector<1x1024xf32> to vector<256x1024xf32>
    %17 = arith.subf %15, %16 : vector<256x1024xf32>
    %c0_10 = arith.constant 0 : index
    %c0_11 = arith.constant 0 : index
    %18 = vector.load %arg10[%c0_10, %c0_11] : memref<1x1024xf32, #tpu.memory_space<vmem>>, vector<1x1024xf32>
    %19 = vector.broadcast %18 : vector<1x1024xf32> to vector<256x1024xf32>
    %20 = arith.mulf %17, %19 : vector<256x1024xf32>
    %21 = arith.mulf %20, %20 : vector<256x1024xf32>
    %cst_12 = arith.constant dense<0.000000e+00> : vector<256xf32>
    %22 = vector.multi_reduction <add>, %21, %cst_12 [1] : vector<256x1024xf32> to vector<256xf32>
    %23 = vector.shape_cast %22 : vector<256xf32> to vector<256x1xf32>
    %c0_13 = arith.constant 0 : index
    %24 = memref.load %arg1[%c0_13] : memref<6xf32, #tpu.memory_space<smem>>
    %25 = vector.broadcast %24 : f32 to vector<256x1xf32>
    %26 = arith.subf %25, %23 : vector<256x1xf32>
    %c0_14 = arith.constant 0 : index
    %c0_15 = arith.constant 0 : index
    %27 = vector.load %arg8[%c0_14, %c0_15] : memref<1x16xf32, #tpu.memory_space<vmem>>, vector<1x16xf32>
    %cst_16 = arith.constant 2.000000e+00 : f32
    %28 = vector.broadcast %cst_16 : f32 to vector<256x16xf32>
    %29 = arith.mulf %28, %13 : vector<256x16xf32>
    %30 = vector.broadcast %27 : vector<1x16xf32> to vector<256x16xf32>
    %31 = arith.subf %30, %29 : vector<256x16xf32>
    %cst_17 = arith.constant dense<0x7F800000> : vector<256xf32>
    %32 = vector.multi_reduction <minimumf>, %31, %cst_17 [1] : vector<256x16xf32> to vector<256xf32>
    %33 = vector.shape_cast %32 : vector<256xf32> to vector<256x1xf32>
    %34 = arith.subf %26, %33 : vector<256x1xf32>
    %c0_18 = arith.constant 0 : index
    %c0_19 = arith.constant 0 : index
    %35 = vector.load %arg11[%c0_18, %c0_19] : memref<64x32xf32, #tpu.memory_space<vmem>>, vector<64x32xf32>
    %cst_20 = arith.constant dense<0.000000e+00> : vector<256x32xf32>
    %36 = tpu.matmul %8, %35, %cst_20 {dimension_numbers = #tpu.dot_dimension_numbers<[1], [0], [0], [1], [0, 0, 1, 1], [], []>} : vector<256x64xf32>, vector<64x32xf32>, vector<256x32xf32> -> vector<256x32xf32>
    %c0_21 = arith.constant 0 : index
    %c0_22 = arith.constant 0 : index
    %37 = vector.load %arg12[%c0_21, %c0_22] : memref<1x32xf32, #tpu.memory_space<vmem>>, vector<1x32xf32>
    %38 = vector.broadcast %37 : vector<1x32xf32> to vector<256x32xf32>
    %39 = arith.addf %36, %38 : vector<256x32xf32>
    %cst_23 = arith.constant 0.000000e+00 : f32
    %40 = vector.broadcast %cst_23 : f32 to vector<256x32xf32>
    %41 = arith.maximumf %39, %40 : vector<256x32xf32>
    %c0_24 = arith.constant 0 : index
    %c0_25 = arith.constant 0 : index
    %42 = vector.load %arg13[%c0_24, %c0_25] : memref<32x8xf32, #tpu.memory_space<vmem>>, vector<32x8xf32>
    %cst_26 = arith.constant dense<0.000000e+00> : vector<256x8xf32>
    %43 = tpu.matmul %41, %42, %cst_26 {dimension_numbers = #tpu.dot_dimension_numbers<[1], [0], [0], [1], [0, 0, 1, 1], [], []>} : vector<256x32xf32>, vector<32x8xf32>, vector<256x8xf32> -> vector<256x8xf32>
    %c0_27 = arith.constant 0 : index
    %c0_28 = arith.constant 0 : index
    %44 = vector.load %arg14[%c0_27, %c0_28] : memref<1x8xf32, #tpu.memory_space<vmem>>, vector<1x8xf32>
    %45 = vector.broadcast %44 : vector<1x8xf32> to vector<256x8xf32>
    %46 = arith.addf %43, %45 : vector<256x8xf32>
    %c0_29 = arith.constant 0 : index
    %c0_30 = arith.constant 0 : index
    %47 = vector.load %arg15[%c0_29, %c0_30] : memref<1x64xf32, #tpu.memory_space<vmem>>, vector<1x64xf32>
    %48 = vector.broadcast %47 : vector<1x64xf32> to vector<256x64xf32>
    %49 = arith.subf %8, %48 : vector<256x64xf32>
    %c0_31 = arith.constant 0 : index
    %c0_32 = arith.constant 0 : index
    %50 = vector.load %arg16[%c0_31, %c0_32] : memref<1x64xf32, #tpu.memory_space<vmem>>, vector<1x64xf32>
    %51 = vector.broadcast %50 : vector<1x64xf32> to vector<256x64xf32>
    %52 = arith.mulf %49, %51 : vector<256x64xf32>
    %c0_33 = arith.constant 0 : index
    %c0_34 = arith.constant 0 : index
    %53 = vector.load %arg17[%c0_33, %c0_34] : memref<1x32xf32, #tpu.memory_space<vmem>>, vector<1x32xf32>
    %54 = vector.broadcast %53 : vector<1x32xf32> to vector<256x32xf32>
    %55 = arith.subf %41, %54 : vector<256x32xf32>
    %c0_35 = arith.constant 0 : index
    %c0_36 = arith.constant 0 : index
    %56 = vector.load %arg18[%c0_35, %c0_36] : memref<1x32xf32, #tpu.memory_space<vmem>>, vector<1x32xf32>
    %57 = vector.broadcast %56 : vector<1x32xf32> to vector<256x32xf32>
    %58 = arith.mulf %55, %57 : vector<256x32xf32>
    %c0_37 = arith.constant 0 : index
    %c0_38 = arith.constant 0 : index
    %59 = vector.load %arg19[%c0_37, %c0_38] : memref<1x8xf32, #tpu.memory_space<vmem>>, vector<1x8xf32>
    %60 = vector.broadcast %59 : vector<1x8xf32> to vector<256x8xf32>
    %61 = arith.subf %46, %60 : vector<256x8xf32>
    %c0_39 = arith.constant 0 : index
    %c0_40 = arith.constant 0 : index
    %62 = vector.load %arg20[%c0_39, %c0_40] : memref<1x8xf32, #tpu.memory_space<vmem>>, vector<1x8xf32>
    %63 = vector.broadcast %62 : vector<1x8xf32> to vector<256x8xf32>
    %64 = arith.mulf %61, %63 : vector<256x8xf32>
    %65 = arith.mulf %52, %52 : vector<256x64xf32>
    %cst_41 = arith.constant dense<0.000000e+00> : vector<256xf32>
    %66 = vector.multi_reduction <add>, %65, %cst_41 [1] : vector<256x64xf32> to vector<256xf32>
    %67 = vector.shape_cast %66 : vector<256xf32> to vector<256x1xf32>
    %68 = arith.mulf %58, %58 : vector<256x32xf32>
    %cst_42 = arith.constant dense<0.000000e+00> : vector<256xf32>
    %69 = vector.multi_reduction <add>, %68, %cst_42 [1] : vector<256x32xf32> to vector<256xf32>
    %70 = vector.shape_cast %69 : vector<256xf32> to vector<256x1xf32>
    %71 = arith.mulf %64, %64 : vector<256x8xf32>
    %cst_43 = arith.constant dense<0.000000e+00> : vector<256xf32>
    %72 = vector.multi_reduction <add>, %71, %cst_43 [1] : vector<256x8xf32> to vector<256xf32>
    %73 = vector.shape_cast %72 : vector<256xf32> to vector<256x1xf32>
    %c0_44 = arith.constant 0 : index
    %c0_45 = arith.constant 0 : index
    %74 = vector.load %arg21[%c0_44, %c0_45] : memref<64x24xf32, #tpu.memory_space<vmem>>, vector<64x24xf32>
    %cst_46 = arith.constant dense<0.000000e+00> : vector<256x24xf32>
    %75 = tpu.matmul %52, %74, %cst_46 {dimension_numbers = #tpu.dot_dimension_numbers<[1], [0], [0], [1], [0, 0, 1, 1], [], []>} : vector<256x64xf32>, vector<64x24xf32>, vector<256x24xf32> -> vector<256x24xf32>
    %76 = vector.extract_strided_slice %75 {offsets = [0, 0], sizes = [256, 8], strides = [1, 1]} : vector<256x24xf32> to vector<256x8xf32>
    %c0_47 = arith.constant 0 : index
    %c0_48 = arith.constant 0 : index
    %77 = vector.load %arg22[%c0_47, %c0_48] : memref<1x8xf32, #tpu.memory_space<vmem>>, vector<1x8xf32>
    %78 = vector.broadcast %77 : vector<1x8xf32> to vector<256x8xf32>
    %79 = arith.addf %76, %78 : vector<256x8xf32>
    %80 = vector.extract_strided_slice %75 {offsets = [0, 8], sizes = [256, 16], strides = [1, 1]} : vector<256x24xf32> to vector<256x16xf32>
    %c0_49 = arith.constant 0 : index
    %c0_50 = arith.constant 0 : index
    %81 = vector.load %arg23[%c0_49, %c0_50] : memref<1x16xf32, #tpu.memory_space<vmem>>, vector<1x16xf32>
    %c1 = arith.constant 1 : index
    %82 = memref.load %arg1[%c1] : memref<6xf32, #tpu.memory_space<smem>>
    %cst_51 = arith.constant 2.000000e+00 : f32
    %83 = vector.broadcast %cst_51 : f32 to vector<256x16xf32>
    %84 = arith.mulf %83, %80 : vector<256x16xf32>
    %85 = vector.broadcast %67 : vector<256x1xf32> to vector<256x16xf32>
    %86 = arith.subf %85, %84 : vector<256x16xf32>
    %87 = vector.broadcast %81 : vector<1x16xf32> to vector<256x16xf32>
    %88 = arith.addf %86, %87 : vector<256x16xf32>
    %cst_52 = arith.constant dense<0x7F800000> : vector<256xf32>
    %89 = vector.multi_reduction <minimumf>, %88, %cst_52 [1] : vector<256x16xf32> to vector<256xf32>
    %90 = vector.shape_cast %89 : vector<256xf32> to vector<256x1xf32>
    %91 = vector.broadcast %82 : f32 to vector<256x1xf32>
    %92 = arith.subf %91, %90 : vector<256x1xf32>
    %c0_53 = arith.constant 0 : index
    %c0_54 = arith.constant 0 : index
    %93 = vector.load %arg24[%c0_53, %c0_54] : memref<16x32xf32, #tpu.memory_space<vmem>>, vector<16x32xf32>
    %cst_55 = arith.constant dense<0.000000e+00> : vector<256x16xf32>
    %94 = tpu.matmul %58, %93, %cst_55 {dimension_numbers = #tpu.dot_dimension_numbers<[1], [1], [0], [0], [0, 0, 1, 0], [], []>} : vector<256x32xf32>, vector<16x32xf32>, vector<256x16xf32> -> vector<256x16xf32>
    %c0_56 = arith.constant 0 : index
    %c0_57 = arith.constant 0 : index
    %95 = vector.load %arg25[%c0_56, %c0_57] : memref<1x16xf32, #tpu.memory_space<vmem>>, vector<1x16xf32>
    %c2 = arith.constant 2 : index
    %96 = memref.load %arg1[%c2] : memref<6xf32, #tpu.memory_space<smem>>
    %cst_58 = arith.constant 2.000000e+00 : f32
    %97 = vector.broadcast %cst_58 : f32 to vector<256x16xf32>
    %98 = arith.mulf %97, %94 : vector<256x16xf32>
    %99 = vector.broadcast %70 : vector<256x1xf32> to vector<256x16xf32>
    %100 = arith.subf %99, %98 : vector<256x16xf32>
    %101 = vector.broadcast %95 : vector<1x16xf32> to vector<256x16xf32>
    %102 = arith.addf %100, %101 : vector<256x16xf32>
    %cst_59 = arith.constant dense<0x7F800000> : vector<256xf32>
    %103 = vector.multi_reduction <minimumf>, %102, %cst_59 [1] : vector<256x16xf32> to vector<256xf32>
    %104 = vector.shape_cast %103 : vector<256xf32> to vector<256x1xf32>
    %105 = vector.broadcast %96 : f32 to vector<256x1xf32>
    %106 = arith.subf %105, %104 : vector<256x1xf32>
    %c0_60 = arith.constant 0 : index
    %c0_61 = arith.constant 0 : index
    %107 = vector.load %arg26[%c0_60, %c0_61] : memref<16x8xf32, #tpu.memory_space<vmem>>, vector<16x8xf32>
    %cst_62 = arith.constant dense<0.000000e+00> : vector<256x16xf32>
    %108 = tpu.matmul %64, %107, %cst_62 {dimension_numbers = #tpu.dot_dimension_numbers<[1], [1], [0], [0], [0, 0, 1, 0], [], []>} : vector<256x8xf32>, vector<16x8xf32>, vector<256x16xf32> -> vector<256x16xf32>
    %c0_63 = arith.constant 0 : index
    %c0_64 = arith.constant 0 : index
    %109 = vector.load %arg27[%c0_63, %c0_64] : memref<1x16xf32, #tpu.memory_space<vmem>>, vector<1x16xf32>
    %c3 = arith.constant 3 : index
    %110 = memref.load %arg1[%c3] : memref<6xf32, #tpu.memory_space<smem>>
    %cst_65 = arith.constant 2.000000e+00 : f32
    %111 = vector.broadcast %cst_65 : f32 to vector<256x16xf32>
    %112 = arith.mulf %111, %108 : vector<256x16xf32>
    %113 = vector.broadcast %73 : vector<256x1xf32> to vector<256x16xf32>
    %114 = arith.subf %113, %112 : vector<256x16xf32>
    %115 = vector.broadcast %109 : vector<1x16xf32> to vector<256x16xf32>
    %116 = arith.addf %114, %115 : vector<256x16xf32>
    %cst_66 = arith.constant dense<0x7F800000> : vector<256xf32>
    %117 = vector.multi_reduction <minimumf>, %116, %cst_66 [1] : vector<256x16xf32> to vector<256xf32>
    %118 = vector.shape_cast %117 : vector<256xf32> to vector<256x1xf32>
    %119 = vector.broadcast %110 : f32 to vector<256x1xf32>
    %120 = arith.subf %119, %118 : vector<256x1xf32>
    %121 = arith.mulf %12, %12 : vector<256x8xf32>
    %cst_67 = arith.constant dense<0.000000e+00> : vector<256xf32>
    %122 = vector.multi_reduction <add>, %121, %cst_67 [1] : vector<256x8xf32> to vector<256xf32>
    %123 = vector.shape_cast %122 : vector<256xf32> to vector<256x1xf32>
    %124 = arith.mulf %79, %79 : vector<256x8xf32>
    %cst_68 = arith.constant dense<0.000000e+00> : vector<256xf32>
    %125 = vector.multi_reduction <add>, %124, %cst_68 [1] : vector<256x8xf32> to vector<256xf32>
    %126 = vector.shape_cast %125 : vector<256xf32> to vector<256x1xf32>
    %127 = arith.addf %123, %126 : vector<256x1xf32>
    %c0_69 = arith.constant 0 : index
    %c0_70 = arith.constant 0 : index
    %128 = vector.load %arg28[%c0_69, %c0_70] : memref<16x8xf32, #tpu.memory_space<vmem>>, vector<16x8xf32>
    %cst_71 = arith.constant dense<0.000000e+00> : vector<256x16xf32>
    %129 = tpu.matmul %12, %128, %cst_71 {dimension_numbers = #tpu.dot_dimension_numbers<[1], [1], [0], [0], [0, 0, 1, 0], [], []>} : vector<256x8xf32>, vector<16x8xf32>, vector<256x16xf32> -> vector<256x16xf32>
    %c0_72 = arith.constant 0 : index
    %c0_73 = arith.constant 0 : index
    %130 = vector.load %arg29[%c0_72, %c0_73] : memref<16x8xf32, #tpu.memory_space<vmem>>, vector<16x8xf32>
    %cst_74 = arith.constant dense<0.000000e+00> : vector<256x16xf32>
    %131 = tpu.matmul %79, %130, %cst_74 {dimension_numbers = #tpu.dot_dimension_numbers<[1], [1], [0], [0], [0, 0, 1, 0], [], []>} : vector<256x8xf32>, vector<16x8xf32>, vector<256x16xf32> -> vector<256x16xf32>
    %132 = arith.addf %129, %131 : vector<256x16xf32>
    %c0_75 = arith.constant 0 : index
    %c0_76 = arith.constant 0 : index
    %133 = vector.load %arg30[%c0_75, %c0_76] : memref<1x16xf32, #tpu.memory_space<vmem>>, vector<1x16xf32>
    %c4 = arith.constant 4 : index
    %134 = memref.load %arg1[%c4] : memref<6xf32, #tpu.memory_space<smem>>
    %cst_77 = arith.constant 2.000000e+00 : f32
    %135 = vector.broadcast %cst_77 : f32 to vector<256x16xf32>
    %136 = arith.mulf %135, %132 : vector<256x16xf32>
    %137 = vector.broadcast %127 : vector<256x1xf32> to vector<256x16xf32>
    %138 = arith.subf %137, %136 : vector<256x16xf32>
    %139 = vector.broadcast %133 : vector<1x16xf32> to vector<256x16xf32>
    %140 = arith.addf %138, %139 : vector<256x16xf32>
    %cst_78 = arith.constant dense<0x7F800000> : vector<256xf32>
    %141 = vector.multi_reduction <minimumf>, %140, %cst_78 [1] : vector<256x16xf32> to vector<256xf32>
    %142 = vector.shape_cast %141 : vector<256xf32> to vector<256x1xf32>
    %143 = vector.broadcast %134 : f32 to vector<256x1xf32>
    %144 = arith.subf %143, %142 : vector<256x1xf32>
    %145 = arith.addf %126, %73 : vector<256x1xf32>
    %c0_79 = arith.constant 0 : index
    %c0_80 = arith.constant 0 : index
    %146 = vector.load %arg31[%c0_79, %c0_80] : memref<16x8xf32, #tpu.memory_space<vmem>>, vector<16x8xf32>
    %cst_81 = arith.constant dense<0.000000e+00> : vector<256x16xf32>
    %147 = tpu.matmul %79, %146, %cst_81 {dimension_numbers = #tpu.dot_dimension_numbers<[1], [1], [0], [0], [0, 0, 1, 0], [], []>} : vector<256x8xf32>, vector<16x8xf32>, vector<256x16xf32> -> vector<256x16xf32>
    %c0_82 = arith.constant 0 : index
    %c0_83 = arith.constant 0 : index
    %148 = vector.load %arg32[%c0_82, %c0_83] : memref<16x8xf32, #tpu.memory_space<vmem>>, vector<16x8xf32>
    %cst_84 = arith.constant dense<0.000000e+00> : vector<256x16xf32>
    %149 = tpu.matmul %64, %148, %cst_84 {dimension_numbers = #tpu.dot_dimension_numbers<[1], [1], [0], [0], [0, 0, 1, 0], [], []>} : vector<256x8xf32>, vector<16x8xf32>, vector<256x16xf32> -> vector<256x16xf32>
    %150 = arith.addf %147, %149 : vector<256x16xf32>
    %c0_85 = arith.constant 0 : index
    %c0_86 = arith.constant 0 : index
    %151 = vector.load %arg33[%c0_85, %c0_86] : memref<1x16xf32, #tpu.memory_space<vmem>>, vector<1x16xf32>
    %c5 = arith.constant 5 : index
    %152 = memref.load %arg1[%c5] : memref<6xf32, #tpu.memory_space<smem>>
    %cst_87 = arith.constant 2.000000e+00 : f32
    %153 = vector.broadcast %cst_87 : f32 to vector<256x16xf32>
    %154 = arith.mulf %153, %150 : vector<256x16xf32>
    %155 = vector.broadcast %145 : vector<256x1xf32> to vector<256x16xf32>
    %156 = arith.subf %155, %154 : vector<256x16xf32>
    %157 = vector.broadcast %151 : vector<1x16xf32> to vector<256x16xf32>
    %158 = arith.addf %156, %157 : vector<256x16xf32>
    %cst_88 = arith.constant dense<0x7F800000> : vector<256xf32>
    %159 = vector.multi_reduction <minimumf>, %158, %cst_88 [1] : vector<256x16xf32> to vector<256xf32>
    %160 = vector.shape_cast %159 : vector<256xf32> to vector<256x1xf32>
    %161 = vector.broadcast %152 : f32 to vector<256x1xf32>
    %162 = arith.subf %161, %160 : vector<256x1xf32>
    %c0_89 = arith.constant 0 : index
    %163 = memref.load %arg3[%c0_89] : memref<1xf32, #tpu.memory_space<smem>>
    %c0_90 = arith.constant 0 : index
    %164 = memref.load %arg2[%c0_90] : memref<6xf32, #tpu.memory_space<smem>>
    %165 = vector.broadcast %164 : f32 to vector<256x1xf32>
    %166 = arith.mulf %165, %34 : vector<256x1xf32>
    %167 = vector.broadcast %163 : f32 to vector<256x1xf32>
    %168 = arith.addf %167, %166 : vector<256x1xf32>
    %c1_91 = arith.constant 1 : index
    %169 = memref.load %arg2[%c1_91] : memref<6xf32, #tpu.memory_space<smem>>
    %170 = vector.broadcast %169 : f32 to vector<256x1xf32>
    %171 = arith.mulf %170, %92 : vector<256x1xf32>
    %172 = arith.addf %168, %171 : vector<256x1xf32>
    %c2_92 = arith.constant 2 : index
    %173 = memref.load %arg2[%c2_92] : memref<6xf32, #tpu.memory_space<smem>>
    %174 = vector.broadcast %173 : f32 to vector<256x1xf32>
    %175 = arith.mulf %174, %106 : vector<256x1xf32>
    %176 = arith.addf %172, %175 : vector<256x1xf32>
    %c3_93 = arith.constant 3 : index
    %177 = memref.load %arg2[%c3_93] : memref<6xf32, #tpu.memory_space<smem>>
    %178 = vector.broadcast %177 : f32 to vector<256x1xf32>
    %179 = arith.mulf %178, %120 : vector<256x1xf32>
    %180 = arith.addf %176, %179 : vector<256x1xf32>
    %c4_94 = arith.constant 4 : index
    %181 = memref.load %arg2[%c4_94] : memref<6xf32, #tpu.memory_space<smem>>
    %182 = vector.broadcast %181 : f32 to vector<256x1xf32>
    %183 = arith.mulf %182, %144 : vector<256x1xf32>
    %184 = arith.addf %180, %183 : vector<256x1xf32>
    %c5_95 = arith.constant 5 : index
    %185 = memref.load %arg2[%c5_95] : memref<6xf32, #tpu.memory_space<smem>>
    %186 = vector.broadcast %185 : f32 to vector<256x1xf32>
    %187 = arith.mulf %186, %162 : vector<256x1xf32>
    %188 = arith.addf %184, %187 : vector<256x1xf32>
    %c0_96 = arith.constant 0 : index
    %c0_97 = arith.constant 0 : index
    %189 = vector.load %arg34[%c0_96, %c0_97] : memref<256x1xf32, #tpu.memory_space<vmem>>, vector<256x1xf32>
    tpu.vector_store %arg34[%c0_96, %c0_97], %188 {strides = array<i32>} : memref<256x1xf32, #tpu.memory_space<vmem>>, vector<256x1xf32>,
    return
  }
  func.func @transform_0(%arg0: i32, %arg1: memref<6xf32, #tpu.memory_space<smem>>, %arg2: memref<6xf32, #tpu.memory_space<smem>>, %arg3: memref<1xf32, #tpu.memory_space<smem>>) -> (i32, i32) {
    %c0_i32 = arith.constant 0 : i32
    %c0_i32_0 = arith.constant 0 : i32
    return %arg0, %c0_i32 : i32, i32
  }
  func.func @transform_1(%arg0: i32, %arg1: memref<6xf32, #tpu.memory_space<smem>>, %arg2: memref<6xf32, #tpu.memory_space<smem>>, %arg3: memref<1xf32, #tpu.memory_space<smem>>) -> (i32, i32) {
    %c0_i32 = arith.constant 0 : i32
    %c0_i32_0 = arith.constant 0 : i32
    %c0_i32_1 = arith.constant 0 : i32
    return %c0_i32, %c0_i32_0 : i32, i32
  }
  func.func @transform_2(%arg0: i32, %arg1: memref<6xf32, #tpu.memory_space<smem>>, %arg2: memref<6xf32, #tpu.memory_space<smem>>, %arg3: memref<1xf32, #tpu.memory_space<smem>>) -> (i32, i32) {
    %c0_i32 = arith.constant 0 : i32
    %c0_i32_0 = arith.constant 0 : i32
    %c0_i32_1 = arith.constant 0 : i32
    return %c0_i32, %c0_i32_0 : i32, i32
  }
  func.func @transform_3(%arg0: i32, %arg1: memref<6xf32, #tpu.memory_space<smem>>, %arg2: memref<6xf32, #tpu.memory_space<smem>>, %arg3: memref<1xf32, #tpu.memory_space<smem>>) -> (i32, i32) {
    %c0_i32 = arith.constant 0 : i32
    %c0_i32_0 = arith.constant 0 : i32
    %c0_i32_1 = arith.constant 0 : i32
    return %c0_i32, %c0_i32_0 : i32, i32
  }
  func.func @transform_4(%arg0: i32, %arg1: memref<6xf32, #tpu.memory_space<smem>>, %arg2: memref<6xf32, #tpu.memory_space<smem>>, %arg3: memref<1xf32, #tpu.memory_space<smem>>) -> (i32, i32) {
    %c0_i32 = arith.constant 0 : i32
    %c0_i32_0 = arith.constant 0 : i32
    %c0_i32_1 = arith.constant 0 : i32
    return %c0_i32, %c0_i32_0 : i32, i32
  }
  func.func @transform_5(%arg0: i32, %arg1: memref<6xf32, #tpu.memory_space<smem>>, %arg2: memref<6xf32, #tpu.memory_space<smem>>, %arg3: memref<1xf32, #tpu.memory_space<smem>>) -> (i32, i32) {
    %c0_i32 = arith.constant 0 : i32
    %c0_i32_0 = arith.constant 0 : i32
    %c0_i32_1 = arith.constant 0 : i32
    return %c0_i32, %c0_i32_0 : i32, i32
  }
  func.func @transform_6(%arg0: i32, %arg1: memref<6xf32, #tpu.memory_space<smem>>, %arg2: memref<6xf32, #tpu.memory_space<smem>>, %arg3: memref<1xf32, #tpu.memory_space<smem>>) -> (i32, i32) {
    %c0_i32 = arith.constant 0 : i32
    %c0_i32_0 = arith.constant 0 : i32
    %c0_i32_1 = arith.constant 0 : i32
    return %c0_i32, %c0_i32_0 : i32, i32
  }
  func.func @transform_7(%arg0: i32, %arg1: memref<6xf32, #tpu.memory_space<smem>>, %arg2: memref<6xf32, #tpu.memory_space<smem>>, %arg3: memref<1xf32, #tpu.memory_space<smem>>) -> (i32, i32) {
    %c0_i32 = arith.constant 0 : i32
    %c0_i32_0 = arith.constant 0 : i32
    %c0_i32_1 = arith.constant 0 : i32
    return %c0_i32, %c0_i32_0 : i32, i32
  }
  func.func @transform_8(%arg0: i32, %arg1: memref<6xf32, #tpu.memory_space<smem>>, %arg2: memref<6xf32, #tpu.memory_space<smem>>, %arg3: memref<1xf32, #tpu.memory_space<smem>>) -> (i32, i32) {
    %c0_i32 = arith.constant 0 : i32
    %c0_i32_0 = arith.constant 0 : i32
    %c0_i32_1 = arith.constant 0 : i32
    return %c0_i32, %c0_i32_0 : i32, i32
  }
  func.func @transform_9(%arg0: i32, %arg1: memref<6xf32, #tpu.memory_space<smem>>, %arg2: memref<6xf32, #tpu.memory_space<smem>>, %arg3: memref<1xf32, #tpu.memory_space<smem>>) -> (i32, i32) {
    %c0_i32 = arith.constant 0 : i32
    %c0_i32_0 = arith.constant 0 : i32
    %c0_i32_1 = arith.constant 0 : i32
    return %c0_i32, %c0_i32_0 : i32, i32
  }
  func.func @transform_10(%arg0: i32, %arg1: memref<6xf32, #tpu.memory_space<smem>>, %arg2: memref<6xf32, #tpu.memory_space<smem>>, %arg3: memref<1xf32, #tpu.memory_space<smem>>) -> (i32, i32) {
    %c0_i32 = arith.constant 0 : i32
    %c0_i32_0 = arith.constant 0 : i32
    %c0_i32_1 = arith.constant 0 : i32
    return %c0_i32, %c0_i32_0 : i32, i32
  }
  func.func @transform_11(%arg0: i32, %arg1: memref<6xf32, #tpu.memory_space<smem>>, %arg2: memref<6xf32, #tpu.memory_space<smem>>, %arg3: memref<1xf32, #tpu.memory_space<smem>>) -> (i32, i32) {
    %c0_i32 = arith.constant 0 : i32
    %c0_i32_0 = arith.constant 0 : i32
    %c0_i32_1 = arith.constant 0 : i32
    return %c0_i32, %c0_i32_0 : i32, i32
  }
  func.func @transform_12(%arg0: i32, %arg1: memref<6xf32, #tpu.memory_space<smem>>, %arg2: memref<6xf32, #tpu.memory_space<smem>>, %arg3: memref<1xf32, #tpu.memory_space<smem>>) -> (i32, i32) {
    %c0_i32 = arith.constant 0 : i32
    %c0_i32_0 = arith.constant 0 : i32
    %c0_i32_1 = arith.constant 0 : i32
    return %c0_i32, %c0_i32_0 : i32, i32
  }
  func.func @transform_13(%arg0: i32, %arg1: memref<6xf32, #tpu.memory_space<smem>>, %arg2: memref<6xf32, #tpu.memory_space<smem>>, %arg3: memref<1xf32, #tpu.memory_space<smem>>) -> (i32, i32) {
    %c0_i32 = arith.constant 0 : i32
    %c0_i32_0 = arith.constant 0 : i32
    %c0_i32_1 = arith.constant 0 : i32
    return %c0_i32, %c0_i32_0 : i32, i32
  }
  func.func @transform_14(%arg0: i32, %arg1: memref<6xf32, #tpu.memory_space<smem>>, %arg2: memref<6xf32, #tpu.memory_space<smem>>, %arg3: memref<1xf32, #tpu.memory_space<smem>>) -> (i32, i32) {
    %c0_i32 = arith.constant 0 : i32
    %c0_i32_0 = arith.constant 0 : i32
    %c0_i32_1 = arith.constant 0 : i32
    return %c0_i32, %c0_i32_0 : i32, i32
  }
  func.func @transform_15(%arg0: i32, %arg1: memref<6xf32, #tpu.memory_space<smem>>, %arg2: memref<6xf32, #tpu.memory_space<smem>>, %arg3: memref<1xf32, #tpu.memory_space<smem>>) -> (i32, i32) {
    %c0_i32 = arith.constant 0 : i32
    %c0_i32_0 = arith.constant 0 : i32
    %c0_i32_1 = arith.constant 0 : i32
    return %c0_i32, %c0_i32_0 : i32, i32
  }
  func.func @transform_16(%arg0: i32, %arg1: memref<6xf32, #tpu.memory_space<smem>>, %arg2: memref<6xf32, #tpu.memory_space<smem>>, %arg3: memref<1xf32, #tpu.memory_space<smem>>) -> (i32, i32) {
    %c0_i32 = arith.constant 0 : i32
    %c0_i32_0 = arith.constant 0 : i32
    %c0_i32_1 = arith.constant 0 : i32
    return %c0_i32, %c0_i32_0 : i32, i32
  }
  func.func @transform_17(%arg0: i32, %arg1: memref<6xf32, #tpu.memory_space<smem>>, %arg2: memref<6xf32, #tpu.memory_space<smem>>, %arg3: memref<1xf32, #tpu.memory_space<smem>>) -> (i32, i32) {
    %c0_i32 = arith.constant 0 : i32
    %c0_i32_0 = arith.constant 0 : i32
    %c0_i32_1 = arith.constant 0 : i32
    return %c0_i32, %c0_i32_0 : i32, i32
  }
  func.func @transform_18(%arg0: i32, %arg1: memref<6xf32, #tpu.memory_space<smem>>, %arg2: memref<6xf32, #tpu.memory_space<smem>>, %arg3: memref<1xf32, #tpu.memory_space<smem>>) -> (i32, i32) {
    %c0_i32 = arith.constant 0 : i32
    %c0_i32_0 = arith.constant 0 : i32
    %c0_i32_1 = arith.constant 0 : i32
    return %c0_i32, %c0_i32_0 : i32, i32
  }
  func.func @transform_19(%arg0: i32, %arg1: memref<6xf32, #tpu.memory_space<smem>>, %arg2: memref<6xf32, #tpu.memory_space<smem>>, %arg3: memref<1xf32, #tpu.memory_space<smem>>) -> (i32, i32) {
    %c0_i32 = arith.constant 0 : i32
    %c0_i32_0 = arith.constant 0 : i32
    %c0_i32_1 = arith.constant 0 : i32
    return %c0_i32, %c0_i32_0 : i32, i32
  }
  func.func @transform_20(%arg0: i32, %arg1: memref<6xf32, #tpu.memory_space<smem>>, %arg2: memref<6xf32, #tpu.memory_space<smem>>, %arg3: memref<1xf32, #tpu.memory_space<smem>>) -> (i32, i32) {
    %c0_i32 = arith.constant 0 : i32
    %c0_i32_0 = arith.constant 0 : i32
    %c0_i32_1 = arith.constant 0 : i32
    return %c0_i32, %c0_i32_0 : i32, i32
  }
  func.func @transform_21(%arg0: i32, %arg1: memref<6xf32, #tpu.memory_space<smem>>, %arg2: memref<6xf32, #tpu.memory_space<smem>>, %arg3: memref<1xf32, #tpu.memory_space<smem>>) -> (i32, i32) {
    %c0_i32 = arith.constant 0 : i32
    %c0_i32_0 = arith.constant 0 : i32
    %c0_i32_1 = arith.constant 0 : i32
    return %c0_i32, %c0_i32_0 : i32, i32
  }
  func.func @transform_22(%arg0: i32, %arg1: memref<6xf32, #tpu.memory_space<smem>>, %arg2: memref<6xf32, #tpu.memory_space<smem>>, %arg3: memref<1xf32, #tpu.memory_space<smem>>) -> (i32, i32) {
    %c0_i32 = arith.constant 0 : i32
    %c0_i32_0 = arith.constant 0 : i32
    %c0_i32_1 = arith.constant 0 : i32
    return %c0_i32, %c0_i32_0 : i32, i32
  }
  func.func @transform_23(%arg0: i32, %arg1: memref<6xf32, #tpu.memory_space<smem>>, %arg2: memref<6xf32, #tpu.memory_space<smem>>, %arg3: memref<1xf32, #tpu.memory_space<smem>>) -> (i32, i32) {
    %c0_i32 = arith.constant 0 : i32
    %c0_i32_0 = arith.constant 0 : i32
    %c0_i32_1 = arith.constant 0 : i32
    return %c0_i32, %c0_i32_0 : i32, i32
  }
  func.func @transform_24(%arg0: i32, %arg1: memref<6xf32, #tpu.memory_space<smem>>, %arg2: memref<6xf32, #tpu.memory_space<smem>>, %arg3: memref<1xf32, #tpu.memory_space<smem>>) -> (i32, i32) {
    %c0_i32 = arith.constant 0 : i32
    %c0_i32_0 = arith.constant 0 : i32
    %c0_i32_1 = arith.constant 0 : i32
    return %c0_i32, %c0_i32_0 : i32, i32
  }
  func.func @transform_25(%arg0: i32, %arg1: memref<6xf32, #tpu.memory_space<smem>>, %arg2: memref<6xf32, #tpu.memory_space<smem>>, %arg3: memref<1xf32, #tpu.memory_space<smem>>) -> (i32, i32) {
    %c0_i32 = arith.constant 0 : i32
    %c0_i32_0 = arith.constant 0 : i32
    %c0_i32_1 = arith.constant 0 : i32
    return %c0_i32, %c0_i32_0 : i32, i32
  }
  func.func @transform_26(%arg0: i32, %arg1: memref<6xf32, #tpu.memory_space<smem>>, %arg2: memref<6xf32, #tpu.memory_space<smem>>, %arg3: memref<1xf32, #tpu.memory_space<smem>>) -> (i32, i32) {
    %c0_i32 = arith.constant 0 : i32
    %c0_i32_0 = arith.constant 0 : i32
    %c0_i32_1 = arith.constant 0 : i32
    return %c0_i32, %c0_i32_0 : i32, i32
  }
  func.func @transform_27(%arg0: i32, %arg1: memref<6xf32, #tpu.memory_space<smem>>, %arg2: memref<6xf32, #tpu.memory_space<smem>>, %arg3: memref<1xf32, #tpu.memory_space<smem>>) -> (i32, i32) {
    %c0_i32 = arith.constant 0 : i32
    %c0_i32_0 = arith.constant 0 : i32
    %c0_i32_1 = arith.constant 0 : i32
    return %c0_i32, %c0_i32_0 : i32, i32
  }
  func.func @transform_28(%arg0: i32, %arg1: memref<6xf32, #tpu.memory_space<smem>>, %arg2: memref<6xf32, #tpu.memory_space<smem>>, %arg3: memref<1xf32, #tpu.memory_space<smem>>) -> (i32, i32) {
    %c0_i32 = arith.constant 0 : i32
    %c0_i32_0 = arith.constant 0 : i32
    %c0_i32_1 = arith.constant 0 : i32
    return %c0_i32, %c0_i32_0 : i32, i32
  }
  func.func @transform_29(%arg0: i32, %arg1: memref<6xf32, #tpu.memory_space<smem>>, %arg2: memref<6xf32, #tpu.memory_space<smem>>, %arg3: memref<1xf32, #tpu.memory_space<smem>>) -> (i32, i32) {
    %c0_i32 = arith.constant 0 : i32
    %c0_i32_0 = arith.constant 0 : i32
    %c0_i32_1 = arith.constant 0 : i32
    return %c0_i32, %c0_i32_0 : i32, i32
  }
  func.func @transform_30(%arg0: i32, %arg1: memref<6xf32, #tpu.memory_space<smem>>, %arg2: memref<6xf32, #tpu.memory_space<smem>>, %arg3: memref<1xf32, #tpu.memory_space<smem>>) -> (i32, i32) {
    %c0_i32 = arith.constant 0 : i32
    %c0_i32_0 = arith.constant 0 : i32
    return %arg0, %c0_i32 : i32, i32
  }
}

</mosaic_0001>

<llo_original>
// kernel: nic_forward.1
$region0: #{nic_forward.1}
  #allocation0 [shape = 'u32[]', space=smem, size = 0x4, offset = 0x4, fixed_abs, tag = 'smem constant byte address 0x4 - core index']
  #allocation1 [shape = 'u32[72,128]{1,0:T(1,128)}', space=vmem, size = 0x9000, scoped, tag = 'internal scratch']
  #allocation2 [shape = 's32[1]{0}', space=sflag, size = 0x4, scoped, tag = 'scoped memory for nic_forward.1']
  #allocation3 [shape = 'u8[512]{0}', space=smem, size = 0x200, scoped, tag = 'prefetched SMEM operand 0']
  #allocation4 [shape = 'u8[512]{0}', space=smem, size = 0x200, scoped, tag = 'prefetched SMEM operand 1']
  #allocation5 [shape = 'f32[1]{0:T(128)S(6)}', space=smem, size = 0x200, scoped, tag = 'prefetched SMEM operand 2']
  %s0 = inlined_call_operand.smem [shape: u32[34], index: -1, kind: input, shape index: {}]
  %s1 = sld [smem:[%s0]]
  %s2 = scalar_lea.smem %s0, 1
  %s3 = sld [smem:[%s2]]
  %s4 = scalar_lea.smem %s0, 2
  %s5 = sld [smem:[%s4]]
  %s6 = scalar_lea.smem %s0, 3
  %s7 = sld [smem:[%s6]]
  %s8 = scalar_lea.smem %s0, 4
  %s9 = sld [smem:[%s8]]
  %s10 = scalar_lea.smem %s0, 5
  %s11 = sld [smem:[%s10]]
  %s12 = scalar_lea.smem %s0, 6
  %s13 = sld [smem:[%s12]]
  %s14 = scalar_lea.smem %s0, 7
  %s15 = sld [smem:[%s14]]
  %s16 = scalar_lea.smem %s0, 8
  %s17 = sld [smem:[%s16]]
  %s18 = scalar_lea.smem %s0, 9
  %s19 = sld [smem:[%s18]]
  %s20 = scalar_lea.smem %s0, 10
  %s21 = sld [smem:[%s20]]
  %s22 = scalar_lea.smem %s0, 11
  %s23 = sld [smem:[%s22]]
  %s24 = scalar_lea.smem %s0, 12
  %s25 = sld [smem:[%s24]]
  %s26 = scalar_lea.smem %s0, 13
  %s27 = sld [smem:[%s26]]
  %s28 = scalar_lea.smem %s0, 14
  %s29 = sld [smem:[%s28]]
  %s30 = scalar_lea.smem %s0, 15
  %s31 = sld [smem:[%s30]]
  %s32 = scalar_lea.smem %s0, 16
  %s33 = sld [smem:[%s32]]
  %s34 = scalar_lea.smem %s0, 17
  %s35 = sld [smem:[%s34]]
  %s36 = scalar_lea.smem %s0, 18
  %s37 = sld [smem:[%s36]]
  %s38 = scalar_lea.smem %s0, 19
  %s39 = sld [smem:[%s38]]
  %s40 = scalar_lea.smem %s0, 20
  %s41 = sld [smem:[%s40]]
  %s42 = scalar_lea.smem %s0, 21
  %s43 = sld [smem:[%s42]]
  %s44 = scalar_lea.smem %s0, 22
  %s45 = sld [smem:[%s44]]
  %s46 = scalar_lea.smem %s0, 23
  %s47 = sld [smem:[%s46]]
  %s48 = scalar_lea.smem %s0, 24
  %s49 = sld [smem:[%s48]]
  %s50 = scalar_lea.smem %s0, 25
  %s51 = sld [smem:[%s50]]
  %s52 = scalar_lea.smem %s0, 26
  %s53 = sld [smem:[%s52]]
  %s54 = scalar_lea.smem %s0, 27
  %s55 = sld [smem:[%s54]]
  %s56 = scalar_lea.smem %s0, 28
  %s57 = sld [smem:[%s56]]
  %s58 = scalar_lea.smem %s0, 29
  %s59 = sld [smem:[%s58]]
  %s60 = scalar_lea.smem %s0, 30
  %s61 = sld [smem:[%s60]]
  %s62 = scalar_lea.smem %s0, 31
  %s63 = sld [smem:[%s62]]
  %s64 = scalar_lea.smem %s0, 32
  %s65 = sld [smem:[%s64]]
  %s66 = scalar_lea.smem %s0, 33
  %s67 = sld [smem:[%s66]]
  %s68 = sld [smem:[#allocation0]]
  $region130: #{nic_forward.1} parent=0
    _
  %s70 = ssub.s32 1, %s68
  %s71 = scalar_select 0, %s70, %s68
  %s73 = sshll.u32 %s1, 4
  %s74 = int_to_ptr.vmem [resolvable:$true] %s73
  %76 = dma.vmem_to_smem %s74, 16, [#allocation3], [#allocation2]
  %s78 = sshll.u32 %s3, 4
  %s79 = int_to_ptr.vmem [resolvable:$true] %s78
  %81 = dma.vmem_to_smem %s79, 16, [#allocation4], [#allocation2]
  %82 = sst [smem:[#allocation5]] %s5
  %84 = dma.done [#allocation2], 32
  %85 = sfence
  // Predicated region
  $region2: #{nic_forward.1} parent=0 // pred_check
    _
  $region3: #{nic_forward.1} parent=0 // pred_check_branch
    %87 = sbr.rel (0) target = $region5
  $region4: #{nic_forward.1} parent=0 // pred_region
    _
  $region5: #{nic_forward.1} parent=0 // pred_fallthru
    _
  // Predicated region
  $region6: #{nic_forward.1} parent=0 // pred_check
    _
  $region7: #{nic_forward.1} parent=0 // pred_check_branch
    %89 = sbr.rel (0) target = $region9
  $region8: #{nic_forward.1} parent=0 // pred_region
    _
  $region9: #{nic_forward.1} parent=0 // pred_fallthru
    _
  // Predicated region
  $region10: #{nic_forward.1} parent=0 // pred_check
    _
  $region11: #{nic_forward.1} parent=0 // pred_check_branch
    %91 = sbr.rel (0) target = $region13
  $region12: #{nic_forward.1} parent=0 // pred_region
    _
  $region13: #{nic_forward.1} parent=0 // pred_fallthru
    _
  // Predicated region
  $region14: #{nic_forward.1} parent=0 // pred_check
    _
  $region15: #{nic_forward.1} parent=0 // pred_check_branch
    %93 = sbr.rel (0) target = $region17
  $region16: #{nic_forward.1} parent=0 // pred_region
    _
  $region17: #{nic_forward.1} parent=0 // pred_fallthru
    _
  // Predicated region
  $region18: #{nic_forward.1} parent=0 // pred_check
    _
  $region19: #{nic_forward.1} parent=0 // pred_check_branch
    %95 = sbr.rel (0) target = $region21
  $region20: #{nic_forward.1} parent=0 // pred_region
    _
  $region21: #{nic_forward.1} parent=0 // pred_fallthru
    _
  // Predicated region
  $region22: #{nic_forward.1} parent=0 // pred_check
    _
  $region23: #{nic_forward.1} parent=0 // pred_check_branch
    %97 = sbr.rel (0) target = $region25
  $region24: #{nic_forward.1} parent=0 // pred_region
    _
  $region25: #{nic_forward.1} parent=0 // pred_fallthru
    _
  // Predicated region
  $region26: #{nic_forward.1} parent=0 // pred_check
    _
  $region27: #{nic_forward.1} parent=0 // pred_check_branch
    %99 = sbr.rel (0) target = $region29
  $region28: #{nic_forward.1} parent=0 // pred_region
    _
  $region29: #{nic_forward.1} parent=0 // pred_fallthru
    _
  // Predicated region
  $region30: #{nic_forward.1} parent=0 // pred_check
    _
  $region31: #{nic_forward.1} parent=0 // pred_check_branch
    %101 = sbr.rel (0) target = $region33
  $region32: #{nic_forward.1} parent=0 // pred_region
    _
  $region33: #{nic_forward.1} parent=0 // pred_fallthru
    _
  // Predicated region
  $region34: #{nic_forward.1} parent=0 // pred_check
    _
  $region35: #{nic_forward.1} parent=0 // pred_check_branch
    %103 = sbr.rel (0) target = $region37
  $region36: #{nic_forward.1} parent=0 // pred_region
    _
  $region37: #{nic_forward.1} parent=0 // pred_fallthru
    _
  // Predicated region
  $region38: #{nic_forward.1} parent=0 // pred_check
    _
  $region39: #{nic_forward.1} parent=0 // pred_check_branch
    %105 = sbr.rel (0) target = $region41
  $region40: #{nic_forward.1} parent=0 // pred_region
    _
  $region41: #{nic_forward.1} parent=0 // pred_fallthru
    _
  // Predicated region
  $region42: #{nic_forward.1} parent=0 // pred_check
    _
  $region43: #{nic_forward.1} parent=0 // pred_check_branch
    %107 = sbr.rel (0) target = $region45
  $region44: #{nic_forward.1} parent=0 // pred_region
    _
  $region45: #{nic_forward.1} parent=0 // pred_fallthru
    _
  // Predicated region
  $region46: #{nic_forward.1} parent=0 // pred_check
    _
  $region47: #{nic_forward.1} parent=0 // pred_check_branch
    %109 = sbr.rel (0) target = $region49
  $region48: #{nic_forward.1} parent=0 // pred_region
    _
  $region49: #{nic_forward.1} parent=0 // pred_fallthru
    _
  // Predicated region
  $region50: #{nic_forward.1} parent=0 // pred_check
    _
  $region51: #{nic_forward.1} parent=0 // pred_check_branch
    %111 = sbr.rel (0) target = $region53
  $region52: #{nic_forward.1} parent=0 // pred_region
    _
  $region53: #{nic_forward.1} parent=0 // pred_fallthru
    _
  // Predicated region
  $region54: #{nic_forward.1} parent=0 // pred_check
    _
  $region55: #{nic_forward.1} parent=0 // pred_check_branch
    %113 = sbr.rel (0) target = $region57
  $region56: #{nic_forward.1} parent=0 // pred_region
    _
  $region57: #{nic_forward.1} parent=0 // pred_fallthru
    _
  // Predicated region
  $region58: #{nic_forward.1} parent=0 // pred_check
    _
  $region59: #{nic_forward.1} parent=0 // pred_check_branch
    %115 = sbr.rel (0) target = $region61
  $region60: #{nic_forward.1} parent=0 // pred_region
    _
  $region61: #{nic_forward.1} parent=0 // pred_fallthru
    _
  // Predicated region
  $region62: #{nic_forward.1} parent=0 // pred_check
    _
  $region63: #{nic_forward.1} parent=0 // pred_check_branch
    %117 = sbr.rel (0) target = $region65
  $region64: #{nic_forward.1} parent=0 // pred_region
    _
  $region65: #{nic_forward.1} parent=0 // pred_fallthru
    _
  // Predicated region
  $region66: #{nic_forward.1} parent=0 // pred_check
    _
  $region67: #{nic_forward.1} parent=0 // pred_check_branch
    %119 = sbr.rel (0) target = $region69
  $region68: #{nic_forward.1} parent=0 // pred_region
    _
  $region69: #{nic_forward.1} parent=0 // pred_fallthru
    _
  // Predicated region
  $region70: #{nic_forward.1} parent=0 // pred_check
    _
  $region71: #{nic_forward.1} parent=0 // pred_check_branch
    %121 = sbr.rel (0) target = $region73
  $region72: #{nic_forward.1} parent=0 // pred_region
    _
  $region73: #{nic_forward.1} parent=0 // pred_fallthru
    _
  // Predicated region
  $region74: #{nic_forward.1} parent=0 // pred_check
    _
  $region75: #{nic_forward.1} parent=0 // pred_check_branch
    %123 = sbr.rel (0) target = $region77
  $region76: #{nic_forward.1} parent=0 // pred_region
    _
  $region77: #{nic_forward.1} parent=0 // pred_fallthru
    _
  // Predicated region
  $region78: #{nic_forward.1} parent=0 // pred_check
    _
  $region79: #{nic_forward.1} parent=0 // pred_check_branch
    %125 = sbr.rel (0) target = $region81
  $region80: #{nic_forward.1} parent=0 // pred_region
    _
  $region81: #{nic_forward.1} parent=0 // pred_fallthru
    _
  // Predicated region
  $region82: #{nic_forward.1} parent=0 // pred_check
    _
  $region83: #{nic_forward.1} parent=0 // pred_check_branch
    %127 = sbr.rel (0) target = $region85
  $region84: #{nic_forward.1} parent=0 // pred_region
    _
  $region85: #{nic_forward.1} parent=0 // pred_fallthru
    _
  // Predicated region
  $region86: #{nic_forward.1} parent=0 // pred_check
    _
  $region87: #{nic_forward.1} parent=0 // pred_check_branch
    %129 = sbr.rel (0) target = $region89
  $region88: #{nic_forward.1} parent=0 // pred_region
    _
  $region89: #{nic_forward.1} parent=0 // pred_fallthru
    _
  // Predicated region
  $region90: #{nic_forward.1} parent=0 // pred_check
    _
  $region91: #{nic_forward.1} parent=0 // pred_check_branch
    %131 = sbr.rel (0) target = $region93
  $region92: #{nic_forward.1} parent=0 // pred_region
    _
  $region93: #{nic_forward.1} parent=0 // pred_fallthru
    _
  // Predicated region
  $region94: #{nic_forward.1} parent=0 // pred_check
    _
  $region95: #{nic_forward.1} parent=0 // pred_check_branch
    %133 = sbr.rel (0) target = $region97
  $region96: #{nic_forward.1} parent=0 // pred_region
    _
  $region97: #{nic_forward.1} parent=0 // pred_fallthru
    _
  // Predicated region
  $region98: #{nic_forward.1} parent=0 // pred_check
    _
  $region99: #{nic_forward.1} parent=0 // pred_check_branch
    %135 = sbr.rel (0) target = $region101
  $region100: #{nic_forward.1} parent=0 // pred_region
    _
  $region101: #{nic_forward.1} parent=0 // pred_fallthru
    _
  // Predicated region
  $region102: #{nic_forward.1} parent=0 // pred_check
    _
  $region103: #{nic_forward.1} parent=0 // pred_check_branch
    %137 = sbr.rel (0) target = $region105
  $region104: #{nic_forward.1} parent=0 // pred_region
    _
  $region105: #{nic_forward.1} parent=0 // pred_fallthru
    _
  // Predicated region
  $region106: #{nic_forward.1} parent=0 // pred_check
    _
  $region107: #{nic_forward.1} parent=0 // pred_check_branch
    %139 = sbr.rel (0) target = $region109
  $region108: #{nic_forward.1} parent=0 // pred_region
    _
  $region109: #{nic_forward.1} parent=0 // pred_fallthru
    _
  // Predicated region
  $region110: #{nic_forward.1} parent=0 // pred_check
    _
  $region111: #{nic_forward.1} parent=0 // pred_check_branch
    %141 = sbr.rel (0) target = $region113
  $region112: #{nic_forward.1} parent=0 // pred_region
    _
  $region113: #{nic_forward.1} parent=0 // pred_fallthru
    _
  // Predicated region
  $region114: #{nic_forward.1} parent=0 // pred_check
    _
  $region115: #{nic_forward.1} parent=0 // pred_check_branch
    %143 = sbr.rel (0) target = $region117
  $region116: #{nic_forward.1} parent=0 // pred_region
    _
  $region117: #{nic_forward.1} parent=0 // pred_fallthru
    _
  // Predicated region
  $region118: #{nic_forward.1} parent=0 // pred_check
    _
  $region119: #{nic_forward.1} parent=0 // pred_check_branch
    %145 = sbr.rel (0) target = $region121
  $region120: #{nic_forward.1} parent=0 // pred_region
    _
  $region121: #{nic_forward.1} parent=0 // pred_fallthru
    _
  %v146 = vld [vmem:[%s7] sm:$0xff]
  %v147 = vld [vmem:[%s7 + $0x8] sm:$0xff]
  %v148 = vld [vmem:[%s7 + $0x10] sm:$0xff]
  %v149 = vld [vmem:[%s7 + $0x18] sm:$0xff]
  %v150 = vld [vmem:[%s7 + $0x20] sm:$0xff]
  %v151 = vld [vmem:[%s7 + $0x28] sm:$0xff]
  %v152 = vld [vmem:[%s7 + $0x30] sm:$0xff]
  %v153 = vld [vmem:[%s7 + $0x38] sm:$0xff]
  %v154 = vld [vmem:[%s7 + $0x40] sm:$0xff]
  %v155 = vld [vmem:[%s7 + $0x48] sm:$0xff]
  %v156 = vld [vmem:[%s7 + $0x50] sm:$0xff]
  %v157 = vld [vmem:[%s7 + $0x58] sm:$0xff]
  %v158 = vld [vmem:[%s7 + $0x60] sm:$0xff]
  %v159 = vld [vmem:[%s7 + $0x68] sm:$0xff]
  %v160 = vld [vmem:[%s7 + $0x70] sm:$0xff]
  %v161 = vld [vmem:[%s7 + $0x78] sm:$0xff]
  %v162 = vld [vmem:[%s7 + $0x80] sm:$0xff]
  %v163 = vld [vmem:[%s7 + $0x88] sm:$0xff]
  %v164 = vld [vmem:[%s7 + $0x90] sm:$0xff]
  %v165 = vld [vmem:[%s7 + $0x98] sm:$0xff]
  %v166 = vld [vmem:[%s7 + $0xa0] sm:$0xff]
  %v167 = vld [vmem:[%s7 + $0xa8] sm:$0xff]
  %v168 = vld [vmem:[%s7 + $0xb0] sm:$0xff]
  %v169 = vld [vmem:[%s7 + $0xb8] sm:$0xff]
  %v170 = vld [vmem:[%s7 + $0xc0] sm:$0xff]
  %v171 = vld [vmem:[%s7 + $0xc8] sm:$0xff]
  %v172 = vld [vmem:[%s7 + $0xd0] sm:$0xff]
  %v173 = vld [vmem:[%s7 + $0xd8] sm:$0xff]
  %v174 = vld [vmem:[%s7 + $0xe0] sm:$0xff]
  %v175 = vld [vmem:[%s7 + $0xe8] sm:$0xff]
  %v176 = vld [vmem:[%s7 + $0xf0] sm:$0xff]
  %v177 = vld [vmem:[%s7 + $0xf8] sm:$0xff]
  %v178 = vld [vmem:[%s7 + $0x100] sm:$0xff]
  %v179 = vld [vmem:[%s7 + $0x108] sm:$0xff]
  %v180 = vld [vmem:[%s7 + $0x110] sm:$0xff]
  %v181 = vld [vmem:[%s7 + $0x118] sm:$0xff]
  %v182 = vld [vmem:[%s7 + $0x120] sm:$0xff]
  %v183 = vld [vmem:[%s7 + $0x128] sm:$0xff]
  %v184 = vld [vmem:[%s7 + $0x130] sm:$0xff]
  %v185 = vld [vmem:[%s7 + $0x138] sm:$0xff]
  %v186 = vld [vmem:[%s7 + $0x140] sm:$0xff]
  %v187 = vld [vmem:[%s7 + $0x148] sm:$0xff]
  %v188 = vld [vmem:[%s7 + $0x150] sm:$0xff]
  %v189 = vld [vmem:[%s7 + $0x158] sm:$0xff]
  %v190 = vld [vmem:[%s7 + $0x160] sm:$0xff]
  %v191 = vld [vmem:[%s7 + $0x168] sm:$0xff]
  %v192 = vld [vmem:[%s7 + $0x170] sm:$0xff]
  %v193 = vld [vmem:[%s7 + $0x178] sm:$0xff]
  %v194 = vld [vmem:[%s7 + $0x180] sm:$0xff]
  %v195 = vld [vmem:[%s7 + $0x188] sm:$0xff]
  %v196 = vld [vmem:[%s7 + $0x190] sm:$0xff]
  %v197 = vld [vmem:[%s7 + $0x198] sm:$0xff]
  %v198 = vld [vmem:[%s7 + $0x1a0] sm:$0xff]
  %v199 = vld [vmem:[%s7 + $0x1a8] sm:$0xff]
  %v200 = vld [vmem:[%s7 + $0x1b0] sm:$0xff]
  %v201 = vld [vmem:[%s7 + $0x1b8] sm:$0xff]
  %v202 = vld [vmem:[%s7 + $0x1c0] sm:$0xff]
  %v203 = vld [vmem:[%s7 + $0x1c8] sm:$0xff]
  %v204 = vld [vmem:[%s7 + $0x1d0] sm:$0xff]
  %v205 = vld [vmem:[%s7 + $0x1d8] sm:$0xff]
  %v206 = vld [vmem:[%s7 + $0x1e0] sm:$0xff]
  %v207 = vld [vmem:[%s7 + $0x1e8] sm:$0xff]
  %v208 = vld [vmem:[%s7 + $0x1f0] sm:$0xff]
  %v209 = vld [vmem:[%s7 + $0x1f8] sm:$0xff]
  %v210 = vld [vmem:[%s7 + $0x200] sm:$0xff]
  %v211 = vld [vmem:[%s7 + $0x208] sm:$0xff]
  %v212 = vld [vmem:[%s7 + $0x210] sm:$0xff]
  %v213 = vld [vmem:[%s7 + $0x218] sm:$0xff]
  %v214 = vld [vmem:[%s7 + $0x220] sm:$0xff]
  %v215 = vld [vmem:[%s7 + $0x228] sm:$0xff]
  %v216 = vld [vmem:[%s7 + $0x230] sm:$0xff]
  %v217 = vld [vmem:[%s7 + $0x238] sm:$0xff]
  %v218 = vld [vmem:[%s7 + $0x240] sm:$0xff]
  %v219 = vld [vmem:[%s7 + $0x248] sm:$0xff]
  %v220 = vld [vmem:[%s7 + $0x250] sm:$0xff]
  %v221 = vld [vmem:[%s7 + $0x258] sm:$0xff]
  %v222 = vld [vmem:[%s7 + $0x260] sm:$0xff]
  %v223 = vld [vmem:[%s7 + $0x268] sm:$0xff]
  %v224 = vld [vmem:[%s7 + $0x270] sm:$0xff]
  %v225 = vld [vmem:[%s7 + $0x278] sm:$0xff]
  %v226 = vld [vmem:[%s7 + $0x280] sm:$0xff]
  %v227 = vld [vmem:[%s7 + $0x288] sm:$0xff]
  %v228 = vld [vmem:[%s7 + $0x290] sm:$0xff]
  %v229 = vld [vmem:[%s7 + $0x298] sm:$0xff]
  %v230 = vld [vmem:[%s7 + $0x2a0] sm:$0xff]
  %v231 = vld [vmem:[%s7 + $0x2a8] sm:$0xff]
  %v232 = vld [vmem:[%s7 + $0x2b0] sm:$0xff]
  %v233 = vld [vmem:[%s7 + $0x2b8] sm:$0xff]
  %v234 = vld [vmem:[%s7 + $0x2c0] sm:$0xff]
  %v235 = vld [vmem:[%s7 + $0x2c8] sm:$0xff]
  %v236 = vld [vmem:[%s7 + $0x2d0] sm:$0xff]
  %v237 = vld [vmem:[%s7 + $0x2d8] sm:$0xff]
  %v238 = vld [vmem:[%s7 + $0x2e0] sm:$0xff]
  %v239 = vld [vmem:[%s7 + $0x2e8] sm:$0xff]
  %v240 = vld [vmem:[%s7 + $0x2f0] sm:$0xff]
  %v241 = vld [vmem:[%s7 + $0x2f8] sm:$0xff]
  %v242 = vld [vmem:[%s7 + $0x300] sm:$0xff]
  %v243 = vld [vmem:[%s7 + $0x308] sm:$0xff]
  %v244 = vld [vmem:[%s7 + $0x310] sm:$0xff]
  %v245 = vld [vmem:[%s7 + $0x318] sm:$0xff]
  %v246 = vld [vmem:[%s7 + $0x320] sm:$0xff]
  %v247 = vld [vmem:[%s7 + $0x328] sm:$0xff]
  %v248 = vld [vmem:[%s7 + $0x330] sm:$0xff]
  %v249 = vld [vmem:[%s7 + $0x338] sm:$0xff]
  %v250 = vld [vmem:[%s7 + $0x340] sm:$0xff]
  %v251 = vld [vmem:[%s7 + $0x348] sm:$0xff]
  %v252 = vld [vmem:[%s7 + $0x350] sm:$0xff]
  %v253 = vld [vmem:[%s7 + $0x358] sm:$0xff]
  %v254 = vld [vmem:[%s7 + $0x360] sm:$0xff]
  %v255 = vld [vmem:[%s7 + $0x368] sm:$0xff]
  %v256 = vld [vmem:[%s7 + $0x370] sm:$0xff]
  %v257 = vld [vmem:[%s7 + $0x378] sm:$0xff]
  %v258 = vld [vmem:[%s7 + $0x380] sm:$0xff]
  %v259 = vld [vmem:[%s7 + $0x388] sm:$0xff]
  %v260 = vld [vmem:[%s7 + $0x390] sm:$0xff]
  %v261 = vld [vmem:[%s7 + $0x398] sm:$0xff]
  %v262 = vld [vmem:[%s7 + $0x3a0] sm:$0xff]
  %v263 = vld [vmem:[%s7 + $0x3a8] sm:$0xff]
  %v264 = vld [vmem:[%s7 + $0x3b0] sm:$0xff]
  %v265 = vld [vmem:[%s7 + $0x3b8] sm:$0xff]
  %v266 = vld [vmem:[%s7 + $0x3c0] sm:$0xff]
  %v267 = vld [vmem:[%s7 + $0x3c8] sm:$0xff]
  %v268 = vld [vmem:[%s7 + $0x3d0] sm:$0xff]
  %v269 = vld [vmem:[%s7 + $0x3d8] sm:$0xff]
  %v270 = vld [vmem:[%s7 + $0x3e0] sm:$0xff]
  %v271 = vld [vmem:[%s7 + $0x3e8] sm:$0xff]
  %v272 = vld [vmem:[%s7 + $0x3f0] sm:$0xff]
  %v273 = vld [vmem:[%s7 + $0x3f8] sm:$0xff]
  %v274 = vld [vmem:[%s9] sm:$0xf]
  %v275 = vld [vmem:[%s9 + $0x4] sm:$0xf]
  %v276 = vld [vmem:[%s9 + $0x8] sm:$0xf]
  %v277 = vld [vmem:[%s9 + $0xc] sm:$0xf]
  %v278 = vld [vmem:[%s9 + $0x10] sm:$0xf]
  %v279 = vld [vmem:[%s9 + $0x14] sm:$0xf]
  %v280 = vld [vmem:[%s9 + $0x18] sm:$0xf]
  %v281 = vld [vmem:[%s9 + $0x1c] sm:$0xf]
  %v282 = vld [vmem:[%s9 + $0x20] sm:$0xf]
  %v283 = vld [vmem:[%s9 + $0x24] sm:$0xf]
  %v284 = vld [vmem:[%s9 + $0x28] sm:$0xf]
  %v285 = vld [vmem:[%s9 + $0x2c] sm:$0xf]
  %v286 = vld [vmem:[%s9 + $0x30] sm:$0xf]
  %v287 = vld [vmem:[%s9 + $0x34] sm:$0xf]
  %v288 = vld [vmem:[%s9 + $0x38] sm:$0xf]
  %v289 = vld [vmem:[%s9 + $0x3c] sm:$0xf]
  %v290 = vld [vmem:[%s9 + $0x40] sm:$0xf]
  %v291 = vld [vmem:[%s9 + $0x44] sm:$0xf]
  %v292 = vld [vmem:[%s9 + $0x48] sm:$0xf]
  %v293 = vld [vmem:[%s9 + $0x4c] sm:$0xf]
  %v294 = vld [vmem:[%s9 + $0x50] sm:$0xf]
  %v295 = vld [vmem:[%s9 + $0x54] sm:$0xf]
  %v296 = vld [vmem:[%s9 + $0x58] sm:$0xf]
  %v297 = vld [vmem:[%s9 + $0x5c] sm:$0xf]
  %v298 = vld [vmem:[%s9 + $0x60] sm:$0xf]
  %v299 = vld [vmem:[%s9 + $0x64] sm:$0xf]
  %v300 = vld [vmem:[%s9 + $0x68] sm:$0xf]
  %v301 = vld [vmem:[%s9 + $0x6c] sm:$0xf]
  %v302 = vld [vmem:[%s9 + $0x70] sm:$0xf]
  %v303 = vld [vmem:[%s9 + $0x74] sm:$0xf]
  %v304 = vld [vmem:[%s9 + $0x78] sm:$0xf]
  %v305 = vld [vmem:[%s9 + $0x7c] sm:$0xf]
  %v306 = vld [vmem:[%s9 + $0x80] sm:$0xf]
  %v307 = vld [vmem:[%s9 + $0x84] sm:$0xf]
  %v308 = vld [vmem:[%s9 + $0x88] sm:$0xf]
  %v309 = vld [vmem:[%s9 + $0x8c] sm:$0xf]
  %v310 = vld [vmem:[%s9 + $0x90] sm:$0xf]
  %v311 = vld [vmem:[%s9 + $0x94] sm:$0xf]
  %v312 = vld [vmem:[%s9 + $0x98] sm:$0xf]
  %v313 = vld [vmem:[%s9 + $0x9c] sm:$0xf]
  %v314 = vld [vmem:[%s9 + $0xa0] sm:$0xf]
  %v315 = vld [vmem:[%s9 + $0xa4] sm:$0xf]
  %v316 = vld [vmem:[%s9 + $0xa8] sm:$0xf]
  %v317 = vld [vmem:[%s9 + $0xac] sm:$0xf]
  %v318 = vld [vmem:[%s9 + $0xb0] sm:$0xf]
  %v319 = vld [vmem:[%s9 + $0xb4] sm:$0xf]
  %v320 = vld [vmem:[%s9 + $0xb8] sm:$0xf]
  %v321 = vld [vmem:[%s9 + $0xbc] sm:$0xf]
  %v322 = vld [vmem:[%s9 + $0xc0] sm:$0xf]
  %v323 = vld [vmem:[%s9 + $0xc4] sm:$0xf]
  %v324 = vld [vmem:[%s9 + $0xc8] sm:$0xf]
  %v325 = vld [vmem:[%s9 + $0xcc] sm:$0xf]
  %v326 = vld [vmem:[%s9 + $0xd0] sm:$0xf]
  %v327 = vld [vmem:[%s9 + $0xd4] sm:$0xf]
  %v328 = vld [vmem:[%s9 + $0xd8] sm:$0xf]
  %v329 = vld [vmem:[%s9 + $0xdc] sm:$0xf]
  %v330 = vld [vmem:[%s9 + $0xe0] sm:$0xf]
  %v331 = vld [vmem:[%s9 + $0xe4] sm:$0xf]
  %v332 = vld [vmem:[%s9 + $0xe8] sm:$0xf]
  %v333 = vld [vmem:[%s9 + $0xec] sm:$0xf]
  %v334 = vld [vmem:[%s9 + $0xf0] sm:$0xf]
  %v335 = vld [vmem:[%s9 + $0xf4] sm:$0xf]
  %v336 = vld [vmem:[%s9 + $0xf8] sm:$0xf]
  %v337 = vld [vmem:[%s9 + $0xfc] sm:$0xf]
  %v338 = vld [vmem:[%s9 + $0x100] sm:$0xf]
  %v339 = vld [vmem:[%s9 + $0x104] sm:$0xf]
  %v340 = vld [vmem:[%s9 + $0x108] sm:$0xf]
  %v341 = vld [vmem:[%s9 + $0x10c] sm:$0xf]
  %v342 = vld [vmem:[%s9 + $0x110] sm:$0xf]
  %v343 = vld [vmem:[%s9 + $0x114] sm:$0xf]
  %v344 = vld [vmem:[%s9 + $0x118] sm:$0xf]
  %v345 = vld [vmem:[%s9 + $0x11c] sm:$0xf]
  %v346 = vld [vmem:[%s9 + $0x120] sm:$0xf]
  %v347 = vld [vmem:[%s9 + $0x124] sm:$0xf]
  %v348 = vld [vmem:[%s9 + $0x128] sm:$0xf]
  %v349 = vld [vmem:[%s9 + $0x12c] sm:$0xf]
  %v350 = vld [vmem:[%s9 + $0x130] sm:$0xf]
  %v351 = vld [vmem:[%s9 + $0x134] sm:$0xf]
  %v352 = vld [vmem:[%s9 + $0x138] sm:$0xf]
  %v353 = vld [vmem:[%s9 + $0x13c] sm:$0xf]
  %v354 = vld [vmem:[%s9 + $0x140] sm:$0xf]
  %v355 = vld [vmem:[%s9 + $0x144] sm:$0xf]
  %v356 = vld [vmem:[%s9 + $0x148] sm:$0xf]
  %v357 = vld [vmem:[%s9 + $0x14c] sm:$0xf]
  %v358 = vld [vmem:[%s9 + $0x150] sm:$0xf]
  %v359 = vld [vmem:[%s9 + $0x154] sm:$0xf]
  %v360 = vld [vmem:[%s9 + $0x158] sm:$0xf]
  %v361 = vld [vmem:[%s9 + $0x15c] sm:$0xf]
  %v362 = vld [vmem:[%s9 + $0x160] sm:$0xf]
  %v363 = vld [vmem:[%s9 + $0x164] sm:$0xf]
  %v364 = vld [vmem:[%s9 + $0x168] sm:$0xf]
  %v365 = vld [vmem:[%s9 + $0x16c] sm:$0xf]
  %v366 = vld [vmem:[%s9 + $0x170] sm:$0xf]
  %v367 = vld [vmem:[%s9 + $0x174] sm:$0xf]
  %v368 = vld [vmem:[%s9 + $0x178] sm:$0xf]
  %v369 = vld [vmem:[%s9 + $0x17c] sm:$0xf]
  %v370 = vld [vmem:[%s9 + $0x180] sm:$0xf]
  %v371 = vld [vmem:[%s9 + $0x184] sm:$0xf]
  %v372 = vld [vmem:[%s9 + $0x188] sm:$0xf]
  %v373 = vld [vmem:[%s9 + $0x18c] sm:$0xf]
  %v374 = vld [vmem:[%s9 + $0x190] sm:$0xf]
  %v375 = vld [vmem:[%s9 + $0x194] sm:$0xf]
  %v376 = vld [vmem:[%s9 + $0x198] sm:$0xf]
  %v377 = vld [vmem:[%s9 + $0x19c] sm:$0xf]
  %v378 = vld [vmem:[%s9 + $0x1a0] sm:$0xf]
  %v379 = vld [vmem:[%s9 + $0x1a4] sm:$0xf]
  %v380 = vld [vmem:[%s9 + $0x1a8] sm:$0xf]
  %v381 = vld [vmem:[%s9 + $0x1ac] sm:$0xf]
  %v382 = vld [vmem:[%s9 + $0x1b0] sm:$0xf]
  %v383 = vld [vmem:[%s9 + $0x1b4] sm:$0xf]
  %v384 = vld [vmem:[%s9 + $0x1b8] sm:$0xf]
  %v385 = vld [vmem:[%s9 + $0x1bc] sm:$0xf]
  %v386 = vld [vmem:[%s9 + $0x1c0] sm:$0xf]
  %v387 = vld [vmem:[%s9 + $0x1c4] sm:$0xf]
  %v388 = vld [vmem:[%s9 + $0x1c8] sm:$0xf]
  %v389 = vld [vmem:[%s9 + $0x1cc] sm:$0xf]
  %v390 = vld [vmem:[%s9 + $0x1d0] sm:$0xf]
  %v391 = vld [vmem:[%s9 + $0x1d4] sm:$0xf]
  %v392 = vld [vmem:[%s9 + $0x1d8] sm:$0xf]
  %v393 = vld [vmem:[%s9 + $0x1dc] sm:$0xf]
  %v394 = vld [vmem:[%s9 + $0x1e0] sm:$0xf]
  %v395 = vld [vmem:[%s9 + $0x1e4] sm:$0xf]
  %v396 = vld [vmem:[%s9 + $0x1e8] sm:$0xf]
  %v397 = vld [vmem:[%s9 + $0x1ec] sm:$0xf]
  %v398 = vld [vmem:[%s9 + $0x1f0] sm:$0xf]
  %v399 = vld [vmem:[%s9 + $0x1f4] sm:$0xf]
  %v400 = vld [vmem:[%s9 + $0x1f8] sm:$0xf]
  %v401 = vld [vmem:[%s9 + $0x1fc] sm:$0xf]
  %v530 = vunpack.c.l.b16 %v146
  %v531 = vunpack.c.h.b16 %v146
  %v532 = vunpack.c.l.b16 %v147
  %v533 = vunpack.c.h.b16 %v147
  %v534 = vunpack.c.l.b16 %v148
  %v535 = vunpack.c.h.b16 %v148
  %v536 = vunpack.c.l.b16 %v149
  %v537 = vunpack.c.h.b16 %v149
  %v538 = vunpack.c.l.b16 %v150
  %v539 = vunpack.c.h.b16 %v150
  %v540 = vunpack.c.l.b16 %v151
  %v541 = vunpack.c.h.b16 %v151
  %v542 = vunpack.c.l.b16 %v152
  %v543 = vunpack.c.h.b16 %v152
  %v544 = vunpack.c.l.b16 %v153
  %v545 = vunpack.c.h.b16 %v153
  %v546 = vunpack.c.l.b16 %v154
  %v547 = vunpack.c.h.b16 %v154
  %v548 = vunpack.c.l.b16 %v155
  %v549 = vunpack.c.h.b16 %v155
  %v550 = vunpack.c.l.b16 %v156
  %v551 = vunpack.c.h.b16 %v156
  %v552 = vunpack.c.l.b16 %v157
  %v553 = vunpack.c.h.b16 %v157
  %v554 = vunpack.c.l.b16 %v158
  %v555 = vunpack.c.h.b16 %v158
  %v556 = vunpack.c.l.b16 %v159
  %v557 = vunpack.c.h.b16 %v159
  %v558 = vunpack.c.l.b16 %v160
  %v559 = vunpack.c.h.b16 %v160
  %v560 = vunpack.c.l.b16 %v161
  %v561 = vunpack.c.h.b16 %v161
  %v562 = vunpack.c.l.b16 %v162
  %v563 = vunpack.c.h.b16 %v162
  %v564 = vunpack.c.l.b16 %v163
  %v565 = vunpack.c.h.b16 %v163
  %v566 = vunpack.c.l.b16 %v164
  %v567 = vunpack.c.h.b16 %v164
  %v568 = vunpack.c.l.b16 %v165
  %v569 = vunpack.c.h.b16 %v165
  %v570 = vunpack.c.l.b16 %v166
  %v571 = vunpack.c.h.b16 %v166
  %v572 = vunpack.c.l.b16 %v167
  %v573 = vunpack.c.h.b16 %v167
  %v574 = vunpack.c.l.b16 %v168
  %v575 = vunpack.c.h.b16 %v168
  %v576 = vunpack.c.l.b16 %v169
  %v577 = vunpack.c.h.b16 %v169
  %v578 = vunpack.c.l.b16 %v170
  %v579 = vunpack.c.h.b16 %v170
  %v580 = vunpack.c.l.b16 %v171
  %v581 = vunpack.c.h.b16 %v171
  %v582 = vunpack.c.l.b16 %v172
  %v583 = vunpack.c.h.b16 %v172
  %v584 = vunpack.c.l.b16 %v173
  %v585 = vunpack.c.h.b16 %v173
  %v586 = vunpack.c.l.b16 %v174
  %v587 = vunpack.c.h.b16 %v174
  %v588 = vunpack.c.l.b16 %v175
  %v589 = vunpack.c.h.b16 %v175
  %v590 = vunpack.c.l.b16 %v176
  %v591 = vunpack.c.h.b16 %v176
  %v592 = vunpack.c.l.b16 %v177
  %v593 = vunpack.c.h.b16 %v177
  %v594 = vunpack.c.l.b16 %v178
  %v595 = vunpack.c.h.b16 %v178
  %v596 = vunpack.c.l.b16 %v179
  %v597 = vunpack.c.h.b16 %v179
  %v598 = vunpack.c.l.b16 %v180
  %v599 = vunpack.c.h.b16 %v180
  %v600 = vunpack.c.l.b16 %v181
  %v601 = vunpack.c.h.b16 %v181
  %v602 = vunpack.c.l.b16 %v182
  %v603 = vunpack.c.h.b16 %v182
  %v604 = vunpack.c.l.b16 %v183
  %v605 = vunpack.c.h.b16 %v183
  %v606 = vunpack.c.l.b16 %v184
  %v607 = vunpack.c.h.b16 %v184
  %v608 = vunpack.c.l.b16 %v185
  %v609 = vunpack.c.h.b16 %v185
  %v610 = vunpack.c.l.b16 %v186
  %v611 = vunpack.c.h.b16 %v186
  %v612 = vunpack.c.l.b16 %v187
  %v613 = vunpack.c.h.b16 %v187
  %v614 = vunpack.c.l.b16 %v188
  %v615 = vunpack.c.h.b16 %v188
  %v616 = vunpack.c.l.b16 %v189
  %v617 = vunpack.c.h.b16 %v189
  %v618 = vunpack.c.l.b16 %v190
  %v619 = vunpack.c.h.b16 %v190
  %v620 = vunpack.c.l.b16 %v191
  %v621 = vunpack.c.h.b16 %v191
  %v622 = vunpack.c.l.b16 %v192
  %v623 = vunpack.c.h.b16 %v192
  %v624 = vunpack.c.l.b16 %v193
  %v625 = vunpack.c.h.b16 %v193
  %v626 = vunpack.c.l.b16 %v194
  %v627 = vunpack.c.h.b16 %v194
  %v628 = vunpack.c.l.b16 %v195
  %v629 = vunpack.c.h.b16 %v195
  %v630 = vunpack.c.l.b16 %v196
  %v631 = vunpack.c.h.b16 %v196
  %v632 = vunpack.c.l.b16 %v197
  %v633 = vunpack.c.h.b16 %v197
  %v634 = vunpack.c.l.b16 %v198
  %v635 = vunpack.c.h.b16 %v198
  %v636 = vunpack.c.l.b16 %v199
  %v637 = vunpack.c.h.b16 %v199
  %v638 = vunpack.c.l.b16 %v200
  %v639 = vunpack.c.h.b16 %v200
  %v640 = vunpack.c.l.b16 %v201
  %v641 = vunpack.c.h.b16 %v201
  %v642 = vunpack.c.l.b16 %v202
  %v643 = vunpack.c.h.b16 %v202
  %v644 = vunpack.c.l.b16 %v203
  %v645 = vunpack.c.h.b16 %v203
  %v646 = vunpack.c.l.b16 %v204
  %v647 = vunpack.c.h.b16 %v204
  %v648 = vunpack.c.l.b16 %v205
  %v649 = vunpack.c.h.b16 %v205
  %v650 = vunpack.c.l.b16 %v206
  %v651 = vunpack.c.h.b16 %v206
  %v652 = vunpack.c.l.b16 %v207
  %v653 = vunpack.c.h.b16 %v207
  %v654 = vunpack.c.l.b16 %v208
  %v655 = vunpack.c.h.b16 %v208
  %v656 = vunpack.c.l.b16 %v209
  %v657 = vunpack.c.h.b16 %v209
  %v658 = vunpack.c.l.b16 %v210
  %v659 = vunpack.c.h.b16 %v210
  %v660 = vunpack.c.l.b16 %v211
  %v661 = vunpack.c.h.b16 %v211
  %v662 = vunpack.c.l.b16 %v212
  %v663 = vunpack.c.h.b16 %v212
  %v664 = vunpack.c.l.b16 %v213
  %v665 = vunpack.c.h.b16 %v213
  %v666 = vunpack.c.l.b16 %v214
  %v667 = vunpack.c.h.b16 %v214
  %v668 = vunpack.c.l.b16 %v215
  %v669 = vunpack.c.h.b16 %v215
  %v670 = vunpack.c.l.b16 %v216
  %v671 = vunpack.c.h.b16 %v216
  %v672 = vunpack.c.l.b16 %v217
  %v673 = vunpack.c.h.b16 %v217
  %v674 = vunpack.c.l.b16 %v218
  %v675 = vunpack.c.h.b16 %v218
  %v676 = vunpack.c.l.b16 %v219
  %v677 = vunpack.c.h.b16 %v219
  %v678 = vunpack.c.l.b16 %v220
  %v679 = vunpack.c.h.b16 %v220
  %v680 = vunpack.c.l.b16 %v221
  %v681 = vunpack.c.h.b16 %v221
  %v682 = vunpack.c.l.b16 %v222
  %v683 = vunpack.c.h.b16 %v222
  %v684 = vunpack.c.l.b16 %v223
  %v685 = vunpack.c.h.b16 %v223
  %v686 = vunpack.c.l.b16 %v224
  %v687 = vunpack.c.h.b16 %v224
  %v688 = vunpack.c.l.b16 %v225
  %v689 = vunpack.c.h.b16 %v225
  %v690 = vunpack.c.l.b16 %v226
  %v691 = vunpack.c.h.b16 %v226
  %v692 = vunpack.c.l.b16 %v227
  %v693 = vunpack.c.h.b16 %v227
  %v694 = vunpack.c.l.b16 %v228
  %v695 = vunpack.c.h.b16 %v228
  %v696 = vunpack.c.l.b16 %v229
  %v697 = vunpack.c.h.b16 %v229
  %v698 = vunpack.c.l.b16 %v230
  %v699 = vunpack.c.h.b16 %v230
  %v700 = vunpack.c.l.b16 %v231
  %v701 = vunpack.c.h.b16 %v231
  %v702 = vunpack.c.l.b16 %v232
  %v703 = vunpack.c.h.b16 %v232
  %v704 = vunpack.c.l.b16 %v233
  %v705 = vunpack.c.h.b16 %v233
  %v706 = vunpack.c.l.b16 %v234
  %v707 = vunpack.c.h.b16 %v234
  %v708 = vunpack.c.l.b16 %v235
  %v709 = vunpack.c.h.b16 %v235
  %v710 = vunpack.c.l.b16 %v236
  %v711 = vunpack.c.h.b16 %v236
  %v712 = vunpack.c.l.b16 %v237
  %v713 = vunpack.c.h.b16 %v237
  %v714 = vunpack.c.l.b16 %v238
  %v715 = vunpack.c.h.b16 %v238
  %v716 = vunpack.c.l.b16 %v239
  %v717 = vunpack.c.h.b16 %v239
  %v718 = vunpack.c.l.b16 %v240
  %v719 = vunpack.c.h.b16 %v240
  %v720 = vunpack.c.l.b16 %v241
  %v721 = vunpack.c.h.b16 %v241
  %v722 = vunpack.c.l.b16 %v242
  %v723 = vunpack.c.h.b16 %v242
  %v724 = vunpack.c.l.b16 %v243
  %v725 = vunpack.c.h.b16 %v243
  %v726 = vunpack.c.l.b16 %v244
  %v727 = vunpack.c.h.b16 %v244
  %v728 = vunpack.c.l.b16 %v245
  %v729 = vunpack.c.h.b16 %v245
  %v730 = vunpack.c.l.b16 %v246
  %v731 = vunpack.c.h.b16 %v246
  %v732 = vunpack.c.l.b16 %v247
  %v733 = vunpack.c.h.b16 %v247
  %v734 = vunpack.c.l.b16 %v248
  %v735 = vunpack.c.h.b16 %v248
  %v736 = vunpack.c.l.b16 %v249
  %v737 = vunpack.c.h.b16 %v249
  %v738 = vunpack.c.l.b16 %v250
  %v739 = vunpack.c.h.b16 %v250
  %v740 = vunpack.c.l.b16 %v251
  %v741 = vunpack.c.h.b16 %v251
  %v742 = vunpack.c.l.b16 %v252
  %v743 = vunpack.c.h.b16 %v252
  %v744 = vunpack.c.l.b16 %v253
  %v745 = vunpack.c.h.b16 %v253
  %v746 = vunpack.c.l.b16 %v254
  %v747 = vunpack.c.h.b16 %v254
  %v748 = vunpack.c.l.b16 %v255
  %v749 = vunpack.c.h.b16 %v255
  %v750 = vunpack.c.l.b16 %v256
  %v751 = vunpack.c.h.b16 %v256
  %v752 = vunpack.c.l.b16 %v257
  %v753 = vunpack.c.h.b16 %v257
  %v754 = vunpack.c.l.b16 %v258
  %v755 = vunpack.c.h.b16 %v258
  %v756 = vunpack.c.l.b16 %v259
  %v757 = vunpack.c.h.b16 %v259
  %v758 = vunpack.c.l.b16 %v260
  %v759 = vunpack.c.h.b16 %v260
  %v760 = vunpack.c.l.b16 %v261
  %v761 = vunpack.c.h.b16 %v261
  %v762 = vunpack.c.l.b16 %v262
  %v763 = vunpack.c.h.b16 %v262
  %v764 = vunpack.c.l.b16 %v263
  %v765 = vunpack.c.h.b16 %v263
  %v766 = vunpack.c.l.b16 %v264
  %v767 = vunpack.c.h.b16 %v264
  %v768 = vunpack.c.l.b16 %v265
  %v769 = vunpack.c.h.b16 %v265
  %v770 = vunpack.c.l.b16 %v266
  %v771 = vunpack.c.h.b16 %v266
  %v772 = vunpack.c.l.b16 %v267
  %v773 = vunpack.c.h.b16 %v267
  %v774 = vunpack.c.l.b16 %v268
  %v775 = vunpack.c.h.b16 %v268
  %v776 = vunpack.c.l.b16 %v269
  %v777 = vunpack.c.h.b16 %v269
  %v778 = vunpack.c.l.b16 %v270
  %v779 = vunpack.c.h.b16 %v270
  %v780 = vunpack.c.l.b16 %v271
  %v781 = vunpack.c.h.b16 %v271
  %v782 = vunpack.c.l.b16 %v272
  %v783 = vunpack.c.h.b16 %v272
  %v784 = vunpack.c.l.b16 %v273
  %v785 = vunpack.c.h.b16 %v273
  %v786 = vpack.c.b16 %v538, %v530
  %v787 = vpack.c.b16 %v539, %v531
  %v788 = vpack.c.b16 %v540, %v532
  %v789 = vpack.c.b16 %v541, %v533
  %v790 = vpack.c.b16 %v542, %v534
  %v791 = vpack.c.b16 %v543, %v535
  %v792 = vpack.c.b16 %v544, %v536
  %v793 = vpack.c.b16 %v545, %v537
  %v794 = vpack.c.b16 %v554, %v546
  %v795 = vpack.c.b16 %v555, %v547
  %v796 = vpack.c.b16 %v556, %v548
  %v797 = vpack.c.b16 %v557, %v549
  %v798 = vpack.c.b16 %v558, %v550
  %v799 = vpack.c.b16 %v559, %v551
  %v800 = vpack.c.b16 %v560, %v552
  %v801 = vpack.c.b16 %v561, %v553
  %v802 = vpack.c.b16 %v570, %v562
  %v803 = vpack.c.b16 %v571, %v563
  %v804 = vpack.c.b16 %v572, %v564
  %v805 = vpack.c.b16 %v573, %v565
  %v806 = vpack.c.b16 %v574, %v566
  %v807 = vpack.c.b16 %v575, %v567
  %v808 = vpack.c.b16 %v576, %v568
  %v809 = vpack.c.b16 %v577, %v569
  %v810 = vpack.c.b16 %v586, %v578
  %v811 = vpack.c.b16 %v587, %v579
  %v812 = vpack.c.b16 %v588, %v580
  %v813 = vpack.c.b16 %v589, %v581
  %v814 = vpack.c.b16 %v590, %v582
  %v815 = vpack.c.b16 %v591, %v583
  %v816 = vpack.c.b16 %v592, %v584
  %v817 = vpack.c.b16 %v593, %v585
  %v818 = vpack.c.b16 %v602, %v594
  %v819 = vpack.c.b16 %v603, %v595
  %v820 = vpack.c.b16 %v604, %v596
  %v821 = vpack.c.b16 %v605, %v597
  %v822 = vpack.c.b16 %v606, %v598
  %v823 = vpack.c.b16 %v607, %v599
  %v824 = vpack.c.b16 %v608, %v600
  %v825 = vpack.c.b16 %v609, %v601
  %v826 = vpack.c.b16 %v618, %v610
  %v827 = vpack.c.b16 %v619, %v611
  %v828 = vpack.c.b16 %v620, %v612
  %v829 = vpack.c.b16 %v621, %v613
  %v830 = vpack.c.b16 %v622, %v614
  %v831 = vpack.c.b16 %v623, %v615
  %v832 = vpack.c.b16 %v624, %v616
  %v833 = vpack.c.b16 %v625, %v617
  %v834 = vpack.c.b16 %v634, %v626
  %v835 = vpack.c.b16 %v635, %v627
  %v836 = vpack.c.b16 %v636, %v628
  %v837 = vpack.c.b16 %v637, %v629
  %v838 = vpack.c.b16 %v638, %v630
  %v839 = vpack.c.b16 %v639, %v631
  %v840 = vpack.c.b16 %v640, %v632
  %v841 = vpack.c.b16 %v641, %v633
  %v842 = vpack.c.b16 %v650, %v642
  %v843 = vpack.c.b16 %v651, %v643
  %v844 = vpack.c.b16 %v652, %v644
  %v845 = vpack.c.b16 %v653, %v645
  %v846 = vpack.c.b16 %v654, %v646
  %v847 = vpack.c.b16 %v655, %v647
  %v848 = vpack.c.b16 %v656, %v648
  %v849 = vpack.c.b16 %v657, %v649
  %v850 = vpack.c.b16 %v666, %v658
  %v851 = vpack.c.b16 %v667, %v659
  %v852 = vpack.c.b16 %v668, %v660
  %v853 = vpack.c.b16 %v669, %v661
  %v854 = vpack.c.b16 %v670, %v662
  %v855 = vpack.c.b16 %v671, %v663
  %v856 = vpack.c.b16 %v672, %v664
  %v857 = vpack.c.b16 %v673, %v665
  %v858 = vpack.c.b16 %v682, %v674
  %v859 = vpack.c.b16 %v683, %v675
  %v860 = vpack.c.b16 %v684, %v676
  %v861 = vpack.c.b16 %v685, %v677
  %v862 = vpack.c.b16 %v686, %v678
  %v863 = vpack.c.b16 %v687, %v679
  %v864 = vpack.c.b16 %v688, %v680
  %v865 = vpack.c.b16 %v689, %v681
  %v866 = vpack.c.b16 %v698, %v690
  %v867 = vpack.c.b16 %v699, %v691
  %v868 = vpack.c.b16 %v700, %v692
  %v869 = vpack.c.b16 %v701, %v693
  %v870 = vpack.c.b16 %v702, %v694
  %v871 = vpack.c.b16 %v703, %v695
  %v872 = vpack.c.b16 %v704, %v696
  %v873 = vpack.c.b16 %v705, %v697
  %v874 = vpack.c.b16 %v714, %v706
  %v875 = vpack.c.b16 %v715, %v707
  %v876 = vpack.c.b16 %v716, %v708
  %v877 = vpack.c.b16 %v717, %v709
  %v878 = vpack.c.b16 %v718, %v710
  %v879 = vpack.c.b16 %v719, %v711
  %v880 = vpack.c.b16 %v720, %v712
  %v881 = vpack.c.b16 %v721, %v713
  %v882 = vpack.c.b16 %v730, %v722
  %v883 = vpack.c.b16 %v731, %v723
  %v884 = vpack.c.b16 %v732, %v724
  %v885 = vpack.c.b16 %v733, %v725
  %v886 = vpack.c.b16 %v734, %v726
  %v887 = vpack.c.b16 %v735, %v727
  %v888 = vpack.c.b16 %v736, %v728
  %v889 = vpack.c.b16 %v737, %v729
  %v890 = vpack.c.b16 %v746, %v738
  %v891 = vpack.c.b16 %v747, %v739
  %v892 = vpack.c.b16 %v748, %v740
  %v893 = vpack.c.b16 %v749, %v741
  %v894 = vpack.c.b16 %v750, %v742
  %v895 = vpack.c.b16 %v751, %v743
  %v896 = vpack.c.b16 %v752, %v744
  %v897 = vpack.c.b16 %v753, %v745
  %v898 = vpack.c.b16 %v762, %v754
  %v899 = vpack.c.b16 %v763, %v755
  %v900 = vpack.c.b16 %v764, %v756
  %v901 = vpack.c.b16 %v765, %v757
  %v902 = vpack.c.b16 %v766, %v758
  %v903 = vpack.c.b16 %v767, %v759
  %v904 = vpack.c.b16 %v768, %v760
  %v905 = vpack.c.b16 %v769, %v761
  %v906 = vpack.c.b16 %v778, %v770
  %v907 = vpack.c.b16 %v779, %v771
  %v908 = vpack.c.b16 %v780, %v772
  %v909 = vpack.c.b16 %v781, %v773
  %v910 = vpack.c.b16 %v782, %v774
  %v911 = vpack.c.b16 %v783, %v775
  %v912 = vpack.c.b16 %v784, %v776
  %v913 = vpack.c.b16 %v785, %v777
  %v1170 = vunpack.c.l.b16 %v274
  %v1171 = vunpack.c.l.b16 %v275
  %v1172 = vunpack.c.l.b16 %v276
  %v1173 = vunpack.c.l.b16 %v277
  %v1174 = vunpack.c.l.b16 %v278
  %v1175 = vunpack.c.l.b16 %v279
  %v1176 = vunpack.c.l.b16 %v280
  %v1177 = vunpack.c.l.b16 %v281
  %v1178 = vunpack.c.l.b16 %v282
  %v1179 = vunpack.c.l.b16 %v283
  %v1180 = vunpack.c.l.b16 %v284
  %v1181 = vunpack.c.l.b16 %v285
  %v1182 = vunpack.c.l.b16 %v286
  %v1183 = vunpack.c.l.b16 %v287
  %v1184 = vunpack.c.l.b16 %v288
  %v1185 = vunpack.c.l.b16 %v289
  %v1186 = vunpack.c.l.b16 %v290
  %v1187 = vunpack.c.l.b16 %v291
  %v1188 = vunpack.c.l.b16 %v292
  %v1189 = vunpack.c.l.b16 %v293
  %v1190 = vunpack.c.l.b16 %v294
  %v1191 = vunpack.c.l.b16 %v295
  %v1192 = vunpack.c.l.b16 %v296
  %v1193 = vunpack.c.l.b16 %v297
  %v1194 = vunpack.c.l.b16 %v298
  %v1195 = vunpack.c.l.b16 %v299
  %v1196 = vunpack.c.l.b16 %v300
  %v1197 = vunpack.c.l.b16 %v301
  %v1198 = vunpack.c.l.b16 %v302
  %v1199 = vunpack.c.l.b16 %v303
  %v1200 = vunpack.c.l.b16 %v304
  %v1201 = vunpack.c.l.b16 %v305
  %v1202 = vunpack.c.l.b16 %v306
  %v1203 = vunpack.c.l.b16 %v307
  %v1204 = vunpack.c.l.b16 %v308
  %v1205 = vunpack.c.l.b16 %v309
  %v1206 = vunpack.c.l.b16 %v310
  %v1207 = vunpack.c.l.b16 %v311
  %v1208 = vunpack.c.l.b16 %v312
  %v1209 = vunpack.c.l.b16 %v313
  %v1210 = vunpack.c.l.b16 %v314
  %v1211 = vunpack.c.l.b16 %v315
  %v1212 = vunpack.c.l.b16 %v316
  %v1213 = vunpack.c.l.b16 %v317
  %v1214 = vunpack.c.l.b16 %v318
  %v1215 = vunpack.c.l.b16 %v319
  %v1216 = vunpack.c.l.b16 %v320
  %v1217 = vunpack.c.l.b16 %v321
  %v1218 = vunpack.c.l.b16 %v322
  %v1219 = vunpack.c.l.b16 %v323
  %v1220 = vunpack.c.l.b16 %v324
  %v1221 = vunpack.c.l.b16 %v325
  %v1222 = vunpack.c.l.b16 %v326
  %v1223 = vunpack.c.l.b16 %v327
  %v1224 = vunpack.c.l.b16 %v328
  %v1225 = vunpack.c.l.b16 %v329
  %v1226 = vunpack.c.l.b16 %v330
  %v1227 = vunpack.c.l.b16 %v331
  %v1228 = vunpack.c.l.b16 %v332
  %v1229 = vunpack.c.l.b16 %v333
  %v1230 = vunpack.c.l.b16 %v334
  %v1231 = vunpack.c.l.b16 %v335
  %v1232 = vunpack.c.l.b16 %v336
  %v1233 = vunpack.c.l.b16 %v337
  %v1234 = vunpack.c.l.b16 %v338
  %v1235 = vunpack.c.l.b16 %v339
  %v1236 = vunpack.c.l.b16 %v340
  %v1237 = vunpack.c.l.b16 %v341
  %v1238 = vunpack.c.l.b16 %v342
  %v1239 = vunpack.c.l.b16 %v343
  %v1240 = vunpack.c.l.b16 %v344
  %v1241 = vunpack.c.l.b16 %v345
  %v1242 = vunpack.c.l.b16 %v346
  %v1243 = vunpack.c.l.b16 %v347
  %v1244 = vunpack.c.l.b16 %v348
  %v1245 = vunpack.c.l.b16 %v349
  %v1246 = vunpack.c.l.b16 %v350
  %v1247 = vunpack.c.l.b16 %v351
  %v1248 = vunpack.c.l.b16 %v352
  %v1249 = vunpack.c.l.b16 %v353
  %v1250 = vunpack.c.l.b16 %v354
  %v1251 = vunpack.c.l.b16 %v355
  %v1252 = vunpack.c.l.b16 %v356
  %v1253 = vunpack.c.l.b16 %v357
  %v1254 = vunpack.c.l.b16 %v358
  %v1255 = vunpack.c.l.b16 %v359
  %v1256 = vunpack.c.l.b16 %v360
  %v1257 = vunpack.c.l.b16 %v361
  %v1258 = vunpack.c.l.b16 %v362
  %v1259 = vunpack.c.l.b16 %v363
  %v1260 = vunpack.c.l.b16 %v364
  %v1261 = vunpack.c.l.b16 %v365
  %v1262 = vunpack.c.l.b16 %v366
  %v1263 = vunpack.c.l.b16 %v367
  %v1264 = vunpack.c.l.b16 %v368
  %v1265 = vunpack.c.l.b16 %v369
  %v1266 = vunpack.c.l.b16 %v370
  %v1267 = vunpack.c.l.b16 %v371
  %v1268 = vunpack.c.l.b16 %v372
  %v1269 = vunpack.c.l.b16 %v373
  %v1270 = vunpack.c.l.b16 %v374
  %v1271 = vunpack.c.l.b16 %v375
  %v1272 = vunpack.c.l.b16 %v376
  %v1273 = vunpack.c.l.b16 %v377
  %v1274 = vunpack.c.l.b16 %v378
  %v1275 = vunpack.c.l.b16 %v379
  %v1276 = vunpack.c.l.b16 %v380
  %v1277 = vunpack.c.l.b16 %v381
  %v1278 = vunpack.c.l.b16 %v382
  %v1279 = vunpack.c.l.b16 %v383
  %v1280 = vunpack.c.l.b16 %v384
  %v1281 = vunpack.c.l.b16 %v385
  %v1282 = vunpack.c.l.b16 %v386
  %v1283 = vunpack.c.l.b16 %v387
  %v1284 = vunpack.c.l.b16 %v388
  %v1285 = vunpack.c.l.b16 %v389
  %v1286 = vunpack.c.l.b16 %v390
  %v1287 = vunpack.c.l.b16 %v391
  %v1288 = vunpack.c.l.b16 %v392
  %v1289 = vunpack.c.l.b16 %v393
  %v1290 = vunpack.c.l.b16 %v394
  %v1291 = vunpack.c.l.b16 %v395
  %v1292 = vunpack.c.l.b16 %v396
  %v1293 = vunpack.c.l.b16 %v397
  %v1294 = vunpack.c.l.b16 %v398
  %v1295 = vunpack.c.l.b16 %v399
  %v1296 = vunpack.c.l.b16 %v400
  %v1297 = vunpack.c.l.b16 %v401
  %v1298 = vpack.c.b16 %v1171, %v1170
  %v1299 = vpack.c.b16 %v1173, %v1172
  %v1300 = vpack.c.b16 %v1175, %v1174
  %v1301 = vpack.c.b16 %v1177, %v1176
  %v1302 = vpack.c.b16 %v1179, %v1178
  %v1303 = vpack.c.b16 %v1181, %v1180
  %v1304 = vpack.c.b16 %v1183, %v1182
  %v1305 = vpack.c.b16 %v1185, %v1184
  %v1306 = vpack.c.b16 %v1187, %v1186
  %v1307 = vpack.c.b16 %v1189, %v1188
  %v1308 = vpack.c.b16 %v1191, %v1190
  %v1309 = vpack.c.b16 %v1193, %v1192
  %v1310 = vpack.c.b16 %v1195, %v1194
  %v1311 = vpack.c.b16 %v1197, %v1196
  %v1312 = vpack.c.b16 %v1199, %v1198
  %v1313 = vpack.c.b16 %v1201, %v1200
  %v1314 = vpack.c.b16 %v1203, %v1202
  %v1315 = vpack.c.b16 %v1205, %v1204
  %v1316 = vpack.c.b16 %v1207, %v1206
  %v1317 = vpack.c.b16 %v1209, %v1208
  %v1318 = vpack.c.b16 %v1211, %v1210
  %v1319 = vpack.c.b16 %v1213, %v1212
  %v1320 = vpack.c.b16 %v1215, %v1214
  %v1321 = vpack.c.b16 %v1217, %v1216
  %v1322 = vpack.c.b16 %v1219, %v1218
  %v1323 = vpack.c.b16 %v1221, %v1220
  %v1324 = vpack.c.b16 %v1223, %v1222
  %v1325 = vpack.c.b16 %v1225, %v1224
  %v1326 = vpack.c.b16 %v1227, %v1226
  %v1327 = vpack.c.b16 %v1229, %v1228
  %v1328 = vpack.c.b16 %v1231, %v1230
  %v1329 = vpack.c.b16 %v1233, %v1232
  %v1330 = vpack.c.b16 %v1235, %v1234
  %v1331 = vpack.c.b16 %v1237, %v1236
  %v1332 = vpack.c.b16 %v1239, %v1238
  %v1333 = vpack.c.b16 %v1241, %v1240
  %v1334 = vpack.c.b16 %v1243, %v1242
  %v1335 = vpack.c.b16 %v1245, %v1244
  %v1336 = vpack.c.b16 %v1247, %v1246
  %v1337 = vpack.c.b16 %v1249, %v1248
  %v1338 = vpack.c.b16 %v1251, %v1250
  %v1339 = vpack.c.b16 %v1253, %v1252
  %v1340 = vpack.c.b16 %v1255, %v1254
  %v1341 = vpack.c.b16 %v1257, %v1256
  %v1342 = vpack.c.b16 %v1259, %v1258
  %v1343 = vpack.c.b16 %v1261, %v1260
  %v1344 = vpack.c.b16 %v1263, %v1262
  %v1345 = vpack.c.b16 %v1265, %v1264
  %v1346 = vpack.c.b16 %v1267, %v1266
  %v1347 = vpack.c.b16 %v1269, %v1268
  %v1348 = vpack.c.b16 %v1271, %v1270
  %v1349 = vpack.c.b16 %v1273, %v1272
  %v1350 = vpack.c.b16 %v1275, %v1274
  %v1351 = vpack.c.b16 %v1277, %v1276
  %v1352 = vpack.c.b16 %v1279, %v1278
  %v1353 = vpack.c.b16 %v1281, %v1280
  %v1354 = vpack.c.b16 %v1283, %v1282
  %v1355 = vpack.c.b16 %v1285, %v1284
  %v1356 = vpack.c.b16 %v1287, %v1286
  %v1357 = vpack.c.b16 %v1289, %v1288
  %v1358 = vpack.c.b16 %v1291, %v1290
  %v1359 = vpack.c.b16 %v1293, %v1292
  %v1360 = vpack.c.b16 %v1295, %v1294
  %v1361 = vpack.c.b16 %v1297, %v1296
  %1426 = vmatpush.bf16.msra.mxu0 %v1305
  %1427 = vmatpush.bf16.msra.mxu0 %v1304
  %1428 = vmatpush.bf16.msra.mxu0 %v1303
  %1429 = vmatpush.bf16.msra.mxu0 %v1302
  %1430 = vmatpush.bf16.msra.mxu0 %v1301
  %1431 = vmatpush.bf16.msra.mxu0 %v1300
  %1432 = vmatpush.bf16.msra.mxu0 %v1299
  %1433 = vmatpush.bf16.msra.mxu0 %v1298
  %1434 = vmatmul.bf16.gmra.mxu0 %v786
  %v1435 = vpop.f32.mrf.mxu0
  %v1436 = vadd.f32 0.0, %v1435
  %v1437 = vpop.f32.mrf.mxu0
  %v1438 = vadd.f32 0.0, %v1437
  %1439 = vmatmul.bf16.gmra.mxu0 %v794
  %v1440 = vpop.f32.mrf.mxu0
  %v1441 = vadd.f32 0.0, %v1440
  %v1442 = vpop.f32.mrf.mxu0
  %v1443 = vadd.f32 0.0, %v1442
  %1444 = vmatmul.bf16.gmra.mxu0 %v802
  %v1445 = vpop.f32.mrf.mxu0
  %v1446 = vadd.f32 0.0, %v1445
  %v1447 = vpop.f32.mrf.mxu0
  %v1448 = vadd.f32 0.0, %v1447
  %1449 = vmatmul.bf16.gmra.mxu0 %v810
  %v1450 = vpop.f32.mrf.mxu0
  %v1451 = vadd.f32 0.0, %v1450
  %v1452 = vpop.f32.mrf.mxu0
  %v1453 = vadd.f32 0.0, %v1452
  %1454 = vmatmul.bf16.gmra.mxu0 %v818
  %v1455 = vpop.f32.mrf.mxu0
  %v1456 = vadd.f32 0.0, %v1455
  %v1457 = vpop.f32.mrf.mxu0
  %v1458 = vadd.f32 0.0, %v1457
  %1459 = vmatmul.bf16.gmra.mxu0 %v826
  %v1460 = vpop.f32.mrf.mxu0
  %v1461 = vadd.f32 0.0, %v1460
  %v1462 = vpop.f32.mrf.mxu0
  %v1463 = vadd.f32 0.0, %v1462
  %1464 = vmatmul.bf16.gmra.mxu0 %v834
  %v1465 = vpop.f32.mrf.mxu0
  %v1466 = vadd.f32 0.0, %v1465
  %v1467 = vpop.f32.mrf.mxu0
  %v1468 = vadd.f32 0.0, %v1467
  %1469 = vmatmul.bf16.gmra.mxu0 %v842
  %v1470 = vpop.f32.mrf.mxu0
  %v1471 = vadd.f32 0.0, %v1470
  %v1472 = vpop.f32.mrf.mxu0
  %v1473 = vadd.f32 0.0, %v1472
  %1474 = vmatmul.bf16.gmra.mxu0 %v850
  %v1475 = vpop.f32.mrf.mxu0
  %v1476 = vadd.f32 0.0, %v1475
  %v1477 = vpop.f32.mrf.mxu0
  %v1478 = vadd.f32 0.0, %v1477
  %1479 = vmatmul.bf16.gmra.mxu0 %v858
  %v1480 = vpop.f32.mrf.mxu0
  %v1481 = vadd.f32 0.0, %v1480
  %v1482 = vpop.f32.mrf.mxu0
  %v1483 = vadd.f32 0.0, %v1482
  %1484 = vmatmul.bf16.gmra.mxu0 %v866
  %v1485 = vpop.f32.mrf.mxu0
  %v1486 = vadd.f32 0.0, %v1485
  %v1487 = vpop.f32.mrf.mxu0
  %v1488 = vadd.f32 0.0, %v1487
  %1489 = vmatmul.bf16.gmra.mxu0 %v874
  %v1490 = vpop.f32.mrf.mxu0
  %v1491 = vadd.f32 0.0, %v1490
  %v1492 = vpop.f32.mrf.mxu0
  %v1493 = vadd.f32 0.0, %v1492
  %1494 = vmatmul.bf16.gmra.mxu0 %v882
  %v1495 = vpop.f32.mrf.mxu0
  %v1496 = vadd.f32 0.0, %v1495
  %v1497 = vpop.f32.mrf.mxu0
  %v1498 = vadd.f32 0.0, %v1497
  %1499 = vmatmul.bf16.gmra.mxu0 %v890
  %v1500 = vpop.f32.mrf.mxu0
  %v1501 = vadd.f32 0.0, %v1500
  %v1502 = vpop.f32.mrf.mxu0
  %v1503 = vadd.f32 0.0, %v1502
  %1504 = vmatmul.bf16.gmra.mxu0 %v898
  %v1505 = vpop.f32.mrf.mxu0
  %v1506 = vadd.f32 0.0, %v1505
  %v1507 = vpop.f32.mrf.mxu0
  %v1508 = vadd.f32 0.0, %v1507
  %1509 = vmatmul.bf16.gmra.mxu0 %v906
  %v1510 = vpop.f32.mrf.mxu0
  %v1511 = vadd.f32 0.0, %v1510
  %v1512 = vpop.f32.mrf.mxu0
  %v1513 = vadd.f32 0.0, %v1512
  %1514 = vdwg.mxu0
  %1515 = vmatpush.bf16.msra.mxu0 %v1313
  %1516 = vmatpush.bf16.msra.mxu0 %v1312
  %1517 = vmatpush.bf16.msra.mxu0 %v1311
  %1518 = vmatpush.bf16.msra.mxu0 %v1310
  %1519 = vmatpush.bf16.msra.mxu0 %v1309
  %1520 = vmatpush.bf16.msra.mxu0 %v1308
  %1521 = vmatpush.bf16.msra.mxu0 %v1307
  %1522 = vmatpush.bf16.msra.mxu0 %v1306
  %1523 = vmatmul.bf16.gmra.mxu0 %v787
  %v1524 = vpop.f32.mrf.mxu0
  %v1525 = vadd.f32 %v1436, %v1524
  %v1526 = vpop.f32.mrf.mxu0
  %v1527 = vadd.f32 %v1438, %v1526
  %1528 = vmatmul.bf16.gmra.mxu0 %v795
  %v1529 = vpop.f32.mrf.mxu0
  %v1530 = vadd.f32 %v1441, %v1529
  %v1531 = vpop.f32.mrf.mxu0
  %v1532 = vadd.f32 %v1443, %v1531
  %1533 = vmatmul.bf16.gmra.mxu0 %v803
  %v1534 = vpop.f32.mrf.mxu0
  %v1535 = vadd.f32 %v1446, %v1534
  %v1536 = vpop.f32.mrf.mxu0
  %v1537 = vadd.f32 %v1448, %v1536
  %1538 = vmatmul.bf16.gmra.mxu0 %v811
  %v1539 = vpop.f32.mrf.mxu0
  %v1540 = vadd.f32 %v1451, %v1539
  %v1541 = vpop.f32.mrf.mxu0
  %v1542 = vadd.f32 %v1453, %v1541
  %1543 = vmatmul.bf16.gmra.mxu0 %v819
  %v1544 = vpop.f32.mrf.mxu0
  %v1545 = vadd.f32 %v1456, %v1544
  %v1546 = vpop.f32.mrf.mxu0
  %v1547 = vadd.f32 %v1458, %v1546
  %1548 = vmatmul.bf16.gmra.mxu0 %v827
  %v1549 = vpop.f32.mrf.mxu0
  %v1550 = vadd.f32 %v1461, %v1549
  %v1551 = vpop.f32.mrf.mxu0
  %v1552 = vadd.f32 %v1463, %v1551
  %1553 = vmatmul.bf16.gmra.mxu0 %v835
  %v1554 = vpop.f32.mrf.mxu0
  %v1555 = vadd.f32 %v1466, %v1554
  %v1556 = vpop.f32.mrf.mxu0
  %v1557 = vadd.f32 %v1468, %v1556
  %1558 = vmatmul.bf16.gmra.mxu0 %v843
  %v1559 = vpop.f32.mrf.mxu0
  %v1560 = vadd.f32 %v1471, %v1559
  %v1561 = vpop.f32.mrf.mxu0
  %v1562 = vadd.f32 %v1473, %v1561
  %1563 = vmatmul.bf16.gmra.mxu0 %v851
  %v1564 = vpop.f32.mrf.mxu0
  %v1565 = vadd.f32 %v1476, %v1564
  %v1566 = vpop.f32.mrf.mxu0
  %v1567 = vadd.f32 %v1478, %v1566
  %1568 = vmatmul.bf16.gmra.mxu0 %v859
  %v1569 = vpop.f32.mrf.mxu0
  %v1570 = vadd.f32 %v1481, %v1569
  %v1571 = vpop.f32.mrf.mxu0
  %v1572 = vadd.f32 %v1483, %v1571
  %1573 = vmatmul.bf16.gmra.mxu0 %v867
  %v1574 = vpop.f32.mrf.mxu0
  %v1575 = vadd.f32 %v1486, %v1574
  %v1576 = vpop.f32.mrf.mxu0
  %v1577 = vadd.f32 %v1488, %v1576
  %1578 = vmatmul.bf16.gmra.mxu0 %v875
  %v1579 = vpop.f32.mrf.mxu0
  %v1580 = vadd.f32 %v1491, %v1579
  %v1581 = vpop.f32.mrf.mxu0
  %v1582 = vadd.f32 %v1493, %v1581
  %1583 = vmatmul.bf16.gmra.mxu0 %v883
  %v1584 = vpop.f32.mrf.mxu0
  %v1585 = vadd.f32 %v1496, %v1584
  %v1586 = vpop.f32.mrf.mxu0
  %v1587 = vadd.f32 %v1498, %v1586
  %1588 = vmatmul.bf16.gmra.mxu0 %v891
  %v1589 = vpop.f32.mrf.mxu0
  %v1590 = vadd.f32 %v1501, %v1589
  %v1591 = vpop.f32.mrf.mxu0
  %v1592 = vadd.f32 %v1503, %v1591
  %1593 = vmatmul.bf16.gmra.mxu0 %v899
  %v1594 = vpop.f32.mrf.mxu0
  %v1595 = vadd.f32 %v1506, %v1594
  %v1596 = vpop.f32.mrf.mxu0
  %v1597 = vadd.f32 %v1508, %v1596
  %1598 = vmatmul.bf16.gmra.mxu0 %v907
  %v1599 = vpop.f32.mrf.mxu0
  %v1600 = vadd.f32 %v1511, %v1599
  %v1601 = vpop.f32.mrf.mxu0
  %v1602 = vadd.f32 %v1513, %v1601
  %1603 = vdwg.mxu0
  %1604 = vmatpush.bf16.msra.mxu0 %v1321
  %1605 = vmatpush.bf16.msra.mxu0 %v1320
  %1606 = vmatpush.bf16.msra.mxu0 %v1319
  %1607 = vmatpush.bf16.msra.mxu0 %v1318
  %1608 = vmatpush.bf16.msra.mxu0 %v1317
  %1609 = vmatpush.bf16.msra.mxu0 %v1316
  %1610 = vmatpush.bf16.msra.mxu0 %v1315
  %1611 = vmatpush.bf16.msra.mxu0 %v1314
  %1612 = vmatmul.bf16.gmra.mxu0 %v788
  %v1613 = vpop.f32.mrf.mxu0
  %v1614 = vadd.f32 %v1525, %v1613
  %v1615 = vpop.f32.mrf.mxu0
  %v1616 = vadd.f32 %v1527, %v1615
  %1617 = vmatmul.bf16.gmra.mxu0 %v796
  %v1618 = vpop.f32.mrf.mxu0
  %v1619 = vadd.f32 %v1530, %v1618
  %v1620 = vpop.f32.mrf.mxu0
  %v1621 = vadd.f32 %v1532, %v1620
  %1622 = vmatmul.bf16.gmra.mxu0 %v804
  %v1623 = vpop.f32.mrf.mxu0
  %v1624 = vadd.f32 %v1535, %v1623
  %v1625 = vpop.f32.mrf.mxu0
  %v1626 = vadd.f32 %v1537, %v1625
  %1627 = vmatmul.bf16.gmra.mxu0 %v812
  %v1628 = vpop.f32.mrf.mxu0
  %v1629 = vadd.f32 %v1540, %v1628
  %v1630 = vpop.f32.mrf.mxu0
  %v1631 = vadd.f32 %v1542, %v1630
  %1632 = vmatmul.bf16.gmra.mxu0 %v820
  %v1633 = vpop.f32.mrf.mxu0
  %v1634 = vadd.f32 %v1545, %v1633
  %v1635 = vpop.f32.mrf.mxu0
  %v1636 = vadd.f32 %v1547, %v1635
  %1637 = vmatmul.bf16.gmra.mxu0 %v828
  %v1638 = vpop.f32.mrf.mxu0
  %v1639 = vadd.f32 %v1550, %v1638
  %v1640 = vpop.f32.mrf.mxu0
  %v1641 = vadd.f32 %v1552, %v1640
  %1642 = vmatmul.bf16.gmra.mxu0 %v836
  %v1643 = vpop.f32.mrf.mxu0
  %v1644 = vadd.f32 %v1555, %v1643
  %v1645 = vpop.f32.mrf.mxu0
  %v1646 = vadd.f32 %v1557, %v1645
  %1647 = vmatmul.bf16.gmra.mxu0 %v844
  %v1648 = vpop.f32.mrf.mxu0
  %v1649 = vadd.f32 %v1560, %v1648
  %v1650 = vpop.f32.mrf.mxu0
  %v1651 = vadd.f32 %v1562, %v1650
  %1652 = vmatmul.bf16.gmra.mxu0 %v852
  %v1653 = vpop.f32.mrf.mxu0
  %v1654 = vadd.f32 %v1565, %v1653
  %v1655 = vpop.f32.mrf.mxu0
  %v1656 = vadd.f32 %v1567, %v1655
  %1657 = vmatmul.bf16.gmra.mxu0 %v860
  %v1658 = vpop.f32.mrf.mxu0
  %v1659 = vadd.f32 %v1570, %v1658
  %v1660 = vpop.f32.mrf.mxu0
  %v1661 = vadd.f32 %v1572, %v1660
  %1662 = vmatmul.bf16.gmra.mxu0 %v868
  %v1663 = vpop.f32.mrf.mxu0
  %v1664 = vadd.f32 %v1575, %v1663
  %v1665 = vpop.f32.mrf.mxu0
  %v1666 = vadd.f32 %v1577, %v1665
  %1667 = vmatmul.bf16.gmra.mxu0 %v876
  %v1668 = vpop.f32.mrf.mxu0
  %v1669 = vadd.f32 %v1580, %v1668
  %v1670 = vpop.f32.mrf.mxu0
  %v1671 = vadd.f32 %v1582, %v1670
  %1672 = vmatmul.bf16.gmra.mxu0 %v884
  %v1673 = vpop.f32.mrf.mxu0
  %v1674 = vadd.f32 %v1585, %v1673
  %v1675 = vpop.f32.mrf.mxu0
  %v1676 = vadd.f32 %v1587, %v1675
  %1677 = vmatmul.bf16.gmra.mxu0 %v892
  %v1678 = vpop.f32.mrf.mxu0
  %v1679 = vadd.f32 %v1590, %v1678
  %v1680 = vpop.f32.mrf.mxu0
  %v1681 = vadd.f32 %v1592, %v1680
  %1682 = vmatmul.bf16.gmra.mxu0 %v900
  %v1683 = vpop.f32.mrf.mxu0
  %v1684 = vadd.f32 %v1595, %v1683
  %v1685 = vpop.f32.mrf.mxu0
  %v1686 = vadd.f32 %v1597, %v1685
  %1687 = vmatmul.bf16.gmra.mxu0 %v908
  %v1688 = vpop.f32.mrf.mxu0
  %v1689 = vadd.f32 %v1600, %v1688
  %v1690 = vpop.f32.mrf.mxu0
  %v1691 = vadd.f32 %v1602, %v1690
  %1692 = vdwg.mxu0
  %1693 = vmatpush.bf16.msra.mxu0 %v1329
  %1694 = vmatpush.bf16.msra.mxu0 %v1328
  %1695 = vmatpush.bf16.msra.mxu0 %v1327
  %1696 = vmatpush.bf16.msra.mxu0 %v1326
  %1697 = vmatpush.bf16.msra.mxu0 %v1325
  %1698 = vmatpush.bf16.msra.mxu0 %v1324
  %1699 = vmatpush.bf16.msra.mxu0 %v1323
  %1700 = vmatpush.bf16.msra.mxu0 %v1322
  %1701 = vmatmul.bf16.gmra.mxu0 %v789
  %v1702 = vpop.f32.mrf.mxu0
  %v1703 = vadd.f32 %v1614, %v1702
  %v1704 = vpop.f32.mrf.mxu0
  %v1705 = vadd.f32 %v1616, %v1704
  %1706 = vmatmul.bf16.gmra.mxu0 %v797
  %v1707 = vpop.f32.mrf.mxu0
  %v1708 = vadd.f32 %v1619, %v1707
  %v1709 = vpop.f32.mrf.mxu0
  %v1710 = vadd.f32 %v1621, %v1709
  %1711 = vmatmul.bf16.gmra.mxu0 %v805
  %v1712 = vpop.f32.mrf.mxu0
  %v1713 = vadd.f32 %v1624, %v1712
  %v1714 = vpop.f32.mrf.mxu0
  %v1715 = vadd.f32 %v1626, %v1714
  %1716 = vmatmul.bf16.gmra.mxu0 %v813
  %v1717 = vpop.f32.mrf.mxu0
  %v1718 = vadd.f32 %v1629, %v1717
  %v1719 = vpop.f32.mrf.mxu0
  %v1720 = vadd.f32 %v1631, %v1719
  %1721 = vmatmul.bf16.gmra.mxu0 %v821
  %v1722 = vpop.f32.mrf.mxu0
  %v1723 = vadd.f32 %v1634, %v1722
  %v1724 = vpop.f32.mrf.mxu0
  %v1725 = vadd.f32 %v1636, %v1724
  %1726 = vmatmul.bf16.gmra.mxu0 %v829
  %v1727 = vpop.f32.mrf.mxu0
  %v1728 = vadd.f32 %v1639, %v1727
  %v1729 = vpop.f32.mrf.mxu0
  %v1730 = vadd.f32 %v1641, %v1729
  %1731 = vmatmul.bf16.gmra.mxu0 %v837
  %v1732 = vpop.f32.mrf.mxu0
  %v1733 = vadd.f32 %v1644, %v1732
  %v1734 = vpop.f32.mrf.mxu0
  %v1735 = vadd.f32 %v1646, %v1734
  %1736 = vmatmul.bf16.gmra.mxu0 %v845
  %v1737 = vpop.f32.mrf.mxu0
  %v1738 = vadd.f32 %v1649, %v1737
  %v1739 = vpop.f32.mrf.mxu0
  %v1740 = vadd.f32 %v1651, %v1739
  %1741 = vmatmul.bf16.gmra.mxu0 %v853
  %v1742 = vpop.f32.mrf.mxu0
  %v1743 = vadd.f32 %v1654, %v1742
  %v1744 = vpop.f32.mrf.mxu0
  %v1745 = vadd.f32 %v1656, %v1744
  %1746 = vmatmul.bf16.gmra.mxu0 %v861
  %v1747 = vpop.f32.mrf.mxu0
  %v1748 = vadd.f32 %v1659, %v1747
  %v1749 = vpop.f32.mrf.mxu0
  %v1750 = vadd.f32 %v1661, %v1749
  %1751 = vmatmul.bf16.gmra.mxu0 %v869
  %v1752 = vpop.f32.mrf.mxu0
  %v1753 = vadd.f32 %v1664, %v1752
  %v1754 = vpop.f32.mrf.mxu0
  %v1755 = vadd.f32 %v1666, %v1754
  %1756 = vmatmul.bf16.gmra.mxu0 %v877
  %v1757 = vpop.f32.mrf.mxu0
  %v1758 = vadd.f32 %v1669, %v1757
  %v1759 = vpop.f32.mrf.mxu0
  %v1760 = vadd.f32 %v1671, %v1759
  %1761 = vmatmul.bf16.gmra.mxu0 %v885
  %v1762 = vpop.f32.mrf.mxu0
  %v1763 = vadd.f32 %v1674, %v1762
  %v1764 = vpop.f32.mrf.mxu0
  %v1765 = vadd.f32 %v1676, %v1764
  %1766 = vmatmul.bf16.gmra.mxu0 %v893
  %v1767 = vpop.f32.mrf.mxu0
  %v1768 = vadd.f32 %v1679, %v1767
  %v1769 = vpop.f32.mrf.mxu0
  %v1770 = vadd.f32 %v1681, %v1769
  %1771 = vmatmul.bf16.gmra.mxu0 %v901
  %v1772 = vpop.f32.mrf.mxu0
  %v1773 = vadd.f32 %v1684, %v1772
  %v1774 = vpop.f32.mrf.mxu0
  %v1775 = vadd.f32 %v1686, %v1774
  %1776 = vmatmul.bf16.gmra.mxu0 %v909
  %v1777 = vpop.f32.mrf.mxu0
  %v1778 = vadd.f32 %v1689, %v1777
  %v1779 = vpop.f32.mrf.mxu0
  %v1780 = vadd.f32 %v1691, %v1779
  %1781 = vdwg.mxu0
  %1782 = vmatpush.bf16.msra.mxu0 %v1337
  %1783 = vmatpush.bf16.msra.mxu0 %v1336
  %1784 = vmatpush.bf16.msra.mxu0 %v1335
  %1785 = vmatpush.bf16.msra.mxu0 %v1334
  %1786 = vmatpush.bf16.msra.mxu0 %v1333
  %1787 = vmatpush.bf16.msra.mxu0 %v1332
  %1788 = vmatpush.bf16.msra.mxu0 %v1331
  %1789 = vmatpush.bf16.msra.mxu0 %v1330
  %1790 = vmatmul.bf16.gmra.mxu0 %v790
  %v1791 = vpop.f32.mrf.mxu0
  %v1792 = vadd.f32 %v1703, %v1791
  %v1793 = vpop.f32.mrf.mxu0
  %v1794 = vadd.f32 %v1705, %v1793
  %1795 = vmatmul.bf16.gmra.mxu0 %v798
  %v1796 = vpop.f32.mrf.mxu0
  %v1797 = vadd.f32 %v1708, %v1796
  %v1798 = vpop.f32.mrf.mxu0
  %v1799 = vadd.f32 %v1710, %v1798
  %1800 = vmatmul.bf16.gmra.mxu0 %v806
  %v1801 = vpop.f32.mrf.mxu0
  %v1802 = vadd.f32 %v1713, %v1801
  %v1803 = vpop.f32.mrf.mxu0
  %v1804 = vadd.f32 %v1715, %v1803
  %1805 = vmatmul.bf16.gmra.mxu0 %v814
  %v1806 = vpop.f32.mrf.mxu0
  %v1807 = vadd.f32 %v1718, %v1806
  %v1808 = vpop.f32.mrf.mxu0
  %v1809 = vadd.f32 %v1720, %v1808
  %1810 = vmatmul.bf16.gmra.mxu0 %v822
  %v1811 = vpop.f32.mrf.mxu0
  %v1812 = vadd.f32 %v1723, %v1811
  %v1813 = vpop.f32.mrf.mxu0
  %v1814 = vadd.f32 %v1725, %v1813
  %1815 = vmatmul.bf16.gmra.mxu0 %v830
  %v1816 = vpop.f32.mrf.mxu0
  %v1817 = vadd.f32 %v1728, %v1816
  %v1818 = vpop.f32.mrf.mxu0
  %v1819 = vadd.f32 %v1730, %v1818
  %1820 = vmatmul.bf16.gmra.mxu0 %v838
  %v1821 = vpop.f32.mrf.mxu0
  %v1822 = vadd.f32 %v1733, %v1821
  %v1823 = vpop.f32.mrf.mxu0
  %v1824 = vadd.f32 %v1735, %v1823
  %1825 = vmatmul.bf16.gmra.mxu0 %v846
  %v1826 = vpop.f32.mrf.mxu0
  %v1827 = vadd.f32 %v1738, %v1826
  %v1828 = vpop.f32.mrf.mxu0
  %v1829 = vadd.f32 %v1740, %v1828
  %1830 = vmatmul.bf16.gmra.mxu0 %v854
  %v1831 = vpop.f32.mrf.mxu0
  %v1832 = vadd.f32 %v1743, %v1831
  %v1833 = vpop.f32.mrf.mxu0
  %v1834 = vadd.f32 %v1745, %v1833
  %1835 = vmatmul.bf16.gmra.mxu0 %v862
  %v1836 = vpop.f32.mrf.mxu0
  %v1837 = vadd.f32 %v1748, %v1836
  %v1838 = vpop.f32.mrf.mxu0
  %v1839 = vadd.f32 %v1750, %v1838
  %1840 = vmatmul.bf16.gmra.mxu0 %v870
  %v1841 = vpop.f32.mrf.mxu0
  %v1842 = vadd.f32 %v1753, %v1841
  %v1843 = vpop.f32.mrf.mxu0
  %v1844 = vadd.f32 %v1755, %v1843
  %1845 = vmatmul.bf16.gmra.mxu0 %v878
  %v1846 = vpop.f32.mrf.mxu0
  %v1847 = vadd.f32 %v1758, %v1846
  %v1848 = vpop.f32.mrf.mxu0
  %v1849 = vadd.f32 %v1760, %v1848
  %1850 = vmatmul.bf16.gmra.mxu0 %v886
  %v1851 = vpop.f32.mrf.mxu0
  %v1852 = vadd.f32 %v1763, %v1851
  %v1853 = vpop.f32.mrf.mxu0
  %v1854 = vadd.f32 %v1765, %v1853
  %1855 = vmatmul.bf16.gmra.mxu0 %v894
  %v1856 = vpop.f32.mrf.mxu0
  %v1857 = vadd.f32 %v1768, %v1856
  %v1858 = vpop.f32.mrf.mxu0
  %v1859 = vadd.f32 %v1770, %v1858
  %1860 = vmatmul.bf16.gmra.mxu0 %v902
  %v1861 = vpop.f32.mrf.mxu0
  %v1862 = vadd.f32 %v1773, %v1861
  %v1863 = vpop.f32.mrf.mxu0
  %v1864 = vadd.f32 %v1775, %v1863
  %1865 = vmatmul.bf16.gmra.mxu0 %v910
  %v1866 = vpop.f32.mrf.mxu0
  %v1867 = vadd.f32 %v1778, %v1866
  %v1868 = vpop.f32.mrf.mxu0
  %v1869 = vadd.f32 %v1780, %v1868
  %1870 = vdwg.mxu0
  %1871 = vmatpush.bf16.msra.mxu0 %v1345
  %1872 = vmatpush.bf16.msra.mxu0 %v1344
  %1873 = vmatpush.bf16.msra.mxu0 %v1343
  %1874 = vmatpush.bf16.msra.mxu0 %v1342
  %1875 = vmatpush.bf16.msra.mxu0 %v1341
  %1876 = vmatpush.bf16.msra.mxu0 %v1340
  %1877 = vmatpush.bf16.msra.mxu0 %v1339
  %1878 = vmatpush.bf16.msra.mxu0 %v1338
  %1879 = vmatmul.bf16.gmra.mxu0 %v791
  %v1880 = vpop.f32.mrf.mxu0
  %v1881 = vadd.f32 %v1792, %v1880
  %v1882 = vpop.f32.mrf.mxu0
  %v1883 = vadd.f32 %v1794, %v1882
  %1884 = vmatmul.bf16.gmra.mxu0 %v799
  %v1885 = vpop.f32.mrf.mxu0
  %v1886 = vadd.f32 %v1797, %v1885
  %v1887 = vpop.f32.mrf.mxu0
  %v1888 = vadd.f32 %v1799, %v1887
  %1889 = vmatmul.bf16.gmra.mxu0 %v807
  %v1890 = vpop.f32.mrf.mxu0
  %v1891 = vadd.f32 %v1802, %v1890
  %v1892 = vpop.f32.mrf.mxu0
  %v1893 = vadd.f32 %v1804, %v1892
  %1894 = vmatmul.bf16.gmra.mxu0 %v815
  %v1895 = vpop.f32.mrf.mxu0
  %v1896 = vadd.f32 %v1807, %v1895
  %v1897 = vpop.f32.mrf.mxu0
  %v1898 = vadd.f32 %v1809, %v1897
  %1899 = vmatmul.bf16.gmra.mxu0 %v823
  %v1900 = vpop.f32.mrf.mxu0
  %v1901 = vadd.f32 %v1812, %v1900
  %v1902 = vpop.f32.mrf.mxu0
  %v1903 = vadd.f32 %v1814, %v1902
  %1904 = vmatmul.bf16.gmra.mxu0 %v831
  %v1905 = vpop.f32.mrf.mxu0
  %v1906 = vadd.f32 %v1817, %v1905
  %v1907 = vpop.f32.mrf.mxu0
  %v1908 = vadd.f32 %v1819, %v1907
  %1909 = vmatmul.bf16.gmra.mxu0 %v839
  %v1910 = vpop.f32.mrf.mxu0
  %v1911 = vadd.f32 %v1822, %v1910
  %v1912 = vpop.f32.mrf.mxu0
  %v1913 = vadd.f32 %v1824, %v1912
  %1914 = vmatmul.bf16.gmra.mxu0 %v847
  %v1915 = vpop.f32.mrf.mxu0
  %v1916 = vadd.f32 %v1827, %v1915
  %v1917 = vpop.f32.mrf.mxu0
  %v1918 = vadd.f32 %v1829, %v1917
  %1919 = vmatmul.bf16.gmra.mxu0 %v855
  %v1920 = vpop.f32.mrf.mxu0
  %v1921 = vadd.f32 %v1832, %v1920
  %v1922 = vpop.f32.mrf.mxu0
  %v1923 = vadd.f32 %v1834, %v1922
  %1924 = vmatmul.bf16.gmra.mxu0 %v863
  %v1925 = vpop.f32.mrf.mxu0
  %v1926 = vadd.f32 %v1837, %v1925
  %v1927 = vpop.f32.mrf.mxu0
  %v1928 = vadd.f32 %v1839, %v1927
  %1929 = vmatmul.bf16.gmra.mxu0 %v871
  %v1930 = vpop.f32.mrf.mxu0
  %v1931 = vadd.f32 %v1842, %v1930
  %v1932 = vpop.f32.mrf.mxu0
  %v1933 = vadd.f32 %v1844, %v1932
  %1934 = vmatmul.bf16.gmra.mxu0 %v879
  %v1935 = vpop.f32.mrf.mxu0
  %v1936 = vadd.f32 %v1847, %v1935
  %v1937 = vpop.f32.mrf.mxu0
  %v1938 = vadd.f32 %v1849, %v1937
  %1939 = vmatmul.bf16.gmra.mxu0 %v887
  %v1940 = vpop.f32.mrf.mxu0
  %v1941 = vadd.f32 %v1852, %v1940
  %v1942 = vpop.f32.mrf.mxu0
  %v1943 = vadd.f32 %v1854, %v1942
  %1944 = vmatmul.bf16.gmra.mxu0 %v895
  %v1945 = vpop.f32.mrf.mxu0
  %v1946 = vadd.f32 %v1857, %v1945
  %v1947 = vpop.f32.mrf.mxu0
  %v1948 = vadd.f32 %v1859, %v1947
  %1949 = vmatmul.bf16.gmra.mxu0 %v903
  %v1950 = vpop.f32.mrf.mxu0
  %v1951 = vadd.f32 %v1862, %v1950
  %v1952 = vpop.f32.mrf.mxu0
  %v1953 = vadd.f32 %v1864, %v1952
  %1954 = vmatmul.bf16.gmra.mxu0 %v911
  %v1955 = vpop.f32.mrf.mxu0
  %v1956 = vadd.f32 %v1867, %v1955
  %v1957 = vpop.f32.mrf.mxu0
  %v1958 = vadd.f32 %v1869, %v1957
  %1959 = vdwg.mxu0
  %1960 = vmatpush.bf16.msra.mxu0 %v1353
  %1961 = vmatpush.bf16.msra.mxu0 %v1352
  %1962 = vmatpush.bf16.msra.mxu0 %v1351
  %1963 = vmatpush.bf16.msra.mxu0 %v1350
  %1964 = vmatpush.bf16.msra.mxu0 %v1349
  %1965 = vmatpush.bf16.msra.mxu0 %v1348
  %1966 = vmatpush.bf16.msra.mxu0 %v1347
  %1967 = vmatpush.bf16.msra.mxu0 %v1346
  %1968 = vmatmul.bf16.gmra.mxu0 %v792
  %v1969 = vpop.f32.mrf.mxu0
  %v1970 = vadd.f32 %v1881, %v1969
  %v1971 = vpop.f32.mrf.mxu0
  %v1972 = vadd.f32 %v1883, %v1971
  %1973 = vmatmul.bf16.gmra.mxu0 %v800
  %v1974 = vpop.f32.mrf.mxu0
  %v1975 = vadd.f32 %v1886, %v1974
  %v1976 = vpop.f32.mrf.mxu0
  %v1977 = vadd.f32 %v1888, %v1976
  %1978 = vmatmul.bf16.gmra.mxu0 %v808
  %v1979 = vpop.f32.mrf.mxu0
  %v1980 = vadd.f32 %v1891, %v1979
  %v1981 = vpop.f32.mrf.mxu0
  %v1982 = vadd.f32 %v1893, %v1981
  %1983 = vmatmul.bf16.gmra.mxu0 %v816
  %v1984 = vpop.f32.mrf.mxu0
  %v1985 = vadd.f32 %v1896, %v1984
  %v1986 = vpop.f32.mrf.mxu0
  %v1987 = vadd.f32 %v1898, %v1986
  %1988 = vmatmul.bf16.gmra.mxu0 %v824
  %v1989 = vpop.f32.mrf.mxu0
  %v1990 = vadd.f32 %v1901, %v1989
  %v1991 = vpop.f32.mrf.mxu0
  %v1992 = vadd.f32 %v1903, %v1991
  %1993 = vmatmul.bf16.gmra.mxu0 %v832
  %v1994 = vpop.f32.mrf.mxu0
  %v1995 = vadd.f32 %v1906, %v1994
  %v1996 = vpop.f32.mrf.mxu0
  %v1997 = vadd.f32 %v1908, %v1996
  %1998 = vmatmul.bf16.gmra.mxu0 %v840
  %v1999 = vpop.f32.mrf.mxu0
  %v2000 = vadd.f32 %v1911, %v1999
  %v2001 = vpop.f32.mrf.mxu0
  %v2002 = vadd.f32 %v1913, %v2001
  %2003 = vmatmul.bf16.gmra.mxu0 %v848
  %v2004 = vpop.f32.mrf.mxu0
  %v2005 = vadd.f32 %v1916, %v2004
  %v2006 = vpop.f32.mrf.mxu0
  %v2007 = vadd.f32 %v1918, %v2006
  %2008 = vmatmul.bf16.gmra.mxu0 %v856
  %v2009 = vpop.f32.mrf.mxu0
  %v2010 = vadd.f32 %v1921, %v2009
  %v2011 = vpop.f32.mrf.mxu0
  %v2012 = vadd.f32 %v1923, %v2011
  %2013 = vmatmul.bf16.gmra.mxu0 %v864
  %v2014 = vpop.f32.mrf.mxu0
  %v2015 = vadd.f32 %v1926, %v2014
  %v2016 = vpop.f32.mrf.mxu0
  %v2017 = vadd.f32 %v1928, %v2016
  %2018 = vmatmul.bf16.gmra.mxu0 %v872
  %v2019 = vpop.f32.mrf.mxu0
  %v2020 = vadd.f32 %v1931, %v2019
  %v2021 = vpop.f32.mrf.mxu0
  %v2022 = vadd.f32 %v1933, %v2021
  %2023 = vmatmul.bf16.gmra.mxu0 %v880
  %v2024 = vpop.f32.mrf.mxu0
  %v2025 = vadd.f32 %v1936, %v2024
  %v2026 = vpop.f32.mrf.mxu0
  %v2027 = vadd.f32 %v1938, %v2026
  %2028 = vmatmul.bf16.gmra.mxu0 %v888
  %v2029 = vpop.f32.mrf.mxu0
  %v2030 = vadd.f32 %v1941, %v2029
  %v2031 = vpop.f32.mrf.mxu0
  %v2032 = vadd.f32 %v1943, %v2031
  %2033 = vmatmul.bf16.gmra.mxu0 %v896
  %v2034 = vpop.f32.mrf.mxu0
  %v2035 = vadd.f32 %v1946, %v2034
  %v2036 = vpop.f32.mrf.mxu0
  %v2037 = vadd.f32 %v1948, %v2036
  %2038 = vmatmul.bf16.gmra.mxu0 %v904
  %v2039 = vpop.f32.mrf.mxu0
  %v2040 = vadd.f32 %v1951, %v2039
  %v2041 = vpop.f32.mrf.mxu0
  %v2042 = vadd.f32 %v1953, %v2041
  %2043 = vmatmul.bf16.gmra.mxu0 %v912
  %v2044 = vpop.f32.mrf.mxu0
  %v2045 = vadd.f32 %v1956, %v2044
  %v2046 = vpop.f32.mrf.mxu0
  %v2047 = vadd.f32 %v1958, %v2046
  %2048 = vdwg.mxu0
  %2049 = vmatpush.bf16.msra.mxu0 %v1361
  %2050 = vmatpush.bf16.msra.mxu0 %v1360
  %2051 = vmatpush.bf16.msra.mxu0 %v1359
  %2052 = vmatpush.bf16.msra.mxu0 %v1358
  %2053 = vmatpush.bf16.msra.mxu0 %v1357
  %2054 = vmatpush.bf16.msra.mxu0 %v1356
  %2055 = vmatpush.bf16.msra.mxu0 %v1355
  %2056 = vmatpush.bf16.msra.mxu0 %v1354
  %2057 = vmatmul.bf16.gmra.mxu0 %v793
  %v2058 = vpop.f32.mrf.mxu0
  %v2059 = vadd.f32 %v1970, %v2058
  %v2060 = vpop.f32.mrf.mxu0
  %v2061 = vadd.f32 %v1972, %v2060
  %2062 = vmatmul.bf16.gmra.mxu0 %v801
  %v2063 = vpop.f32.mrf.mxu0
  %v2064 = vadd.f32 %v1975, %v2063
  %v2065 = vpop.f32.mrf.mxu0
  %v2066 = vadd.f32 %v1977, %v2065
  %2067 = vmatmul.bf16.gmra.mxu0 %v809
  %v2068 = vpop.f32.mrf.mxu0
  %v2069 = vadd.f32 %v1980, %v2068
  %v2070 = vpop.f32.mrf.mxu0
  %v2071 = vadd.f32 %v1982, %v2070
  %2072 = vmatmul.bf16.gmra.mxu0 %v817
  %v2073 = vpop.f32.mrf.mxu0
  %v2074 = vadd.f32 %v1985, %v2073
  %v2075 = vpop.f32.mrf.mxu0
  %v2076 = vadd.f32 %v1987, %v2075
  %2077 = vmatmul.bf16.gmra.mxu0 %v825
  %v2078 = vpop.f32.mrf.mxu0
  %v2079 = vadd.f32 %v1990, %v2078
  %v2080 = vpop.f32.mrf.mxu0
  %v2081 = vadd.f32 %v1992, %v2080
  %2082 = vmatmul.bf16.gmra.mxu0 %v833
  %v2083 = vpop.f32.mrf.mxu0
  %v2084 = vadd.f32 %v1995, %v2083
  %v2085 = vpop.f32.mrf.mxu0
  %v2086 = vadd.f32 %v1997, %v2085
  %2087 = vmatmul.bf16.gmra.mxu0 %v841
  %v2088 = vpop.f32.mrf.mxu0
  %v2089 = vadd.f32 %v2000, %v2088
  %v2090 = vpop.f32.mrf.mxu0
  %v2091 = vadd.f32 %v2002, %v2090
  %2092 = vmatmul.bf16.gmra.mxu0 %v849
  %v2093 = vpop.f32.mrf.mxu0
  %v2094 = vadd.f32 %v2005, %v2093
  %v2095 = vpop.f32.mrf.mxu0
  %v2096 = vadd.f32 %v2007, %v2095
  %2097 = vmatmul.bf16.gmra.mxu0 %v857
  %v2098 = vpop.f32.mrf.mxu0
  %v2099 = vadd.f32 %v2010, %v2098
  %v2100 = vpop.f32.mrf.mxu0
  %v2101 = vadd.f32 %v2012, %v2100
  %2102 = vmatmul.bf16.gmra.mxu0 %v865
  %v2103 = vpop.f32.mrf.mxu0
  %v2104 = vadd.f32 %v2015, %v2103
  %v2105 = vpop.f32.mrf.mxu0
  %v2106 = vadd.f32 %v2017, %v2105
  %2107 = vmatmul.bf16.gmra.mxu0 %v873
  %v2108 = vpop.f32.mrf.mxu0
  %v2109 = vadd.f32 %v2020, %v2108
  %v2110 = vpop.f32.mrf.mxu0
  %v2111 = vadd.f32 %v2022, %v2110
  %2112 = vmatmul.bf16.gmra.mxu0 %v881
  %v2113 = vpop.f32.mrf.mxu0
  %v2114 = vadd.f32 %v2025, %v2113
  %v2115 = vpop.f32.mrf.mxu0
  %v2116 = vadd.f32 %v2027, %v2115
  %2117 = vmatmul.bf16.gmra.mxu0 %v889
  %v2118 = vpop.f32.mrf.mxu0
  %v2119 = vadd.f32 %v2030, %v2118
  %v2120 = vpop.f32.mrf.mxu0
  %v2121 = vadd.f32 %v2032, %v2120
  %2122 = vmatmul.bf16.gmra.mxu0 %v897
  %v2123 = vpop.f32.mrf.mxu0
  %v2124 = vadd.f32 %v2035, %v2123
  %v2125 = vpop.f32.mrf.mxu0
  %v2126 = vadd.f32 %v2037, %v2125
  %2127 = vmatmul.bf16.gmra.mxu0 %v905
  %v2128 = vpop.f32.mrf.mxu0
  %v2129 = vadd.f32 %v2040, %v2128
  %v2130 = vpop.f32.mrf.mxu0
  %v2131 = vadd.f32 %v2042, %v2130
  %2132 = vmatmul.bf16.gmra.mxu0 %v913
  %v2133 = vpop.f32.mrf.mxu0
  %v2134 = vadd.f32 %v2045, %v2133
  %v2135 = vpop.f32.mrf.mxu0
  %v2136 = vadd.f32 %v2047, %v2135
  %2137 = vdwg.mxu0
  %v2138 = vld [vmem:[%s11] sm:$0x1]
  %v2140 = vperm.slane %v2138, 0
  %v2142 = vadd.f32 %v2059, %v2140
  %v2143 = vadd.f32 %v2061, %v2140
  %v2144 = vadd.f32 %v2064, %v2140
  %v2145 = vadd.f32 %v2066, %v2140
  %v2146 = vadd.f32 %v2069, %v2140
  %v2147 = vadd.f32 %v2071, %v2140
  %v2148 = vadd.f32 %v2074, %v2140
  %v2149 = vadd.f32 %v2076, %v2140
  %v2150 = vadd.f32 %v2079, %v2140
  %v2151 = vadd.f32 %v2081, %v2140
  %v2152 = vadd.f32 %v2084, %v2140
  %v2153 = vadd.f32 %v2086, %v2140
  %v2154 = vadd.f32 %v2089, %v2140
  %v2155 = vadd.f32 %v2091, %v2140
  %v2156 = vadd.f32 %v2094, %v2140
  %v2157 = vadd.f32 %v2096, %v2140
  %v2158 = vadd.f32 %v2099, %v2140
  %v2159 = vadd.f32 %v2101, %v2140
  %v2160 = vadd.f32 %v2104, %v2140
  %v2161 = vadd.f32 %v2106, %v2140
  %v2162 = vadd.f32 %v2109, %v2140
  %v2163 = vadd.f32 %v2111, %v2140
  %v2164 = vadd.f32 %v2114, %v2140
  %v2165 = vadd.f32 %v2116, %v2140
  %v2166 = vadd.f32 %v2119, %v2140
  %v2167 = vadd.f32 %v2121, %v2140
  %v2168 = vadd.f32 %v2124, %v2140
  %v2169 = vadd.f32 %v2126, %v2140
  %v2170 = vadd.f32 %v2129, %v2140
  %v2171 = vadd.f32 %v2131, %v2140
  %v2172 = vadd.f32 %v2134, %v2140
  %v2173 = vadd.f32 %v2136, %v2140
  %v2174 = vmax.f32 %v2142, 0.0
  %v2175 = vmax.f32 %v2143, 0.0
  %v2176 = vmax.f32 %v2144, 0.0
  %v2177 = vmax.f32 %v2145, 0.0
  %v2178 = vmax.f32 %v2146, 0.0
  %v2179 = vmax.f32 %v2147, 0.0
  %v2180 = vmax.f32 %v2148, 0.0
  %v2181 = vmax.f32 %v2149, 0.0
  %v2182 = vmax.f32 %v2150, 0.0
  %v2183 = vmax.f32 %v2151, 0.0
  %v2184 = vmax.f32 %v2152, 0.0
  %v2185 = vmax.f32 %v2153, 0.0
  %v2186 = vmax.f32 %v2154, 0.0
  %v2187 = vmax.f32 %v2155, 0.0
  %v2188 = vmax.f32 %v2156, 0.0
  %v2189 = vmax.f32 %v2157, 0.0
  %v2190 = vmax.f32 %v2158, 0.0
  %v2191 = vmax.f32 %v2159, 0.0
  %v2192 = vmax.f32 %v2160, 0.0
  %v2193 = vmax.f32 %v2161, 0.0
  %v2194 = vmax.f32 %v2162, 0.0
  %v2195 = vmax.f32 %v2163, 0.0
  %v2196 = vmax.f32 %v2164, 0.0
  %v2197 = vmax.f32 %v2165, 0.0
  %v2198 = vmax.f32 %v2166, 0.0
  %v2199 = vmax.f32 %v2167, 0.0
  %v2200 = vmax.f32 %v2168, 0.0
  %v2201 = vmax.f32 %v2169, 0.0
  %v2202 = vmax.f32 %v2170, 0.0
  %v2203 = vmax.f32 %v2171, 0.0
  %v2204 = vmax.f32 %v2172, 0.0
  %v2205 = vmax.f32 %v2173, 0.0
  %v2206 = vld [vmem:[%s13] sm:$0x1]
  %v2208 = vperm.slane %v2206, 0
  %2209 = vrot.lane.b32.xlu0 %v2208, 64
  %v2210 = vpop.permute.xlu0 %2209
  %v2212 = vadd.f32 %v2059, %v2210
  %v2213 = vadd.f32 %v2061, %v2210
  %v2214 = vadd.f32 %v2064, %v2210
  %v2215 = vadd.f32 %v2066, %v2210
  %v2216 = vadd.f32 %v2069, %v2210
  %v2217 = vadd.f32 %v2071, %v2210
  %v2218 = vadd.f32 %v2074, %v2210
  %v2219 = vadd.f32 %v2076, %v2210
  %v2220 = vadd.f32 %v2079, %v2210
  %v2221 = vadd.f32 %v2081, %v2210
  %v2222 = vadd.f32 %v2084, %v2210
  %v2223 = vadd.f32 %v2086, %v2210
  %v2224 = vadd.f32 %v2089, %v2210
  %v2225 = vadd.f32 %v2091, %v2210
  %v2226 = vadd.f32 %v2094, %v2210
  %v2227 = vadd.f32 %v2096, %v2210
  %v2228 = vadd.f32 %v2099, %v2210
  %v2229 = vadd.f32 %v2101, %v2210
  %v2230 = vadd.f32 %v2104, %v2210
  %v2231 = vadd.f32 %v2106, %v2210
  %v2232 = vadd.f32 %v2109, %v2210
  %v2233 = vadd.f32 %v2111, %v2210
  %v2234 = vadd.f32 %v2114, %v2210
  %v2235 = vadd.f32 %v2116, %v2210
  %v2236 = vadd.f32 %v2119, %v2210
  %v2237 = vadd.f32 %v2121, %v2210
  %v2238 = vadd.f32 %v2124, %v2210
  %v2239 = vadd.f32 %v2126, %v2210
  %v2240 = vadd.f32 %v2129, %v2210
  %v2241 = vadd.f32 %v2131, %v2210
  %v2242 = vadd.f32 %v2134, %v2210
  %v2243 = vadd.f32 %v2136, %v2210
  %v2244 = vld [vmem:[%s17] sm:$0xff]
  %v2245 = vunpack.c.l.bf16 %v146
  %v2246 = vunpack.c.h.bf16 %v146
  %v2247 = vunpack.c.l.bf16 %v147
  %v2248 = vunpack.c.h.bf16 %v147
  %v2249 = vunpack.c.l.bf16 %v148
  %v2250 = vunpack.c.h.bf16 %v148
  %v2251 = vunpack.c.l.bf16 %v149
  %v2252 = vunpack.c.h.bf16 %v149
  %v2253 = vunpack.c.l.bf16 %v150
  %v2254 = vunpack.c.h.bf16 %v150
  %v2255 = vunpack.c.l.bf16 %v151
  %v2256 = vunpack.c.h.bf16 %v151
  %v2257 = vunpack.c.l.bf16 %v152
  %v2258 = vunpack.c.h.bf16 %v152
  %v2259 = vunpack.c.l.bf16 %v153
  %v2260 = vunpack.c.h.bf16 %v153
  %v2261 = vunpack.c.l.bf16 %v154
  %v2262 = vunpack.c.h.bf16 %v154
  %v2263 = vunpack.c.l.bf16 %v155
  %v2264 = vunpack.c.h.bf16 %v155
  %v2265 = vunpack.c.l.bf16 %v156
  %v2266 = vunpack.c.h.bf16 %v156
  %v2267 = vunpack.c.l.bf16 %v157
  %v2268 = vunpack.c.h.bf16 %v157
  %v2269 = vunpack.c.l.bf16 %v158
  %v2270 = vunpack.c.h.bf16 %v158
  %v2271 = vunpack.c.l.bf16 %v159
  %v2272 = vunpack.c.h.bf16 %v159
  %v2273 = vunpack.c.l.bf16 %v160
  %v2274 = vunpack.c.h.bf16 %v160
  %v2275 = vunpack.c.l.bf16 %v161
  %v2276 = vunpack.c.h.bf16 %v161
  %v2277 = vunpack.c.l.bf16 %v162
  %v2278 = vunpack.c.h.bf16 %v162
  %v2279 = vunpack.c.l.bf16 %v163
  %v2280 = vunpack.c.h.bf16 %v163
  %v2281 = vunpack.c.l.bf16 %v164
  %v2282 = vunpack.c.h.bf16 %v164
  %v2283 = vunpack.c.l.bf16 %v165
  %v2284 = vunpack.c.h.bf16 %v165
  %v2285 = vunpack.c.l.bf16 %v166
  %v2286 = vunpack.c.h.bf16 %v166
  %v2287 = vunpack.c.l.bf16 %v167
  %v2288 = vunpack.c.h.bf16 %v167
  %v2289 = vunpack.c.l.bf16 %v168
  %v2290 = vunpack.c.h.bf16 %v168
  %v2291 = vunpack.c.l.bf16 %v169
  %v2292 = vunpack.c.h.bf16 %v169
  %v2293 = vunpack.c.l.bf16 %v170
  %v2294 = vunpack.c.h.bf16 %v170
  %v2295 = vunpack.c.l.bf16 %v171
  %v2296 = vunpack.c.h.bf16 %v171
  %v2297 = vunpack.c.l.bf16 %v172
  %v2298 = vunpack.c.h.bf16 %v172
  %v2299 = vunpack.c.l.bf16 %v173
  %v2300 = vunpack.c.h.bf16 %v173
  %v2301 = vunpack.c.l.bf16 %v174
  %v2302 = vunpack.c.h.bf16 %v174
  %v2303 = vunpack.c.l.bf16 %v175
  %v2304 = vunpack.c.h.bf16 %v175
  %v2305 = vunpack.c.l.bf16 %v176
  %v2306 = vunpack.c.h.bf16 %v176
  %v2307 = vunpack.c.l.bf16 %v177
  %v2308 = vunpack.c.h.bf16 %v177
  %v2309 = vunpack.c.l.bf16 %v178
  %v2310 = vunpack.c.h.bf16 %v178
  %v2311 = vunpack.c.l.bf16 %v179
  %v2312 = vunpack.c.h.bf16 %v179
  %v2313 = vunpack.c.l.bf16 %v180
  %v2314 = vunpack.c.h.bf16 %v180
  %v2315 = vunpack.c.l.bf16 %v181
  %v2316 = vunpack.c.h.bf16 %v181
  %v2317 = vunpack.c.l.bf16 %v182
  %v2318 = vunpack.c.h.bf16 %v182
  %v2319 = vunpack.c.l.bf16 %v183
  %v2320 = vunpack.c.h.bf16 %v183
  %v2321 = vunpack.c.l.bf16 %v184
  %v2322 = vunpack.c.h.bf16 %v184
  %v2323 = vunpack.c.l.bf16 %v185
  %v2324 = vunpack.c.h.bf16 %v185
  %v2325 = vunpack.c.l.bf16 %v186
  %v2326 = vunpack.c.h.bf16 %v186
  %v2327 = vunpack.c.l.bf16 %v187
  %v2328 = vunpack.c.h.bf16 %v187
  %v2329 = vunpack.c.l.bf16 %v188
  %v2330 = vunpack.c.h.bf16 %v188
  %v2331 = vunpack.c.l.bf16 %v189
  %v2332 = vunpack.c.h.bf16 %v189
  %v2333 = vunpack.c.l.bf16 %v190
  %v2334 = vunpack.c.h.bf16 %v190
  %v2335 = vunpack.c.l.bf16 %v191
  %v2336 = vunpack.c.h.bf16 %v191
  %v2337 = vunpack.c.l.bf16 %v192
  %v2338 = vunpack.c.h.bf16 %v192
  %v2339 = vunpack.c.l.bf16 %v193
  %v2340 = vunpack.c.h.bf16 %v193
  %v2341 = vunpack.c.l.bf16 %v194
  %v2342 = vunpack.c.h.bf16 %v194
  %v2343 = vunpack.c.l.bf16 %v195
  %v2344 = vunpack.c.h.bf16 %v195
  %v2345 = vunpack.c.l.bf16 %v196
  %v2346 = vunpack.c.h.bf16 %v196
  %v2347 = vunpack.c.l.bf16 %v197
  %v2348 = vunpack.c.h.bf16 %v197
  %v2349 = vunpack.c.l.bf16 %v198
  %v2350 = vunpack.c.h.bf16 %v198
  %v2351 = vunpack.c.l.bf16 %v199
  %v2352 = vunpack.c.h.bf16 %v199
  %v2353 = vunpack.c.l.bf16 %v200
  %v2354 = vunpack.c.h.bf16 %v200
  %v2355 = vunpack.c.l.bf16 %v201
  %v2356 = vunpack.c.h.bf16 %v201
  %v2357 = vunpack.c.l.bf16 %v202
  %v2358 = vunpack.c.h.bf16 %v202
  %v2359 = vunpack.c.l.bf16 %v203
  %v2360 = vunpack.c.h.bf16 %v203
  %v2361 = vunpack.c.l.bf16 %v204
  %v2362 = vunpack.c.h.bf16 %v204
  %v2363 = vunpack.c.l.bf16 %v205
  %v2364 = vunpack.c.h.bf16 %v205
  %v2365 = vunpack.c.l.bf16 %v206
  %v2366 = vunpack.c.h.bf16 %v206
  %v2367 = vunpack.c.l.bf16 %v207
  %v2368 = vunpack.c.h.bf16 %v207
  %v2369 = vunpack.c.l.bf16 %v208
  %v2370 = vunpack.c.h.bf16 %v208
  %v2371 = vunpack.c.l.bf16 %v209
  %v2372 = vunpack.c.h.bf16 %v209
  %v2373 = vunpack.c.l.bf16 %v210
  %v2374 = vunpack.c.h.bf16 %v210
  %v2375 = vunpack.c.l.bf16 %v211
  %v2376 = vunpack.c.h.bf16 %v211
  %v2377 = vunpack.c.l.bf16 %v212
  %v2378 = vunpack.c.h.bf16 %v212
  %v2379 = vunpack.c.l.bf16 %v213
  %v2380 = vunpack.c.h.bf16 %v213
  %v2381 = vunpack.c.l.bf16 %v214
  %v2382 = vunpack.c.h.bf16 %v214
  %v2383 = vunpack.c.l.bf16 %v215
  %v2384 = vunpack.c.h.bf16 %v215
  %v2385 = vunpack.c.l.bf16 %v216
  %v2386 = vunpack.c.h.bf16 %v216
  %v2387 = vunpack.c.l.bf16 %v217
  %v2388 = vunpack.c.h.bf16 %v217
  %v2389 = vunpack.c.l.bf16 %v218
  %v2390 = vunpack.c.h.bf16 %v218
  %v2391 = vunpack.c.l.bf16 %v219
  %v2392 = vunpack.c.h.bf16 %v219
  %v2393 = vunpack.c.l.bf16 %v220
  %v2394 = vunpack.c.h.bf16 %v220
  %v2395 = vunpack.c.l.bf16 %v221
  %v2396 = vunpack.c.h.bf16 %v221
  %v2397 = vunpack.c.l.bf16 %v222
  %v2398 = vunpack.c.h.bf16 %v222
  %v2399 = vunpack.c.l.bf16 %v223
  %v2400 = vunpack.c.h.bf16 %v223
  %v2401 = vunpack.c.l.bf16 %v224
  %v2402 = vunpack.c.h.bf16 %v224
  %v2403 = vunpack.c.l.bf16 %v225
  %v2404 = vunpack.c.h.bf16 %v225
  %v2405 = vunpack.c.l.bf16 %v226
  %v2406 = vunpack.c.h.bf16 %v226
  %v2407 = vunpack.c.l.bf16 %v227
  %v2408 = vunpack.c.h.bf16 %v227
  %v2409 = vunpack.c.l.bf16 %v228
  %v2410 = vunpack.c.h.bf16 %v228
  %v2411 = vunpack.c.l.bf16 %v229
  %v2412 = vunpack.c.h.bf16 %v229
  %v2413 = vunpack.c.l.bf16 %v230
  %v2414 = vunpack.c.h.bf16 %v230
  %v2415 = vunpack.c.l.bf16 %v231
  %v2416 = vunpack.c.h.bf16 %v231
  %v2417 = vunpack.c.l.bf16 %v232
  %v2418 = vunpack.c.h.bf16 %v232
  %v2419 = vunpack.c.l.bf16 %v233
  %v2420 = vunpack.c.h.bf16 %v233
  %v2421 = vunpack.c.l.bf16 %v234
  %v2422 = vunpack.c.h.bf16 %v234
  %v2423 = vunpack.c.l.bf16 %v235
  %v2424 = vunpack.c.h.bf16 %v235
  %v2425 = vunpack.c.l.bf16 %v236
  %v2426 = vunpack.c.h.bf16 %v236
  %v2427 = vunpack.c.l.bf16 %v237
  %v2428 = vunpack.c.h.bf16 %v237
  %v2429 = vunpack.c.l.bf16 %v238
  %v2430 = vunpack.c.h.bf16 %v238
  %v2431 = vunpack.c.l.bf16 %v239
  %v2432 = vunpack.c.h.bf16 %v239
  %v2433 = vunpack.c.l.bf16 %v240
  %v2434 = vunpack.c.h.bf16 %v240
  %v2435 = vunpack.c.l.bf16 %v241
  %v2436 = vunpack.c.h.bf16 %v241
  %v2437 = vunpack.c.l.bf16 %v242
  %v2438 = vunpack.c.h.bf16 %v242
  %v2439 = vunpack.c.l.bf16 %v243
  %v2440 = vunpack.c.h.bf16 %v243
  %v2441 = vunpack.c.l.bf16 %v244
  %v2442 = vunpack.c.h.bf16 %v244
  %v2443 = vunpack.c.l.bf16 %v245
  %v2444 = vunpack.c.h.bf16 %v245
  %v2445 = vunpack.c.l.bf16 %v246
  %v2446 = vunpack.c.h.bf16 %v246
  %v2447 = vunpack.c.l.bf16 %v247
  %v2448 = vunpack.c.h.bf16 %v247
  %v2449 = vunpack.c.l.bf16 %v248
  %v2450 = vunpack.c.h.bf16 %v248
  %v2451 = vunpack.c.l.bf16 %v249
  %v2452 = vunpack.c.h.bf16 %v249
  %v2453 = vunpack.c.l.bf16 %v250
  %v2454 = vunpack.c.h.bf16 %v250
  %v2455 = vunpack.c.l.bf16 %v251
  %v2456 = vunpack.c.h.bf16 %v251
  %v2457 = vunpack.c.l.bf16 %v252
  %v2458 = vunpack.c.h.bf16 %v252
  %v2459 = vunpack.c.l.bf16 %v253
  %v2460 = vunpack.c.h.bf16 %v253
  %v2461 = vunpack.c.l.bf16 %v254
  %v2462 = vunpack.c.h.bf16 %v254
  %v2463 = vunpack.c.l.bf16 %v255
  %v2464 = vunpack.c.h.bf16 %v255
  %v2465 = vunpack.c.l.bf16 %v256
  %v2466 = vunpack.c.h.bf16 %v256
  %v2467 = vunpack.c.l.bf16 %v257
  %v2468 = vunpack.c.h.bf16 %v257
  %v2469 = vunpack.c.l.bf16 %v258
  %v2470 = vunpack.c.h.bf16 %v258
  %v2471 = vunpack.c.l.bf16 %v259
  %v2472 = vunpack.c.h.bf16 %v259
  %v2473 = vunpack.c.l.bf16 %v260
  %v2474 = vunpack.c.h.bf16 %v260
  %v2475 = vunpack.c.l.bf16 %v261
  %v2476 = vunpack.c.h.bf16 %v261
  %v2477 = vunpack.c.l.bf16 %v262
  %v2478 = vunpack.c.h.bf16 %v262
  %v2479 = vunpack.c.l.bf16 %v263
  %v2480 = vunpack.c.h.bf16 %v263
  %v2481 = vunpack.c.l.bf16 %v264
  %v2482 = vunpack.c.h.bf16 %v264
  %v2483 = vunpack.c.l.bf16 %v265
  %v2484 = vunpack.c.h.bf16 %v265
  %v2485 = vunpack.c.l.bf16 %v266
  %v2486 = vunpack.c.h.bf16 %v266
  %v2487 = vunpack.c.l.bf16 %v267
  %v2488 = vunpack.c.h.bf16 %v267
  %v2489 = vunpack.c.l.bf16 %v268
  %v2490 = vunpack.c.h.bf16 %v268
  %v2491 = vunpack.c.l.bf16 %v269
  %v2492 = vunpack.c.h.bf16 %v269
  %v2493 = vunpack.c.l.bf16 %v270
  %v2494 = vunpack.c.h.bf16 %v270
  %v2495 = vunpack.c.l.bf16 %v271
  %v2496 = vunpack.c.h.bf16 %v271
  %v2497 = vunpack.c.l.bf16 %v272
  %v2498 = vunpack.c.h.bf16 %v272
  %v2499 = vunpack.c.l.bf16 %v273
  %v2500 = vunpack.c.h.bf16 %v273
  %v2502 = vperm.slane %v2244, 0
  %v2503 = vperm.slane %v2244, 1
  %v2504 = vperm.slane %v2244, 2
  %v2505 = vperm.slane %v2244, 3
  %v2506 = vperm.slane %v2244, 4
  %v2507 = vperm.slane %v2244, 5
  %v2508 = vperm.slane %v2244, 6
  %v2509 = vperm.slane %v2244, 7
  %v2518 = vsub.f32 %v2245, %v2502
  %v2519 = vsub.f32 %v2246, %v2503
  %v2520 = vsub.f32 %v2247, %v2504
  %v2521 = vsub.f32 %v2248, %v2505
  %v2522 = vsub.f32 %v2249, %v2506
  %v2523 = vsub.f32 %v2250, %v2507
  %v2524 = vsub.f32 %v2251, %v2508
  %v2525 = vsub.f32 %v2252, %v2509
  %v2526 = vsub.f32 %v2253, %v2502
  %v2527 = vsub.f32 %v2254, %v2503
  %v2528 = vsub.f32 %v2255, %v2504
  %v2529 = vsub.f32 %v2256, %v2505
  %v2530 = vsub.f32 %v2257, %v2506
  %v2531 = vsub.f32 %v2258, %v2507
  %v2532 = vsub.f32 %v2259, %v2508
  %v2533 = vsub.f32 %v2260, %v2509
  %v2534 = vsub.f32 %v2261, %v2502
  %v2535 = vsub.f32 %v2262, %v2503
  %v2536 = vsub.f32 %v2263, %v2504
  %v2537 = vsub.f32 %v2264, %v2505
  %v2538 = vsub.f32 %v2265, %v2506
  %v2539 = vsub.f32 %v2266, %v2507
  %v2540 = vsub.f32 %v2267, %v2508
  %v2541 = vsub.f32 %v2268, %v2509
  %v2542 = vsub.f32 %v2269, %v2502
  %v2543 = vsub.f32 %v2270, %v2503
  %v2544 = vsub.f32 %v2271, %v2504
  %v2545 = vsub.f32 %v2272, %v2505
  %v2546 = vsub.f32 %v2273, %v2506
  %v2547 = vsub.f32 %v2274, %v2507
  %v2548 = vsub.f32 %v2275, %v2508
  %v2549 = vsub.f32 %v2276, %v2509
  %v2550 = vsub.f32 %v2277, %v2502
  %v2551 = vsub.f32 %v2278, %v2503
  %v2552 = vsub.f32 %v2279, %v2504
  %v2553 = vsub.f32 %v2280, %v2505
  %v2554 = vsub.f32 %v2281, %v2506
  %v2555 = vsub.f32 %v2282, %v2507
  %v2556 = vsub.f32 %v2283, %v2508
  %v2557 = vsub.f32 %v2284, %v2509
  %v2558 = vsub.f32 %v2285, %v2502
  %v2559 = vsub.f32 %v2286, %v2503
  %v2560 = vsub.f32 %v2287, %v2504
  %v2561 = vsub.f32 %v2288, %v2505
  %v2562 = vsub.f32 %v2289, %v2506
  %v2563 = vsub.f32 %v2290, %v2507
  %v2564 = vsub.f32 %v2291, %v2508
  %v2565 = vsub.f32 %v2292, %v2509
  %v2566 = vsub.f32 %v2293, %v2502
  %v2567 = vsub.f32 %v2294, %v2503
  %v2568 = vsub.f32 %v2295, %v2504
  %v2569 = vsub.f32 %v2296, %v2505
  %v2570 = vsub.f32 %v2297, %v2506
  %v2571 = vsub.f32 %v2298, %v2507
  %v2572 = vsub.f32 %v2299, %v2508
  %v2573 = vsub.f32 %v2300, %v2509
  %v2574 = vsub.f32 %v2301, %v2502
  %v2575 = vsub.f32 %v2302, %v2503
  %v2576 = vsub.f32 %v2303, %v2504
  %v2577 = vsub.f32 %v2304, %v2505
  %v2578 = vsub.f32 %v2305, %v2506
  %v2579 = vsub.f32 %v2306, %v2507
  %v2580 = vsub.f32 %v2307, %v2508
  %v2581 = vsub.f32 %v2308, %v2509
  %v2582 = vsub.f32 %v2309, %v2502
  %v2583 = vsub.f32 %v2310, %v2503
  %v2584 = vsub.f32 %v2311, %v2504
  %v2585 = vsub.f32 %v2312, %v2505
  %v2586 = vsub.f32 %v2313, %v2506
  %v2587 = vsub.f32 %v2314, %v2507
  %v2588 = vsub.f32 %v2315, %v2508
  %v2589 = vsub.f32 %v2316, %v2509
  %v2590 = vsub.f32 %v2317, %v2502
  %v2591 = vsub.f32 %v2318, %v2503
  %v2592 = vsub.f32 %v2319, %v2504
  %v2593 = vsub.f32 %v2320, %v2505
  %v2594 = vsub.f32 %v2321, %v2506
  %v2595 = vsub.f32 %v2322, %v2507
  %v2596 = vsub.f32 %v2323, %v2508
  %v2597 = vsub.f32 %v2324, %v2509
  %v2598 = vsub.f32 %v2325, %v2502
  %v2599 = vsub.f32 %v2326, %v2503
  %v2600 = vsub.f32 %v2327, %v2504
  %v2601 = vsub.f32 %v2328, %v2505
  %v2602 = vsub.f32 %v2329, %v2506
  %v2603 = vsub.f32 %v2330, %v2507
  %v2604 = vsub.f32 %v2331, %v2508
  %v2605 = vsub.f32 %v2332, %v2509
  %v2606 = vsub.f32 %v2333, %v2502
  %v2607 = vsub.f32 %v2334, %v2503
  %v2608 = vsub.f32 %v2335, %v2504
  %v2609 = vsub.f32 %v2336, %v2505
  %v2610 = vsub.f32 %v2337, %v2506
  %v2611 = vsub.f32 %v2338, %v2507
  %v2612 = vsub.f32 %v2339, %v2508
  %v2613 = vsub.f32 %v2340, %v2509
  %v2614 = vsub.f32 %v2341, %v2502
  %v2615 = vsub.f32 %v2342, %v2503
  %v2616 = vsub.f32 %v2343, %v2504
  %v2617 = vsub.f32 %v2344, %v2505
  %v2618 = vsub.f32 %v2345, %v2506
  %v2619 = vsub.f32 %v2346, %v2507
  %v2620 = vsub.f32 %v2347, %v2508
  %v2621 = vsub.f32 %v2348, %v2509
  %v2622 = vsub.f32 %v2349, %v2502
  %v2623 = vsub.f32 %v2350, %v2503
  %v2624 = vsub.f32 %v2351, %v2504
  %v2625 = vsub.f32 %v2352, %v2505
  %v2626 = vsub.f32 %v2353, %v2506
  %v2627 = vsub.f32 %v2354, %v2507
  %v2628 = vsub.f32 %v2355, %v2508
  %v2629 = vsub.f32 %v2356, %v2509
  %v2630 = vsub.f32 %v2357, %v2502
  %v2631 = vsub.f32 %v2358, %v2503
  %v2632 = vsub.f32 %v2359, %v2504
  %v2633 = vsub.f32 %v2360, %v2505
  %v2634 = vsub.f32 %v2361, %v2506
  %v2635 = vsub.f32 %v2362, %v2507
  %v2636 = vsub.f32 %v2363, %v2508
  %v2637 = vsub.f32 %v2364, %v2509
  %v2638 = vsub.f32 %v2365, %v2502
  %v2639 = vsub.f32 %v2366, %v2503
  %v2640 = vsub.f32 %v2367, %v2504
  %v2641 = vsub.f32 %v2368, %v2505
  %v2642 = vsub.f32 %v2369, %v2506
  %v2643 = vsub.f32 %v2370, %v2507
  %v2644 = vsub.f32 %v2371, %v2508
  %v2645 = vsub.f32 %v2372, %v2509
  %v2646 = vsub.f32 %v2373, %v2502
  %v2647 = vsub.f32 %v2374, %v2503
  %v2648 = vsub.f32 %v2375, %v2504
  %v2649 = vsub.f32 %v2376, %v2505
  %v2650 = vsub.f32 %v2377, %v2506
  %v2651 = vsub.f32 %v2378, %v2507
  %v2652 = vsub.f32 %v2379, %v2508
  %v2653 = vsub.f32 %v2380, %v2509
  %v2654 = vsub.f32 %v2381, %v2502
  %v2655 = vsub.f32 %v2382, %v2503
  %v2656 = vsub.f32 %v2383, %v2504
  %v2657 = vsub.f32 %v2384, %v2505
  %v2658 = vsub.f32 %v2385, %v2506
  %v2659 = vsub.f32 %v2386, %v2507
  %v2660 = vsub.f32 %v2387, %v2508
  %v2661 = vsub.f32 %v2388, %v2509
  %v2662 = vsub.f32 %v2389, %v2502
  %v2663 = vsub.f32 %v2390, %v2503
  %v2664 = vsub.f32 %v2391, %v2504
  %v2665 = vsub.f32 %v2392, %v2505
  %v2666 = vsub.f32 %v2393, %v2506
  %v2667 = vsub.f32 %v2394, %v2507
  %v2668 = vsub.f32 %v2395, %v2508
  %v2669 = vsub.f32 %v2396, %v2509
  %v2670 = vsub.f32 %v2397, %v2502
  %v2671 = vsub.f32 %v2398, %v2503
  %v2672 = vsub.f32 %v2399, %v2504
  %v2673 = vsub.f32 %v2400, %v2505
  %v2674 = vsub.f32 %v2401, %v2506
  %v2675 = vsub.f32 %v2402, %v2507
  %v2676 = vsub.f32 %v2403, %v2508
  %v2677 = vsub.f32 %v2404, %v2509
  %v2678 = vsub.f32 %v2405, %v2502
  %v2679 = vsub.f32 %v2406, %v2503
  %v2680 = vsub.f32 %v2407, %v2504
  %v2681 = vsub.f32 %v2408, %v2505
  %v2682 = vsub.f32 %v2409, %v2506
  %v2683 = vsub.f32 %v2410, %v2507
  %v2684 = vsub.f32 %v2411, %v2508
  %v2685 = vsub.f32 %v2412, %v2509
  %v2686 = vsub.f32 %v2413, %v2502
  %v2687 = vsub.f32 %v2414, %v2503
  %v2688 = vsub.f32 %v2415, %v2504
  %v2689 = vsub.f32 %v2416, %v2505
  %v2690 = vsub.f32 %v2417, %v2506
  %v2691 = vsub.f32 %v2418, %v2507
  %v2692 = vsub.f32 %v2419, %v2508
  %v2693 = vsub.f32 %v2420, %v2509
  %v2694 = vsub.f32 %v2421, %v2502
  %v2695 = vsub.f32 %v2422, %v2503
  %v2696 = vsub.f32 %v2423, %v2504
  %v2697 = vsub.f32 %v2424, %v2505
  %v2698 = vsub.f32 %v2425, %v2506
  %v2699 = vsub.f32 %v2426, %v2507
  %v2700 = vsub.f32 %v2427, %v2508
  %v2701 = vsub.f32 %v2428, %v2509
  %v2702 = vsub.f32 %v2429, %v2502
  %v2703 = vsub.f32 %v2430, %v2503
  %v2704 = vsub.f32 %v2431, %v2504
  %v2705 = vsub.f32 %v2432, %v2505
  %v2706 = vsub.f32 %v2433, %v2506
  %v2707 = vsub.f32 %v2434, %v2507
  %v2708 = vsub.f32 %v2435, %v2508
  %v2709 = vsub.f32 %v2436, %v2509
  %v2710 = vsub.f32 %v2437, %v2502
  %v2711 = vsub.f32 %v2438, %v2503
  %v2712 = vsub.f32 %v2439, %v2504
  %v2713 = vsub.f32 %v2440, %v2505
  %v2714 = vsub.f32 %v2441, %v2506
  %v2715 = vsub.f32 %v2442, %v2507
  %v2716 = vsub.f32 %v2443, %v2508
  %v2717 = vsub.f32 %v2444, %v2509
  %v2718 = vsub.f32 %v2445, %v2502
  %v2719 = vsub.f32 %v2446, %v2503
  %v2720 = vsub.f32 %v2447, %v2504
  %v2721 = vsub.f32 %v2448, %v2505
  %v2722 = vsub.f32 %v2449, %v2506
  %v2723 = vsub.f32 %v2450, %v2507
  %v2724 = vsub.f32 %v2451, %v2508
  %v2725 = vsub.f32 %v2452, %v2509
  %v2726 = vsub.f32 %v2453, %v2502
  %v2727 = vsub.f32 %v2454, %v2503
  %v2728 = vsub.f32 %v2455, %v2504
  %v2729 = vsub.f32 %v2456, %v2505
  %v2730 = vsub.f32 %v2457, %v2506
  %v2731 = vsub.f32 %v2458, %v2507
  %v2732 = vsub.f32 %v2459, %v2508
  %v2733 = vsub.f32 %v2460, %v2509
  %v2734 = vsub.f32 %v2461, %v2502
  %v2735 = vsub.f32 %v2462, %v2503
  %v2736 = vsub.f32 %v2463, %v2504
  %v2737 = vsub.f32 %v2464, %v2505
  %v2738 = vsub.f32 %v2465, %v2506
  %v2739 = vsub.f32 %v2466, %v2507
  %v2740 = vsub.f32 %v2467, %v2508
  %v2741 = vsub.f32 %v2468, %v2509
  %v2742 = vsub.f32 %v2469, %v2502
  %v2743 = vsub.f32 %v2470, %v2503
  %v2744 = vsub.f32 %v2471, %v2504
  %v2745 = vsub.f32 %v2472, %v2505
  %v2746 = vsub.f32 %v2473, %v2506
  %v2747 = vsub.f32 %v2474, %v2507
  %v2748 = vsub.f32 %v2475, %v2508
  %v2749 = vsub.f32 %v2476, %v2509
  %v2750 = vsub.f32 %v2477, %v2502
  %v2751 = vsub.f32 %v2478, %v2503
  %v2752 = vsub.f32 %v2479, %v2504
  %v2753 = vsub.f32 %v2480, %v2505
  %v2754 = vsub.f32 %v2481, %v2506
  %v2755 = vsub.f32 %v2482, %v2507
  %v2756 = vsub.f32 %v2483, %v2508
  %v2757 = vsub.f32 %v2484, %v2509
  %v2758 = vsub.f32 %v2485, %v2502
  %v2759 = vsub.f32 %v2486, %v2503
  %v2760 = vsub.f32 %v2487, %v2504
  %v2761 = vsub.f32 %v2488, %v2505
  %v2762 = vsub.f32 %v2489, %v2506
  %v2763 = vsub.f32 %v2490, %v2507
  %v2764 = vsub.f32 %v2491, %v2508
  %v2765 = vsub.f32 %v2492, %v2509
  %v2766 = vsub.f32 %v2493, %v2502
  %v2767 = vsub.f32 %v2494, %v2503
  %v2768 = vsub.f32 %v2495, %v2504
  %v2769 = vsub.f32 %v2496, %v2505
  %v2770 = vsub.f32 %v2497, %v2506
  %v2771 = vsub.f32 %v2498, %v2507
  %v2772 = vsub.f32 %v2499, %v2508
  %v2773 = vsub.f32 %v2500, %v2509
  %v2774 = vld [vmem:[%s19] sm:$0xff]
  %v2776 = vperm.slane %v2774, 0
  %v2777 = vperm.slane %v2774, 1
  %v2778 = vperm.slane %v2774, 2
  %v2779 = vperm.slane %v2774, 3
  %v2780 = vperm.slane %v2774, 4
  %v2781 = vperm.slane %v2774, 5
  %v2782 = vperm.slane %v2774, 6
  %v2783 = vperm.slane %v2774, 7
  %v2792 = vmul.f32 %v2518, %v2776
  %v2793 = vmul.f32 %v2519, %v2777
  %v2794 = vmul.f32 %v2520, %v2778
  %v2795 = vmul.f32 %v2521, %v2779
  %v2796 = vmul.f32 %v2522, %v2780
  %v2797 = vmul.f32 %v2523, %v2781
  %v2798 = vmul.f32 %v2524, %v2782
  %v2799 = vmul.f32 %v2525, %v2783
  %v2800 = vmul.f32 %v2526, %v2776
  %v2801 = vmul.f32 %v2527, %v2777
  %v2802 = vmul.f32 %v2528, %v2778
  %v2803 = vmul.f32 %v2529, %v2779
  %v2804 = vmul.f32 %v2530, %v2780
  %v2805 = vmul.f32 %v2531, %v2781
  %v2806 = vmul.f32 %v2532, %v2782
  %v2807 = vmul.f32 %v2533, %v2783
  %v2808 = vmul.f32 %v2534, %v2776
  %v2809 = vmul.f32 %v2535, %v2777
  %v2810 = vmul.f32 %v2536, %v2778
  %v2811 = vmul.f32 %v2537, %v2779
  %v2812 = vmul.f32 %v2538, %v2780
  %v2813 = vmul.f32 %v2539, %v2781
  %v2814 = vmul.f32 %v2540, %v2782
  %v2815 = vmul.f32 %v2541, %v2783
  %v2816 = vmul.f32 %v2542, %v2776
  %v2817 = vmul.f32 %v2543, %v2777
  %v2818 = vmul.f32 %v2544, %v2778
  %v2819 = vmul.f32 %v2545, %v2779
  %v2820 = vmul.f32 %v2546, %v2780
  %v2821 = vmul.f32 %v2547, %v2781
  %v2822 = vmul.f32 %v2548, %v2782
  %v2823 = vmul.f32 %v2549, %v2783
  %v2824 = vmul.f32 %v2550, %v2776
  %v2825 = vmul.f32 %v2551, %v2777
  %v2826 = vmul.f32 %v2552, %v2778
  %v2827 = vmul.f32 %v2553, %v2779
  %v2828 = vmul.f32 %v2554, %v2780
  %v2829 = vmul.f32 %v2555, %v2781
  %v2830 = vmul.f32 %v2556, %v2782
  %v2831 = vmul.f32 %v2557, %v2783
  %v2832 = vmul.f32 %v2558, %v2776
  %v2833 = vmul.f32 %v2559, %v2777
  %v2834 = vmul.f32 %v2560, %v2778
  %v2835 = vmul.f32 %v2561, %v2779
  %v2836 = vmul.f32 %v2562, %v2780
  %v2837 = vmul.f32 %v2563, %v2781
  %v2838 = vmul.f32 %v2564, %v2782
  %v2839 = vmul.f32 %v2565, %v2783
  %v2840 = vmul.f32 %v2566, %v2776
  %v2841 = vmul.f32 %v2567, %v2777
  %v2842 = vmul.f32 %v2568, %v2778
  %v2843 = vmul.f32 %v2569, %v2779
  %v2844 = vmul.f32 %v2570, %v2780
  %v2845 = vmul.f32 %v2571, %v2781
  %v2846 = vmul.f32 %v2572, %v2782
  %v2847 = vmul.f32 %v2573, %v2783
  %v2848 = vmul.f32 %v2574, %v2776
  %v2849 = vmul.f32 %v2575, %v2777
  %v2850 = vmul.f32 %v2576, %v2778
  %v2851 = vmul.f32 %v2577, %v2779
  %v2852 = vmul.f32 %v2578, %v2780
  %v2853 = vmul.f32 %v2579, %v2781
  %v2854 = vmul.f32 %v2580, %v2782
  %v2855 = vmul.f32 %v2581, %v2783
  %v2856 = vmul.f32 %v2582, %v2776
  %v2857 = vmul.f32 %v2583, %v2777
  %v2858 = vmul.f32 %v2584, %v2778
  %v2859 = vmul.f32 %v2585, %v2779
  %v2860 = vmul.f32 %v2586, %v2780
  %v2861 = vmul.f32 %v2587, %v2781
  %v2862 = vmul.f32 %v2588, %v2782
  %v2863 = vmul.f32 %v2589, %v2783
  %v2864 = vmul.f32 %v2590, %v2776
  %v2865 = vmul.f32 %v2591, %v2777
  %v2866 = vmul.f32 %v2592, %v2778
  %v2867 = vmul.f32 %v2593, %v2779
  %v2868 = vmul.f32 %v2594, %v2780
  %v2869 = vmul.f32 %v2595, %v2781
  %v2870 = vmul.f32 %v2596, %v2782
  %v2871 = vmul.f32 %v2597, %v2783
  %v2872 = vmul.f32 %v2598, %v2776
  %v2873 = vmul.f32 %v2599, %v2777
  %v2874 = vmul.f32 %v2600, %v2778
  %v2875 = vmul.f32 %v2601, %v2779
  %v2876 = vmul.f32 %v2602, %v2780
  %v2877 = vmul.f32 %v2603, %v2781
  %v2878 = vmul.f32 %v2604, %v2782
  %v2879 = vmul.f32 %v2605, %v2783
  %v2880 = vmul.f32 %v2606, %v2776
  %v2881 = vmul.f32 %v2607, %v2777
  %v2882 = vmul.f32 %v2608, %v2778
  %v2883 = vmul.f32 %v2609, %v2779
  %v2884 = vmul.f32 %v2610, %v2780
  %v2885 = vmul.f32 %v2611, %v2781
  %v2886 = vmul.f32 %v2612, %v2782
  %v2887 = vmul.f32 %v2613, %v2783
  %v2888 = vmul.f32 %v2614, %v2776
  %v2889 = vmul.f32 %v2615, %v2777
  %v2890 = vmul.f32 %v2616, %v2778
  %v2891 = vmul.f32 %v2617, %v2779
  %v2892 = vmul.f32 %v2618, %v2780
  %v2893 = vmul.f32 %v2619, %v2781
  %v2894 = vmul.f32 %v2620, %v2782
  %v2895 = vmul.f32 %v2621, %v2783
  %v2896 = vmul.f32 %v2622, %v2776
  %v2897 = vmul.f32 %v2623, %v2777
  %v2898 = vmul.f32 %v2624, %v2778
  %v2899 = vmul.f32 %v2625, %v2779
  %v2900 = vmul.f32 %v2626, %v2780
  %v2901 = vmul.f32 %v2627, %v2781
  %v2902 = vmul.f32 %v2628, %v2782
  %v2903 = vmul.f32 %v2629, %v2783
  %v2904 = vmul.f32 %v2630, %v2776
  %v2905 = vmul.f32 %v2631, %v2777
  %v2906 = vmul.f32 %v2632, %v2778
  %v2907 = vmul.f32 %v2633, %v2779
  %v2908 = vmul.f32 %v2634, %v2780
  %v2909 = vmul.f32 %v2635, %v2781
  %v2910 = vmul.f32 %v2636, %v2782
  %v2911 = vmul.f32 %v2637, %v2783
  %v2912 = vmul.f32 %v2638, %v2776
  %v2913 = vmul.f32 %v2639, %v2777
  %v2914 = vmul.f32 %v2640, %v2778
  %v2915 = vmul.f32 %v2641, %v2779
  %v2916 = vmul.f32 %v2642, %v2780
  %v2917 = vmul.f32 %v2643, %v2781
  %v2918 = vmul.f32 %v2644, %v2782
  %v2919 = vmul.f32 %v2645, %v2783
  %v2920 = vmul.f32 %v2646, %v2776
  %v2921 = vmul.f32 %v2647, %v2777
  %v2922 = vmul.f32 %v2648, %v2778
  %v2923 = vmul.f32 %v2649, %v2779
  %v2924 = vmul.f32 %v2650, %v2780
  %v2925 = vmul.f32 %v2651, %v2781
  %v2926 = vmul.f32 %v2652, %v2782
  %v2927 = vmul.f32 %v2653, %v2783
  %v2928 = vmul.f32 %v2654, %v2776
  %v2929 = vmul.f32 %v2655, %v2777
  %v2930 = vmul.f32 %v2656, %v2778
  %v2931 = vmul.f32 %v2657, %v2779
  %v2932 = vmul.f32 %v2658, %v2780
  %v2933 = vmul.f32 %v2659, %v2781
  %v2934 = vmul.f32 %v2660, %v2782
  %v2935 = vmul.f32 %v2661, %v2783
  %v2936 = vmul.f32 %v2662, %v2776
  %v2937 = vmul.f32 %v2663, %v2777
  %v2938 = vmul.f32 %v2664, %v2778
  %v2939 = vmul.f32 %v2665, %v2779
  %v2940 = vmul.f32 %v2666, %v2780
  %v2941 = vmul.f32 %v2667, %v2781
  %v2942 = vmul.f32 %v2668, %v2782
  %v2943 = vmul.f32 %v2669, %v2783
  %v2944 = vmul.f32 %v2670, %v2776
  %v2945 = vmul.f32 %v2671, %v2777
  %v2946 = vmul.f32 %v2672, %v2778
  %v2947 = vmul.f32 %v2673, %v2779
  %v2948 = vmul.f32 %v2674, %v2780
  %v2949 = vmul.f32 %v2675, %v2781
  %v2950 = vmul.f32 %v2676, %v2782
  %v2951 = vmul.f32 %v2677, %v2783
  %v2952 = vmul.f32 %v2678, %v2776
  %v2953 = vmul.f32 %v2679, %v2777
  %v2954 = vmul.f32 %v2680, %v2778
  %v2955 = vmul.f32 %v2681, %v2779
  %v2956 = vmul.f32 %v2682, %v2780
  %v2957 = vmul.f32 %v2683, %v2781
  %v2958 = vmul.f32 %v2684, %v2782
  %v2959 = vmul.f32 %v2685, %v2783
  %v2960 = vmul.f32 %v2686, %v2776
  %v2961 = vmul.f32 %v2687, %v2777
  %v2962 = vmul.f32 %v2688, %v2778
  %v2963 = vmul.f32 %v2689, %v2779
  %v2964 = vmul.f32 %v2690, %v2780
  %v2965 = vmul.f32 %v2691, %v2781
  %v2966 = vmul.f32 %v2692, %v2782
  %v2967 = vmul.f32 %v2693, %v2783
  %v2968 = vmul.f32 %v2694, %v2776
  %v2969 = vmul.f32 %v2695, %v2777
  %v2970 = vmul.f32 %v2696, %v2778
  %v2971 = vmul.f32 %v2697, %v2779
  %v2972 = vmul.f32 %v2698, %v2780
  %v2973 = vmul.f32 %v2699, %v2781
  %v2974 = vmul.f32 %v2700, %v2782
  %v2975 = vmul.f32 %v2701, %v2783
  %v2976 = vmul.f32 %v2702, %v2776
  %v2977 = vmul.f32 %v2703, %v2777
  %v2978 = vmul.f32 %v2704, %v2778
  %v2979 = vmul.f32 %v2705, %v2779
  %v2980 = vmul.f32 %v2706, %v2780
  %v2981 = vmul.f32 %v2707, %v2781
  %v2982 = vmul.f32 %v2708, %v2782
  %v2983 = vmul.f32 %v2709, %v2783
  %v2984 = vmul.f32 %v2710, %v2776
  %v2985 = vmul.f32 %v2711, %v2777
  %v2986 = vmul.f32 %v2712, %v2778
  %v2987 = vmul.f32 %v2713, %v2779
  %v2988 = vmul.f32 %v2714, %v2780
  %v2989 = vmul.f32 %v2715, %v2781
  %v2990 = vmul.f32 %v2716, %v2782
  %v2991 = vmul.f32 %v2717, %v2783
  %v2992 = vmul.f32 %v2718, %v2776
  %v2993 = vmul.f32 %v2719, %v2777
  %v2994 = vmul.f32 %v2720, %v2778
  %v2995 = vmul.f32 %v2721, %v2779
  %v2996 = vmul.f32 %v2722, %v2780
  %v2997 = vmul.f32 %v2723, %v2781
  %v2998 = vmul.f32 %v2724, %v2782
  %v2999 = vmul.f32 %v2725, %v2783
  %v3000 = vmul.f32 %v2726, %v2776
  %v3001 = vmul.f32 %v2727, %v2777
  %v3002 = vmul.f32 %v2728, %v2778
  %v3003 = vmul.f32 %v2729, %v2779
  %v3004 = vmul.f32 %v2730, %v2780
  %v3005 = vmul.f32 %v2731, %v2781
  %v3006 = vmul.f32 %v2732, %v2782
  %v3007 = vmul.f32 %v2733, %v2783
  %v3008 = vmul.f32 %v2734, %v2776
  %v3009 = vmul.f32 %v2735, %v2777
  %v3010 = vmul.f32 %v2736, %v2778
  %v3011 = vmul.f32 %v2737, %v2779
  %v3012 = vmul.f32 %v2738, %v2780
  %v3013 = vmul.f32 %v2739, %v2781
  %v3014 = vmul.f32 %v2740, %v2782
  %v3015 = vmul.f32 %v2741, %v2783
  %v3016 = vmul.f32 %v2742, %v2776
  %v3017 = vmul.f32 %v2743, %v2777
  %v3018 = vmul.f32 %v2744, %v2778
  %v3019 = vmul.f32 %v2745, %v2779
  %v3020 = vmul.f32 %v2746, %v2780
  %v3021 = vmul.f32 %v2747, %v2781
  %v3022 = vmul.f32 %v2748, %v2782
  %v3023 = vmul.f32 %v2749, %v2783
  %v3024 = vmul.f32 %v2750, %v2776
  %v3025 = vmul.f32 %v2751, %v2777
  %v3026 = vmul.f32 %v2752, %v2778
  %v3027 = vmul.f32 %v2753, %v2779
  %v3028 = vmul.f32 %v2754, %v2780
  %v3029 = vmul.f32 %v2755, %v2781
  %v3030 = vmul.f32 %v2756, %v2782
  %v3031 = vmul.f32 %v2757, %v2783
  %v3032 = vmul.f32 %v2758, %v2776
  %v3033 = vmul.f32 %v2759, %v2777
  %v3034 = vmul.f32 %v2760, %v2778
  %v3035 = vmul.f32 %v2761, %v2779
  %v3036 = vmul.f32 %v2762, %v2780
  %v3037 = vmul.f32 %v2763, %v2781
  %v3038 = vmul.f32 %v2764, %v2782
  %v3039 = vmul.f32 %v2765, %v2783
  %v3040 = vmul.f32 %v2766, %v2776
  %v3041 = vmul.f32 %v2767, %v2777
  %v3042 = vmul.f32 %v2768, %v2778
  %v3043 = vmul.f32 %v2769, %v2779
  %v3044 = vmul.f32 %v2770, %v2780
  %v3045 = vmul.f32 %v2771, %v2781
  %v3046 = vmul.f32 %v2772, %v2782
  %v3047 = vmul.f32 %v2773, %v2783
  %v3048 = vmul.f32 %v2792, %v2792
  %v3049 = vmul.f32 %v2793, %v2793
  %v3050 = vmul.f32 %v2794, %v2794
  %v3051 = vmul.f32 %v2795, %v2795
  %v3052 = vmul.f32 %v2796, %v2796
  %v3053 = vmul.f32 %v2797, %v2797
  %v3054 = vmul.f32 %v2798, %v2798
  %v3055 = vmul.f32 %v2799, %v2799
  %v3056 = vmul.f32 %v2800, %v2800
  %v3057 = vmul.f32 %v2801, %v2801
  %v3058 = vmul.f32 %v2802, %v2802
  %v3059 = vmul.f32 %v2803, %v2803
  %v3060 = vmul.f32 %v2804, %v2804
  %v3061 = vmul.f32 %v2805, %v2805
  %v3062 = vmul.f32 %v2806, %v2806
  %v3063 = vmul.f32 %v2807, %v2807
  %v3064 = vmul.f32 %v2808, %v2808
  %v3065 = vmul.f32 %v2809, %v2809
  %v3066 = vmul.f32 %v2810, %v2810
  %v3067 = vmul.f32 %v2811, %v2811
  %v3068 = vmul.f32 %v2812, %v2812
  %v3069 = vmul.f32 %v2813, %v2813
  %v3070 = vmul.f32 %v2814, %v2814
  %v3071 = vmul.f32 %v2815, %v2815
  %v3072 = vmul.f32 %v2816, %v2816
  %v3073 = vmul.f32 %v2817, %v2817
  %v3074 = vmul.f32 %v2818, %v2818
  %v3075 = vmul.f32 %v2819, %v2819
  %v3076 = vmul.f32 %v2820, %v2820
  %v3077 = vmul.f32 %v2821, %v2821
  %v3078 = vmul.f32 %v2822, %v2822
  %v3079 = vmul.f32 %v2823, %v2823
  %v3080 = vmul.f32 %v2824, %v2824
  %v3081 = vmul.f32 %v2825, %v2825
  %v3082 = vmul.f32 %v2826, %v2826
  %v3083 = vmul.f32 %v2827, %v2827
  %v3084 = vmul.f32 %v2828, %v2828
  %v3085 = vmul.f32 %v2829, %v2829
  %v3086 = vmul.f32 %v2830, %v2830
  %v3087 = vmul.f32 %v2831, %v2831
  %v3088 = vmul.f32 %v2832, %v2832
  %v3089 = vmul.f32 %v2833, %v2833
  %v3090 = vmul.f32 %v2834, %v2834
  %v3091 = vmul.f32 %v2835, %v2835
  %v3092 = vmul.f32 %v2836, %v2836
  %v3093 = vmul.f32 %v2837, %v2837
  %v3094 = vmul.f32 %v2838, %v2838
  %v3095 = vmul.f32 %v2839, %v2839
  %v3096 = vmul.f32 %v2840, %v2840
  %v3097 = vmul.f32 %v2841, %v2841
  %v3098 = vmul.f32 %v2842, %v2842
  %v3099 = vmul.f32 %v2843, %v2843
  %v3100 = vmul.f32 %v2844, %v2844
  %v3101 = vmul.f32 %v2845, %v2845
  %v3102 = vmul.f32 %v2846, %v2846
  %v3103 = vmul.f32 %v2847, %v2847
  %v3104 = vmul.f32 %v2848, %v2848
  %v3105 = vmul.f32 %v2849, %v2849
  %v3106 = vmul.f32 %v2850, %v2850
  %v3107 = vmul.f32 %v2851, %v2851
  %v3108 = vmul.f32 %v2852, %v2852
  %v3109 = vmul.f32 %v2853, %v2853
  %v3110 = vmul.f32 %v2854, %v2854
  %v3111 = vmul.f32 %v2855, %v2855
  %v3112 = vmul.f32 %v2856, %v2856
  %v3113 = vmul.f32 %v2857, %v2857
  %v3114 = vmul.f32 %v2858, %v2858
  %v3115 = vmul.f32 %v2859, %v2859
  %v3116 = vmul.f32 %v2860, %v2860
  %v3117 = vmul.f32 %v2861, %v2861
  %v3118 = vmul.f32 %v2862, %v2862
  %v3119 = vmul.f32 %v2863, %v2863
  %v3120 = vmul.f32 %v2864, %v2864
  %v3121 = vmul.f32 %v2865, %v2865
  %v3122 = vmul.f32 %v2866, %v2866
  %v3123 = vmul.f32 %v2867, %v2867
  %v3124 = vmul.f32 %v2868, %v2868
  %v3125 = vmul.f32 %v2869, %v2869
  %v3126 = vmul.f32 %v2870, %v2870
  %v3127 = vmul.f32 %v2871, %v2871
  %v3128 = vmul.f32 %v2872, %v2872
  %v3129 = vmul.f32 %v2873, %v2873
  %v3130 = vmul.f32 %v2874, %v2874
  %v3131 = vmul.f32 %v2875, %v2875
  %v3132 = vmul.f32 %v2876, %v2876
  %v3133 = vmul.f32 %v2877, %v2877
  %v3134 = vmul.f32 %v2878, %v2878
  %v3135 = vmul.f32 %v2879, %v2879
  %v3136 = vmul.f32 %v2880, %v2880
  %v3137 = vmul.f32 %v2881, %v2881
  %v3138 = vmul.f32 %v2882, %v2882
  %v3139 = vmul.f32 %v2883, %v2883
  %v3140 = vmul.f32 %v2884, %v2884
  %v3141 = vmul.f32 %v2885, %v2885
  %v3142 = vmul.f32 %v2886, %v2886
  %v3143 = vmul.f32 %v2887, %v2887
  %v3144 = vmul.f32 %v2888, %v2888
  %v3145 = vmul.f32 %v2889, %v2889
  %v3146 = vmul.f32 %v2890, %v2890
  %v3147 = vmul.f32 %v2891, %v2891
  %v3148 = vmul.f32 %v2892, %v2892
  %v3149 = vmul.f32 %v2893, %v2893
  %v3150 = vmul.f32 %v2894, %v2894
  %v3151 = vmul.f32 %v2895, %v2895
  %v3152 = vmul.f32 %v2896, %v2896
  %v3153 = vmul.f32 %v2897, %v2897
  %v3154 = vmul.f32 %v2898, %v2898
  %v3155 = vmul.f32 %v2899, %v2899
  %v3156 = vmul.f32 %v2900, %v2900
  %v3157 = vmul.f32 %v2901, %v2901
  %v3158 = vmul.f32 %v2902, %v2902
  %v3159 = vmul.f32 %v2903, %v2903
  %v3160 = vmul.f32 %v2904, %v2904
  %v3161 = vmul.f32 %v2905, %v2905
  %v3162 = vmul.f32 %v2906, %v2906
  %v3163 = vmul.f32 %v2907, %v2907
  %v3164 = vmul.f32 %v2908, %v2908
  %v3165 = vmul.f32 %v2909, %v2909
  %v3166 = vmul.f32 %v2910, %v2910
  %v3167 = vmul.f32 %v2911, %v2911
  %v3168 = vmul.f32 %v2912, %v2912
  %v3169 = vmul.f32 %v2913, %v2913
  %v3170 = vmul.f32 %v2914, %v2914
  %v3171 = vmul.f32 %v2915, %v2915
  %v3172 = vmul.f32 %v2916, %v2916
  %v3173 = vmul.f32 %v2917, %v2917
  %v3174 = vmul.f32 %v2918, %v2918
  %v3175 = vmul.f32 %v2919, %v2919
  %v3176 = vmul.f32 %v2920, %v2920
  %v3177 = vmul.f32 %v2921, %v2921
  %v3178 = vmul.f32 %v2922, %v2922
  %v3179 = vmul.f32 %v2923, %v2923
  %v3180 = vmul.f32 %v2924, %v2924
  %v3181 = vmul.f32 %v2925, %v2925
  %v3182 = vmul.f32 %v2926, %v2926
  %v3183 = vmul.f32 %v2927, %v2927
  %v3184 = vmul.f32 %v2928, %v2928
  %v3185 = vmul.f32 %v2929, %v2929
  %v3186 = vmul.f32 %v2930, %v2930
  %v3187 = vmul.f32 %v2931, %v2931
  %v3188 = vmul.f32 %v2932, %v2932
  %v3189 = vmul.f32 %v2933, %v2933
  %v3190 = vmul.f32 %v2934, %v2934
  %v3191 = vmul.f32 %v2935, %v2935
  %v3192 = vmul.f32 %v2936, %v2936
  %v3193 = vmul.f32 %v2937, %v2937
  %v3194 = vmul.f32 %v2938, %v2938
  %v3195 = vmul.f32 %v2939, %v2939
  %v3196 = vmul.f32 %v2940, %v2940
  %v3197 = vmul.f32 %v2941, %v2941
  %v3198 = vmul.f32 %v2942, %v2942
  %v3199 = vmul.f32 %v2943, %v2943
  %v3200 = vmul.f32 %v2944, %v2944
  %v3201 = vmul.f32 %v2945, %v2945
  %v3202 = vmul.f32 %v2946, %v2946
  %v3203 = vmul.f32 %v2947, %v2947
  %v3204 = vmul.f32 %v2948, %v2948
  %v3205 = vmul.f32 %v2949, %v2949
  %v3206 = vmul.f32 %v2950, %v2950
  %v3207 = vmul.f32 %v2951, %v2951
  %v3208 = vmul.f32 %v2952, %v2952
  %v3209 = vmul.f32 %v2953, %v2953
  %v3210 = vmul.f32 %v2954, %v2954
  %v3211 = vmul.f32 %v2955, %v2955
  %v3212 = vmul.f32 %v2956, %v2956
  %v3213 = vmul.f32 %v2957, %v2957
  %v3214 = vmul.f32 %v2958, %v2958
  %v3215 = vmul.f32 %v2959, %v2959
  %v3216 = vmul.f32 %v2960, %v2960
  %v3217 = vmul.f32 %v2961, %v2961
  %v3218 = vmul.f32 %v2962, %v2962
  %v3219 = vmul.f32 %v2963, %v2963
  %v3220 = vmul.f32 %v2964, %v2964
  %v3221 = vmul.f32 %v2965, %v2965
  %v3222 = vmul.f32 %v2966, %v2966
  %v3223 = vmul.f32 %v2967, %v2967
  %v3224 = vmul.f32 %v2968, %v2968
  %v3225 = vmul.f32 %v2969, %v2969
  %v3226 = vmul.f32 %v2970, %v2970
  %v3227 = vmul.f32 %v2971, %v2971
  %v3228 = vmul.f32 %v2972, %v2972
  %v3229 = vmul.f32 %v2973, %v2973
  %v3230 = vmul.f32 %v2974, %v2974
  %v3231 = vmul.f32 %v2975, %v2975
  %v3232 = vmul.f32 %v2976, %v2976
  %v3233 = vmul.f32 %v2977, %v2977
  %v3234 = vmul.f32 %v2978, %v2978
  %v3235 = vmul.f32 %v2979, %v2979
  %v3236 = vmul.f32 %v2980, %v2980
  %v3237 = vmul.f32 %v2981, %v2981
  %v3238 = vmul.f32 %v2982, %v2982
  %v3239 = vmul.f32 %v2983, %v2983
  %v3240 = vmul.f32 %v2984, %v2984
  %v3241 = vmul.f32 %v2985, %v2985
  %v3242 = vmul.f32 %v2986, %v2986
  %v3243 = vmul.f32 %v2987, %v2987
  %v3244 = vmul.f32 %v2988, %v2988
  %v3245 = vmul.f32 %v2989, %v2989
  %v3246 = vmul.f32 %v2990, %v2990
  %v3247 = vmul.f32 %v2991, %v2991
  %v3248 = vmul.f32 %v2992, %v2992
  %v3249 = vmul.f32 %v2993, %v2993
  %v3250 = vmul.f32 %v2994, %v2994
  %v3251 = vmul.f32 %v2995, %v2995
  %v3252 = vmul.f32 %v2996, %v2996
  %v3253 = vmul.f32 %v2997, %v2997
  %v3254 = vmul.f32 %v2998, %v2998
  %v3255 = vmul.f32 %v2999, %v2999
  %v3256 = vmul.f32 %v3000, %v3000
  %v3257 = vmul.f32 %v3001, %v3001
  %v3258 = vmul.f32 %v3002, %v3002
  %v3259 = vmul.f32 %v3003, %v3003
  %v3260 = vmul.f32 %v3004, %v3004
  %v3261 = vmul.f32 %v3005, %v3005
  %v3262 = vmul.f32 %v3006, %v3006
  %v3263 = vmul.f32 %v3007, %v3007
  %v3264 = vmul.f32 %v3008, %v3008
  %v3265 = vmul.f32 %v3009, %v3009
  %v3266 = vmul.f32 %v3010, %v3010
  %v3267 = vmul.f32 %v3011, %v3011
  %v3268 = vmul.f32 %v3012, %v3012
  %v3269 = vmul.f32 %v3013, %v3013
  %v3270 = vmul.f32 %v3014, %v3014
  %v3271 = vmul.f32 %v3015, %v3015
  %v3272 = vmul.f32 %v3016, %v3016
  %v3273 = vmul.f32 %v3017, %v3017
  %v3274 = vmul.f32 %v3018, %v3018
  %v3275 = vmul.f32 %v3019, %v3019
  %v3276 = vmul.f32 %v3020, %v3020
  %v3277 = vmul.f32 %v3021, %v3021
  %v3278 = vmul.f32 %v3022, %v3022
  %v3279 = vmul.f32 %v3023, %v3023
  %v3280 = vmul.f32 %v3024, %v3024
  %v3281 = vmul.f32 %v3025, %v3025
  %v3282 = vmul.f32 %v3026, %v3026
  %v3283 = vmul.f32 %v3027, %v3027
  %v3284 = vmul.f32 %v3028, %v3028
  %v3285 = vmul.f32 %v3029, %v3029
  %v3286 = vmul.f32 %v3030, %v3030
  %v3287 = vmul.f32 %v3031, %v3031
  %v3288 = vmul.f32 %v3032, %v3032
  %v3289 = vmul.f32 %v3033, %v3033
  %v3290 = vmul.f32 %v3034, %v3034
  %v3291 = vmul.f32 %v3035, %v3035
  %v3292 = vmul.f32 %v3036, %v3036
  %v3293 = vmul.f32 %v3037, %v3037
  %v3294 = vmul.f32 %v3038, %v3038
  %v3295 = vmul.f32 %v3039, %v3039
  %v3296 = vmul.f32 %v3040, %v3040
  %v3297 = vmul.f32 %v3041, %v3041
  %v3298 = vmul.f32 %v3042, %v3042
  %v3299 = vmul.f32 %v3043, %v3043
  %v3300 = vmul.f32 %v3044, %v3044
  %v3301 = vmul.f32 %v3045, %v3045
  %v3302 = vmul.f32 %v3046, %v3046
  %v3303 = vmul.f32 %v3047, %v3047
  %v3304 = vadd.f32 %v3048, %v3049
  %v3305 = vadd.f32 %v3304, %v3050
  %v3306 = vadd.f32 %v3305, %v3051
  %v3307 = vadd.f32 %v3306, %v3052
  %v3308 = vadd.f32 %v3307, %v3053
  %v3309 = vadd.f32 %v3308, %v3054
  %v3310 = vadd.f32 %v3309, %v3055
  %3311 = vadd.xlane.f32.xlu0 %v3310
  %v3312 = vpop.xlane.xlu0 %3311
  %v3313 = vadd.f32 %v3056, %v3057
  %v3314 = vadd.f32 %v3313, %v3058
  %v3315 = vadd.f32 %v3314, %v3059
  %v3316 = vadd.f32 %v3315, %v3060
  %v3317 = vadd.f32 %v3316, %v3061
  %v3318 = vadd.f32 %v3317, %v3062
  %v3319 = vadd.f32 %v3318, %v3063
  %3320 = vadd.xlane.f32.xlu0 %v3319
  %v3321 = vpop.xlane.xlu0 %3320
  %v3322 = vadd.f32 %v3064, %v3065
  %v3323 = vadd.f32 %v3322, %v3066
  %v3324 = vadd.f32 %v3323, %v3067
  %v3325 = vadd.f32 %v3324, %v3068
  %v3326 = vadd.f32 %v3325, %v3069
  %v3327 = vadd.f32 %v3326, %v3070
  %v3328 = vadd.f32 %v3327, %v3071
  %3329 = vadd.xlane.f32.xlu0 %v3328
  %v3330 = vpop.xlane.xlu0 %3329
  %v3331 = vadd.f32 %v3072, %v3073
  %v3332 = vadd.f32 %v3331, %v3074
  %v3333 = vadd.f32 %v3332, %v3075
  %v3334 = vadd.f32 %v3333, %v3076
  %v3335 = vadd.f32 %v3334, %v3077
  %v3336 = vadd.f32 %v3335, %v3078
  %v3337 = vadd.f32 %v3336, %v3079
  %3338 = vadd.xlane.f32.xlu0 %v3337
  %v3339 = vpop.xlane.xlu0 %3338
  %v3340 = vadd.f32 %v3080, %v3081
  %v3341 = vadd.f32 %v3340, %v3082
  %v3342 = vadd.f32 %v3341, %v3083
  %v3343 = vadd.f32 %v3342, %v3084
  %v3344 = vadd.f32 %v3343, %v3085
  %v3345 = vadd.f32 %v3344, %v3086
  %v3346 = vadd.f32 %v3345, %v3087
  %3347 = vadd.xlane.f32.xlu0 %v3346
  %v3348 = vpop.xlane.xlu0 %3347
  %v3349 = vadd.f32 %v3088, %v3089
  %v3350 = vadd.f32 %v3349, %v3090
  %v3351 = vadd.f32 %v3350, %v3091
  %v3352 = vadd.f32 %v3351, %v3092
  %v3353 = vadd.f32 %v3352, %v3093
  %v3354 = vadd.f32 %v3353, %v3094
  %v3355 = vadd.f32 %v3354, %v3095
  %3356 = vadd.xlane.f32.xlu0 %v3355
  %v3357 = vpop.xlane.xlu0 %3356
  %v3358 = vadd.f32 %v3096, %v3097
  %v3359 = vadd.f32 %v3358, %v3098
  %v3360 = vadd.f32 %v3359, %v3099
  %v3361 = vadd.f32 %v3360, %v3100
  %v3362 = vadd.f32 %v3361, %v3101
  %v3363 = vadd.f32 %v3362, %v3102
  %v3364 = vadd.f32 %v3363, %v3103
  %3365 = vadd.xlane.f32.xlu0 %v3364
  %v3366 = vpop.xlane.xlu0 %3365
  %v3367 = vadd.f32 %v3104, %v3105
  %v3368 = vadd.f32 %v3367, %v3106
  %v3369 = vadd.f32 %v3368, %v3107
  %v3370 = vadd.f32 %v3369, %v3108
  %v3371 = vadd.f32 %v3370, %v3109
  %v3372 = vadd.f32 %v3371, %v3110
  %v3373 = vadd.f32 %v3372, %v3111
  %3374 = vadd.xlane.f32.xlu0 %v3373
  %v3375 = vpop.xlane.xlu0 %3374
  %v3376 = vadd.f32 %v3112, %v3113
  %v3377 = vadd.f32 %v3376, %v3114
  %v3378 = vadd.f32 %v3377, %v3115
  %v3379 = vadd.f32 %v3378, %v3116
  %v3380 = vadd.f32 %v3379, %v3117
  %v3381 = vadd.f32 %v3380, %v3118
  %v3382 = vadd.f32 %v3381, %v3119
  %3383 = vadd.xlane.f32.xlu0 %v3382
  %v3384 = vpop.xlane.xlu0 %3383
  %v3385 = vadd.f32 %v3120, %v3121
  %v3386 = vadd.f32 %v3385, %v3122
  %v3387 = vadd.f32 %v3386, %v3123
  %v3388 = vadd.f32 %v3387, %v3124
  %v3389 = vadd.f32 %v3388, %v3125
  %v3390 = vadd.f32 %v3389, %v3126
  %v3391 = vadd.f32 %v3390, %v3127
  %3392 = vadd.xlane.f32.xlu0 %v3391
  %v3393 = vpop.xlane.xlu0 %3392
  %v3394 = vadd.f32 %v3128, %v3129
  %v3395 = vadd.f32 %v3394, %v3130
  %v3396 = vadd.f32 %v3395, %v3131
  %v3397 = vadd.f32 %v3396, %v3132
  %v3398 = vadd.f32 %v3397, %v3133
  %v3399 = vadd.f32 %v3398, %v3134
  %v3400 = vadd.f32 %v3399, %v3135
  %3401 = vadd.xlane.f32.xlu0 %v3400
  %v3402 = vpop.xlane.xlu0 %3401
  %v3403 = vadd.f32 %v3136, %v3137
  %v3404 = vadd.f32 %v3403, %v3138
  %v3405 = vadd.f32 %v3404, %v3139
  %v3406 = vadd.f32 %v3405, %v3140
  %v3407 = vadd.f32 %v3406, %v3141
  %v3408 = vadd.f32 %v3407, %v3142
  %v3409 = vadd.f32 %v3408, %v3143
  %3410 = vadd.xlane.f32.xlu0 %v3409
  %v3411 = vpop.xlane.xlu0 %3410
  %v3412 = vadd.f32 %v3144, %v3145
  %v3413 = vadd.f32 %v3412, %v3146
  %v3414 = vadd.f32 %v3413, %v3147
  %v3415 = vadd.f32 %v3414, %v3148
  %v3416 = vadd.f32 %v3415, %v3149
  %v3417 = vadd.f32 %v3416, %v3150
  %v3418 = vadd.f32 %v3417, %v3151
  %3419 = vadd.xlane.f32.xlu0 %v3418
  %v3420 = vpop.xlane.xlu0 %3419
  %v3421 = vadd.f32 %v3152, %v3153
  %v3422 = vadd.f32 %v3421, %v3154
  %v3423 = vadd.f32 %v3422, %v3155
  %v3424 = vadd.f32 %v3423, %v3156
  %v3425 = vadd.f32 %v3424, %v3157
  %v3426 = vadd.f32 %v3425, %v3158
  %v3427 = vadd.f32 %v3426, %v3159
  %3428 = vadd.xlane.f32.xlu0 %v3427
  %v3429 = vpop.xlane.xlu0 %3428
  %v3430 = vadd.f32 %v3160, %v3161
  %v3431 = vadd.f32 %v3430, %v3162
  %v3432 = vadd.f32 %v3431, %v3163
  %v3433 = vadd.f32 %v3432, %v3164
  %v3434 = vadd.f32 %v3433, %v3165
  %v3435 = vadd.f32 %v3434, %v3166
  %v3436 = vadd.f32 %v3435, %v3167
  %3437 = vadd.xlane.f32.xlu0 %v3436
  %v3438 = vpop.xlane.xlu0 %3437
  %v3439 = vadd.f32 %v3168, %v3169
  %v3440 = vadd.f32 %v3439, %v3170
  %v3441 = vadd.f32 %v3440, %v3171
  %v3442 = vadd.f32 %v3441, %v3172
  %v3443 = vadd.f32 %v3442, %v3173
  %v3444 = vadd.f32 %v3443, %v3174
  %v3445 = vadd.f32 %v3444, %v3175
  %3446 = vadd.xlane.f32.xlu0 %v3445
  %v3447 = vpop.xlane.xlu0 %3446
  %v3448 = vadd.f32 %v3176, %v3177
  %v3449 = vadd.f32 %v3448, %v3178
  %v3450 = vadd.f32 %v3449, %v3179
  %v3451 = vadd.f32 %v3450, %v3180
  %v3452 = vadd.f32 %v3451, %v3181
  %v3453 = vadd.f32 %v3452, %v3182
  %v3454 = vadd.f32 %v3453, %v3183
  %3455 = vadd.xlane.f32.xlu0 %v3454
  %v3456 = vpop.xlane.xlu0 %3455
  %v3457 = vadd.f32 %v3184, %v3185
  %v3458 = vadd.f32 %v3457, %v3186
  %v3459 = vadd.f32 %v3458, %v3187
  %v3460 = vadd.f32 %v3459, %v3188
  %v3461 = vadd.f32 %v3460, %v3189
  %v3462 = vadd.f32 %v3461, %v3190
  %v3463 = vadd.f32 %v3462, %v3191
  %3464 = vadd.xlane.f32.xlu0 %v3463
  %v3465 = vpop.xlane.xlu0 %3464
  %v3466 = vadd.f32 %v3192, %v3193
  %v3467 = vadd.f32 %v3466, %v3194
  %v3468 = vadd.f32 %v3467, %v3195
  %v3469 = vadd.f32 %v3468, %v3196
  %v3470 = vadd.f32 %v3469, %v3197
  %v3471 = vadd.f32 %v3470, %v3198
  %v3472 = vadd.f32 %v3471, %v3199
  %3473 = vadd.xlane.f32.xlu0 %v3472
  %v3474 = vpop.xlane.xlu0 %3473
  %v3475 = vadd.f32 %v3200, %v3201
  %v3476 = vadd.f32 %v3475, %v3202
  %v3477 = vadd.f32 %v3476, %v3203
  %v3478 = vadd.f32 %v3477, %v3204
  %v3479 = vadd.f32 %v3478, %v3205
  %v3480 = vadd.f32 %v3479, %v3206
  %v3481 = vadd.f32 %v3480, %v3207
  %3482 = vadd.xlane.f32.xlu0 %v3481
  %v3483 = vpop.xlane.xlu0 %3482
  %v3484 = vadd.f32 %v3208, %v3209
  %v3485 = vadd.f32 %v3484, %v3210
  %v3486 = vadd.f32 %v3485, %v3211
  %v3487 = vadd.f32 %v3486, %v3212
  %v3488 = vadd.f32 %v3487, %v3213
  %v3489 = vadd.f32 %v3488, %v3214
  %v3490 = vadd.f32 %v3489, %v3215
  %3491 = vadd.xlane.f32.xlu0 %v3490
  %v3492 = vpop.xlane.xlu0 %3491
  %v3493 = vadd.f32 %v3216, %v3217
  %v3494 = vadd.f32 %v3493, %v3218
  %v3495 = vadd.f32 %v3494, %v3219
  %v3496 = vadd.f32 %v3495, %v3220
  %v3497 = vadd.f32 %v3496, %v3221
  %v3498 = vadd.f32 %v3497, %v3222
  %v3499 = vadd.f32 %v3498, %v3223
  %3500 = vadd.xlane.f32.xlu0 %v3499
  %v3501 = vpop.xlane.xlu0 %3500
  %v3502 = vadd.f32 %v3224, %v3225
  %v3503 = vadd.f32 %v3502, %v3226
  %v3504 = vadd.f32 %v3503, %v3227
  %v3505 = vadd.f32 %v3504, %v3228
  %v3506 = vadd.f32 %v3505, %v3229
  %v3507 = vadd.f32 %v3506, %v3230
  %v3508 = vadd.f32 %v3507, %v3231
  %3509 = vadd.xlane.f32.xlu0 %v3508
  %v3510 = vpop.xlane.xlu0 %3509
  %v3511 = vadd.f32 %v3232, %v3233
  %v3512 = vadd.f32 %v3511, %v3234
  %v3513 = vadd.f32 %v3512, %v3235
  %v3514 = vadd.f32 %v3513, %v3236
  %v3515 = vadd.f32 %v3514, %v3237
  %v3516 = vadd.f32 %v3515, %v3238
  %v3517 = vadd.f32 %v3516, %v3239
  %3518 = vadd.xlane.f32.xlu0 %v3517
  %v3519 = vpop.xlane.xlu0 %3518
  %v3520 = vadd.f32 %v3240, %v3241
  %v3521 = vadd.f32 %v3520, %v3242
  %v3522 = vadd.f32 %v3521, %v3243
  %v3523 = vadd.f32 %v3522, %v3244
  %v3524 = vadd.f32 %v3523, %v3245
  %v3525 = vadd.f32 %v3524, %v3246
  %v3526 = vadd.f32 %v3525, %v3247
  %3527 = vadd.xlane.f32.xlu0 %v3526
  %v3528 = vpop.xlane.xlu0 %3527
  %v3529 = vadd.f32 %v3248, %v3249
  %v3530 = vadd.f32 %v3529, %v3250
  %v3531 = vadd.f32 %v3530, %v3251
  %v3532 = vadd.f32 %v3531, %v3252
  %v3533 = vadd.f32 %v3532, %v3253
  %v3534 = vadd.f32 %v3533, %v3254
  %v3535 = vadd.f32 %v3534, %v3255
  %3536 = vadd.xlane.f32.xlu0 %v3535
  %v3537 = vpop.xlane.xlu0 %3536
  %v3538 = vadd.f32 %v3256, %v3257
  %v3539 = vadd.f32 %v3538, %v3258
  %v3540 = vadd.f32 %v3539, %v3259
  %v3541 = vadd.f32 %v3540, %v3260
  %v3542 = vadd.f32 %v3541, %v3261
  %v3543 = vadd.f32 %v3542, %v3262
  %v3544 = vadd.f32 %v3543, %v3263
  %3545 = vadd.xlane.f32.xlu0 %v3544
  %v3546 = vpop.xlane.xlu0 %3545
  %v3547 = vadd.f32 %v3264, %v3265
  %v3548 = vadd.f32 %v3547, %v3266
  %v3549 = vadd.f32 %v3548, %v3267
  %v3550 = vadd.f32 %v3549, %v3268
  %v3551 = vadd.f32 %v3550, %v3269
  %v3552 = vadd.f32 %v3551, %v3270
  %v3553 = vadd.f32 %v3552, %v3271
  %3554 = vadd.xlane.f32.xlu0 %v3553
  %v3555 = vpop.xlane.xlu0 %3554
  %v3556 = vadd.f32 %v3272, %v3273
  %v3557 = vadd.f32 %v3556, %v3274
  %v3558 = vadd.f32 %v3557, %v3275
  %v3559 = vadd.f32 %v3558, %v3276
  %v3560 = vadd.f32 %v3559, %v3277
  %v3561 = vadd.f32 %v3560, %v3278
  %v3562 = vadd.f32 %v3561, %v3279
  %3563 = vadd.xlane.f32.xlu0 %v3562
  %v3564 = vpop.xlane.xlu0 %3563
  %v3565 = vadd.f32 %v3280, %v3281
  %v3566 = vadd.f32 %v3565, %v3282
  %v3567 = vadd.f32 %v3566, %v3283
  %v3568 = vadd.f32 %v3567, %v3284
  %v3569 = vadd.f32 %v3568, %v3285
  %v3570 = vadd.f32 %v3569, %v3286
  %v3571 = vadd.f32 %v3570, %v3287
  %3572 = vadd.xlane.f32.xlu0 %v3571
  %v3573 = vpop.xlane.xlu0 %3572
  %v3574 = vadd.f32 %v3288, %v3289
  %v3575 = vadd.f32 %v3574, %v3290
  %v3576 = vadd.f32 %v3575, %v3291
  %v3577 = vadd.f32 %v3576, %v3292
  %v3578 = vadd.f32 %v3577, %v3293
  %v3579 = vadd.f32 %v3578, %v3294
  %v3580 = vadd.f32 %v3579, %v3295
  %3581 = vadd.xlane.f32.xlu0 %v3580
  %v3582 = vpop.xlane.xlu0 %3581
  %v3583 = vadd.f32 %v3296, %v3297
  %v3584 = vadd.f32 %v3583, %v3298
  %v3585 = vadd.f32 %v3584, %v3299
  %v3586 = vadd.f32 %v3585, %v3300
  %v3587 = vadd.f32 %v3586, %v3301
  %v3588 = vadd.f32 %v3587, %v3302
  %v3589 = vadd.f32 %v3588, %v3303
  %3590 = vadd.xlane.f32.xlu0 %v3589
  %v3591 = vpop.xlane.xlu0 %3590
  %s3592 = sld [smem:[#allocation3]]
  %v3593 = vstv %s3592
  %v3594 = vsub.f32 %v3593, %v3312
  %v3595 = vsub.f32 %v3593, %v3321
  %v3596 = vsub.f32 %v3593, %v3330
  %v3597 = vsub.f32 %v3593, %v3339
  %v3598 = vsub.f32 %v3593, %v3348
  %v3599 = vsub.f32 %v3593, %v3357
  %v3600 = vsub.f32 %v3593, %v3366
  %v3601 = vsub.f32 %v3593, %v3375
  %v3602 = vsub.f32 %v3593, %v3384
  %v3603 = vsub.f32 %v3593, %v3393
  %v3604 = vsub.f32 %v3593, %v3402
  %v3605 = vsub.f32 %v3593, %v3411
  %v3606 = vsub.f32 %v3593, %v3420
  %v3607 = vsub.f32 %v3593, %v3429
  %v3608 = vsub.f32 %v3593, %v3438
  %v3609 = vsub.f32 %v3593, %v3447
  %v3610 = vsub.f32 %v3593, %v3456
  %v3611 = vsub.f32 %v3593, %v3465
  %v3612 = vsub.f32 %v3593, %v3474
  %v3613 = vsub.f32 %v3593, %v3483
  %v3614 = vsub.f32 %v3593, %v3492
  %v3615 = vsub.f32 %v3593, %v3501
  %v3616 = vsub.f32 %v3593, %v3510
  %v3617 = vsub.f32 %v3593, %v3519
  %v3618 = vsub.f32 %v3593, %v3528
  %v3619 = vsub.f32 %v3593, %v3537
  %v3620 = vsub.f32 %v3593, %v3546
  %v3621 = vsub.f32 %v3593, %v3555
  %v3622 = vsub.f32 %v3593, %v3564
  %v3623 = vsub.f32 %v3593, %v3573
  %v3624 = vsub.f32 %v3593, %v3582
  %v3625 = vsub.f32 %v3593, %v3591
  %v3626 = vld [vmem:[%s15] sm:$0x1]
  %v3627 = vmul.f32 %v2059, 2.0
  %v3628 = vmul.f32 %v2061, 2.0
  %v3629 = vmul.f32 %v2064, 2.0
  %v3630 = vmul.f32 %v2066, 2.0
  %v3631 = vmul.f32 %v2069, 2.0
  %v3632 = vmul.f32 %v2071, 2.0
  %v3633 = vmul.f32 %v2074, 2.0
  %v3634 = vmul.f32 %v2076, 2.0
  %v3635 = vmul.f32 %v2079, 2.0
  %v3636 = vmul.f32 %v2081, 2.0
  %v3637 = vmul.f32 %v2084, 2.0
  %v3638 = vmul.f32 %v2086, 2.0
  %v3639 = vmul.f32 %v2089, 2.0
  %v3640 = vmul.f32 %v2091, 2.0
  %v3641 = vmul.f32 %v2094, 2.0
  %v3642 = vmul.f32 %v2096, 2.0
  %v3643 = vmul.f32 %v2099, 2.0
  %v3644 = vmul.f32 %v2101, 2.0
  %v3645 = vmul.f32 %v2104, 2.0
  %v3646 = vmul.f32 %v2106, 2.0
  %v3647 = vmul.f32 %v2109, 2.0
  %v3648 = vmul.f32 %v2111, 2.0
  %v3649 = vmul.f32 %v2114, 2.0
  %v3650 = vmul.f32 %v2116, 2.0
  %v3651 = vmul.f32 %v2119, 2.0
  %v3652 = vmul.f32 %v2121, 2.0
  %v3653 = vmul.f32 %v2124, 2.0
  %v3654 = vmul.f32 %v2126, 2.0
  %v3655 = vmul.f32 %v2129, 2.0
  %v3656 = vmul.f32 %v2131, 2.0
  %v3657 = vmul.f32 %v2134, 2.0
  %v3658 = vmul.f32 %v2136, 2.0
  %v3660 = vperm.slane %v3626, 0
  %3694 = vrot.lane.b32.xlu0 %v3627, 56
  %v3695 = vpop.permute.xlu0 %3694
  %3696 = vrot.lane.b32.xlu0 %v3628, 56
  %v3697 = vpop.permute.xlu0 %3696
  %3698 = vrot.lane.b32.xlu0 %v3629, 56
  %v3699 = vpop.permute.xlu0 %3698
  %3700 = vrot.lane.b32.xlu0 %v3630, 56
  %v3701 = vpop.permute.xlu0 %3700
  %3702 = vrot.lane.b32.xlu0 %v3631, 56
  %v3703 = vpop.permute.xlu0 %3702
  %3704 = vrot.lane.b32.xlu0 %v3632, 56
  %v3705 = vpop.permute.xlu0 %3704
  %3706 = vrot.lane.b32.xlu0 %v3633, 56
  %v3707 = vpop.permute.xlu0 %3706
  %3708 = vrot.lane.b32.xlu0 %v3634, 56
  %v3709 = vpop.permute.xlu0 %3708
  %3710 = vrot.lane.b32.xlu0 %v3635, 56
  %v3711 = vpop.permute.xlu0 %3710
  %3712 = vrot.lane.b32.xlu0 %v3636, 56
  %v3713 = vpop.permute.xlu0 %3712
  %3714 = vrot.lane.b32.xlu0 %v3637, 56
  %v3715 = vpop.permute.xlu0 %3714
  %3716 = vrot.lane.b32.xlu0 %v3638, 56
  %v3717 = vpop.permute.xlu0 %3716
  %3718 = vrot.lane.b32.xlu0 %v3639, 56
  %v3719 = vpop.permute.xlu0 %3718
  %3720 = vrot.lane.b32.xlu0 %v3640, 56
  %v3721 = vpop.permute.xlu0 %3720
  %3722 = vrot.lane.b32.xlu0 %v3641, 56
  %v3723 = vpop.permute.xlu0 %3722
  %3724 = vrot.lane.b32.xlu0 %v3642, 56
  %v3725 = vpop.permute.xlu0 %3724
  %3726 = vrot.lane.b32.xlu0 %v3643, 56
  %v3727 = vpop.permute.xlu0 %3726
  %3728 = vrot.lane.b32.xlu0 %v3644, 56
  %v3729 = vpop.permute.xlu0 %3728
  %3730 = vrot.lane.b32.xlu0 %v3645, 56
  %v3731 = vpop.permute.xlu0 %3730
  %3732 = vrot.lane.b32.xlu0 %v3646, 56
  %v3733 = vpop.permute.xlu0 %3732
  %3734 = vrot.lane.b32.xlu0 %v3647, 56
  %v3735 = vpop.permute.xlu0 %3734
  %3736 = vrot.lane.b32.xlu0 %v3648, 56
  %v3737 = vpop.permute.xlu0 %3736
  %3738 = vrot.lane.b32.xlu0 %v3649, 56
  %v3739 = vpop.permute.xlu0 %3738
  %3740 = vrot.lane.b32.xlu0 %v3650, 56
  %v3741 = vpop.permute.xlu0 %3740
  %3742 = vrot.lane.b32.xlu0 %v3651, 56
  %v3743 = vpop.permute.xlu0 %3742
  %3744 = vrot.lane.b32.xlu0 %v3652, 56
  %v3745 = vpop.permute.xlu0 %3744
  %3746 = vrot.lane.b32.xlu0 %v3653, 56
  %v3747 = vpop.permute.xlu0 %3746
  %3748 = vrot.lane.b32.xlu0 %v3654, 56
  %v3749 = vpop.permute.xlu0 %3748
  %3750 = vrot.lane.b32.xlu0 %v3655, 56
  %v3751 = vpop.permute.xlu0 %3750
  %3752 = vrot.lane.b32.xlu0 %v3656, 56
  %v3753 = vpop.permute.xlu0 %3752
  %3754 = vrot.lane.b32.xlu0 %v3657, 56
  %v3755 = vpop.permute.xlu0 %3754
  %3756 = vrot.lane.b32.xlu0 %v3658, 56
  %v3757 = vpop.permute.xlu0 %3756
  %v3790 = vsub.f32 %v3660, %v3695
  %v3791 = vsub.f32 %v3660, %v3697
  %v3792 = vsub.f32 %v3660, %v3699
  %v3793 = vsub.f32 %v3660, %v3701
  %v3794 = vsub.f32 %v3660, %v3703
  %v3795 = vsub.f32 %v3660, %v3705
  %v3796 = vsub.f32 %v3660, %v3707
  %v3797 = vsub.f32 %v3660, %v3709
  %v3798 = vsub.f32 %v3660, %v3711
  %v3799 = vsub.f32 %v3660, %v3713
  %v3800 = vsub.f32 %v3660, %v3715
  %v3801 = vsub.f32 %v3660, %v3717
  %v3802 = vsub.f32 %v3660, %v3719
  %v3803 = vsub.f32 %v3660, %v3721
  %v3804 = vsub.f32 %v3660, %v3723
  %v3805 = vsub.f32 %v3660, %v3725
  %v3806 = vsub.f32 %v3660, %v3727
  %v3807 = vsub.f32 %v3660, %v3729
  %v3808 = vsub.f32 %v3660, %v3731
  %v3809 = vsub.f32 %v3660, %v3733
  %v3810 = vsub.f32 %v3660, %v3735
  %v3811 = vsub.f32 %v3660, %v3737
  %v3812 = vsub.f32 %v3660, %v3739
  %v3813 = vsub.f32 %v3660, %v3741
  %v3814 = vsub.f32 %v3660, %v3743
  %v3815 = vsub.f32 %v3660, %v3745
  %v3816 = vsub.f32 %v3660, %v3747
  %v3817 = vsub.f32 %v3660, %v3749
  %v3818 = vsub.f32 %v3660, %v3751
  %v3819 = vsub.f32 %v3660, %v3753
  %v3820 = vsub.f32 %v3660, %v3755
  %v3821 = vsub.f32 %v3660, %v3757
  %vm3822 = vcmask 130048
  %v3823 = vsel %vm3822, %v3790, inf
  %3824 = vmin.xlane.f32.xlu0 %v3823
  %v3825 = vpop.xlane.xlu0 %3824
  %v3826 = vsel %vm3822, %v3791, inf
  %3827 = vmin.xlane.f32.xlu0 %v3826
  %v3828 = vpop.xlane.xlu0 %3827
  %v3829 = vsel %vm3822, %v3792, inf
  %3830 = vmin.xlane.f32.xlu0 %v3829
  %v3831 = vpop.xlane.xlu0 %3830
  %v3832 = vsel %vm3822, %v3793, inf
  %3833 = vmin.xlane.f32.xlu0 %v3832
  %v3834 = vpop.xlane.xlu0 %3833
  %v3835 = vsel %vm3822, %v3794, inf
  %3836 = vmin.xlane.f32.xlu0 %v3835
  %v3837 = vpop.xlane.xlu0 %3836
  %v3838 = vsel %vm3822, %v3795, inf
  %3839 = vmin.xlane.f32.xlu0 %v3838
  %v3840 = vpop.xlane.xlu0 %3839
  %v3841 = vsel %vm3822, %v3796, inf
  %3842 = vmin.xlane.f32.xlu0 %v3841
  %v3843 = vpop.xlane.xlu0 %3842
  %v3844 = vsel %vm3822, %v3797, inf
  %3845 = vmin.xlane.f32.xlu0 %v3844
  %v3846 = vpop.xlane.xlu0 %3845
  %v3847 = vsel %vm3822, %v3798, inf
  %3848 = vmin.xlane.f32.xlu0 %v3847
  %v3849 = vpop.xlane.xlu0 %3848
  %v3850 = vsel %vm3822, %v3799, inf
  %3851 = vmin.xlane.f32.xlu0 %v3850
  %v3852 = vpop.xlane.xlu0 %3851
  %v3853 = vsel %vm3822, %v3800, inf
  %3854 = vmin.xlane.f32.xlu0 %v3853
  %v3855 = vpop.xlane.xlu0 %3854
  %v3856 = vsel %vm3822, %v3801, inf
  %3857 = vmin.xlane.f32.xlu0 %v3856
  %v3858 = vpop.xlane.xlu0 %3857
  %v3859 = vsel %vm3822, %v3802, inf
  %3860 = vmin.xlane.f32.xlu0 %v3859
  %v3861 = vpop.xlane.xlu0 %3860
  %v3862 = vsel %vm3822, %v3803, inf
  %3863 = vmin.xlane.f32.xlu0 %v3862
  %v3864 = vpop.xlane.xlu0 %3863
  %v3865 = vsel %vm3822, %v3804, inf
  %3866 = vmin.xlane.f32.xlu0 %v3865
  %v3867 = vpop.xlane.xlu0 %3866
  %v3868 = vsel %vm3822, %v3805, inf
  %3869 = vmin.xlane.f32.xlu0 %v3868
  %v3870 = vpop.xlane.xlu0 %3869
  %v3871 = vsel %vm3822, %v3806, inf
  %3872 = vmin.xlane.f32.xlu0 %v3871
  %v3873 = vpop.xlane.xlu0 %3872
  %v3874 = vsel %vm3822, %v3807, inf
  %3875 = vmin.xlane.f32.xlu0 %v3874
  %v3876 = vpop.xlane.xlu0 %3875
  %v3877 = vsel %vm3822, %v3808, inf
  %3878 = vmin.xlane.f32.xlu0 %v3877
  %v3879 = vpop.xlane.xlu0 %3878
  %v3880 = vsel %vm3822, %v3809, inf
  %3881 = vmin.xlane.f32.xlu0 %v3880
  %v3882 = vpop.xlane.xlu0 %3881
  %v3883 = vsel %vm3822, %v3810, inf
  %3884 = vmin.xlane.f32.xlu0 %v3883
  %v3885 = vpop.xlane.xlu0 %3884
  %v3886 = vsel %vm3822, %v3811, inf
  %3887 = vmin.xlane.f32.xlu0 %v3886
  %v3888 = vpop.xlane.xlu0 %3887
  %v3889 = vsel %vm3822, %v3812, inf
  %3890 = vmin.xlane.f32.xlu0 %v3889
  %v3891 = vpop.xlane.xlu0 %3890
  %v3892 = vsel %vm3822, %v3813, inf
  %3893 = vmin.xlane.f32.xlu0 %v3892
  %v3894 = vpop.xlane.xlu0 %3893
  %v3895 = vsel %vm3822, %v3814, inf
  %3896 = vmin.xlane.f32.xlu0 %v3895
  %v3897 = vpop.xlane.xlu0 %3896
  %v3898 = vsel %vm3822, %v3815, inf
  %3899 = vmin.xlane.f32.xlu0 %v3898
  %v3900 = vpop.xlane.xlu0 %3899
  %v3901 = vsel %vm3822, %v3816, inf
  %3902 = vmin.xlane.f32.xlu0 %v3901
  %v3903 = vpop.xlane.xlu0 %3902
  %v3904 = vsel %vm3822, %v3817, inf
  %3905 = vmin.xlane.f32.xlu0 %v3904
  %v3906 = vpop.xlane.xlu0 %3905
  %v3907 = vsel %vm3822, %v3818, inf
  %3908 = vmin.xlane.f32.xlu0 %v3907
  %v3909 = vpop.xlane.xlu0 %3908
  %v3910 = vsel %vm3822, %v3819, inf
  %3911 = vmin.xlane.f32.xlu0 %v3910
  %v3912 = vpop.xlane.xlu0 %3911
  %v3913 = vsel %vm3822, %v3820, inf
  %3914 = vmin.xlane.f32.xlu0 %v3913
  %v3915 = vpop.xlane.xlu0 %3914
  %v3916 = vsel %vm3822, %v3821, inf
  %3917 = vmin.xlane.f32.xlu0 %v3916
  %v3918 = vpop.xlane.xlu0 %3917
  %v3919 = vsub.f32 %v3594, %v3825
  %v3920 = vsub.f32 %v3595, %v3828
  %v3921 = vsub.f32 %v3596, %v3831
  %v3922 = vsub.f32 %v3597, %v3834
  %v3923 = vsub.f32 %v3598, %v3837
  %v3924 = vsub.f32 %v3599, %v3840
  %v3925 = vsub.f32 %v3600, %v3843
  %v3926 = vsub.f32 %v3601, %v3846
  %v3927 = vsub.f32 %v3602, %v3849
  %v3928 = vsub.f32 %v3603, %v3852
  %v3929 = vsub.f32 %v3604, %v3855
  %v3930 = vsub.f32 %v3605, %v3858
  %v3931 = vsub.f32 %v3606, %v3861
  %v3932 = vsub.f32 %v3607, %v3864
  %v3933 = vsub.f32 %v3608, %v3867
  %v3934 = vsub.f32 %v3609, %v3870
  %v3935 = vsub.f32 %v3610, %v3873
  %v3936 = vsub.f32 %v3611, %v3876
  %v3937 = vsub.f32 %v3612, %v3879
  %v3938 = vsub.f32 %v3613, %v3882
  %v3939 = vsub.f32 %v3614, %v3885
  %v3940 = vsub.f32 %v3615, %v3888
  %v3941 = vsub.f32 %v3616, %v3891
  %v3942 = vsub.f32 %v3617, %v3894
  %v3943 = vsub.f32 %v3618, %v3897
  %v3944 = vsub.f32 %v3619, %v3900
  %v3945 = vsub.f32 %v3620, %v3903
  %v3946 = vsub.f32 %v3621, %v3906
  %v3947 = vsub.f32 %v3622, %v3909
  %v3948 = vsub.f32 %v3623, %v3912
  %v3949 = vsub.f32 %v3624, %v3915
  %v3950 = vsub.f32 %v3625, %v3918
  %v3951 = vld [vmem:[%s21] sm:$0xff]
  %v3952 = vld [vmem:[%s21 + $0x8] sm:$0xff]
  %v3953 = vld [vmem:[%s21 + $0x10] sm:$0xff]
  %v3954 = vld [vmem:[%s21 + $0x18] sm:$0xff]
  %v3955 = vld [vmem:[%s21 + $0x20] sm:$0xff]
  %v3956 = vld [vmem:[%s21 + $0x28] sm:$0xff]
  %v3957 = vld [vmem:[%s21 + $0x30] sm:$0xff]
  %v3958 = vld [vmem:[%s21 + $0x38] sm:$0xff]
  %v3959 = vld [vmem:[%s23] sm:$0x1]
  %v3961 = vperm.slane %v3959, 0
  %vm3963 = vcmask 523264
  %v3965 = vsel %vm3963, %v2174, 0
  %v3968 = vsel %vm3963, %v2175, 0
  %v3971 = vsel %vm3963, %v2176, 0
  %v3974 = vsel %vm3963, %v2177, 0
  %v3977 = vsel %vm3963, %v2178, 0
  %v3980 = vsel %vm3963, %v2179, 0
  %v3983 = vsel %vm3963, %v2180, 0
  %v3986 = vsel %vm3963, %v2181, 0
  %v3989 = vsel %vm3963, %v2182, 0
  %v3992 = vsel %vm3963, %v2183, 0
  %v3995 = vsel %vm3963, %v2184, 0
  %v3998 = vsel %vm3963, %v2185, 0
  %v4001 = vsel %vm3963, %v2186, 0
  %v4004 = vsel %vm3963, %v2187, 0
  %v4007 = vsel %vm3963, %v2188, 0
  %v4010 = vsel %vm3963, %v2189, 0
  %v4013 = vsel %vm3963, %v2190, 0
  %v4016 = vsel %vm3963, %v2191, 0
  %v4019 = vsel %vm3963, %v2192, 0
  %v4022 = vsel %vm3963, %v2193, 0
  %v4025 = vsel %vm3963, %v2194, 0
  %v4028 = vsel %vm3963, %v2195, 0
  %v4031 = vsel %vm3963, %v2196, 0
  %v4034 = vsel %vm3963, %v2197, 0
  %v4037 = vsel %vm3963, %v2198, 0
  %v4040 = vsel %vm3963, %v2199, 0
  %v4043 = vsel %vm3963, %v2200, 0
  %v4046 = vsel %vm3963, %v2201, 0
  %v4049 = vsel %vm3963, %v2202, 0
  %v4052 = vsel %vm3963, %v2203, 0
  %v4055 = vsel %vm3963, %v2204, 0
  %v4058 = vsel %vm3963, %v2205, 0
  %4060 = vmatpush.msra.mxu0 0.0
  %4061 = vmatpush.msra.mxu0 0.0
  %4062 = vmatpush.msra.mxu0 0.0
  %4063 = vmatpush.msra.mxu0 0.0
  %4064 = vmatpush.msra.mxu0 0.0
  %4065 = vmatpush.msra.mxu0 0.0
  %4066 = vmatpush.msra.mxu0 0.0
  %4067 = vmatpush.msra.mxu0 0.0
  %4068 = vmatpush.msra.mxu0 %v3958
  %4069 = vmatpush.msra.mxu0 %v3957
  %4070 = vmatpush.msra.mxu0 %v3956
  %4071 = vmatpush.msra.mxu0 %v3955
  %4072 = vmatpush.msra.mxu0 %v3954
  %4073 = vmatpush.msra.mxu0 %v3953
  %4074 = vmatpush.msra.mxu0 %v3952
  %4075 = vmatpush.msra.mxu0 %v3951
  %4076 = vmatmul.f32.gmra.mxu0 %v3965
  %v4077 = vpop.f32.mrf.mxu0
  %v4078 = vadd.f32 %v3961, %v4077
  %4079 = vmatmul.f32.gmra.mxu0 %v3968
  %v4080 = vpop.f32.mrf.mxu0
  %v4081 = vadd.f32 %v3961, %v4080
  %4082 = vmatmul.f32.gmra.mxu0 %v3971
  %v4083 = vpop.f32.mrf.mxu0
  %v4084 = vadd.f32 %v3961, %v4083
  %4085 = vmatmul.f32.gmra.mxu0 %v3974
  %v4086 = vpop.f32.mrf.mxu0
  %v4087 = vadd.f32 %v3961, %v4086
  %4088 = vmatmul.f32.gmra.mxu0 %v3977
  %v4089 = vpop.f32.mrf.mxu0
  %v4090 = vadd.f32 %v3961, %v4089
  %4091 = vmatmul.f32.gmra.mxu0 %v3980
  %v4092 = vpop.f32.mrf.mxu0
  %v4093 = vadd.f32 %v3961, %v4092
  %4094 = vmatmul.f32.gmra.mxu0 %v3983
  %v4095 = vpop.f32.mrf.mxu0
  %v4096 = vadd.f32 %v3961, %v4095
  %4097 = vmatmul.f32.gmra.mxu0 %v3986
  %v4098 = vpop.f32.mrf.mxu0
  %v4099 = vadd.f32 %v3961, %v4098
  %4100 = vmatmul.f32.gmra.mxu0 %v3989
  %v4101 = vpop.f32.mrf.mxu0
  %v4102 = vadd.f32 %v3961, %v4101
  %4103 = vmatmul.f32.gmra.mxu0 %v3992
  %v4104 = vpop.f32.mrf.mxu0
  %v4105 = vadd.f32 %v3961, %v4104
  %4106 = vmatmul.f32.gmra.mxu0 %v3995
  %v4107 = vpop.f32.mrf.mxu0
  %v4108 = vadd.f32 %v3961, %v4107
  %4109 = vmatmul.f32.gmra.mxu0 %v3998
  %v4110 = vpop.f32.mrf.mxu0
  %v4111 = vadd.f32 %v3961, %v4110
  %4112 = vmatmul.f32.gmra.mxu0 %v4001
  %v4113 = vpop.f32.mrf.mxu0
  %v4114 = vadd.f32 %v3961, %v4113
  %4115 = vmatmul.f32.gmra.mxu0 %v4004
  %v4116 = vpop.f32.mrf.mxu0
  %v4117 = vadd.f32 %v3961, %v4116
  %4118 = vmatmul.f32.gmra.mxu0 %v4007
  %v4119 = vpop.f32.mrf.mxu0
  %v4120 = vadd.f32 %v3961, %v4119
  %4121 = vmatmul.f32.gmra.mxu0 %v4010
  %v4122 = vpop.f32.mrf.mxu0
  %v4123 = vadd.f32 %v3961, %v4122
  %4124 = vmatmul.f32.gmra.mxu0 %v4013
  %v4125 = vpop.f32.mrf.mxu0
  %v4126 = vadd.f32 %v3961, %v4125
  %4127 = vmatmul.f32.gmra.mxu0 %v4016
  %v4128 = vpop.f32.mrf.mxu0
  %v4129 = vadd.f32 %v3961, %v4128
  %4130 = vmatmul.f32.gmra.mxu0 %v4019
  %v4131 = vpop.f32.mrf.mxu0
  %v4132 = vadd.f32 %v3961, %v4131
  %4133 = vmatmul.f32.gmra.mxu0 %v4022
  %v4134 = vpop.f32.mrf.mxu0
  %v4135 = vadd.f32 %v3961, %v4134
  %4136 = vmatmul.f32.gmra.mxu0 %v4025
  %v4137 = vpop.f32.mrf.mxu0
  %v4138 = vadd.f32 %v3961, %v4137
  %4139 = vmatmul.f32.gmra.mxu0 %v4028
  %v4140 = vpop.f32.mrf.mxu0
  %v4141 = vadd.f32 %v3961, %v4140
  %4142 = vmatmul.f32.gmra.mxu0 %v4031
  %v4143 = vpop.f32.mrf.mxu0
  %v4144 = vadd.f32 %v3961, %v4143
  %4145 = vmatmul.f32.gmra.mxu0 %v4034
  %v4146 = vpop.f32.mrf.mxu0
  %v4147 = vadd.f32 %v3961, %v4146
  %4148 = vmatmul.f32.gmra.mxu0 %v4037
  %v4149 = vpop.f32.mrf.mxu0
  %v4150 = vadd.f32 %v3961, %v4149
  %4151 = vmatmul.f32.gmra.mxu0 %v4040
  %v4152 = vpop.f32.mrf.mxu0
  %v4153 = vadd.f32 %v3961, %v4152
  %4154 = vmatmul.f32.gmra.mxu0 %v4043
  %v4155 = vpop.f32.mrf.mxu0
  %v4156 = vadd.f32 %v3961, %v4155
  %4157 = vmatmul.f32.gmra.mxu0 %v4046
  %v4158 = vpop.f32.mrf.mxu0
  %v4159 = vadd.f32 %v3961, %v4158
  %4160 = vmatmul.f32.gmra.mxu0 %v4049
  %v4161 = vpop.f32.mrf.mxu0
  %v4162 = vadd.f32 %v3961, %v4161
  %4163 = vmatmul.f32.gmra.mxu0 %v4052
  %v4164 = vpop.f32.mrf.mxu0
  %v4165 = vadd.f32 %v3961, %v4164
  %4166 = vmatmul.f32.gmra.mxu0 %v4055
  %v4167 = vpop.f32.mrf.mxu0
  %v4168 = vadd.f32 %v3961, %v4167
  %4169 = vmatmul.f32.gmra.mxu0 %v4058
  %v4170 = vpop.f32.mrf.mxu0
  %v4171 = vadd.f32 %v3961, %v4170
  %4172 = vdwg.mxu0
  %v4173 = vmax.f32 %v4078, 0.0
  %v4174 = vmax.f32 %v4081, 0.0
  %v4175 = vmax.f32 %v4084, 0.0
  %v4176 = vmax.f32 %v4087, 0.0
  %v4177 = vmax.f32 %v4090, 0.0
  %v4178 = vmax.f32 %v4093, 0.0
  %v4179 = vmax.f32 %v4096, 0.0
  %v4180 = vmax.f32 %v4099, 0.0
  %v4181 = vmax.f32 %v4102, 0.0
  %v4182 = vmax.f32 %v4105, 0.0
  %v4183 = vmax.f32 %v4108, 0.0
  %v4184 = vmax.f32 %v4111, 0.0
  %v4185 = vmax.f32 %v4114, 0.0
  %v4186 = vmax.f32 %v4117, 0.0
  %v4187 = vmax.f32 %v4120, 0.0
  %v4188 = vmax.f32 %v4123, 0.0
  %v4189 = vmax.f32 %v4126, 0.0
  %v4190 = vmax.f32 %v4129, 0.0
  %v4191 = vmax.f32 %v4132, 0.0
  %v4192 = vmax.f32 %v4135, 0.0
  %v4193 = vmax.f32 %v4138, 0.0
  %v4194 = vmax.f32 %v4141, 0.0
  %v4195 = vmax.f32 %v4144, 0.0
  %v4196 = vmax.f32 %v4147, 0.0
  %v4197 = vmax.f32 %v4150, 0.0
  %v4198 = vmax.f32 %v4153, 0.0
  %v4199 = vmax.f32 %v4156, 0.0
  %v4200 = vmax.f32 %v4159, 0.0
  %v4201 = vmax.f32 %v4162, 0.0
  %v4202 = vmax.f32 %v4165, 0.0
  %v4203 = vmax.f32 %v4168, 0.0
  %v4204 = vmax.f32 %v4171, 0.0
  %v4205 = vld [vmem:[%s25] sm:$0xff]
  %v4206 = vld [vmem:[%s25 + $0x8] sm:$0xff]
  %v4207 = vld [vmem:[%s25 + $0x10] sm:$0xff]
  %v4208 = vld [vmem:[%s25 + $0x18] sm:$0xff]
  %v4209 = vld [vmem:[%s27] sm:$0x1]
  %v4211 = vperm.slane %v4209, 0
  %vm4213 = vcmask 261120
  %v4215 = vsel %vm4213, %v4173, 0
  %v4218 = vsel %vm4213, %v4174, 0
  %v4221 = vsel %vm4213, %v4175, 0
  %v4224 = vsel %vm4213, %v4176, 0
  %v4227 = vsel %vm4213, %v4177, 0
  %v4230 = vsel %vm4213, %v4178, 0
  %v4233 = vsel %vm4213, %v4179, 0
  %v4236 = vsel %vm4213, %v4180, 0
  %v4239 = vsel %vm4213, %v4181, 0
  %v4242 = vsel %vm4213, %v4182, 0
  %v4245 = vsel %vm4213, %v4183, 0
  %v4248 = vsel %vm4213, %v4184, 0
  %v4251 = vsel %vm4213, %v4185, 0
  %v4254 = vsel %vm4213, %v4186, 0
  %v4257 = vsel %vm4213, %v4187, 0
  %v4260 = vsel %vm4213, %v4188, 0
  %v4263 = vsel %vm4213, %v4189, 0
  %v4266 = vsel %vm4213, %v4190, 0
  %v4269 = vsel %vm4213, %v4191, 0
  %v4272 = vsel %vm4213, %v4192, 0
  %v4275 = vsel %vm4213, %v4193, 0
  %v4278 = vsel %vm4213, %v4194, 0
  %v4281 = vsel %vm4213, %v4195, 0
  %v4284 = vsel %vm4213, %v4196, 0
  %v4287 = vsel %vm4213, %v4197, 0
  %v4290 = vsel %vm4213, %v4198, 0
  %v4293 = vsel %vm4213, %v4199, 0
  %v4296 = vsel %vm4213, %v4200, 0
  %v4299 = vsel %vm4213, %v4201, 0
  %v4302 = vsel %vm4213, %v4202, 0
  %v4305 = vsel %vm4213, %v4203, 0
  %v4308 = vsel %vm4213, %v4204, 0
  %4310 = vmatpush.msra.mxu0 0.0
  %4311 = vmatpush.msra.mxu0 0.0
  %4312 = vmatpush.msra.mxu0 0.0
  %4313 = vmatpush.msra.mxu0 0.0
  %4314 = vmatpush.msra.mxu0 0.0
  %4315 = vmatpush.msra.mxu0 0.0
  %4316 = vmatpush.msra.mxu0 0.0
  %4317 = vmatpush.msra.mxu0 0.0
  %4318 = vmatpush.msra.mxu0 0.0
  %4319 = vmatpush.msra.mxu0 0.0
  %4320 = vmatpush.msra.mxu0 0.0
  %4321 = vmatpush.msra.mxu0 0.0
  %4322 = vmatpush.msra.mxu0 %v4208
  %4323 = vmatpush.msra.mxu0 %v4207
  %4324 = vmatpush.msra.mxu0 %v4206
  %4325 = vmatpush.msra.mxu0 %v4205
  %4326 = vmatmul.f32.gmra.mxu0 %v4215
  %v4327 = vpop.f32.mrf.mxu0
  %v4328 = vadd.f32 %v4211, %v4327
  %4329 = vmatmul.f32.gmra.mxu0 %v4218
  %v4330 = vpop.f32.mrf.mxu0
  %v4331 = vadd.f32 %v4211, %v4330
  %4332 = vmatmul.f32.gmra.mxu0 %v4221
  %v4333 = vpop.f32.mrf.mxu0
  %v4334 = vadd.f32 %v4211, %v4333
  %4335 = vmatmul.f32.gmra.mxu0 %v4224
  %v4336 = vpop.f32.mrf.mxu0
  %v4337 = vadd.f32 %v4211, %v4336
  %4338 = vmatmul.f32.gmra.mxu0 %v4227
  %v4339 = vpop.f32.mrf.mxu0
  %v4340 = vadd.f32 %v4211, %v4339
  %4341 = vmatmul.f32.gmra.mxu0 %v4230
  %v4342 = vpop.f32.mrf.mxu0
  %v4343 = vadd.f32 %v4211, %v4342
  %4344 = vmatmul.f32.gmra.mxu0 %v4233
  %v4345 = vpop.f32.mrf.mxu0
  %v4346 = vadd.f32 %v4211, %v4345
  %4347 = vmatmul.f32.gmra.mxu0 %v4236
  %v4348 = vpop.f32.mrf.mxu0
  %v4349 = vadd.f32 %v4211, %v4348
  %4350 = vmatmul.f32.gmra.mxu0 %v4239
  %v4351 = vpop.f32.mrf.mxu0
  %v4352 = vadd.f32 %v4211, %v4351
  %4353 = vmatmul.f32.gmra.mxu0 %v4242
  %v4354 = vpop.f32.mrf.mxu0
  %v4355 = vadd.f32 %v4211, %v4354
  %4356 = vmatmul.f32.gmra.mxu0 %v4245
  %v4357 = vpop.f32.mrf.mxu0
  %v4358 = vadd.f32 %v4211, %v4357
  %4359 = vmatmul.f32.gmra.mxu0 %v4248
  %v4360 = vpop.f32.mrf.mxu0
  %v4361 = vadd.f32 %v4211, %v4360
  %4362 = vmatmul.f32.gmra.mxu0 %v4251
  %v4363 = vpop.f32.mrf.mxu0
  %v4364 = vadd.f32 %v4211, %v4363
  %4365 = vmatmul.f32.gmra.mxu0 %v4254
  %v4366 = vpop.f32.mrf.mxu0
  %v4367 = vadd.f32 %v4211, %v4366
  %4368 = vmatmul.f32.gmra.mxu0 %v4257
  %v4369 = vpop.f32.mrf.mxu0
  %v4370 = vadd.f32 %v4211, %v4369
  %4371 = vmatmul.f32.gmra.mxu0 %v4260
  %v4372 = vpop.f32.mrf.mxu0
  %v4373 = vadd.f32 %v4211, %v4372
  %4374 = vmatmul.f32.gmra.mxu0 %v4263
  %v4375 = vpop.f32.mrf.mxu0
  %v4376 = vadd.f32 %v4211, %v4375
  %4377 = vmatmul.f32.gmra.mxu0 %v4266
  %v4378 = vpop.f32.mrf.mxu0
  %v4379 = vadd.f32 %v4211, %v4378
  %4380 = vmatmul.f32.gmra.mxu0 %v4269
  %v4381 = vpop.f32.mrf.mxu0
  %v4382 = vadd.f32 %v4211, %v4381
  %4383 = vmatmul.f32.gmra.mxu0 %v4272
  %v4384 = vpop.f32.mrf.mxu0
  %v4385 = vadd.f32 %v4211, %v4384
  %4386 = vmatmul.f32.gmra.mxu0 %v4275
  %v4387 = vpop.f32.mrf.mxu0
  %v4388 = vadd.f32 %v4211, %v4387
  %4389 = vmatmul.f32.gmra.mxu0 %v4278
  %v4390 = vpop.f32.mrf.mxu0
  %v4391 = vadd.f32 %v4211, %v4390
  %4392 = vmatmul.f32.gmra.mxu0 %v4281
  %v4393 = vpop.f32.mrf.mxu0
  %v4394 = vadd.f32 %v4211, %v4393
  %4395 = vmatmul.f32.gmra.mxu0 %v4284
  %v4396 = vpop.f32.mrf.mxu0
  %v4397 = vadd.f32 %v4211, %v4396
  %4398 = vmatmul.f32.gmra.mxu0 %v4287
  %v4399 = vpop.f32.mrf.mxu0
  %v4400 = vadd.f32 %v4211, %v4399
  %4401 = vmatmul.f32.gmra.mxu0 %v4290
  %v4402 = vpop.f32.mrf.mxu0
  %v4403 = vadd.f32 %v4211, %v4402
  %4404 = vmatmul.f32.gmra.mxu0 %v4293
  %v4405 = vpop.f32.mrf.mxu0
  %v4406 = vadd.f32 %v4211, %v4405
  %4407 = vmatmul.f32.gmra.mxu0 %v4296
  %v4408 = vpop.f32.mrf.mxu0
  %v4409 = vadd.f32 %v4211, %v4408
  %4410 = vmatmul.f32.gmra.mxu0 %v4299
  %v4411 = vpop.f32.mrf.mxu0
  %v4412 = vadd.f32 %v4211, %v4411
  %4413 = vmatmul.f32.gmra.mxu0 %v4302
  %v4414 = vpop.f32.mrf.mxu0
  %v4415 = vadd.f32 %v4211, %v4414
  %4416 = vmatmul.f32.gmra.mxu0 %v4305
  %v4417 = vpop.f32.mrf.mxu0
  %v4418 = vadd.f32 %v4211, %v4417
  %4419 = vmatmul.f32.gmra.mxu0 %v4308
  %v4420 = vpop.f32.mrf.mxu0
  %v4421 = vadd.f32 %v4211, %v4420
  %4422 = vdwg.mxu0
  %v4423 = vld [vmem:[%s29] sm:$0x1]
  %v4425 = vperm.slane %v4423, 0
  %v4427 = vsub.f32 %v2174, %v4425
  %v4428 = vsub.f32 %v2175, %v4425
  %v4429 = vsub.f32 %v2176, %v4425
  %v4430 = vsub.f32 %v2177, %v4425
  %v4431 = vsub.f32 %v2178, %v4425
  %v4432 = vsub.f32 %v2179, %v4425
  %v4433 = vsub.f32 %v2180, %v4425
  %v4434 = vsub.f32 %v2181, %v4425
  %v4435 = vsub.f32 %v2182, %v4425
  %v4436 = vsub.f32 %v2183, %v4425
  %v4437 = vsub.f32 %v2184, %v4425
  %v4438 = vsub.f32 %v2185, %v4425
  %v4439 = vsub.f32 %v2186, %v4425
  %v4440 = vsub.f32 %v2187, %v4425
  %v4441 = vsub.f32 %v2188, %v4425
  %v4442 = vsub.f32 %v2189, %v4425
  %v4443 = vsub.f32 %v2190, %v4425
  %v4444 = vsub.f32 %v2191, %v4425
  %v4445 = vsub.f32 %v2192, %v4425
  %v4446 = vsub.f32 %v2193, %v4425
  %v4447 = vsub.f32 %v2194, %v4425
  %v4448 = vsub.f32 %v2195, %v4425
  %v4449 = vsub.f32 %v2196, %v4425
  %v4450 = vsub.f32 %v2197, %v4425
  %v4451 = vsub.f32 %v2198, %v4425
  %v4452 = vsub.f32 %v2199, %v4425
  %v4453 = vsub.f32 %v2200, %v4425
  %v4454 = vsub.f32 %v2201, %v4425
  %v4455 = vsub.f32 %v2202, %v4425
  %v4456 = vsub.f32 %v2203, %v4425
  %v4457 = vsub.f32 %v2204, %v4425
  %v4458 = vsub.f32 %v2205, %v4425
  %v4459 = vld [vmem:[%s31] sm:$0x1]
  %v4461 = vperm.slane %v4459, 0
  %v4463 = vmul.f32 %v4427, %v4461
  %v4464 = vmul.f32 %v4428, %v4461
  %v4465 = vmul.f32 %v4429, %v4461
  %v4466 = vmul.f32 %v4430, %v4461
  %v4467 = vmul.f32 %v4431, %v4461
  %v4468 = vmul.f32 %v4432, %v4461
  %v4469 = vmul.f32 %v4433, %v4461
  %v4470 = vmul.f32 %v4434, %v4461
  %v4471 = vmul.f32 %v4435, %v4461
  %v4472 = vmul.f32 %v4436, %v4461
  %v4473 = vmul.f32 %v4437, %v4461
  %v4474 = vmul.f32 %v4438, %v4461
  %v4475 = vmul.f32 %v4439, %v4461
  %v4476 = vmul.f32 %v4440, %v4461
  %v4477 = vmul.f32 %v4441, %v4461
  %v4478 = vmul.f32 %v4442, %v4461
  %v4479 = vmul.f32 %v4443, %v4461
  %v4480 = vmul.f32 %v4444, %v4461
  %v4481 = vmul.f32 %v4445, %v4461
  %v4482 = vmul.f32 %v4446, %v4461
  %v4483 = vmul.f32 %v4447, %v4461
  %v4484 = vmul.f32 %v4448, %v4461
  %v4485 = vmul.f32 %v4449, %v4461
  %v4486 = vmul.f32 %v4450, %v4461
  %v4487 = vmul.f32 %v4451, %v4461
  %v4488 = vmul.f32 %v4452, %v4461
  %v4489 = vmul.f32 %v4453, %v4461
  %v4490 = vmul.f32 %v4454, %v4461
  %v4491 = vmul.f32 %v4455, %v4461
  %v4492 = vmul.f32 %v4456, %v4461
  %v4493 = vmul.f32 %v4457, %v4461
  %v4494 = vmul.f32 %v4458, %v4461
  %v4495 = vld [vmem:[%s33] sm:$0x1]
  %v4497 = vperm.slane %v4495, 0
  %v4499 = vsub.f32 %v4173, %v4497
  %v4500 = vsub.f32 %v4174, %v4497
  %v4501 = vsub.f32 %v4175, %v4497
  %v4502 = vsub.f32 %v4176, %v4497
  %v4503 = vsub.f32 %v4177, %v4497
  %v4504 = vsub.f32 %v4178, %v4497
  %v4505 = vsub.f32 %v4179, %v4497
  %v4506 = vsub.f32 %v4180, %v4497
  %v4507 = vsub.f32 %v4181, %v4497
  %v4508 = vsub.f32 %v4182, %v4497
  %v4509 = vsub.f32 %v4183, %v4497
  %v4510 = vsub.f32 %v4184, %v4497
  %v4511 = vsub.f32 %v4185, %v4497
  %v4512 = vsub.f32 %v4186, %v4497
  %v4513 = vsub.f32 %v4187, %v4497
  %v4514 = vsub.f32 %v4188, %v4497
  %v4515 = vsub.f32 %v4189, %v4497
  %v4516 = vsub.f32 %v4190, %v4497
  %v4517 = vsub.f32 %v4191, %v4497
  %v4518 = vsub.f32 %v4192, %v4497
  %v4519 = vsub.f32 %v4193, %v4497
  %v4520 = vsub.f32 %v4194, %v4497
  %v4521 = vsub.f32 %v4195, %v4497
  %v4522 = vsub.f32 %v4196, %v4497
  %v4523 = vsub.f32 %v4197, %v4497
  %v4524 = vsub.f32 %v4198, %v4497
  %v4525 = vsub.f32 %v4199, %v4497
  %v4526 = vsub.f32 %v4200, %v4497
  %v4527 = vsub.f32 %v4201, %v4497
  %v4528 = vsub.f32 %v4202, %v4497
  %v4529 = vsub.f32 %v4203, %v4497
  %v4530 = vsub.f32 %v4204, %v4497
  %v4531 = vld [vmem:[%s35] sm:$0x1]
  %v4533 = vperm.slane %v4531, 0
  %v4535 = vmul.f32 %v4499, %v4533
  %v4536 = vmul.f32 %v4500, %v4533
  %v4537 = vmul.f32 %v4501, %v4533
  %v4538 = vmul.f32 %v4502, %v4533
  %v4539 = vmul.f32 %v4503, %v4533
  %v4540 = vmul.f32 %v4504, %v4533
  %v4541 = vmul.f32 %v4505, %v4533
  %v4542 = vmul.f32 %v4506, %v4533
  %v4543 = vmul.f32 %v4507, %v4533
  %v4544 = vmul.f32 %v4508, %v4533
  %v4545 = vmul.f32 %v4509, %v4533
  %v4546 = vmul.f32 %v4510, %v4533
  %v4547 = vmul.f32 %v4511, %v4533
  %v4548 = vmul.f32 %v4512, %v4533
  %v4549 = vmul.f32 %v4513, %v4533
  %v4550 = vmul.f32 %v4514, %v4533
  %v4551 = vmul.f32 %v4515, %v4533
  %v4552 = vmul.f32 %v4516, %v4533
  %v4553 = vmul.f32 %v4517, %v4533
  %v4554 = vmul.f32 %v4518, %v4533
  %v4555 = vmul.f32 %v4519, %v4533
  %v4556 = vmul.f32 %v4520, %v4533
  %v4557 = vmul.f32 %v4521, %v4533
  %v4558 = vmul.f32 %v4522, %v4533
  %v4559 = vmul.f32 %v4523, %v4533
  %v4560 = vmul.f32 %v4524, %v4533
  %v4561 = vmul.f32 %v4525, %v4533
  %v4562 = vmul.f32 %v4526, %v4533
  %v4563 = vmul.f32 %v4527, %v4533
  %v4564 = vmul.f32 %v4528, %v4533
  %v4565 = vmul.f32 %v4529, %v4533
  %v4566 = vmul.f32 %v4530, %v4533
  %v4567 = vld [vmem:[%s37] sm:$0x1]
  %v4569 = vperm.slane %v4567, 0
  %v4571 = vsub.f32 %v4328, %v4569
  %v4572 = vsub.f32 %v4331, %v4569
  %v4573 = vsub.f32 %v4334, %v4569
  %v4574 = vsub.f32 %v4337, %v4569
  %v4575 = vsub.f32 %v4340, %v4569
  %v4576 = vsub.f32 %v4343, %v4569
  %v4577 = vsub.f32 %v4346, %v4569
  %v4578 = vsub.f32 %v4349, %v4569
  %v4579 = vsub.f32 %v4352, %v4569
  %v4580 = vsub.f32 %v4355, %v4569
  %v4581 = vsub.f32 %v4358, %v4569
  %v4582 = vsub.f32 %v4361, %v4569
  %v4583 = vsub.f32 %v4364, %v4569
  %v4584 = vsub.f32 %v4367, %v4569
  %v4585 = vsub.f32 %v4370, %v4569
  %v4586 = vsub.f32 %v4373, %v4569
  %v4587 = vsub.f32 %v4376, %v4569
  %v4588 = vsub.f32 %v4379, %v4569
  %v4589 = vsub.f32 %v4382, %v4569
  %v4590 = vsub.f32 %v4385, %v4569
  %v4591 = vsub.f32 %v4388, %v4569
  %v4592 = vsub.f32 %v4391, %v4569
  %v4593 = vsub.f32 %v4394, %v4569
  %v4594 = vsub.f32 %v4397, %v4569
  %v4595 = vsub.f32 %v4400, %v4569
  %v4596 = vsub.f32 %v4403, %v4569
  %v4597 = vsub.f32 %v4406, %v4569
  %v4598 = vsub.f32 %v4409, %v4569
  %v4599 = vsub.f32 %v4412, %v4569
  %v4600 = vsub.f32 %v4415, %v4569
  %v4601 = vsub.f32 %v4418, %v4569
  %v4602 = vsub.f32 %v4421, %v4569
  %v4603 = vld [vmem:[%s39] sm:$0x1]
  %v4605 = vperm.slane %v4603, 0
  %v4607 = vmul.f32 %v4571, %v4605
  %v4608 = vmul.f32 %v4572, %v4605
  %v4609 = vmul.f32 %v4573, %v4605
  %v4610 = vmul.f32 %v4574, %v4605
  %v4611 = vmul.f32 %v4575, %v4605
  %v4612 = vmul.f32 %v4576, %v4605
  %v4613 = vmul.f32 %v4577, %v4605
  %v4614 = vmul.f32 %v4578, %v4605
  %v4615 = vmul.f32 %v4579, %v4605
  %v4616 = vmul.f32 %v4580, %v4605
  %v4617 = vmul.f32 %v4581, %v4605
  %v4618 = vmul.f32 %v4582, %v4605
  %v4619 = vmul.f32 %v4583, %v4605
  %v4620 = vmul.f32 %v4584, %v4605
  %v4621 = vmul.f32 %v4585, %v4605
  %v4622 = vmul.f32 %v4586, %v4605
  %v4623 = vmul.f32 %v4587, %v4605
  %v4624 = vmul.f32 %v4588, %v4605
  %v4625 = vmul.f32 %v4589, %v4605
  %v4626 = vmul.f32 %v4590, %v4605
  %v4627 = vmul.f32 %v4591, %v4605
  %v4628 = vmul.f32 %v4592, %v4605
  %v4629 = vmul.f32 %v4593, %v4605
  %v4630 = vmul.f32 %v4594, %v4605
  %v4631 = vmul.f32 %v4595, %v4605
  %v4632 = vmul.f32 %v4596, %v4605
  %v4633 = vmul.f32 %v4597, %v4605
  %v4634 = vmul.f32 %v4598, %v4605
  %v4635 = vmul.f32 %v4599, %v4605
  %v4636 = vmul.f32 %v4600, %v4605
  %v4637 = vmul.f32 %v4601, %v4605
  %v4638 = vmul.f32 %v4602, %v4605
  %v4639 = vmul.f32 %v4463, %v4463
  %v4640 = vmul.f32 %v4464, %v4464
  %v4641 = vmul.f32 %v4465, %v4465
  %v4642 = vmul.f32 %v4466, %v4466
  %v4643 = vmul.f32 %v4467, %v4467
  %v4644 = vmul.f32 %v4468, %v4468
  %v4645 = vmul.f32 %v4469, %v4469
  %v4646 = vmul.f32 %v4470, %v4470
  %v4647 = vmul.f32 %v4471, %v4471
  %v4648 = vmul.f32 %v4472, %v4472
  %v4649 = vmul.f32 %v4473, %v4473
  %v4650 = vmul.f32 %v4474, %v4474
  %v4651 = vmul.f32 %v4475, %v4475
  %v4652 = vmul.f32 %v4476, %v4476
  %v4653 = vmul.f32 %v4477, %v4477
  %v4654 = vmul.f32 %v4478, %v4478
  %v4655 = vmul.f32 %v4479, %v4479
  %v4656 = vmul.f32 %v4480, %v4480
  %v4657 = vmul.f32 %v4481, %v4481
  %v4658 = vmul.f32 %v4482, %v4482
  %v4659 = vmul.f32 %v4483, %v4483
  %v4660 = vmul.f32 %v4484, %v4484
  %v4661 = vmul.f32 %v4485, %v4485
  %v4662 = vmul.f32 %v4486, %v4486
  %v4663 = vmul.f32 %v4487, %v4487
  %v4664 = vmul.f32 %v4488, %v4488
  %v4665 = vmul.f32 %v4489, %v4489
  %v4666 = vmul.f32 %v4490, %v4490
  %v4667 = vmul.f32 %v4491, %v4491
  %v4668 = vmul.f32 %v4492, %v4492
  %v4669 = vmul.f32 %v4493, %v4493
  %v4670 = vmul.f32 %v4494, %v4494
  %v4671 = vsel %vm3963, %v4639, 0.0
  %4672 = vadd.xlane.f32.xlu0 %v4671
  %v4673 = vpop.xlane.xlu0 %4672
  %v4674 = vsel %vm3963, %v4640, 0.0
  %4675 = vadd.xlane.f32.xlu0 %v4674
  %v4676 = vpop.xlane.xlu0 %4675
  %v4677 = vsel %vm3963, %v4641, 0.0
  %4678 = vadd.xlane.f32.xlu0 %v4677
  %v4679 = vpop.xlane.xlu0 %4678
  %v4680 = vsel %vm3963, %v4642, 0.0
  %4681 = vadd.xlane.f32.xlu0 %v4680
  %v4682 = vpop.xlane.xlu0 %4681
  %v4683 = vsel %vm3963, %v4643, 0.0
  %4684 = vadd.xlane.f32.xlu0 %v4683
  %v4685 = vpop.xlane.xlu0 %4684
  %v4686 = vsel %vm3963, %v4644, 0.0
  %4687 = vadd.xlane.f32.xlu0 %v4686
  %v4688 = vpop.xlane.xlu0 %4687
  %v4689 = vsel %vm3963, %v4645, 0.0
  %4690 = vadd.xlane.f32.xlu0 %v4689
  %v4691 = vpop.xlane.xlu0 %4690
  %v4692 = vsel %vm3963, %v4646, 0.0
  %4693 = vadd.xlane.f32.xlu0 %v4692
  %v4694 = vpop.xlane.xlu0 %4693
  %v4695 = vsel %vm3963, %v4647, 0.0
  %4696 = vadd.xlane.f32.xlu0 %v4695
  %v4697 = vpop.xlane.xlu0 %4696
  %v4698 = vsel %vm3963, %v4648, 0.0
  %4699 = vadd.xlane.f32.xlu0 %v4698
  %v4700 = vpop.xlane.xlu0 %4699
  %v4701 = vsel %vm3963, %v4649, 0.0
  %4702 = vadd.xlane.f32.xlu0 %v4701
  %v4703 = vpop.xlane.xlu0 %4702
  %v4704 = vsel %vm3963, %v4650, 0.0
  %4705 = vadd.xlane.f32.xlu0 %v4704
  %v4706 = vpop.xlane.xlu0 %4705
  %v4707 = vsel %vm3963, %v4651, 0.0
  %4708 = vadd.xlane.f32.xlu0 %v4707
  %v4709 = vpop.xlane.xlu0 %4708
  %v4710 = vsel %vm3963, %v4652, 0.0
  %4711 = vadd.xlane.f32.xlu0 %v4710
  %v4712 = vpop.xlane.xlu0 %4711
  %v4713 = vsel %vm3963, %v4653, 0.0
  %4714 = vadd.xlane.f32.xlu0 %v4713
  %v4715 = vpop.xlane.xlu0 %4714
  %v4716 = vsel %vm3963, %v4654, 0.0
  %4717 = vadd.xlane.f32.xlu0 %v4716
  %v4718 = vpop.xlane.xlu0 %4717
  %v4719 = vsel %vm3963, %v4655, 0.0
  %4720 = vadd.xlane.f32.xlu0 %v4719
  %v4721 = vpop.xlane.xlu0 %4720
  %v4722 = vsel %vm3963, %v4656, 0.0
  %4723 = vadd.xlane.f32.xlu0 %v4722
  %v4724 = vpop.xlane.xlu0 %4723
  %v4725 = vsel %vm3963, %v4657, 0.0
  %4726 = vadd.xlane.f32.xlu0 %v4725
  %v4727 = vpop.xlane.xlu0 %4726
  %v4728 = vsel %vm3963, %v4658, 0.0
  %4729 = vadd.xlane.f32.xlu0 %v4728
  %v4730 = vpop.xlane.xlu0 %4729
  %v4731 = vsel %vm3963, %v4659, 0.0
  %4732 = vadd.xlane.f32.xlu0 %v4731
  %v4733 = vpop.xlane.xlu0 %4732
  %v4734 = vsel %vm3963, %v4660, 0.0
  %4735 = vadd.xlane.f32.xlu0 %v4734
  %v4736 = vpop.xlane.xlu0 %4735
  %v4737 = vsel %vm3963, %v4661, 0.0
  %4738 = vadd.xlane.f32.xlu0 %v4737
  %v4739 = vpop.xlane.xlu0 %4738
  %v4740 = vsel %vm3963, %v4662, 0.0
  %4741 = vadd.xlane.f32.xlu0 %v4740
  %v4742 = vpop.xlane.xlu0 %4741
  %v4743 = vsel %vm3963, %v4663, 0.0
  %4744 = vadd.xlane.f32.xlu0 %v4743
  %v4745 = vpop.xlane.xlu0 %4744
  %v4746 = vsel %vm3963, %v4664, 0.0
  %4747 = vadd.xlane.f32.xlu0 %v4746
  %v4748 = vpop.xlane.xlu0 %4747
  %v4749 = vsel %vm3963, %v4665, 0.0
  %4750 = vadd.xlane.f32.xlu0 %v4749
  %v4751 = vpop.xlane.xlu0 %4750
  %v4752 = vsel %vm3963, %v4666, 0.0
  %4753 = vadd.xlane.f32.xlu0 %v4752
  %v4754 = vpop.xlane.xlu0 %4753
  %v4755 = vsel %vm3963, %v4667, 0.0
  %4756 = vadd.xlane.f32.xlu0 %v4755
  %v4757 = vpop.xlane.xlu0 %4756
  %v4758 = vsel %vm3963, %v4668, 0.0
  %4759 = vadd.xlane.f32.xlu0 %v4758
  %v4760 = vpop.xlane.xlu0 %4759
  %v4761 = vsel %vm3963, %v4669, 0.0
  %4762 = vadd.xlane.f32.xlu0 %v4761
  %v4763 = vpop.xlane.xlu0 %4762
  %v4764 = vsel %vm3963, %v4670, 0.0
  %4765 = vadd.xlane.f32.xlu0 %v4764
  %v4766 = vpop.xlane.xlu0 %4765
  %v4767 = vmul.f32 %v4535, %v4535
  %v4768 = vmul.f32 %v4536, %v4536
  %v4769 = vmul.f32 %v4537, %v4537
  %v4770 = vmul.f32 %v4538, %v4538
  %v4771 = vmul.f32 %v4539, %v4539
  %v4772 = vmul.f32 %v4540, %v4540
  %v4773 = vmul.f32 %v4541, %v4541
  %v4774 = vmul.f32 %v4542, %v4542
  %v4775 = vmul.f32 %v4543, %v4543
  %v4776 = vmul.f32 %v4544, %v4544
  %v4777 = vmul.f32 %v4545, %v4545
  %v4778 = vmul.f32 %v4546, %v4546
  %v4779 = vmul.f32 %v4547, %v4547
  %v4780 = vmul.f32 %v4548, %v4548
  %v4781 = vmul.f32 %v4549, %v4549
  %v4782 = vmul.f32 %v4550, %v4550
  %v4783 = vmul.f32 %v4551, %v4551
  %v4784 = vmul.f32 %v4552, %v4552
  %v4785 = vmul.f32 %v4553, %v4553
  %v4786 = vmul.f32 %v4554, %v4554
  %v4787 = vmul.f32 %v4555, %v4555
  %v4788 = vmul.f32 %v4556, %v4556
  %v4789 = vmul.f32 %v4557, %v4557
  %v4790 = vmul.f32 %v4558, %v4558
  %v4791 = vmul.f32 %v4559, %v4559
  %v4792 = vmul.f32 %v4560, %v4560
  %v4793 = vmul.f32 %v4561, %v4561
  %v4794 = vmul.f32 %v4562, %v4562
  %v4795 = vmul.f32 %v4563, %v4563
  %v4796 = vmul.f32 %v4564, %v4564
  %v4797 = vmul.f32 %v4565, %v4565
  %v4798 = vmul.f32 %v4566, %v4566
  %v4799 = vsel %vm4213, %v4767, 0.0
  %4800 = vadd.xlane.f32.xlu0 %v4799
  %v4801 = vpop.xlane.xlu0 %4800
  %v4802 = vsel %vm4213, %v4768, 0.0
  %4803 = vadd.xlane.f32.xlu0 %v4802
  %v4804 = vpop.xlane.xlu0 %4803
  %v4805 = vsel %vm4213, %v4769, 0.0
  %4806 = vadd.xlane.f32.xlu0 %v4805
  %v4807 = vpop.xlane.xlu0 %4806
  %v4808 = vsel %vm4213, %v4770, 0.0
  %4809 = vadd.xlane.f32.xlu0 %v4808
  %v4810 = vpop.xlane.xlu0 %4809
  %v4811 = vsel %vm4213, %v4771, 0.0
  %4812 = vadd.xlane.f32.xlu0 %v4811
  %v4813 = vpop.xlane.xlu0 %4812
  %v4814 = vsel %vm4213, %v4772, 0.0
  %4815 = vadd.xlane.f32.xlu0 %v4814
  %v4816 = vpop.xlane.xlu0 %4815
  %v4817 = vsel %vm4213, %v4773, 0.0
  %4818 = vadd.xlane.f32.xlu0 %v4817
  %v4819 = vpop.xlane.xlu0 %4818
  %v4820 = vsel %vm4213, %v4774, 0.0
  %4821 = vadd.xlane.f32.xlu0 %v4820
  %v4822 = vpop.xlane.xlu0 %4821
  %v4823 = vsel %vm4213, %v4775, 0.0
  %4824 = vadd.xlane.f32.xlu0 %v4823
  %v4825 = vpop.xlane.xlu0 %4824
  %v4826 = vsel %vm4213, %v4776, 0.0
  %4827 = vadd.xlane.f32.xlu0 %v4826
  %v4828 = vpop.xlane.xlu0 %4827
  %v4829 = vsel %vm4213, %v4777, 0.0
  %4830 = vadd.xlane.f32.xlu0 %v4829
  %v4831 = vpop.xlane.xlu0 %4830
  %v4832 = vsel %vm4213, %v4778, 0.0
  %4833 = vadd.xlane.f32.xlu0 %v4832
  %v4834 = vpop.xlane.xlu0 %4833
  %v4835 = vsel %vm4213, %v4779, 0.0
  %4836 = vadd.xlane.f32.xlu0 %v4835
  %v4837 = vpop.xlane.xlu0 %4836
  %v4838 = vsel %vm4213, %v4780, 0.0
  %4839 = vadd.xlane.f32.xlu0 %v4838
  %v4840 = vpop.xlane.xlu0 %4839
  %v4841 = vsel %vm4213, %v4781, 0.0
  %4842 = vadd.xlane.f32.xlu0 %v4841
  %v4843 = vpop.xlane.xlu0 %4842
  %v4844 = vsel %vm4213, %v4782, 0.0
  %4845 = vadd.xlane.f32.xlu0 %v4844
  %v4846 = vpop.xlane.xlu0 %4845
  %v4847 = vsel %vm4213, %v4783, 0.0
  %4848 = vadd.xlane.f32.xlu0 %v4847
  %v4849 = vpop.xlane.xlu0 %4848
  %v4850 = vsel %vm4213, %v4784, 0.0
  %4851 = vadd.xlane.f32.xlu0 %v4850
  %v4852 = vpop.xlane.xlu0 %4851
  %v4853 = vsel %vm4213, %v4785, 0.0
  %4854 = vadd.xlane.f32.xlu0 %v4853
  %v4855 = vpop.xlane.xlu0 %4854
  %v4856 = vsel %vm4213, %v4786, 0.0
  %4857 = vadd.xlane.f32.xlu0 %v4856
  %v4858 = vpop.xlane.xlu0 %4857
  %v4859 = vsel %vm4213, %v4787, 0.0
  %4860 = vadd.xlane.f32.xlu0 %v4859
  %v4861 = vpop.xlane.xlu0 %4860
  %v4862 = vsel %vm4213, %v4788, 0.0
  %4863 = vadd.xlane.f32.xlu0 %v4862
  %v4864 = vpop.xlane.xlu0 %4863
  %v4865 = vsel %vm4213, %v4789, 0.0
  %4866 = vadd.xlane.f32.xlu0 %v4865
  %v4867 = vpop.xlane.xlu0 %4866
  %v4868 = vsel %vm4213, %v4790, 0.0
  %4869 = vadd.xlane.f32.xlu0 %v4868
  %v4870 = vpop.xlane.xlu0 %4869
  %v4871 = vsel %vm4213, %v4791, 0.0
  %4872 = vadd.xlane.f32.xlu0 %v4871
  %v4873 = vpop.xlane.xlu0 %4872
  %v4874 = vsel %vm4213, %v4792, 0.0
  %4875 = vadd.xlane.f32.xlu0 %v4874
  %v4876 = vpop.xlane.xlu0 %4875
  %v4877 = vsel %vm4213, %v4793, 0.0
  %4878 = vadd.xlane.f32.xlu0 %v4877
  %v4879 = vpop.xlane.xlu0 %4878
  %v4880 = vsel %vm4213, %v4794, 0.0
  %4881 = vadd.xlane.f32.xlu0 %v4880
  %v4882 = vpop.xlane.xlu0 %4881
  %v4883 = vsel %vm4213, %v4795, 0.0
  %4884 = vadd.xlane.f32.xlu0 %v4883
  %v4885 = vpop.xlane.xlu0 %4884
  %v4886 = vsel %vm4213, %v4796, 0.0
  %4887 = vadd.xlane.f32.xlu0 %v4886
  %v4888 = vpop.xlane.xlu0 %4887
  %v4889 = vsel %vm4213, %v4797, 0.0
  %4890 = vadd.xlane.f32.xlu0 %v4889
  %v4891 = vpop.xlane.xlu0 %4890
  %v4892 = vsel %vm4213, %v4798, 0.0
  %4893 = vadd.xlane.f32.xlu0 %v4892
  %v4894 = vpop.xlane.xlu0 %4893
  %v4895 = vmul.f32 %v4607, %v4607
  %v4896 = vmul.f32 %v4608, %v4608
  %v4897 = vmul.f32 %v4609, %v4609
  %v4898 = vmul.f32 %v4610, %v4610
  %v4899 = vmul.f32 %v4611, %v4611
  %v4900 = vmul.f32 %v4612, %v4612
  %v4901 = vmul.f32 %v4613, %v4613
  %v4902 = vmul.f32 %v4614, %v4614
  %v4903 = vmul.f32 %v4615, %v4615
  %v4904 = vmul.f32 %v4616, %v4616
  %v4905 = vmul.f32 %v4617, %v4617
  %v4906 = vmul.f32 %v4618, %v4618
  %v4907 = vmul.f32 %v4619, %v4619
  %v4908 = vmul.f32 %v4620, %v4620
  %v4909 = vmul.f32 %v4621, %v4621
  %v4910 = vmul.f32 %v4622, %v4622
  %v4911 = vmul.f32 %v4623, %v4623
  %v4912 = vmul.f32 %v4624, %v4624
  %v4913 = vmul.f32 %v4625, %v4625
  %v4914 = vmul.f32 %v4626, %v4626
  %v4915 = vmul.f32 %v4627, %v4627
  %v4916 = vmul.f32 %v4628, %v4628
  %v4917 = vmul.f32 %v4629, %v4629
  %v4918 = vmul.f32 %v4630, %v4630
  %v4919 = vmul.f32 %v4631, %v4631
  %v4920 = vmul.f32 %v4632, %v4632
  %v4921 = vmul.f32 %v4633, %v4633
  %v4922 = vmul.f32 %v4634, %v4634
  %v4923 = vmul.f32 %v4635, %v4635
  %v4924 = vmul.f32 %v4636, %v4636
  %v4925 = vmul.f32 %v4637, %v4637
  %v4926 = vmul.f32 %v4638, %v4638
  %vm4927 = vcmask 64512
  %v4928 = vsel %vm4927, %v4895, 0.0
  %4929 = vadd.xlane.f32.xlu0 %v4928
  %v4930 = vpop.xlane.xlu0 %4929
  %v4931 = vsel %vm4927, %v4896, 0.0
  %4932 = vadd.xlane.f32.xlu0 %v4931
  %v4933 = vpop.xlane.xlu0 %4932
  %v4934 = vsel %vm4927, %v4897, 0.0
  %4935 = vadd.xlane.f32.xlu0 %v4934
  %v4936 = vpop.xlane.xlu0 %4935
  %v4937 = vsel %vm4927, %v4898, 0.0
  %4938 = vadd.xlane.f32.xlu0 %v4937
  %v4939 = vpop.xlane.xlu0 %4938
  %v4940 = vsel %vm4927, %v4899, 0.0
  %4941 = vadd.xlane.f32.xlu0 %v4940
  %v4942 = vpop.xlane.xlu0 %4941
  %v4943 = vsel %vm4927, %v4900, 0.0
  %4944 = vadd.xlane.f32.xlu0 %v4943
  %v4945 = vpop.xlane.xlu0 %4944
  %v4946 = vsel %vm4927, %v4901, 0.0
  %4947 = vadd.xlane.f32.xlu0 %v4946
  %v4948 = vpop.xlane.xlu0 %4947
  %v4949 = vsel %vm4927, %v4902, 0.0
  %4950 = vadd.xlane.f32.xlu0 %v4949
  %v4951 = vpop.xlane.xlu0 %4950
  %v4952 = vsel %vm4927, %v4903, 0.0
  %4953 = vadd.xlane.f32.xlu0 %v4952
  %v4954 = vpop.xlane.xlu0 %4953
  %v4955 = vsel %vm4927, %v4904, 0.0
  %4956 = vadd.xlane.f32.xlu0 %v4955
  %v4957 = vpop.xlane.xlu0 %4956
  %v4958 = vsel %vm4927, %v4905, 0.0
  %4959 = vadd.xlane.f32.xlu0 %v4958
  %v4960 = vpop.xlane.xlu0 %4959
  %v4961 = vsel %vm4927, %v4906, 0.0
  %4962 = vadd.xlane.f32.xlu0 %v4961
  %v4963 = vpop.xlane.xlu0 %4962
  %v4964 = vsel %vm4927, %v4907, 0.0
  %4965 = vadd.xlane.f32.xlu0 %v4964
  %v4966 = vpop.xlane.xlu0 %4965
  %v4967 = vsel %vm4927, %v4908, 0.0
  %4968 = vadd.xlane.f32.xlu0 %v4967
  %v4969 = vpop.xlane.xlu0 %4968
  %v4970 = vsel %vm4927, %v4909, 0.0
  %4971 = vadd.xlane.f32.xlu0 %v4970
  %v4972 = vpop.xlane.xlu0 %4971
  %v4973 = vsel %vm4927, %v4910, 0.0
  %4974 = vadd.xlane.f32.xlu0 %v4973
  %v4975 = vpop.xlane.xlu0 %4974
  %v4976 = vsel %vm4927, %v4911, 0.0
  %4977 = vadd.xlane.f32.xlu0 %v4976
  %v4978 = vpop.xlane.xlu0 %4977
  %v4979 = vsel %vm4927, %v4912, 0.0
  %4980 = vadd.xlane.f32.xlu0 %v4979
  %v4981 = vpop.xlane.xlu0 %4980
  %v4982 = vsel %vm4927, %v4913, 0.0
  %4983 = vadd.xlane.f32.xlu0 %v4982
  %v4984 = vpop.xlane.xlu0 %4983
  %v4985 = vsel %vm4927, %v4914, 0.0
  %4986 = vadd.xlane.f32.xlu0 %v4985
  %v4987 = vpop.xlane.xlu0 %4986
  %v4988 = vsel %vm4927, %v4915, 0.0
  %4989 = vadd.xlane.f32.xlu0 %v4988
  %v4990 = vpop.xlane.xlu0 %4989
  %v4991 = vsel %vm4927, %v4916, 0.0
  %4992 = vadd.xlane.f32.xlu0 %v4991
  %v4993 = vpop.xlane.xlu0 %4992
  %v4994 = vsel %vm4927, %v4917, 0.0
  %4995 = vadd.xlane.f32.xlu0 %v4994
  %v4996 = vpop.xlane.xlu0 %4995
  %v4997 = vsel %vm4927, %v4918, 0.0
  %4998 = vadd.xlane.f32.xlu0 %v4997
  %v4999 = vpop.xlane.xlu0 %4998
  %v5000 = vsel %vm4927, %v4919, 0.0
  %5001 = vadd.xlane.f32.xlu0 %v5000
  %v5002 = vpop.xlane.xlu0 %5001
  %v5003 = vsel %vm4927, %v4920, 0.0
  %5004 = vadd.xlane.f32.xlu0 %v5003
  %v5005 = vpop.xlane.xlu0 %5004
  %v5006 = vsel %vm4927, %v4921, 0.0
  %5007 = vadd.xlane.f32.xlu0 %v5006
  %v5008 = vpop.xlane.xlu0 %5007
  %v5009 = vsel %vm4927, %v4922, 0.0
  %5010 = vadd.xlane.f32.xlu0 %v5009
  %v5011 = vpop.xlane.xlu0 %5010
  %v5012 = vsel %vm4927, %v4923, 0.0
  %5013 = vadd.xlane.f32.xlu0 %v5012
  %v5014 = vpop.xlane.xlu0 %5013
  %v5015 = vsel %vm4927, %v4924, 0.0
  %5016 = vadd.xlane.f32.xlu0 %v5015
  %v5017 = vpop.xlane.xlu0 %5016
  %v5018 = vsel %vm4927, %v4925, 0.0
  %5019 = vadd.xlane.f32.xlu0 %v5018
  %v5020 = vpop.xlane.xlu0 %5019
  %v5021 = vsel %vm4927, %v4926, 0.0
  %5022 = vadd.xlane.f32.xlu0 %v5021
  %v5023 = vpop.xlane.xlu0 %5022
  %v5024 = vld [vmem:[%s41] sm:$0xff]
  %v5025 = vld [vmem:[%s41 + $0x8] sm:$0xff]
  %v5026 = vld [vmem:[%s41 + $0x10] sm:$0xff]
  %v5027 = vld [vmem:[%s41 + $0x18] sm:$0xff]
  %v5028 = vld [vmem:[%s41 + $0x20] sm:$0xff]
  %v5029 = vld [vmem:[%s41 + $0x28] sm:$0xff]
  %v5030 = vld [vmem:[%s41 + $0x30] sm:$0xff]
  %v5031 = vld [vmem:[%s41 + $0x38] sm:$0xff]
  %v5033 = vsel %vm3963, %v4463, 0
  %v5036 = vsel %vm3963, %v4464, 0
  %v5039 = vsel %vm3963, %v4465, 0
  %v5042 = vsel %vm3963, %v4466, 0
  %v5045 = vsel %vm3963, %v4467, 0
  %v5048 = vsel %vm3963, %v4468, 0
  %v5051 = vsel %vm3963, %v4469, 0
  %v5054 = vsel %vm3963, %v4470, 0
  %v5057 = vsel %vm3963, %v4471, 0
  %v5060 = vsel %vm3963, %v4472, 0
  %v5063 = vsel %vm3963, %v4473, 0
  %v5066 = vsel %vm3963, %v4474, 0
  %v5069 = vsel %vm3963, %v4475, 0
  %v5072 = vsel %vm3963, %v4476, 0
  %v5075 = vsel %vm3963, %v4477, 0
  %v5078 = vsel %vm3963, %v4478, 0
  %v5081 = vsel %vm3963, %v4479, 0
  %v5084 = vsel %vm3963, %v4480, 0
  %v5087 = vsel %vm3963, %v4481, 0
  %v5090 = vsel %vm3963, %v4482, 0
  %v5093 = vsel %vm3963, %v4483, 0
  %v5096 = vsel %vm3963, %v4484, 0
  %v5099 = vsel %vm3963, %v4485, 0
  %v5102 = vsel %vm3963, %v4486, 0
  %v5105 = vsel %vm3963, %v4487, 0
  %v5108 = vsel %vm3963, %v4488, 0
  %v5111 = vsel %vm3963, %v4489, 0
  %v5114 = vsel %vm3963, %v4490, 0
  %v5117 = vsel %vm3963, %v4491, 0
  %v5120 = vsel %vm3963, %v4492, 0
  %v5123 = vsel %vm3963, %v4493, 0
  %v5126 = vsel %vm3963, %v4494, 0
  %5128 = vmatpush.msra.mxu0 0.0
  %5129 = vmatpush.msra.mxu0 0.0
  %5130 = vmatpush.msra.mxu0 0.0
  %5131 = vmatpush.msra.mxu0 0.0
  %5132 = vmatpush.msra.mxu0 0.0
  %5133 = vmatpush.msra.mxu0 0.0
  %5134 = vmatpush.msra.mxu0 0.0
  %5135 = vmatpush.msra.mxu0 0.0
  %5136 = vmatpush.msra.mxu0 %v5031
  %5137 = vmatpush.msra.mxu0 %v5030
  %5138 = vmatpush.msra.mxu0 %v5029
  %5139 = vmatpush.msra.mxu0 %v5028
  %5140 = vmatpush.msra.mxu0 %v5027
  %5141 = vmatpush.msra.mxu0 %v5026
  %5142 = vmatpush.msra.mxu0 %v5025
  %5143 = vmatpush.msra.mxu0 %v5024
  %5144 = vmatmul.f32.gmra.mxu0 %v5033
  %v5145 = vpop.f32.mrf.mxu0
  %v5146 = vadd.f32 0.0, %v5145
  %5147 = vmatmul.f32.gmra.mxu0 %v5036
  %v5148 = vpop.f32.mrf.mxu0
  %v5149 = vadd.f32 0.0, %v5148
  %5150 = vmatmul.f32.gmra.mxu0 %v5039
  %v5151 = vpop.f32.mrf.mxu0
  %v5152 = vadd.f32 0.0, %v5151
  %5153 = vmatmul.f32.gmra.mxu0 %v5042
  %v5154 = vpop.f32.mrf.mxu0
  %v5155 = vadd.f32 0.0, %v5154
  %5156 = vmatmul.f32.gmra.mxu0 %v5045
  %v5157 = vpop.f32.mrf.mxu0
  %v5158 = vadd.f32 0.0, %v5157
  %5159 = vmatmul.f32.gmra.mxu0 %v5048
  %v5160 = vpop.f32.mrf.mxu0
  %v5161 = vadd.f32 0.0, %v5160
  %5162 = vmatmul.f32.gmra.mxu0 %v5051
  %v5163 = vpop.f32.mrf.mxu0
  %v5164 = vadd.f32 0.0, %v5163
  %5165 = vmatmul.f32.gmra.mxu0 %v5054
  %v5166 = vpop.f32.mrf.mxu0
  %v5167 = vadd.f32 0.0, %v5166
  %5168 = vmatmul.f32.gmra.mxu0 %v5057
  %v5169 = vpop.f32.mrf.mxu0
  %v5170 = vadd.f32 0.0, %v5169
  %5171 = vmatmul.f32.gmra.mxu0 %v5060
  %v5172 = vpop.f32.mrf.mxu0
  %v5173 = vadd.f32 0.0, %v5172
  %5174 = vmatmul.f32.gmra.mxu0 %v5063
  %v5175 = vpop.f32.mrf.mxu0
  %v5176 = vadd.f32 0.0, %v5175
  %5177 = vmatmul.f32.gmra.mxu0 %v5066
  %v5178 = vpop.f32.mrf.mxu0
  %v5179 = vadd.f32 0.0, %v5178
  %5180 = vmatmul.f32.gmra.mxu0 %v5069
  %v5181 = vpop.f32.mrf.mxu0
  %v5182 = vadd.f32 0.0, %v5181
  %5183 = vmatmul.f32.gmra.mxu0 %v5072
  %v5184 = vpop.f32.mrf.mxu0
  %v5185 = vadd.f32 0.0, %v5184
  %5186 = vmatmul.f32.gmra.mxu0 %v5075
  %v5187 = vpop.f32.mrf.mxu0
  %v5188 = vadd.f32 0.0, %v5187
  %5189 = vmatmul.f32.gmra.mxu0 %v5078
  %v5190 = vpop.f32.mrf.mxu0
  %v5191 = vadd.f32 0.0, %v5190
  %5192 = vmatmul.f32.gmra.mxu0 %v5081
  %v5193 = vpop.f32.mrf.mxu0
  %v5194 = vadd.f32 0.0, %v5193
  %5195 = vmatmul.f32.gmra.mxu0 %v5084
  %v5196 = vpop.f32.mrf.mxu0
  %v5197 = vadd.f32 0.0, %v5196
  %5198 = vmatmul.f32.gmra.mxu0 %v5087
  %v5199 = vpop.f32.mrf.mxu0
  %v5200 = vadd.f32 0.0, %v5199
  %5201 = vmatmul.f32.gmra.mxu0 %v5090
  %v5202 = vpop.f32.mrf.mxu0
  %v5203 = vadd.f32 0.0, %v5202
  %5204 = vmatmul.f32.gmra.mxu0 %v5093
  %v5205 = vpop.f32.mrf.mxu0
  %v5206 = vadd.f32 0.0, %v5205
  %5207 = vmatmul.f32.gmra.mxu0 %v5096
  %v5208 = vpop.f32.mrf.mxu0
  %v5209 = vadd.f32 0.0, %v5208
  %5210 = vmatmul.f32.gmra.mxu0 %v5099
  %v5211 = vpop.f32.mrf.mxu0
  %v5212 = vadd.f32 0.0, %v5211
  %5213 = vmatmul.f32.gmra.mxu0 %v5102
  %v5214 = vpop.f32.mrf.mxu0
  %v5215 = vadd.f32 0.0, %v5214
  %5216 = vmatmul.f32.gmra.mxu0 %v5105
  %v5217 = vpop.f32.mrf.mxu0
  %v5218 = vadd.f32 0.0, %v5217
  %5219 = vmatmul.f32.gmra.mxu0 %v5108
  %v5220 = vpop.f32.mrf.mxu0
  %v5221 = vadd.f32 0.0, %v5220
  %5222 = vmatmul.f32.gmra.mxu0 %v5111
  %v5223 = vpop.f32.mrf.mxu0
  %v5224 = vadd.f32 0.0, %v5223
  %5225 = vmatmul.f32.gmra.mxu0 %v5114
  %v5226 = vpop.f32.mrf.mxu0
  %v5227 = vadd.f32 0.0, %v5226
  %5228 = vmatmul.f32.gmra.mxu0 %v5117
  %v5229 = vpop.f32.mrf.mxu0
  %v5230 = vadd.f32 0.0, %v5229
  %5231 = vmatmul.f32.gmra.mxu0 %v5120
  %v5232 = vpop.f32.mrf.mxu0
  %v5233 = vadd.f32 0.0, %v5232
  %5234 = vmatmul.f32.gmra.mxu0 %v5123
  %v5235 = vpop.f32.mrf.mxu0
  %v5236 = vadd.f32 0.0, %v5235
  %5237 = vmatmul.f32.gmra.mxu0 %v5126
  %v5238 = vpop.f32.mrf.mxu0
  %v5239 = vadd.f32 0.0, %v5238
  %5240 = vdwg.mxu0
  %v5241 = vld [vmem:[%s43] sm:$0x1]
  %v5243 = vperm.slane %v5241, 0
  %v5245 = vadd.f32 %v5146, %v5243
  %v5246 = vadd.f32 %v5149, %v5243
  %v5247 = vadd.f32 %v5152, %v5243
  %v5248 = vadd.f32 %v5155, %v5243
  %v5249 = vadd.f32 %v5158, %v5243
  %v5250 = vadd.f32 %v5161, %v5243
  %v5251 = vadd.f32 %v5164, %v5243
  %v5252 = vadd.f32 %v5167, %v5243
  %v5253 = vadd.f32 %v5170, %v5243
  %v5254 = vadd.f32 %v5173, %v5243
  %v5255 = vadd.f32 %v5176, %v5243
  %v5256 = vadd.f32 %v5179, %v5243
  %v5257 = vadd.f32 %v5182, %v5243
  %v5258 = vadd.f32 %v5185, %v5243
  %v5259 = vadd.f32 %v5188, %v5243
  %v5260 = vadd.f32 %v5191, %v5243
  %v5261 = vadd.f32 %v5194, %v5243
  %v5262 = vadd.f32 %v5197, %v5243
  %v5263 = vadd.f32 %v5200, %v5243
  %v5264 = vadd.f32 %v5203, %v5243
  %v5265 = vadd.f32 %v5206, %v5243
  %v5266 = vadd.f32 %v5209, %v5243
  %v5267 = vadd.f32 %v5212, %v5243
  %v5268 = vadd.f32 %v5215, %v5243
  %v5269 = vadd.f32 %v5218, %v5243
  %v5270 = vadd.f32 %v5221, %v5243
  %v5271 = vadd.f32 %v5224, %v5243
  %v5272 = vadd.f32 %v5227, %v5243
  %v5273 = vadd.f32 %v5230, %v5243
  %v5274 = vadd.f32 %v5233, %v5243
  %v5275 = vadd.f32 %v5236, %v5243
  %v5276 = vadd.f32 %v5239, %v5243
  %v5277 = vld [vmem:[%s45] sm:$0x1]
  %s5278 = sld [smem:[#allocation3 + $0x1]]
  %v5279 = vmul.f32 %v5146, 2.0
  %v5280 = vmul.f32 %v5149, 2.0
  %v5281 = vmul.f32 %v5152, 2.0
  %v5282 = vmul.f32 %v5155, 2.0
  %v5283 = vmul.f32 %v5158, 2.0
  %v5284 = vmul.f32 %v5161, 2.0
  %v5285 = vmul.f32 %v5164, 2.0
  %v5286 = vmul.f32 %v5167, 2.0
  %v5287 = vmul.f32 %v5170, 2.0
  %v5288 = vmul.f32 %v5173, 2.0
  %v5289 = vmul.f32 %v5176, 2.0
  %v5290 = vmul.f32 %v5179, 2.0
  %v5291 = vmul.f32 %v5182, 2.0
  %v5292 = vmul.f32 %v5185, 2.0
  %v5293 = vmul.f32 %v5188, 2.0
  %v5294 = vmul.f32 %v5191, 2.0
  %v5295 = vmul.f32 %v5194, 2.0
  %v5296 = vmul.f32 %v5197, 2.0
  %v5297 = vmul.f32 %v5200, 2.0
  %v5298 = vmul.f32 %v5203, 2.0
  %v5299 = vmul.f32 %v5206, 2.0
  %v5300 = vmul.f32 %v5209, 2.0
  %v5301 = vmul.f32 %v5212, 2.0
  %v5302 = vmul.f32 %v5215, 2.0
  %v5303 = vmul.f32 %v5218, 2.0
  %v5304 = vmul.f32 %v5221, 2.0
  %v5305 = vmul.f32 %v5224, 2.0
  %v5306 = vmul.f32 %v5227, 2.0
  %v5307 = vmul.f32 %v5230, 2.0
  %v5308 = vmul.f32 %v5233, 2.0
  %v5309 = vmul.f32 %v5236, 2.0
  %v5310 = vmul.f32 %v5239, 2.0
  %v5311 = vsub.f32 %v4673, %v5279
  %v5312 = vsub.f32 %v4676, %v5280
  %v5313 = vsub.f32 %v4679, %v5281
  %v5314 = vsub.f32 %v4682, %v5282
  %v5315 = vsub.f32 %v4685, %v5283
  %v5316 = vsub.f32 %v4688, %v5284
  %v5317 = vsub.f32 %v4691, %v5285
  %v5318 = vsub.f32 %v4694, %v5286
  %v5319 = vsub.f32 %v4697, %v5287
  %v5320 = vsub.f32 %v4700, %v5288
  %v5321 = vsub.f32 %v4703, %v5289
  %v5322 = vsub.f32 %v4706, %v5290
  %v5323 = vsub.f32 %v4709, %v5291
  %v5324 = vsub.f32 %v4712, %v5292
  %v5325 = vsub.f32 %v4715, %v5293
  %v5326 = vsub.f32 %v4718, %v5294
  %v5327 = vsub.f32 %v4721, %v5295
  %v5328 = vsub.f32 %v4724, %v5296
  %v5329 = vsub.f32 %v4727, %v5297
  %v5330 = vsub.f32 %v4730, %v5298
  %v5331 = vsub.f32 %v4733, %v5299
  %v5332 = vsub.f32 %v4736, %v5300
  %v5333 = vsub.f32 %v4739, %v5301
  %v5334 = vsub.f32 %v4742, %v5302
  %v5335 = vsub.f32 %v4745, %v5303
  %v5336 = vsub.f32 %v4748, %v5304
  %v5337 = vsub.f32 %v4751, %v5305
  %v5338 = vsub.f32 %v4754, %v5306
  %v5339 = vsub.f32 %v4757, %v5307
  %v5340 = vsub.f32 %v4760, %v5308
  %v5341 = vsub.f32 %v4763, %v5309
  %v5342 = vsub.f32 %v4766, %v5310
  %v5344 = vperm.slane %v5277, 0
  %5345 = vrot.lane.b32.xlu0 %v5344, 8
  %v5346 = vpop.permute.xlu0 %5345
  %v5348 = vadd.f32 %v5311, %v5346
  %v5349 = vadd.f32 %v5312, %v5346
  %v5350 = vadd.f32 %v5313, %v5346
  %v5351 = vadd.f32 %v5314, %v5346
  %v5352 = vadd.f32 %v5315, %v5346
  %v5353 = vadd.f32 %v5316, %v5346
  %v5354 = vadd.f32 %v5317, %v5346
  %v5355 = vadd.f32 %v5318, %v5346
  %v5356 = vadd.f32 %v5319, %v5346
  %v5357 = vadd.f32 %v5320, %v5346
  %v5358 = vadd.f32 %v5321, %v5346
  %v5359 = vadd.f32 %v5322, %v5346
  %v5360 = vadd.f32 %v5323, %v5346
  %v5361 = vadd.f32 %v5324, %v5346
  %v5362 = vadd.f32 %v5325, %v5346
  %v5363 = vadd.f32 %v5326, %v5346
  %v5364 = vadd.f32 %v5327, %v5346
  %v5365 = vadd.f32 %v5328, %v5346
  %v5366 = vadd.f32 %v5329, %v5346
  %v5367 = vadd.f32 %v5330, %v5346
  %v5368 = vadd.f32 %v5331, %v5346
  %v5369 = vadd.f32 %v5332, %v5346
  %v5370 = vadd.f32 %v5333, %v5346
  %v5371 = vadd.f32 %v5334, %v5346
  %v5372 = vadd.f32 %v5335, %v5346
  %v5373 = vadd.f32 %v5336, %v5346
  %v5374 = vadd.f32 %v5337, %v5346
  %v5375 = vadd.f32 %v5338, %v5346
  %v5376 = vadd.f32 %v5339, %v5346
  %v5377 = vadd.f32 %v5340, %v5346
  %v5378 = vadd.f32 %v5341, %v5346
  %v5379 = vadd.f32 %v5342, %v5346
  %vm5380 = vcmask 195648
  %v5381 = vsel %vm5380, %v5348, inf
  %5382 = vmin.xlane.f32.xlu0 %v5381
  %v5383 = vpop.xlane.xlu0 %5382
  %v5384 = vsel %vm5380, %v5349, inf
  %5385 = vmin.xlane.f32.xlu0 %v5384
  %v5386 = vpop.xlane.xlu0 %5385
  %v5387 = vsel %vm5380, %v5350, inf
  %5388 = vmin.xlane.f32.xlu0 %v5387
  %v5389 = vpop.xlane.xlu0 %5388
  %v5390 = vsel %vm5380, %v5351, inf
  %5391 = vmin.xlane.f32.xlu0 %v5390
  %v5392 = vpop.xlane.xlu0 %5391
  %v5393 = vsel %vm5380, %v5352, inf
  %5394 = vmin.xlane.f32.xlu0 %v5393
  %v5395 = vpop.xlane.xlu0 %5394
  %v5396 = vsel %vm5380, %v5353, inf
  %5397 = vmin.xlane.f32.xlu0 %v5396
  %v5398 = vpop.xlane.xlu0 %5397
  %v5399 = vsel %vm5380, %v5354, inf
  %5400 = vmin.xlane.f32.xlu0 %v5399
  %v5401 = vpop.xlane.xlu0 %5400
  %v5402 = vsel %vm5380, %v5355, inf
  %5403 = vmin.xlane.f32.xlu0 %v5402
  %v5404 = vpop.xlane.xlu0 %5403
  %v5405 = vsel %vm5380, %v5356, inf
  %5406 = vmin.xlane.f32.xlu0 %v5405
  %v5407 = vpop.xlane.xlu0 %5406
  %v5408 = vsel %vm5380, %v5357, inf
  %5409 = vmin.xlane.f32.xlu0 %v5408
  %v5410 = vpop.xlane.xlu0 %5409
  %v5411 = vsel %vm5380, %v5358, inf
  %5412 = vmin.xlane.f32.xlu0 %v5411
  %v5413 = vpop.xlane.xlu0 %5412
  %v5414 = vsel %vm5380, %v5359, inf
  %5415 = vmin.xlane.f32.xlu0 %v5414
  %v5416 = vpop.xlane.xlu0 %5415
  %v5417 = vsel %vm5380, %v5360, inf
  %5418 = vmin.xlane.f32.xlu0 %v5417
  %v5419 = vpop.xlane.xlu0 %5418
  %v5420 = vsel %vm5380, %v5361, inf
  %5421 = vmin.xlane.f32.xlu0 %v5420
  %v5422 = vpop.xlane.xlu0 %5421
  %v5423 = vsel %vm5380, %v5362, inf
  %5424 = vmin.xlane.f32.xlu0 %v5423
  %v5425 = vpop.xlane.xlu0 %5424
  %v5426 = vsel %vm5380, %v5363, inf
  %5427 = vmin.xlane.f32.xlu0 %v5426
  %v5428 = vpop.xlane.xlu0 %5427
  %v5429 = vsel %vm5380, %v5364, inf
  %5430 = vmin.xlane.f32.xlu0 %v5429
  %v5431 = vpop.xlane.xlu0 %5430
  %v5432 = vsel %vm5380, %v5365, inf
  %5433 = vmin.xlane.f32.xlu0 %v5432
  %v5434 = vpop.xlane.xlu0 %5433
  %v5435 = vsel %vm5380, %v5366, inf
  %5436 = vmin.xlane.f32.xlu0 %v5435
  %v5437 = vpop.xlane.xlu0 %5436
  %v5438 = vsel %vm5380, %v5367, inf
  %5439 = vmin.xlane.f32.xlu0 %v5438
  %v5440 = vpop.xlane.xlu0 %5439
  %v5441 = vsel %vm5380, %v5368, inf
  %5442 = vmin.xlane.f32.xlu0 %v5441
  %v5443 = vpop.xlane.xlu0 %5442
  %v5444 = vsel %vm5380, %v5369, inf
  %5445 = vmin.xlane.f32.xlu0 %v5444
  %v5446 = vpop.xlane.xlu0 %5445
  %v5447 = vsel %vm5380, %v5370, inf
  %5448 = vmin.xlane.f32.xlu0 %v5447
  %v5449 = vpop.xlane.xlu0 %5448
  %v5450 = vsel %vm5380, %v5371, inf
  %5451 = vmin.xlane.f32.xlu0 %v5450
  %v5452 = vpop.xlane.xlu0 %5451
  %v5453 = vsel %vm5380, %v5372, inf
  %5454 = vmin.xlane.f32.xlu0 %v5453
  %v5455 = vpop.xlane.xlu0 %5454
  %v5456 = vsel %vm5380, %v5373, inf
  %5457 = vmin.xlane.f32.xlu0 %v5456
  %v5458 = vpop.xlane.xlu0 %5457
  %v5459 = vsel %vm5380, %v5374, inf
  %5460 = vmin.xlane.f32.xlu0 %v5459
  %v5461 = vpop.xlane.xlu0 %5460
  %v5462 = vsel %vm5380, %v5375, inf
  %5463 = vmin.xlane.f32.xlu0 %v5462
  %v5464 = vpop.xlane.xlu0 %5463
  %v5465 = vsel %vm5380, %v5376, inf
  %5466 = vmin.xlane.f32.xlu0 %v5465
  %v5467 = vpop.xlane.xlu0 %5466
  %v5468 = vsel %vm5380, %v5377, inf
  %5469 = vmin.xlane.f32.xlu0 %v5468
  %v5470 = vpop.xlane.xlu0 %5469
  %v5471 = vsel %vm5380, %v5378, inf
  %5472 = vmin.xlane.f32.xlu0 %v5471
  %v5473 = vpop.xlane.xlu0 %5472
  %v5474 = vsel %vm5380, %v5379, inf
  %5475 = vmin.xlane.f32.xlu0 %v5474
  %v5476 = vpop.xlane.xlu0 %5475
  %v5477 = vstv %s5278
  %v5478 = vsub.f32 %v5477, %v5383
  %v5479 = vsub.f32 %v5477, %v5386
  %v5480 = vsub.f32 %v5477, %v5389
  %v5481 = vsub.f32 %v5477, %v5392
  %v5482 = vsub.f32 %v5477, %v5395
  %v5483 = vsub.f32 %v5477, %v5398
  %v5484 = vsub.f32 %v5477, %v5401
  %v5485 = vsub.f32 %v5477, %v5404
  %v5486 = vsub.f32 %v5477, %v5407
  %v5487 = vsub.f32 %v5477, %v5410
  %v5488 = vsub.f32 %v5477, %v5413
  %v5489 = vsub.f32 %v5477, %v5416
  %v5490 = vsub.f32 %v5477, %v5419
  %v5491 = vsub.f32 %v5477, %v5422
  %v5492 = vsub.f32 %v5477, %v5425
  %v5493 = vsub.f32 %v5477, %v5428
  %v5494 = vsub.f32 %v5477, %v5431
  %v5495 = vsub.f32 %v5477, %v5434
  %v5496 = vsub.f32 %v5477, %v5437
  %v5497 = vsub.f32 %v5477, %v5440
  %v5498 = vsub.f32 %v5477, %v5443
  %v5499 = vsub.f32 %v5477, %v5446
  %v5500 = vsub.f32 %v5477, %v5449
  %v5501 = vsub.f32 %v5477, %v5452
  %v5502 = vsub.f32 %v5477, %v5455
  %v5503 = vsub.f32 %v5477, %v5458
  %v5504 = vsub.f32 %v5477, %v5461
  %v5505 = vsub.f32 %v5477, %v5464
  %v5506 = vsub.f32 %v5477, %v5467
  %v5507 = vsub.f32 %v5477, %v5470
  %v5508 = vsub.f32 %v5477, %v5473
  %v5509 = vsub.f32 %v5477, %v5476
  %v5510 = vld [vmem:[%s47] sm:$0xff]
  %v5511 = vld [vmem:[%s47 + $0x8] sm:$0xff]
  %v5513 = vsel %vm4213, %v4535, 0
  %v5516 = vsel %vm4213, %v4536, 0
  %v5519 = vsel %vm4213, %v4537, 0
  %v5522 = vsel %vm4213, %v4538, 0
  %v5525 = vsel %vm4213, %v4539, 0
  %v5528 = vsel %vm4213, %v4540, 0
  %v5531 = vsel %vm4213, %v4541, 0
  %v5534 = vsel %vm4213, %v4542, 0
  %v5537 = vsel %vm4213, %v4543, 0
  %v5540 = vsel %vm4213, %v4544, 0
  %v5543 = vsel %vm4213, %v4545, 0
  %v5546 = vsel %vm4213, %v4546, 0
  %v5549 = vsel %vm4213, %v4547, 0
  %v5552 = vsel %vm4213, %v4548, 0
  %v5555 = vsel %vm4213, %v4549, 0
  %v5558 = vsel %vm4213, %v4550, 0
  %v5561 = vsel %vm4213, %v4551, 0
  %v5564 = vsel %vm4213, %v4552, 0
  %v5567 = vsel %vm4213, %v4553, 0
  %v5570 = vsel %vm4213, %v4554, 0
  %v5573 = vsel %vm4213, %v4555, 0
  %v5576 = vsel %vm4213, %v4556, 0
  %v5579 = vsel %vm4213, %v4557, 0
  %v5582 = vsel %vm4213, %v4558, 0
  %v5585 = vsel %vm4213, %v4559, 0
  %v5588 = vsel %vm4213, %v4560, 0
  %v5591 = vsel %vm4213, %v4561, 0
  %v5594 = vsel %vm4213, %v4562, 0
  %v5597 = vsel %vm4213, %v4563, 0
  %v5600 = vsel %vm4213, %v4564, 0
  %v5603 = vsel %vm4213, %v4565, 0
  %v5606 = vsel %vm4213, %v4566, 0
  %v5609 = vsel %vm4213, %v5510, 0
  %v5612 = vsel %vm4213, %v5511, 0
  %5614 = vmatpush.xpose.msra.mxu0 0.0
  %5615 = vmatpush.xpose.msra.mxu0 0.0
  %5616 = vmatpush.xpose.msra.mxu0 0.0
  %5617 = vmatpush.xpose.msra.mxu0 0.0
  %5618 = vmatpush.xpose.msra.mxu0 0.0
  %5619 = vmatpush.xpose.msra.mxu0 0.0
  %5620 = vmatpush.xpose.msra.mxu0 0.0
  %5621 = vmatpush.xpose.msra.mxu0 0.0
  %5622 = vmatpush.xpose.msra.mxu0 0.0
  %5623 = vmatpush.xpose.msra.mxu0 0.0
  %5624 = vmatpush.xpose.msra.mxu0 0.0
  %5625 = vmatpush.xpose.msra.mxu0 0.0
  %5626 = vmatpush.xpose.msra.mxu0 0.0
  %5627 = vmatpush.xpose.msra.mxu0 0.0
  %5628 = vmatpush.xpose.msra.mxu0 %v5612
  %5629 = vmatpush.xpose.msra.mxu0 %v5609
  %5630 = vmatmul.f32.gmra.mxu0 %v5513
  %v5631 = vpop.f32.mrf.mxu0
  %v5632 = vadd.f32 0.0, %v5631
  %5633 = vmatmul.f32.gmra.mxu0 %v5516
  %v5634 = vpop.f32.mrf.mxu0
  %v5635 = vadd.f32 0.0, %v5634
  %5636 = vmatmul.f32.gmra.mxu0 %v5519
  %v5637 = vpop.f32.mrf.mxu0
  %v5638 = vadd.f32 0.0, %v5637
  %5639 = vmatmul.f32.gmra.mxu0 %v5522
  %v5640 = vpop.f32.mrf.mxu0
  %v5641 = vadd.f32 0.0, %v5640
  %5642 = vmatmul.f32.gmra.mxu0 %v5525
  %v5643 = vpop.f32.mrf.mxu0
  %v5644 = vadd.f32 0.0, %v5643
  %5645 = vmatmul.f32.gmra.mxu0 %v5528
  %v5646 = vpop.f32.mrf.mxu0
  %v5647 = vadd.f32 0.0, %v5646
  %5648 = vmatmul.f32.gmra.mxu0 %v5531
  %v5649 = vpop.f32.mrf.mxu0
  %v5650 = vadd.f32 0.0, %v5649
  %5651 = vmatmul.f32.gmra.mxu0 %v5534
  %v5652 = vpop.f32.mrf.mxu0
  %v5653 = vadd.f32 0.0, %v5652
  %5654 = vmatmul.f32.gmra.mxu0 %v5537
  %v5655 = vpop.f32.mrf.mxu0
  %v5656 = vadd.f32 0.0, %v5655
  %5657 = vmatmul.f32.gmra.mxu0 %v5540
  %v5658 = vpop.f32.mrf.mxu0
  %v5659 = vadd.f32 0.0, %v5658
  %5660 = vmatmul.f32.gmra.mxu0 %v5543
  %v5661 = vpop.f32.mrf.mxu0
  %v5662 = vadd.f32 0.0, %v5661
  %5663 = vmatmul.f32.gmra.mxu0 %v5546
  %v5664 = vpop.f32.mrf.mxu0
  %v5665 = vadd.f32 0.0, %v5664
  %5666 = vmatmul.f32.gmra.mxu0 %v5549
  %v5667 = vpop.f32.mrf.mxu0
  %v5668 = vadd.f32 0.0, %v5667
  %5669 = vmatmul.f32.gmra.mxu0 %v5552
  %v5670 = vpop.f32.mrf.mxu0
  %v5671 = vadd.f32 0.0, %v5670
  %5672 = vmatmul.f32.gmra.mxu0 %v5555
  %v5673 = vpop.f32.mrf.mxu0
  %v5674 = vadd.f32 0.0, %v5673
  %5675 = vmatmul.f32.gmra.mxu0 %v5558
  %v5676 = vpop.f32.mrf.mxu0
  %v5677 = vadd.f32 0.0, %v5676
  %5678 = vmatmul.f32.gmra.mxu0 %v5561
  %v5679 = vpop.f32.mrf.mxu0
  %v5680 = vadd.f32 0.0, %v5679
  %5681 = vmatmul.f32.gmra.mxu0 %v5564
  %v5682 = vpop.f32.mrf.mxu0
  %v5683 = vadd.f32 0.0, %v5682
  %5684 = vmatmul.f32.gmra.mxu0 %v5567
  %v5685 = vpop.f32.mrf.mxu0
  %v5686 = vadd.f32 0.0, %v5685
  %5687 = vmatmul.f32.gmra.mxu0 %v5570
  %v5688 = vpop.f32.mrf.mxu0
  %v5689 = vadd.f32 0.0, %v5688
  %5690 = vmatmul.f32.gmra.mxu0 %v5573
  %v5691 = vpop.f32.mrf.mxu0
  %v5692 = vadd.f32 0.0, %v5691
  %5693 = vmatmul.f32.gmra.mxu0 %v5576
  %v5694 = vpop.f32.mrf.mxu0
  %v5695 = vadd.f32 0.0, %v5694
  %5696 = vmatmul.f32.gmra.mxu0 %v5579
  %v5697 = vpop.f32.mrf.mxu0
  %v5698 = vadd.f32 0.0, %v5697
  %5699 = vmatmul.f32.gmra.mxu0 %v5582
  %v5700 = vpop.f32.mrf.mxu0
  %v5701 = vadd.f32 0.0, %v5700
  %5702 = vmatmul.f32.gmra.mxu0 %v5585
  %v5703 = vpop.f32.mrf.mxu0
  %v5704 = vadd.f32 0.0, %v5703
  %5705 = vmatmul.f32.gmra.mxu0 %v5588
  %v5706 = vpop.f32.mrf.mxu0
  %v5707 = vadd.f32 0.0, %v5706
  %5708 = vmatmul.f32.gmra.mxu0 %v5591
  %v5709 = vpop.f32.mrf.mxu0
  %v5710 = vadd.f32 0.0, %v5709
  %5711 = vmatmul.f32.gmra.mxu0 %v5594
  %v5712 = vpop.f32.mrf.mxu0
  %v5713 = vadd.f32 0.0, %v5712
  %5714 = vmatmul.f32.gmra.mxu0 %v5597
  %v5715 = vpop.f32.mrf.mxu0
  %v5716 = vadd.f32 0.0, %v5715
  %5717 = vmatmul.f32.gmra.mxu0 %v5600
  %v5718 = vpop.f32.mrf.mxu0
  %v5719 = vadd.f32 0.0, %v5718
  %5720 = vmatmul.f32.gmra.mxu0 %v5603
  %v5721 = vpop.f32.mrf.mxu0
  %v5722 = vadd.f32 0.0, %v5721
  %5723 = vmatmul.f32.gmra.mxu0 %v5606
  %v5724 = vpop.f32.mrf.mxu0
  %v5725 = vadd.f32 0.0, %v5724
  %5726 = vdwg.mxu0
  %v5727 = vld [vmem:[%s49] sm:$0x1]
  %s5728 = sld [smem:[#allocation3 + $0x2]]
  %v5729 = vmul.f32 %v5632, 2.0
  %v5730 = vmul.f32 %v5635, 2.0
  %v5731 = vmul.f32 %v5638, 2.0
  %v5732 = vmul.f32 %v5641, 2.0
  %v5733 = vmul.f32 %v5644, 2.0
  %v5734 = vmul.f32 %v5647, 2.0
  %v5735 = vmul.f32 %v5650, 2.0
  %v5736 = vmul.f32 %v5653, 2.0
  %v5737 = vmul.f32 %v5656, 2.0
  %v5738 = vmul.f32 %v5659, 2.0
  %v5739 = vmul.f32 %v5662, 2.0
  %v5740 = vmul.f32 %v5665, 2.0
  %v5741 = vmul.f32 %v5668, 2.0
  %v5742 = vmul.f32 %v5671, 2.0
  %v5743 = vmul.f32 %v5674, 2.0
  %v5744 = vmul.f32 %v5677, 2.0
  %v5745 = vmul.f32 %v5680, 2.0
  %v5746 = vmul.f32 %v5683, 2.0
  %v5747 = vmul.f32 %v5686, 2.0
  %v5748 = vmul.f32 %v5689, 2.0
  %v5749 = vmul.f32 %v5692, 2.0
  %v5750 = vmul.f32 %v5695, 2.0
  %v5751 = vmul.f32 %v5698, 2.0
  %v5752 = vmul.f32 %v5701, 2.0
  %v5753 = vmul.f32 %v5704, 2.0
  %v5754 = vmul.f32 %v5707, 2.0
  %v5755 = vmul.f32 %v5710, 2.0
  %v5756 = vmul.f32 %v5713, 2.0
  %v5757 = vmul.f32 %v5716, 2.0
  %v5758 = vmul.f32 %v5719, 2.0
  %v5759 = vmul.f32 %v5722, 2.0
  %v5760 = vmul.f32 %v5725, 2.0
  %v5761 = vsub.f32 %v4801, %v5729
  %v5762 = vsub.f32 %v4804, %v5730
  %v5763 = vsub.f32 %v4807, %v5731
  %v5764 = vsub.f32 %v4810, %v5732
  %v5765 = vsub.f32 %v4813, %v5733
  %v5766 = vsub.f32 %v4816, %v5734
  %v5767 = vsub.f32 %v4819, %v5735
  %v5768 = vsub.f32 %v4822, %v5736
  %v5769 = vsub.f32 %v4825, %v5737
  %v5770 = vsub.f32 %v4828, %v5738
  %v5771 = vsub.f32 %v4831, %v5739
  %v5772 = vsub.f32 %v4834, %v5740
  %v5773 = vsub.f32 %v4837, %v5741
  %v5774 = vsub.f32 %v4840, %v5742
  %v5775 = vsub.f32 %v4843, %v5743
  %v5776 = vsub.f32 %v4846, %v5744
  %v5777 = vsub.f32 %v4849, %v5745
  %v5778 = vsub.f32 %v4852, %v5746
  %v5779 = vsub.f32 %v4855, %v5747
  %v5780 = vsub.f32 %v4858, %v5748
  %v5781 = vsub.f32 %v4861, %v5749
  %v5782 = vsub.f32 %v4864, %v5750
  %v5783 = vsub.f32 %v4867, %v5751
  %v5784 = vsub.f32 %v4870, %v5752
  %v5785 = vsub.f32 %v4873, %v5753
  %v5786 = vsub.f32 %v4876, %v5754
  %v5787 = vsub.f32 %v4879, %v5755
  %v5788 = vsub.f32 %v4882, %v5756
  %v5789 = vsub.f32 %v4885, %v5757
  %v5790 = vsub.f32 %v4888, %v5758
  %v5791 = vsub.f32 %v4891, %v5759
  %v5792 = vsub.f32 %v4894, %v5760
  %v5794 = vperm.slane %v5727, 0
  %v5796 = vadd.f32 %v5761, %v5794
  %v5797 = vadd.f32 %v5762, %v5794
  %v5798 = vadd.f32 %v5763, %v5794
  %v5799 = vadd.f32 %v5764, %v5794
  %v5800 = vadd.f32 %v5765, %v5794
  %v5801 = vadd.f32 %v5766, %v5794
  %v5802 = vadd.f32 %v5767, %v5794
  %v5803 = vadd.f32 %v5768, %v5794
  %v5804 = vadd.f32 %v5769, %v5794
  %v5805 = vadd.f32 %v5770, %v5794
  %v5806 = vadd.f32 %v5771, %v5794
  %v5807 = vadd.f32 %v5772, %v5794
  %v5808 = vadd.f32 %v5773, %v5794
  %v5809 = vadd.f32 %v5774, %v5794
  %v5810 = vadd.f32 %v5775, %v5794
  %v5811 = vadd.f32 %v5776, %v5794
  %v5812 = vadd.f32 %v5777, %v5794
  %v5813 = vadd.f32 %v5778, %v5794
  %v5814 = vadd.f32 %v5779, %v5794
  %v5815 = vadd.f32 %v5780, %v5794
  %v5816 = vadd.f32 %v5781, %v5794
  %v5817 = vadd.f32 %v5782, %v5794
  %v5818 = vadd.f32 %v5783, %v5794
  %v5819 = vadd.f32 %v5784, %v5794
  %v5820 = vadd.f32 %v5785, %v5794
  %v5821 = vadd.f32 %v5786, %v5794
  %v5822 = vadd.f32 %v5787, %v5794
  %v5823 = vadd.f32 %v5788, %v5794
  %v5824 = vadd.f32 %v5789, %v5794
  %v5825 = vadd.f32 %v5790, %v5794
  %v5826 = vadd.f32 %v5791, %v5794
  %v5827 = vadd.f32 %v5792, %v5794
  %v5828 = vsel %vm3822, %v5796, inf
  %5829 = vmin.xlane.f32.xlu0 %v5828
  %v5830 = vpop.xlane.xlu0 %5829
  %v5831 = vsel %vm3822, %v5797, inf
  %5832 = vmin.xlane.f32.xlu0 %v5831
  %v5833 = vpop.xlane.xlu0 %5832
  %v5834 = vsel %vm3822, %v5798, inf
  %5835 = vmin.xlane.f32.xlu0 %v5834
  %v5836 = vpop.xlane.xlu0 %5835
  %v5837 = vsel %vm3822, %v5799, inf
  %5838 = vmin.xlane.f32.xlu0 %v5837
  %v5839 = vpop.xlane.xlu0 %5838
  %v5840 = vsel %vm3822, %v5800, inf
  %5841 = vmin.xlane.f32.xlu0 %v5840
  %v5842 = vpop.xlane.xlu0 %5841
  %v5843 = vsel %vm3822, %v5801, inf
  %5844 = vmin.xlane.f32.xlu0 %v5843
  %v5845 = vpop.xlane.xlu0 %5844
  %v5846 = vsel %vm3822, %v5802, inf
  %5847 = vmin.xlane.f32.xlu0 %v5846
  %v5848 = vpop.xlane.xlu0 %5847
  %v5849 = vsel %vm3822, %v5803, inf
  %5850 = vmin.xlane.f32.xlu0 %v5849
  %v5851 = vpop.xlane.xlu0 %5850
  %v5852 = vsel %vm3822, %v5804, inf
  %5853 = vmin.xlane.f32.xlu0 %v5852
  %v5854 = vpop.xlane.xlu0 %5853
  %v5855 = vsel %vm3822, %v5805, inf
  %5856 = vmin.xlane.f32.xlu0 %v5855
  %v5857 = vpop.xlane.xlu0 %5856
  %v5858 = vsel %vm3822, %v5806, inf
  %5859 = vmin.xlane.f32.xlu0 %v5858
  %v5860 = vpop.xlane.xlu0 %5859
  %v5861 = vsel %vm3822, %v5807, inf
  %5862 = vmin.xlane.f32.xlu0 %v5861
  %v5863 = vpop.xlane.xlu0 %5862
  %v5864 = vsel %vm3822, %v5808, inf
  %5865 = vmin.xlane.f32.xlu0 %v5864
  %v5866 = vpop.xlane.xlu0 %5865
  %v5867 = vsel %vm3822, %v5809, inf
  %5868 = vmin.xlane.f32.xlu0 %v5867
  %v5869 = vpop.xlane.xlu0 %5868
  %v5870 = vsel %vm3822, %v5810, inf
  %5871 = vmin.xlane.f32.xlu0 %v5870
  %v5872 = vpop.xlane.xlu0 %5871
  %v5873 = vsel %vm3822, %v5811, inf
  %5874 = vmin.xlane.f32.xlu0 %v5873
  %v5875 = vpop.xlane.xlu0 %5874
  %v5876 = vsel %vm3822, %v5812, inf
  %5877 = vmin.xlane.f32.xlu0 %v5876
  %v5878 = vpop.xlane.xlu0 %5877
  %v5879 = vsel %vm3822, %v5813, inf
  %5880 = vmin.xlane.f32.xlu0 %v5879
  %v5881 = vpop.xlane.xlu0 %5880
  %v5882 = vsel %vm3822, %v5814, inf
  %5883 = vmin.xlane.f32.xlu0 %v5882
  %v5884 = vpop.xlane.xlu0 %5883
  %v5885 = vsel %vm3822, %v5815, inf
  %5886 = vmin.xlane.f32.xlu0 %v5885
  %v5887 = vpop.xlane.xlu0 %5886
  %v5888 = vsel %vm3822, %v5816, inf
  %5889 = vmin.xlane.f32.xlu0 %v5888
  %v5890 = vpop.xlane.xlu0 %5889
  %v5891 = vsel %vm3822, %v5817, inf
  %5892 = vmin.xlane.f32.xlu0 %v5891
  %v5893 = vpop.xlane.xlu0 %5892
  %v5894 = vsel %vm3822, %v5818, inf
  %5895 = vmin.xlane.f32.xlu0 %v5894
  %v5896 = vpop.xlane.xlu0 %5895
  %v5897 = vsel %vm3822, %v5819, inf
  %5898 = vmin.xlane.f32.xlu0 %v5897
  %v5899 = vpop.xlane.xlu0 %5898
  %v5900 = vsel %vm3822, %v5820, inf
  %5901 = vmin.xlane.f32.xlu0 %v5900
  %v5902 = vpop.xlane.xlu0 %5901
  %v5903 = vsel %vm3822, %v5821, inf
  %5904 = vmin.xlane.f32.xlu0 %v5903
  %v5905 = vpop.xlane.xlu0 %5904
  %v5906 = vsel %vm3822, %v5822, inf
  %5907 = vmin.xlane.f32.xlu0 %v5906
  %v5908 = vpop.xlane.xlu0 %5907
  %v5909 = vsel %vm3822, %v5823, inf
  %5910 = vmin.xlane.f32.xlu0 %v5909
  %v5911 = vpop.xlane.xlu0 %5910
  %v5912 = vsel %vm3822, %v5824, inf
  %5913 = vmin.xlane.f32.xlu0 %v5912
  %v5914 = vpop.xlane.xlu0 %5913
  %v5915 = vsel %vm3822, %v5825, inf
  %5916 = vmin.xlane.f32.xlu0 %v5915
  %v5917 = vpop.xlane.xlu0 %5916
  %v5918 = vsel %vm3822, %v5826, inf
  %5919 = vmin.xlane.f32.xlu0 %v5918
  %v5920 = vpop.xlane.xlu0 %5919
  %v5921 = vsel %vm3822, %v5827, inf
  %5922 = vmin.xlane.f32.xlu0 %v5921
  %v5923 = vpop.xlane.xlu0 %5922
  %v5924 = vstv %s5728
  %v5925 = vsub.f32 %v5924, %v5830
  %v5926 = vsub.f32 %v5924, %v5833
  %v5927 = vsub.f32 %v5924, %v5836
  %v5928 = vsub.f32 %v5924, %v5839
  %v5929 = vsub.f32 %v5924, %v5842
  %v5930 = vsub.f32 %v5924, %v5845
  %v5931 = vsub.f32 %v5924, %v5848
  %v5932 = vsub.f32 %v5924, %v5851
  %v5933 = vsub.f32 %v5924, %v5854
  %v5934 = vsub.f32 %v5924, %v5857
  %v5935 = vsub.f32 %v5924, %v5860
  %v5936 = vsub.f32 %v5924, %v5863
  %v5937 = vsub.f32 %v5924, %v5866
  %v5938 = vsub.f32 %v5924, %v5869
  %v5939 = vsub.f32 %v5924, %v5872
  %v5940 = vsub.f32 %v5924, %v5875
  %v5941 = vsub.f32 %v5924, %v5878
  %v5942 = vsub.f32 %v5924, %v5881
  %v5943 = vsub.f32 %v5924, %v5884
  %v5944 = vsub.f32 %v5924, %v5887
  %v5945 = vsub.f32 %v5924, %v5890
  %v5946 = vsub.f32 %v5924, %v5893
  %v5947 = vsub.f32 %v5924, %v5896
  %v5948 = vsub.f32 %v5924, %v5899
  %v5949 = vsub.f32 %v5924, %v5902
  %v5950 = vsub.f32 %v5924, %v5905
  %v5951 = vsub.f32 %v5924, %v5908
  %v5952 = vsub.f32 %v5924, %v5911
  %v5953 = vsub.f32 %v5924, %v5914
  %v5954 = vsub.f32 %v5924, %v5917
  %v5955 = vsub.f32 %v5924, %v5920
  %v5956 = vsub.f32 %v5924, %v5923
  %v5957 = vld [vmem:[%s51] sm:$0xff]
  %v5958 = vld [vmem:[%s51 + $0x8] sm:$0xff]
  %v5960 = vsel %vm4927, %v4607, 0
  %v5963 = vsel %vm4927, %v4608, 0
  %v5966 = vsel %vm4927, %v4609, 0
  %v5969 = vsel %vm4927, %v4610, 0
  %v5972 = vsel %vm4927, %v4611, 0
  %v5975 = vsel %vm4927, %v4612, 0
  %v5978 = vsel %vm4927, %v4613, 0
  %v5981 = vsel %vm4927, %v4614, 0
  %v5984 = vsel %vm4927, %v4615, 0
  %v5987 = vsel %vm4927, %v4616, 0
  %v5990 = vsel %vm4927, %v4617, 0
  %v5993 = vsel %vm4927, %v4618, 0
  %v5996 = vsel %vm4927, %v4619, 0
  %v5999 = vsel %vm4927, %v4620, 0
  %v6002 = vsel %vm4927, %v4621, 0
  %v6005 = vsel %vm4927, %v4622, 0
  %v6008 = vsel %vm4927, %v4623, 0
  %v6011 = vsel %vm4927, %v4624, 0
  %v6014 = vsel %vm4927, %v4625, 0
  %v6017 = vsel %vm4927, %v4626, 0
  %v6020 = vsel %vm4927, %v4627, 0
  %v6023 = vsel %vm4927, %v4628, 0
  %v6026 = vsel %vm4927, %v4629, 0
  %v6029 = vsel %vm4927, %v4630, 0
  %v6032 = vsel %vm4927, %v4631, 0
  %v6035 = vsel %vm4927, %v4632, 0
  %v6038 = vsel %vm4927, %v4633, 0
  %v6041 = vsel %vm4927, %v4634, 0
  %v6044 = vsel %vm4927, %v4635, 0
  %v6047 = vsel %vm4927, %v4636, 0
  %v6050 = vsel %vm4927, %v4637, 0
  %v6053 = vsel %vm4927, %v4638, 0
  %v6056 = vsel %vm4927, %v5957, 0
  %v6059 = vsel %vm4927, %v5958, 0
  %6061 = vmatpush.xpose.msra.mxu0 0.0
  %6062 = vmatpush.xpose.msra.mxu0 0.0
  %6063 = vmatpush.xpose.msra.mxu0 0.0
  %6064 = vmatpush.xpose.msra.mxu0 0.0
  %6065 = vmatpush.xpose.msra.mxu0 0.0
  %6066 = vmatpush.xpose.msra.mxu0 0.0
  %6067 = vmatpush.xpose.msra.mxu0 0.0
  %6068 = vmatpush.xpose.msra.mxu0 0.0
  %6069 = vmatpush.xpose.msra.mxu0 0.0
  %6070 = vmatpush.xpose.msra.mxu0 0.0
  %6071 = vmatpush.xpose.msra.mxu0 0.0
  %6072 = vmatpush.xpose.msra.mxu0 0.0
  %6073 = vmatpush.xpose.msra.mxu0 0.0
  %6074 = vmatpush.xpose.msra.mxu0 0.0
  %6075 = vmatpush.xpose.msra.mxu0 %v6059
  %6076 = vmatpush.xpose.msra.mxu0 %v6056
  %6077 = vmatmul.f32.gmra.mxu0 %v5960
  %v6078 = vpop.f32.mrf.mxu0
  %v6079 = vadd.f32 0.0, %v6078
  %6080 = vmatmul.f32.gmra.mxu0 %v5963
  %v6081 = vpop.f32.mrf.mxu0
  %v6082 = vadd.f32 0.0, %v6081
  %6083 = vmatmul.f32.gmra.mxu0 %v5966
  %v6084 = vpop.f32.mrf.mxu0
  %v6085 = vadd.f32 0.0, %v6084
  %6086 = vmatmul.f32.gmra.mxu0 %v5969
  %v6087 = vpop.f32.mrf.mxu0
  %v6088 = vadd.f32 0.0, %v6087
  %6089 = vmatmul.f32.gmra.mxu0 %v5972
  %v6090 = vpop.f32.mrf.mxu0
  %v6091 = vadd.f32 0.0, %v6090
  %6092 = vmatmul.f32.gmra.mxu0 %v5975
  %v6093 = vpop.f32.mrf.mxu0
  %v6094 = vadd.f32 0.0, %v6093
  %6095 = vmatmul.f32.gmra.mxu0 %v5978
  %v6096 = vpop.f32.mrf.mxu0
  %v6097 = vadd.f32 0.0, %v6096
  %6098 = vmatmul.f32.gmra.mxu0 %v5981
  %v6099 = vpop.f32.mrf.mxu0
  %v6100 = vadd.f32 0.0, %v6099
  %6101 = vmatmul.f32.gmra.mxu0 %v5984
  %v6102 = vpop.f32.mrf.mxu0
  %v6103 = vadd.f32 0.0, %v6102
  %6104 = vmatmul.f32.gmra.mxu0 %v5987
  %v6105 = vpop.f32.mrf.mxu0
  %v6106 = vadd.f32 0.0, %v6105
  %6107 = vmatmul.f32.gmra.mxu0 %v5990
  %v6108 = vpop.f32.mrf.mxu0
  %v6109 = vadd.f32 0.0, %v6108
  %6110 = vmatmul.f32.gmra.mxu0 %v5993
  %v6111 = vpop.f32.mrf.mxu0
  %v6112 = vadd.f32 0.0, %v6111
  %6113 = vmatmul.f32.gmra.mxu0 %v5996
  %v6114 = vpop.f32.mrf.mxu0
  %v6115 = vadd.f32 0.0, %v6114
  %6116 = vmatmul.f32.gmra.mxu0 %v5999
  %v6117 = vpop.f32.mrf.mxu0
  %v6118 = vadd.f32 0.0, %v6117
  %6119 = vmatmul.f32.gmra.mxu0 %v6002
  %v6120 = vpop.f32.mrf.mxu0
  %v6121 = vadd.f32 0.0, %v6120
  %6122 = vmatmul.f32.gmra.mxu0 %v6005
  %v6123 = vpop.f32.mrf.mxu0
  %v6124 = vadd.f32 0.0, %v6123
  %6125 = vmatmul.f32.gmra.mxu0 %v6008
  %v6126 = vpop.f32.mrf.mxu0
  %v6127 = vadd.f32 0.0, %v6126
  %6128 = vmatmul.f32.gmra.mxu0 %v6011
  %v6129 = vpop.f32.mrf.mxu0
  %v6130 = vadd.f32 0.0, %v6129
  %6131 = vmatmul.f32.gmra.mxu0 %v6014
  %v6132 = vpop.f32.mrf.mxu0
  %v6133 = vadd.f32 0.0, %v6132
  %6134 = vmatmul.f32.gmra.mxu0 %v6017
  %v6135 = vpop.f32.mrf.mxu0
  %v6136 = vadd.f32 0.0, %v6135
  %6137 = vmatmul.f32.gmra.mxu0 %v6020
  %v6138 = vpop.f32.mrf.mxu0
  %v6139 = vadd.f32 0.0, %v6138
  %6140 = vmatmul.f32.gmra.mxu0 %v6023
  %v6141 = vpop.f32.mrf.mxu0
  %v6142 = vadd.f32 0.0, %v6141
  %6143 = vmatmul.f32.gmra.mxu0 %v6026
  %v6144 = vpop.f32.mrf.mxu0
  %v6145 = vadd.f32 0.0, %v6144
  %6146 = vmatmul.f32.gmra.mxu0 %v6029
  %v6147 = vpop.f32.mrf.mxu0
  %v6148 = vadd.f32 0.0, %v6147
  %6149 = vmatmul.f32.gmra.mxu0 %v6032
  %v6150 = vpop.f32.mrf.mxu0
  %v6151 = vadd.f32 0.0, %v6150
  %6152 = vmatmul.f32.gmra.mxu0 %v6035
  %v6153 = vpop.f32.mrf.mxu0
  %v6154 = vadd.f32 0.0, %v6153
  %6155 = vmatmul.f32.gmra.mxu0 %v6038
  %v6156 = vpop.f32.mrf.mxu0
  %v6157 = vadd.f32 0.0, %v6156
  %6158 = vmatmul.f32.gmra.mxu0 %v6041
  %v6159 = vpop.f32.mrf.mxu0
  %v6160 = vadd.f32 0.0, %v6159
  %6161 = vmatmul.f32.gmra.mxu0 %v6044
  %v6162 = vpop.f32.mrf.mxu0
  %v6163 = vadd.f32 0.0, %v6162
  %6164 = vmatmul.f32.gmra.mxu0 %v6047
  %v6165 = vpop.f32.mrf.mxu0
  %v6166 = vadd.f32 0.0, %v6165
  %6167 = vmatmul.f32.gmra.mxu0 %v6050
  %v6168 = vpop.f32.mrf.mxu0
  %v6169 = vadd.f32 0.0, %v6168
  %6170 = vmatmul.f32.gmra.mxu0 %v6053
  %v6171 = vpop.f32.mrf.mxu0
  %v6172 = vadd.f32 0.0, %v6171
  %6173 = vdwg.mxu0
  %v6174 = vld [vmem:[%s53] sm:$0x1]
  %s6175 = sld [smem:[#allocation3 + $0x3]]
  %v6176 = vmul.f32 %v6079, 2.0
  %v6177 = vmul.f32 %v6082, 2.0
  %v6178 = vmul.f32 %v6085, 2.0
  %v6179 = vmul.f32 %v6088, 2.0
  %v6180 = vmul.f32 %v6091, 2.0
  %v6181 = vmul.f32 %v6094, 2.0
  %v6182 = vmul.f32 %v6097, 2.0
  %v6183 = vmul.f32 %v6100, 2.0
  %v6184 = vmul.f32 %v6103, 2.0
  %v6185 = vmul.f32 %v6106, 2.0
  %v6186 = vmul.f32 %v6109, 2.0
  %v6187 = vmul.f32 %v6112, 2.0
  %v6188 = vmul.f32 %v6115, 2.0
  %v6189 = vmul.f32 %v6118, 2.0
  %v6190 = vmul.f32 %v6121, 2.0
  %v6191 = vmul.f32 %v6124, 2.0
  %v6192 = vmul.f32 %v6127, 2.0
  %v6193 = vmul.f32 %v6130, 2.0
  %v6194 = vmul.f32 %v6133, 2.0
  %v6195 = vmul.f32 %v6136, 2.0
  %v6196 = vmul.f32 %v6139, 2.0
  %v6197 = vmul.f32 %v6142, 2.0
  %v6198 = vmul.f32 %v6145, 2.0
  %v6199 = vmul.f32 %v6148, 2.0
  %v6200 = vmul.f32 %v6151, 2.0
  %v6201 = vmul.f32 %v6154, 2.0
  %v6202 = vmul.f32 %v6157, 2.0
  %v6203 = vmul.f32 %v6160, 2.0
  %v6204 = vmul.f32 %v6163, 2.0
  %v6205 = vmul.f32 %v6166, 2.0
  %v6206 = vmul.f32 %v6169, 2.0
  %v6207 = vmul.f32 %v6172, 2.0
  %v6208 = vsub.f32 %v4930, %v6176
  %v6209 = vsub.f32 %v4933, %v6177
  %v6210 = vsub.f32 %v4936, %v6178
  %v6211 = vsub.f32 %v4939, %v6179
  %v6212 = vsub.f32 %v4942, %v6180
  %v6213 = vsub.f32 %v4945, %v6181
  %v6214 = vsub.f32 %v4948, %v6182
  %v6215 = vsub.f32 %v4951, %v6183
  %v6216 = vsub.f32 %v4954, %v6184
  %v6217 = vsub.f32 %v4957, %v6185
  %v6218 = vsub.f32 %v4960, %v6186
  %v6219 = vsub.f32 %v4963, %v6187
  %v6220 = vsub.f32 %v4966, %v6188
  %v6221 = vsub.f32 %v4969, %v6189
  %v6222 = vsub.f32 %v4972, %v6190
  %v6223 = vsub.f32 %v4975, %v6191
  %v6224 = vsub.f32 %v4978, %v6192
  %v6225 = vsub.f32 %v4981, %v6193
  %v6226 = vsub.f32 %v4984, %v6194
  %v6227 = vsub.f32 %v4987, %v6195
  %v6228 = vsub.f32 %v4990, %v6196
  %v6229 = vsub.f32 %v4993, %v6197
  %v6230 = vsub.f32 %v4996, %v6198
  %v6231 = vsub.f32 %v4999, %v6199
  %v6232 = vsub.f32 %v5002, %v6200
  %v6233 = vsub.f32 %v5005, %v6201
  %v6234 = vsub.f32 %v5008, %v6202
  %v6235 = vsub.f32 %v5011, %v6203
  %v6236 = vsub.f32 %v5014, %v6204
  %v6237 = vsub.f32 %v5017, %v6205
  %v6238 = vsub.f32 %v5020, %v6206
  %v6239 = vsub.f32 %v5023, %v6207
  %v6241 = vperm.slane %v6174, 0
  %v6243 = vadd.f32 %v6208, %v6241
  %v6244 = vadd.f32 %v6209, %v6241
  %v6245 = vadd.f32 %v6210, %v6241
  %v6246 = vadd.f32 %v6211, %v6241
  %v6247 = vadd.f32 %v6212, %v6241
  %v6248 = vadd.f32 %v6213, %v6241
  %v6249 = vadd.f32 %v6214, %v6241
  %v6250 = vadd.f32 %v6215, %v6241
  %v6251 = vadd.f32 %v6216, %v6241
  %v6252 = vadd.f32 %v6217, %v6241
  %v6253 = vadd.f32 %v6218, %v6241
  %v6254 = vadd.f32 %v6219, %v6241
  %v6255 = vadd.f32 %v6220, %v6241
  %v6256 = vadd.f32 %v6221, %v6241
  %v6257 = vadd.f32 %v6222, %v6241
  %v6258 = vadd.f32 %v6223, %v6241
  %v6259 = vadd.f32 %v6224, %v6241
  %v6260 = vadd.f32 %v6225, %v6241
  %v6261 = vadd.f32 %v6226, %v6241
  %v6262 = vadd.f32 %v6227, %v6241
  %v6263 = vadd.f32 %v6228, %v6241
  %v6264 = vadd.f32 %v6229, %v6241
  %v6265 = vadd.f32 %v6230, %v6241
  %v6266 = vadd.f32 %v6231, %v6241
  %v6267 = vadd.f32 %v6232, %v6241
  %v6268 = vadd.f32 %v6233, %v6241
  %v6269 = vadd.f32 %v6234, %v6241
  %v6270 = vadd.f32 %v6235, %v6241
  %v6271 = vadd.f32 %v6236, %v6241
  %v6272 = vadd.f32 %v6237, %v6241
  %v6273 = vadd.f32 %v6238, %v6241
  %v6274 = vadd.f32 %v6239, %v6241
  %v6275 = vsel %vm3822, %v6243, inf
  %6276 = vmin.xlane.f32.xlu0 %v6275
  %v6277 = vpop.xlane.xlu0 %6276
  %v6278 = vsel %vm3822, %v6244, inf
  %6279 = vmin.xlane.f32.xlu0 %v6278
  %v6280 = vpop.xlane.xlu0 %6279
  %v6281 = vsel %vm3822, %v6245, inf
  %6282 = vmin.xlane.f32.xlu0 %v6281
  %v6283 = vpop.xlane.xlu0 %6282
  %v6284 = vsel %vm3822, %v6246, inf
  %6285 = vmin.xlane.f32.xlu0 %v6284
  %v6286 = vpop.xlane.xlu0 %6285
  %v6287 = vsel %vm3822, %v6247, inf
  %6288 = vmin.xlane.f32.xlu0 %v6287
  %v6289 = vpop.xlane.xlu0 %6288
  %v6290 = vsel %vm3822, %v6248, inf
  %6291 = vmin.xlane.f32.xlu0 %v6290
  %v6292 = vpop.xlane.xlu0 %6291
  %v6293 = vsel %vm3822, %v6249, inf
  %6294 = vmin.xlane.f32.xlu0 %v6293
  %v6295 = vpop.xlane.xlu0 %6294
  %v6296 = vsel %vm3822, %v6250, inf
  %6297 = vmin.xlane.f32.xlu0 %v6296
  %v6298 = vpop.xlane.xlu0 %6297
  %v6299 = vsel %vm3822, %v6251, inf
  %6300 = vmin.xlane.f32.xlu0 %v6299
  %v6301 = vpop.xlane.xlu0 %6300
  %v6302 = vsel %vm3822, %v6252, inf
  %6303 = vmin.xlane.f32.xlu0 %v6302
  %v6304 = vpop.xlane.xlu0 %6303
  %v6305 = vsel %vm3822, %v6253, inf
  %6306 = vmin.xlane.f32.xlu0 %v6305
  %v6307 = vpop.xlane.xlu0 %6306
  %v6308 = vsel %vm3822, %v6254, inf
  %6309 = vmin.xlane.f32.xlu0 %v6308
  %v6310 = vpop.xlane.xlu0 %6309
  %v6311 = vsel %vm3822, %v6255, inf
  %6312 = vmin.xlane.f32.xlu0 %v6311
  %v6313 = vpop.xlane.xlu0 %6312
  %v6314 = vsel %vm3822, %v6256, inf
  %6315 = vmin.xlane.f32.xlu0 %v6314
  %v6316 = vpop.xlane.xlu0 %6315
  %v6317 = vsel %vm3822, %v6257, inf
  %6318 = vmin.xlane.f32.xlu0 %v6317
  %v6319 = vpop.xlane.xlu0 %6318
  %v6320 = vsel %vm3822, %v6258, inf
  %6321 = vmin.xlane.f32.xlu0 %v6320
  %v6322 = vpop.xlane.xlu0 %6321
  %v6323 = vsel %vm3822, %v6259, inf
  %6324 = vmin.xlane.f32.xlu0 %v6323
  %v6325 = vpop.xlane.xlu0 %6324
  %v6326 = vsel %vm3822, %v6260, inf
  %6327 = vmin.xlane.f32.xlu0 %v6326
  %v6328 = vpop.xlane.xlu0 %6327
  %v6329 = vsel %vm3822, %v6261, inf
  %6330 = vmin.xlane.f32.xlu0 %v6329
  %v6331 = vpop.xlane.xlu0 %6330
  %v6332 = vsel %vm3822, %v6262, inf
  %6333 = vmin.xlane.f32.xlu0 %v6332
  %v6334 = vpop.xlane.xlu0 %6333
  %v6335 = vsel %vm3822, %v6263, inf
  %6336 = vmin.xlane.f32.xlu0 %v6335
  %v6337 = vpop.xlane.xlu0 %6336
  %v6338 = vsel %vm3822, %v6264, inf
  %6339 = vmin.xlane.f32.xlu0 %v6338
  %v6340 = vpop.xlane.xlu0 %6339
  %v6341 = vsel %vm3822, %v6265, inf
  %6342 = vmin.xlane.f32.xlu0 %v6341
  %v6343 = vpop.xlane.xlu0 %6342
  %v6344 = vsel %vm3822, %v6266, inf
  %6345 = vmin.xlane.f32.xlu0 %v6344
  %v6346 = vpop.xlane.xlu0 %6345
  %v6347 = vsel %vm3822, %v6267, inf
  %6348 = vmin.xlane.f32.xlu0 %v6347
  %v6349 = vpop.xlane.xlu0 %6348
  %v6350 = vsel %vm3822, %v6268, inf
  %6351 = vmin.xlane.f32.xlu0 %v6350
  %v6352 = vpop.xlane.xlu0 %6351
  %v6353 = vsel %vm3822, %v6269, inf
  %6354 = vmin.xlane.f32.xlu0 %v6353
  %v6355 = vpop.xlane.xlu0 %6354
  %v6356 = vsel %vm3822, %v6270, inf
  %6357 = vmin.xlane.f32.xlu0 %v6356
  %v6358 = vpop.xlane.xlu0 %6357
  %v6359 = vsel %vm3822, %v6271, inf
  %6360 = vmin.xlane.f32.xlu0 %v6359
  %v6361 = vpop.xlane.xlu0 %6360
  %v6362 = vsel %vm3822, %v6272, inf
  %6363 = vmin.xlane.f32.xlu0 %v6362
  %v6364 = vpop.xlane.xlu0 %6363
  %v6365 = vsel %vm3822, %v6273, inf
  %6366 = vmin.xlane.f32.xlu0 %v6365
  %v6367 = vpop.xlane.xlu0 %6366
  %v6368 = vsel %vm3822, %v6274, inf
  %6369 = vmin.xlane.f32.xlu0 %v6368
  %v6370 = vpop.xlane.xlu0 %6369
  %v6371 = vstv %s6175
  %v6372 = vsub.f32 %v6371, %v6277
  %v6373 = vsub.f32 %v6371, %v6280
  %v6374 = vsub.f32 %v6371, %v6283
  %v6375 = vsub.f32 %v6371, %v6286
  %v6376 = vsub.f32 %v6371, %v6289
  %v6377 = vsub.f32 %v6371, %v6292
  %v6378 = vsub.f32 %v6371, %v6295
  %v6379 = vsub.f32 %v6371, %v6298
  %v6380 = vsub.f32 %v6371, %v6301
  %v6381 = vsub.f32 %v6371, %v6304
  %v6382 = vsub.f32 %v6371, %v6307
  %v6383 = vsub.f32 %v6371, %v6310
  %v6384 = vsub.f32 %v6371, %v6313
  %v6385 = vsub.f32 %v6371, %v6316
  %v6386 = vsub.f32 %v6371, %v6319
  %v6387 = vsub.f32 %v6371, %v6322
  %v6388 = vsub.f32 %v6371, %v6325
  %v6389 = vsub.f32 %v6371, %v6328
  %v6390 = vsub.f32 %v6371, %v6331
  %v6391 = vsub.f32 %v6371, %v6334
  %v6392 = vsub.f32 %v6371, %v6337
  %v6393 = vsub.f32 %v6371, %v6340
  %v6394 = vsub.f32 %v6371, %v6343
  %v6395 = vsub.f32 %v6371, %v6346
  %v6396 = vsub.f32 %v6371, %v6349
  %v6397 = vsub.f32 %v6371, %v6352
  %v6398 = vsub.f32 %v6371, %v6355
  %v6399 = vsub.f32 %v6371, %v6358
  %v6400 = vsub.f32 %v6371, %v6361
  %v6401 = vsub.f32 %v6371, %v6364
  %v6402 = vsub.f32 %v6371, %v6367
  %v6403 = vsub.f32 %v6371, %v6370
  %v6404 = vmul.f32 %v2212, %v2212
  %v6405 = vmul.f32 %v2213, %v2213
  %v6406 = vmul.f32 %v2214, %v2214
  %v6407 = vmul.f32 %v2215, %v2215
  %v6408 = vmul.f32 %v2216, %v2216
  %v6409 = vmul.f32 %v2217, %v2217
  %v6410 = vmul.f32 %v2218, %v2218
  %v6411 = vmul.f32 %v2219, %v2219
  %v6412 = vmul.f32 %v2220, %v2220
  %v6413 = vmul.f32 %v2221, %v2221
  %v6414 = vmul.f32 %v2222, %v2222
  %v6415 = vmul.f32 %v2223, %v2223
  %v6416 = vmul.f32 %v2224, %v2224
  %v6417 = vmul.f32 %v2225, %v2225
  %v6418 = vmul.f32 %v2226, %v2226
  %v6419 = vmul.f32 %v2227, %v2227
  %v6420 = vmul.f32 %v2228, %v2228
  %v6421 = vmul.f32 %v2229, %v2229
  %v6422 = vmul.f32 %v2230, %v2230
  %v6423 = vmul.f32 %v2231, %v2231
  %v6424 = vmul.f32 %v2232, %v2232
  %v6425 = vmul.f32 %v2233, %v2233
  %v6426 = vmul.f32 %v2234, %v2234
  %v6427 = vmul.f32 %v2235, %v2235
  %v6428 = vmul.f32 %v2236, %v2236
  %v6429 = vmul.f32 %v2237, %v2237
  %v6430 = vmul.f32 %v2238, %v2238
  %v6431 = vmul.f32 %v2239, %v2239
  %v6432 = vmul.f32 %v2240, %v2240
  %v6433 = vmul.f32 %v2241, %v2241
  %v6434 = vmul.f32 %v2242, %v2242
  %v6435 = vmul.f32 %v2243, %v2243
  %6468 = vrot.lane.b32.xlu0 %v6404, 64
  %v6469 = vpop.permute.xlu0 %6468
  %6470 = vrot.lane.b32.xlu0 %v6405, 64
  %v6471 = vpop.permute.xlu0 %6470
  %6472 = vrot.lane.b32.xlu0 %v6406, 64
  %v6473 = vpop.permute.xlu0 %6472
  %6474 = vrot.lane.b32.xlu0 %v6407, 64
  %v6475 = vpop.permute.xlu0 %6474
  %6476 = vrot.lane.b32.xlu0 %v6408, 64
  %v6477 = vpop.permute.xlu0 %6476
  %6478 = vrot.lane.b32.xlu0 %v6409, 64
  %v6479 = vpop.permute.xlu0 %6478
  %6480 = vrot.lane.b32.xlu0 %v6410, 64
  %v6481 = vpop.permute.xlu0 %6480
  %6482 = vrot.lane.b32.xlu0 %v6411, 64
  %v6483 = vpop.permute.xlu0 %6482
  %6484 = vrot.lane.b32.xlu0 %v6412, 64
  %v6485 = vpop.permute.xlu0 %6484
  %6486 = vrot.lane.b32.xlu0 %v6413, 64
  %v6487 = vpop.permute.xlu0 %6486
  %6488 = vrot.lane.b32.xlu0 %v6414, 64
  %v6489 = vpop.permute.xlu0 %6488
  %6490 = vrot.lane.b32.xlu0 %v6415, 64
  %v6491 = vpop.permute.xlu0 %6490
  %6492 = vrot.lane.b32.xlu0 %v6416, 64
  %v6493 = vpop.permute.xlu0 %6492
  %6494 = vrot.lane.b32.xlu0 %v6417, 64
  %v6495 = vpop.permute.xlu0 %6494
  %6496 = vrot.lane.b32.xlu0 %v6418, 64
  %v6497 = vpop.permute.xlu0 %6496
  %6498 = vrot.lane.b32.xlu0 %v6419, 64
  %v6499 = vpop.permute.xlu0 %6498
  %6500 = vrot.lane.b32.xlu0 %v6420, 64
  %v6501 = vpop.permute.xlu0 %6500
  %6502 = vrot.lane.b32.xlu0 %v6421, 64
  %v6503 = vpop.permute.xlu0 %6502
  %6504 = vrot.lane.b32.xlu0 %v6422, 64
  %v6505 = vpop.permute.xlu0 %6504
  %6506 = vrot.lane.b32.xlu0 %v6423, 64
  %v6507 = vpop.permute.xlu0 %6506
  %6508 = vrot.lane.b32.xlu0 %v6424, 64
  %v6509 = vpop.permute.xlu0 %6508
  %6510 = vrot.lane.b32.xlu0 %v6425, 64
  %v6511 = vpop.permute.xlu0 %6510
  %6512 = vrot.lane.b32.xlu0 %v6426, 64
  %v6513 = vpop.permute.xlu0 %6512
  %6514 = vrot.lane.b32.xlu0 %v6427, 64
  %v6515 = vpop.permute.xlu0 %6514
  %6516 = vrot.lane.b32.xlu0 %v6428, 64
  %v6517 = vpop.permute.xlu0 %6516
  %6518 = vrot.lane.b32.xlu0 %v6429, 64
  %v6519 = vpop.permute.xlu0 %6518
  %6520 = vrot.lane.b32.xlu0 %v6430, 64
  %v6521 = vpop.permute.xlu0 %6520
  %6522 = vrot.lane.b32.xlu0 %v6431, 64
  %v6523 = vpop.permute.xlu0 %6522
  %6524 = vrot.lane.b32.xlu0 %v6432, 64
  %v6525 = vpop.permute.xlu0 %6524
  %6526 = vrot.lane.b32.xlu0 %v6433, 64
  %v6527 = vpop.permute.xlu0 %6526
  %6528 = vrot.lane.b32.xlu0 %v6434, 64
  %v6529 = vpop.permute.xlu0 %6528
  %6530 = vrot.lane.b32.xlu0 %v6435, 64
  %v6531 = vpop.permute.xlu0 %6530
  %v6564 = vsel %vm4927, %v6469, 0.0
  %6565 = vadd.xlane.f32.xlu0 %v6564
  %v6566 = vpop.xlane.xlu0 %6565
  %v6567 = vsel %vm4927, %v6471, 0.0
  %6568 = vadd.xlane.f32.xlu0 %v6567
  %v6569 = vpop.xlane.xlu0 %6568
  %v6570 = vsel %vm4927, %v6473, 0.0
  %6571 = vadd.xlane.f32.xlu0 %v6570
  %v6572 = vpop.xlane.xlu0 %6571
  %v6573 = vsel %vm4927, %v6475, 0.0
  %6574 = vadd.xlane.f32.xlu0 %v6573
  %v6575 = vpop.xlane.xlu0 %6574
  %v6576 = vsel %vm4927, %v6477, 0.0
  %6577 = vadd.xlane.f32.xlu0 %v6576
  %v6578 = vpop.xlane.xlu0 %6577
  %v6579 = vsel %vm4927, %v6479, 0.0
  %6580 = vadd.xlane.f32.xlu0 %v6579
  %v6581 = vpop.xlane.xlu0 %6580
  %v6582 = vsel %vm4927, %v6481, 0.0
  %6583 = vadd.xlane.f32.xlu0 %v6582
  %v6584 = vpop.xlane.xlu0 %6583
  %v6585 = vsel %vm4927, %v6483, 0.0
  %6586 = vadd.xlane.f32.xlu0 %v6585
  %v6587 = vpop.xlane.xlu0 %6586
  %v6588 = vsel %vm4927, %v6485, 0.0
  %6589 = vadd.xlane.f32.xlu0 %v6588
  %v6590 = vpop.xlane.xlu0 %6589
  %v6591 = vsel %vm4927, %v6487, 0.0
  %6592 = vadd.xlane.f32.xlu0 %v6591
  %v6593 = vpop.xlane.xlu0 %6592
  %v6594 = vsel %vm4927, %v6489, 0.0
  %6595 = vadd.xlane.f32.xlu0 %v6594
  %v6596 = vpop.xlane.xlu0 %6595
  %v6597 = vsel %vm4927, %v6491, 0.0
  %6598 = vadd.xlane.f32.xlu0 %v6597
  %v6599 = vpop.xlane.xlu0 %6598
  %v6600 = vsel %vm4927, %v6493, 0.0
  %6601 = vadd.xlane.f32.xlu0 %v6600
  %v6602 = vpop.xlane.xlu0 %6601
  %v6603 = vsel %vm4927, %v6495, 0.0
  %6604 = vadd.xlane.f32.xlu0 %v6603
  %v6605 = vpop.xlane.xlu0 %6604
  %v6606 = vsel %vm4927, %v6497, 0.0
  %6607 = vadd.xlane.f32.xlu0 %v6606
  %v6608 = vpop.xlane.xlu0 %6607
  %v6609 = vsel %vm4927, %v6499, 0.0
  %6610 = vadd.xlane.f32.xlu0 %v6609
  %v6611 = vpop.xlane.xlu0 %6610
  %v6612 = vsel %vm4927, %v6501, 0.0
  %6613 = vadd.xlane.f32.xlu0 %v6612
  %v6614 = vpop.xlane.xlu0 %6613
  %v6615 = vsel %vm4927, %v6503, 0.0
  %6616 = vadd.xlane.f32.xlu0 %v6615
  %v6617 = vpop.xlane.xlu0 %6616
  %v6618 = vsel %vm4927, %v6505, 0.0
  %6619 = vadd.xlane.f32.xlu0 %v6618
  %v6620 = vpop.xlane.xlu0 %6619
  %v6621 = vsel %vm4927, %v6507, 0.0
  %6622 = vadd.xlane.f32.xlu0 %v6621
  %v6623 = vpop.xlane.xlu0 %6622
  %v6624 = vsel %vm4927, %v6509, 0.0
  %6625 = vadd.xlane.f32.xlu0 %v6624
  %v6626 = vpop.xlane.xlu0 %6625
  %v6627 = vsel %vm4927, %v6511, 0.0
  %6628 = vadd.xlane.f32.xlu0 %v6627
  %v6629 = vpop.xlane.xlu0 %6628
  %v6630 = vsel %vm4927, %v6513, 0.0
  %6631 = vadd.xlane.f32.xlu0 %v6630
  %v6632 = vpop.xlane.xlu0 %6631
  %v6633 = vsel %vm4927, %v6515, 0.0
  %6634 = vadd.xlane.f32.xlu0 %v6633
  %v6635 = vpop.xlane.xlu0 %6634
  %v6636 = vsel %vm4927, %v6517, 0.0
  %6637 = vadd.xlane.f32.xlu0 %v6636
  %v6638 = vpop.xlane.xlu0 %6637
  %v6639 = vsel %vm4927, %v6519, 0.0
  %6640 = vadd.xlane.f32.xlu0 %v6639
  %v6641 = vpop.xlane.xlu0 %6640
  %v6642 = vsel %vm4927, %v6521, 0.0
  %6643 = vadd.xlane.f32.xlu0 %v6642
  %v6644 = vpop.xlane.xlu0 %6643
  %v6645 = vsel %vm4927, %v6523, 0.0
  %6646 = vadd.xlane.f32.xlu0 %v6645
  %v6647 = vpop.xlane.xlu0 %6646
  %v6648 = vsel %vm4927, %v6525, 0.0
  %6649 = vadd.xlane.f32.xlu0 %v6648
  %v6650 = vpop.xlane.xlu0 %6649
  %v6651 = vsel %vm4927, %v6527, 0.0
  %6652 = vadd.xlane.f32.xlu0 %v6651
  %v6653 = vpop.xlane.xlu0 %6652
  %v6654 = vsel %vm4927, %v6529, 0.0
  %6655 = vadd.xlane.f32.xlu0 %v6654
  %v6656 = vpop.xlane.xlu0 %6655
  %v6657 = vsel %vm4927, %v6531, 0.0
  %6658 = vadd.xlane.f32.xlu0 %v6657
  %v6659 = vpop.xlane.xlu0 %6658
  %v6660 = vmul.f32 %v5245, %v5245
  %v6661 = vmul.f32 %v5246, %v5246
  %v6662 = vmul.f32 %v5247, %v5247
  %v6663 = vmul.f32 %v5248, %v5248
  %v6664 = vmul.f32 %v5249, %v5249
  %v6665 = vmul.f32 %v5250, %v5250
  %v6666 = vmul.f32 %v5251, %v5251
  %v6667 = vmul.f32 %v5252, %v5252
  %v6668 = vmul.f32 %v5253, %v5253
  %v6669 = vmul.f32 %v5254, %v5254
  %v6670 = vmul.f32 %v5255, %v5255
  %v6671 = vmul.f32 %v5256, %v5256
  %v6672 = vmul.f32 %v5257, %v5257
  %v6673 = vmul.f32 %v5258, %v5258
  %v6674 = vmul.f32 %v5259, %v5259
  %v6675 = vmul.f32 %v5260, %v5260
  %v6676 = vmul.f32 %v5261, %v5261
  %v6677 = vmul.f32 %v5262, %v5262
  %v6678 = vmul.f32 %v5263, %v5263
  %v6679 = vmul.f32 %v5264, %v5264
  %v6680 = vmul.f32 %v5265, %v5265
  %v6681 = vmul.f32 %v5266, %v5266
  %v6682 = vmul.f32 %v5267, %v5267
  %v6683 = vmul.f32 %v5268, %v5268
  %v6684 = vmul.f32 %v5269, %v5269
  %v6685 = vmul.f32 %v5270, %v5270
  %v6686 = vmul.f32 %v5271, %v5271
  %v6687 = vmul.f32 %v5272, %v5272
  %v6688 = vmul.f32 %v5273, %v5273
  %v6689 = vmul.f32 %v5274, %v5274
  %v6690 = vmul.f32 %v5275, %v5275
  %v6691 = vmul.f32 %v5276, %v5276
  %v6692 = vsel %vm4927, %v6660, 0.0
  %6693 = vadd.xlane.f32.xlu0 %v6692
  %v6694 = vpop.xlane.xlu0 %6693
  %v6695 = vsel %vm4927, %v6661, 0.0
  %6696 = vadd.xlane.f32.xlu0 %v6695
  %v6697 = vpop.xlane.xlu0 %6696
  %v6698 = vsel %vm4927, %v6662, 0.0
  %6699 = vadd.xlane.f32.xlu0 %v6698
  %v6700 = vpop.xlane.xlu0 %6699
  %v6701 = vsel %vm4927, %v6663, 0.0
  %6702 = vadd.xlane.f32.xlu0 %v6701
  %v6703 = vpop.xlane.xlu0 %6702
  %v6704 = vsel %vm4927, %v6664, 0.0
  %6705 = vadd.xlane.f32.xlu0 %v6704
  %v6706 = vpop.xlane.xlu0 %6705
  %v6707 = vsel %vm4927, %v6665, 0.0
  %6708 = vadd.xlane.f32.xlu0 %v6707
  %v6709 = vpop.xlane.xlu0 %6708
  %v6710 = vsel %vm4927, %v6666, 0.0
  %6711 = vadd.xlane.f32.xlu0 %v6710
  %v6712 = vpop.xlane.xlu0 %6711
  %v6713 = vsel %vm4927, %v6667, 0.0
  %6714 = vadd.xlane.f32.xlu0 %v6713
  %v6715 = vpop.xlane.xlu0 %6714
  %v6716 = vsel %vm4927, %v6668, 0.0
  %6717 = vadd.xlane.f32.xlu0 %v6716
  %v6718 = vpop.xlane.xlu0 %6717
  %v6719 = vsel %vm4927, %v6669, 0.0
  %6720 = vadd.xlane.f32.xlu0 %v6719
  %v6721 = vpop.xlane.xlu0 %6720
  %v6722 = vsel %vm4927, %v6670, 0.0
  %6723 = vadd.xlane.f32.xlu0 %v6722
  %v6724 = vpop.xlane.xlu0 %6723
  %v6725 = vsel %vm4927, %v6671, 0.0
  %6726 = vadd.xlane.f32.xlu0 %v6725
  %v6727 = vpop.xlane.xlu0 %6726
  %v6728 = vsel %vm4927, %v6672, 0.0
  %6729 = vadd.xlane.f32.xlu0 %v6728
  %v6730 = vpop.xlane.xlu0 %6729
  %v6731 = vsel %vm4927, %v6673, 0.0
  %6732 = vadd.xlane.f32.xlu0 %v6731
  %v6733 = vpop.xlane.xlu0 %6732
  %v6734 = vsel %vm4927, %v6674, 0.0
  %6735 = vadd.xlane.f32.xlu0 %v6734
  %v6736 = vpop.xlane.xlu0 %6735
  %v6737 = vsel %vm4927, %v6675, 0.0
  %6738 = vadd.xlane.f32.xlu0 %v6737
  %v6739 = vpop.xlane.xlu0 %6738
  %v6740 = vsel %vm4927, %v6676, 0.0
  %6741 = vadd.xlane.f32.xlu0 %v6740
  %v6742 = vpop.xlane.xlu0 %6741
  %v6743 = vsel %vm4927, %v6677, 0.0
  %6744 = vadd.xlane.f32.xlu0 %v6743
  %v6745 = vpop.xlane.xlu0 %6744
  %v6746 = vsel %vm4927, %v6678, 0.0
  %6747 = vadd.xlane.f32.xlu0 %v6746
  %v6748 = vpop.xlane.xlu0 %6747
  %v6749 = vsel %vm4927, %v6679, 0.0
  %6750 = vadd.xlane.f32.xlu0 %v6749
  %v6751 = vpop.xlane.xlu0 %6750
  %v6752 = vsel %vm4927, %v6680, 0.0
  %6753 = vadd.xlane.f32.xlu0 %v6752
  %v6754 = vpop.xlane.xlu0 %6753
  %v6755 = vsel %vm4927, %v6681, 0.0
  %6756 = vadd.xlane.f32.xlu0 %v6755
  %v6757 = vpop.xlane.xlu0 %6756
  %v6758 = vsel %vm4927, %v6682, 0.0
  %6759 = vadd.xlane.f32.xlu0 %v6758
  %v6760 = vpop.xlane.xlu0 %6759
  %v6761 = vsel %vm4927, %v6683, 0.0
  %6762 = vadd.xlane.f32.xlu0 %v6761
  %v6763 = vpop.xlane.xlu0 %6762
  %v6764 = vsel %vm4927, %v6684, 0.0
  %6765 = vadd.xlane.f32.xlu0 %v6764
  %v6766 = vpop.xlane.xlu0 %6765
  %v6767 = vsel %vm4927, %v6685, 0.0
  %6768 = vadd.xlane.f32.xlu0 %v6767
  %v6769 = vpop.xlane.xlu0 %6768
  %v6770 = vsel %vm4927, %v6686, 0.0
  %6771 = vadd.xlane.f32.xlu0 %v6770
  %v6772 = vpop.xlane.xlu0 %6771
  %v6773 = vsel %vm4927, %v6687, 0.0
  %6774 = vadd.xlane.f32.xlu0 %v6773
  %v6775 = vpop.xlane.xlu0 %6774
  %v6776 = vsel %vm4927, %v6688, 0.0
  %6777 = vadd.xlane.f32.xlu0 %v6776
  %v6778 = vpop.xlane.xlu0 %6777
  %v6779 = vsel %vm4927, %v6689, 0.0
  %6780 = vadd.xlane.f32.xlu0 %v6779
  %v6781 = vpop.xlane.xlu0 %6780
  %v6782 = vsel %vm4927, %v6690, 0.0
  %6783 = vadd.xlane.f32.xlu0 %v6782
  %v6784 = vpop.xlane.xlu0 %6783
  %v6785 = vsel %vm4927, %v6691, 0.0
  %6786 = vadd.xlane.f32.xlu0 %v6785
  %v6787 = vpop.xlane.xlu0 %6786
  %v6788 = vadd.f32 %v6566, %v6694
  %v6789 = vadd.f32 %v6569, %v6697
  %v6790 = vadd.f32 %v6572, %v6700
  %v6791 = vadd.f32 %v6575, %v6703
  %v6792 = vadd.f32 %v6578, %v6706
  %v6793 = vadd.f32 %v6581, %v6709
  %v6794 = vadd.f32 %v6584, %v6712
  %v6795 = vadd.f32 %v6587, %v6715
  %v6796 = vadd.f32 %v6590, %v6718
  %v6797 = vadd.f32 %v6593, %v6721
  %v6798 = vadd.f32 %v6596, %v6724
  %v6799 = vadd.f32 %v6599, %v6727
  %v6800 = vadd.f32 %v6602, %v6730
  %v6801 = vadd.f32 %v6605, %v6733
  %v6802 = vadd.f32 %v6608, %v6736
  %v6803 = vadd.f32 %v6611, %v6739
  %v6804 = vadd.f32 %v6614, %v6742
  %v6805 = vadd.f32 %v6617, %v6745
  %v6806 = vadd.f32 %v6620, %v6748
  %v6807 = vadd.f32 %v6623, %v6751
  %v6808 = vadd.f32 %v6626, %v6754
  %v6809 = vadd.f32 %v6629, %v6757
  %v6810 = vadd.f32 %v6632, %v6760
  %v6811 = vadd.f32 %v6635, %v6763
  %v6812 = vadd.f32 %v6638, %v6766
  %v6813 = vadd.f32 %v6641, %v6769
  %v6814 = vadd.f32 %v6644, %v6772
  %v6815 = vadd.f32 %v6647, %v6775
  %v6816 = vadd.f32 %v6650, %v6778
  %v6817 = vadd.f32 %v6653, %v6781
  %v6818 = vadd.f32 %v6656, %v6784
  %v6819 = vadd.f32 %v6659, %v6787
  %v6820 = vld [vmem:[%s55] sm:$0xff]
  %v6821 = vld [vmem:[%s55 + $0x8] sm:$0xff]
  %v6822 = vld [vmem:[%s57] sm:$0xff]
  %v6823 = vld [vmem:[%s57 + $0x8] sm:$0xff]
  %v6825 = vsel %vm4927, %v5245, 0
  %v6828 = vsel %vm4927, %v5246, 0
  %v6831 = vsel %vm4927, %v5247, 0
  %v6834 = vsel %vm4927, %v5248, 0
  %v6837 = vsel %vm4927, %v5249, 0
  %v6840 = vsel %vm4927, %v5250, 0
  %v6843 = vsel %vm4927, %v5251, 0
  %v6846 = vsel %vm4927, %v5252, 0
  %v6849 = vsel %vm4927, %v5253, 0
  %v6852 = vsel %vm4927, %v5254, 0
  %v6855 = vsel %vm4927, %v5255, 0
  %v6858 = vsel %vm4927, %v5256, 0
  %v6861 = vsel %vm4927, %v5257, 0
  %v6864 = vsel %vm4927, %v5258, 0
  %v6867 = vsel %vm4927, %v5259, 0
  %v6870 = vsel %vm4927, %v5260, 0
  %v6873 = vsel %vm4927, %v5261, 0
  %v6876 = vsel %vm4927, %v5262, 0
  %v6879 = vsel %vm4927, %v5263, 0
  %v6882 = vsel %vm4927, %v5264, 0
  %v6885 = vsel %vm4927, %v5265, 0
  %v6888 = vsel %vm4927, %v5266, 0
  %v6891 = vsel %vm4927, %v5267, 0
  %v6894 = vsel %vm4927, %v5268, 0
  %v6897 = vsel %vm4927, %v5269, 0
  %v6900 = vsel %vm4927, %v5270, 0
  %v6903 = vsel %vm4927, %v5271, 0
  %v6906 = vsel %vm4927, %v5272, 0
  %v6909 = vsel %vm4927, %v5273, 0
  %v6912 = vsel %vm4927, %v5274, 0
  %v6915 = vsel %vm4927, %v5275, 0
  %v6918 = vsel %vm4927, %v5276, 0
  %v6921 = vsel %vm4927, %v6822, 0
  %v6924 = vsel %vm4927, %v6823, 0
  %6926 = vmatpush.xpose.msra.mxu0 0.0
  %6927 = vmatpush.xpose.msra.mxu0 0.0
  %6928 = vmatpush.xpose.msra.mxu0 0.0
  %6929 = vmatpush.xpose.msra.mxu0 0.0
  %6930 = vmatpush.xpose.msra.mxu0 0.0
  %6931 = vmatpush.xpose.msra.mxu0 0.0
  %6932 = vmatpush.xpose.msra.mxu0 0.0
  %6933 = vmatpush.xpose.msra.mxu0 0.0
  %6934 = vmatpush.xpose.msra.mxu0 0.0
  %6935 = vmatpush.xpose.msra.mxu0 0.0
  %6936 = vmatpush.xpose.msra.mxu0 0.0
  %6937 = vmatpush.xpose.msra.mxu0 0.0
  %6938 = vmatpush.xpose.msra.mxu0 0.0
  %6939 = vmatpush.xpose.msra.mxu0 0.0
  %6940 = vmatpush.xpose.msra.mxu0 %v6924
  %6941 = vmatpush.xpose.msra.mxu0 %v6921
  %6942 = vmatmul.f32.gmra.mxu0 %v6825
  %v6943 = vpop.f32.mrf.mxu0
  %v6944 = vadd.f32 0.0, %v6943
  %6945 = vmatmul.f32.gmra.mxu0 %v6828
  %v6946 = vpop.f32.mrf.mxu0
  %v6947 = vadd.f32 0.0, %v6946
  %6948 = vmatmul.f32.gmra.mxu0 %v6831
  %v6949 = vpop.f32.mrf.mxu0
  %v6950 = vadd.f32 0.0, %v6949
  %6951 = vmatmul.f32.gmra.mxu0 %v6834
  %v6952 = vpop.f32.mrf.mxu0
  %v6953 = vadd.f32 0.0, %v6952
  %6954 = vmatmul.f32.gmra.mxu0 %v6837
  %v6955 = vpop.f32.mrf.mxu0
  %v6956 = vadd.f32 0.0, %v6955
  %6957 = vmatmul.f32.gmra.mxu0 %v6840
  %v6958 = vpop.f32.mrf.mxu0
  %v6959 = vadd.f32 0.0, %v6958
  %6960 = vmatmul.f32.gmra.mxu0 %v6843
  %v6961 = vpop.f32.mrf.mxu0
  %v6962 = vadd.f32 0.0, %v6961
  %6963 = vmatmul.f32.gmra.mxu0 %v6846
  %v6964 = vpop.f32.mrf.mxu0
  %v6965 = vadd.f32 0.0, %v6964
  %6966 = vmatmul.f32.gmra.mxu0 %v6849
  %v6967 = vpop.f32.mrf.mxu0
  %v6968 = vadd.f32 0.0, %v6967
  %6969 = vmatmul.f32.gmra.mxu0 %v6852
  %v6970 = vpop.f32.mrf.mxu0
  %v6971 = vadd.f32 0.0, %v6970
  %6972 = vmatmul.f32.gmra.mxu0 %v6855
  %v6973 = vpop.f32.mrf.mxu0
  %v6974 = vadd.f32 0.0, %v6973
  %6975 = vmatmul.f32.gmra.mxu0 %v6858
  %v6976 = vpop.f32.mrf.mxu0
  %v6977 = vadd.f32 0.0, %v6976
  %6978 = vmatmul.f32.gmra.mxu0 %v6861
  %v6979 = vpop.f32.mrf.mxu0
  %v6980 = vadd.f32 0.0, %v6979
  %6981 = vmatmul.f32.gmra.mxu0 %v6864
  %v6982 = vpop.f32.mrf.mxu0
  %v6983 = vadd.f32 0.0, %v6982
  %6984 = vmatmul.f32.gmra.mxu0 %v6867
  %v6985 = vpop.f32.mrf.mxu0
  %v6986 = vadd.f32 0.0, %v6985
  %6987 = vmatmul.f32.gmra.mxu0 %v6870
  %v6988 = vpop.f32.mrf.mxu0
  %v6989 = vadd.f32 0.0, %v6988
  %6990 = vmatmul.f32.gmra.mxu0 %v6873
  %v6991 = vpop.f32.mrf.mxu0
  %v6992 = vadd.f32 0.0, %v6991
  %6993 = vmatmul.f32.gmra.mxu0 %v6876
  %v6994 = vpop.f32.mrf.mxu0
  %v6995 = vadd.f32 0.0, %v6994
  %6996 = vmatmul.f32.gmra.mxu0 %v6879
  %v6997 = vpop.f32.mrf.mxu0
  %v6998 = vadd.f32 0.0, %v6997
  %6999 = vmatmul.f32.gmra.mxu0 %v6882
  %v7000 = vpop.f32.mrf.mxu0
  %v7001 = vadd.f32 0.0, %v7000
  %7002 = vmatmul.f32.gmra.mxu0 %v6885
  %v7003 = vpop.f32.mrf.mxu0
  %v7004 = vadd.f32 0.0, %v7003
  %7005 = vmatmul.f32.gmra.mxu0 %v6888
  %v7006 = vpop.f32.mrf.mxu0
  %v7007 = vadd.f32 0.0, %v7006
  %7008 = vmatmul.f32.gmra.mxu0 %v6891
  %v7009 = vpop.f32.mrf.mxu0
  %v7010 = vadd.f32 0.0, %v7009
  %7011 = vmatmul.f32.gmra.mxu0 %v6894
  %v7012 = vpop.f32.mrf.mxu0
  %v7013 = vadd.f32 0.0, %v7012
  %7014 = vmatmul.f32.gmra.mxu0 %v6897
  %v7015 = vpop.f32.mrf.mxu0
  %v7016 = vadd.f32 0.0, %v7015
  %7017 = vmatmul.f32.gmra.mxu0 %v6900
  %v7018 = vpop.f32.mrf.mxu0
  %v7019 = vadd.f32 0.0, %v7018
  %7020 = vmatmul.f32.gmra.mxu0 %v6903
  %v7021 = vpop.f32.mrf.mxu0
  %v7022 = vadd.f32 0.0, %v7021
  %7023 = vmatmul.f32.gmra.mxu0 %v6906
  %v7024 = vpop.f32.mrf.mxu0
  %v7025 = vadd.f32 0.0, %v7024
  %7026 = vmatmul.f32.gmra.mxu0 %v6909
  %v7027 = vpop.f32.mrf.mxu0
  %v7028 = vadd.f32 0.0, %v7027
  %7029 = vmatmul.f32.gmra.mxu0 %v6912
  %v7030 = vpop.f32.mrf.mxu0
  %v7031 = vadd.f32 0.0, %v7030
  %7032 = vmatmul.f32.gmra.mxu0 %v6915
  %v7033 = vpop.f32.mrf.mxu0
  %v7034 = vadd.f32 0.0, %v7033
  %7035 = vmatmul.f32.gmra.mxu0 %v6918
  %v7036 = vpop.f32.mrf.mxu0
  %v7037 = vadd.f32 0.0, %v7036
  %7038 = vdwg.mxu0
  %7071 = vrot.lane.b32.xlu0 %v2212, 64
  %v7072 = vpop.permute.xlu0 %7071
  %7073 = vrot.lane.b32.xlu0 %v2213, 64
  %v7074 = vpop.permute.xlu0 %7073
  %7075 = vrot.lane.b32.xlu0 %v2214, 64
  %v7076 = vpop.permute.xlu0 %7075
  %7077 = vrot.lane.b32.xlu0 %v2215, 64
  %v7078 = vpop.permute.xlu0 %7077
  %7079 = vrot.lane.b32.xlu0 %v2216, 64
  %v7080 = vpop.permute.xlu0 %7079
  %7081 = vrot.lane.b32.xlu0 %v2217, 64
  %v7082 = vpop.permute.xlu0 %7081
  %7083 = vrot.lane.b32.xlu0 %v2218, 64
  %v7084 = vpop.permute.xlu0 %7083
  %7085 = vrot.lane.b32.xlu0 %v2219, 64
  %v7086 = vpop.permute.xlu0 %7085
  %7087 = vrot.lane.b32.xlu0 %v2220, 64
  %v7088 = vpop.permute.xlu0 %7087
  %7089 = vrot.lane.b32.xlu0 %v2221, 64
  %v7090 = vpop.permute.xlu0 %7089
  %7091 = vrot.lane.b32.xlu0 %v2222, 64
  %v7092 = vpop.permute.xlu0 %7091
  %7093 = vrot.lane.b32.xlu0 %v2223, 64
  %v7094 = vpop.permute.xlu0 %7093
  %7095 = vrot.lane.b32.xlu0 %v2224, 64
  %v7096 = vpop.permute.xlu0 %7095
  %7097 = vrot.lane.b32.xlu0 %v2225, 64
  %v7098 = vpop.permute.xlu0 %7097
  %7099 = vrot.lane.b32.xlu0 %v2226, 64
  %v7100 = vpop.permute.xlu0 %7099
  %7101 = vrot.lane.b32.xlu0 %v2227, 64
  %v7102 = vpop.permute.xlu0 %7101
  %7103 = vrot.lane.b32.xlu0 %v2228, 64
  %v7104 = vpop.permute.xlu0 %7103
  %7105 = vrot.lane.b32.xlu0 %v2229, 64
  %v7106 = vpop.permute.xlu0 %7105
  %7107 = vrot.lane.b32.xlu0 %v2230, 64
  %v7108 = vpop.permute.xlu0 %7107
  %7109 = vrot.lane.b32.xlu0 %v2231, 64
  %v7110 = vpop.permute.xlu0 %7109
  %7111 = vrot.lane.b32.xlu0 %v2232, 64
  %v7112 = vpop.permute.xlu0 %7111
  %7113 = vrot.lane.b32.xlu0 %v2233, 64
  %v7114 = vpop.permute.xlu0 %7113
  %7115 = vrot.lane.b32.xlu0 %v2234, 64
  %v7116 = vpop.permute.xlu0 %7115
  %7117 = vrot.lane.b32.xlu0 %v2235, 64
  %v7118 = vpop.permute.xlu0 %7117
  %7119 = vrot.lane.b32.xlu0 %v2236, 64
  %v7120 = vpop.permute.xlu0 %7119
  %7121 = vrot.lane.b32.xlu0 %v2237, 64
  %v7122 = vpop.permute.xlu0 %7121
  %7123 = vrot.lane.b32.xlu0 %v2238, 64
  %v7124 = vpop.permute.xlu0 %7123
  %7125 = vrot.lane.b32.xlu0 %v2239, 64
  %v7126 = vpop.permute.xlu0 %7125
  %7127 = vrot.lane.b32.xlu0 %v2240, 64
  %v7128 = vpop.permute.xlu0 %7127
  %7129 = vrot.lane.b32.xlu0 %v2241, 64
  %v7130 = vpop.permute.xlu0 %7129
  %7131 = vrot.lane.b32.xlu0 %v2242, 64
  %v7132 = vpop.permute.xlu0 %7131
  %7133 = vrot.lane.b32.xlu0 %v2243, 64
  %v7134 = vpop.permute.xlu0 %7133
  %v7135 = vsel %vm4927, %v7072, 0
  %v7137 = vsel %vm4927, %v7074, 0
  %v7139 = vsel %vm4927, %v7076, 0
  %v7141 = vsel %vm4927, %v7078, 0
  %v7143 = vsel %vm4927, %v7080, 0
  %v7145 = vsel %vm4927, %v7082, 0
  %v7147 = vsel %vm4927, %v7084, 0
  %v7149 = vsel %vm4927, %v7086, 0
  %v7151 = vsel %vm4927, %v7088, 0
  %v7153 = vsel %vm4927, %v7090, 0
  %v7155 = vsel %vm4927, %v7092, 0
  %v7157 = vsel %vm4927, %v7094, 0
  %v7159 = vsel %vm4927, %v7096, 0
  %v7161 = vsel %vm4927, %v7098, 0
  %v7163 = vsel %vm4927, %v7100, 0
  %v7165 = vsel %vm4927, %v7102, 0
  %v7167 = vsel %vm4927, %v7104, 0
  %v7169 = vsel %vm4927, %v7106, 0
  %v7171 = vsel %vm4927, %v7108, 0
  %v7173 = vsel %vm4927, %v7110, 0
  %v7175 = vsel %vm4927, %v7112, 0
  %v7177 = vsel %vm4927, %v7114, 0
  %v7179 = vsel %vm4927, %v7116, 0
  %v7181 = vsel %vm4927, %v7118, 0
  %v7183 = vsel %vm4927, %v7120, 0
  %v7185 = vsel %vm4927, %v7122, 0
  %v7187 = vsel %vm4927, %v7124, 0
  %v7189 = vsel %vm4927, %v7126, 0
  %v7191 = vsel %vm4927, %v7128, 0
  %v7193 = vsel %vm4927, %v7130, 0
  %v7195 = vsel %vm4927, %v7132, 0
  %v7197 = vsel %vm4927, %v7134, 0
  %v7200 = vsel %vm4927, %v6820, 0
  %v7203 = vsel %vm4927, %v6821, 0
  %7205 = vmatpush.xpose.msra.mxu0 0.0
  %7206 = vmatpush.xpose.msra.mxu0 0.0
  %7207 = vmatpush.xpose.msra.mxu0 0.0
  %7208 = vmatpush.xpose.msra.mxu0 0.0
  %7209 = vmatpush.xpose.msra.mxu0 0.0
  %7210 = vmatpush.xpose.msra.mxu0 0.0
  %7211 = vmatpush.xpose.msra.mxu0 0.0
  %7212 = vmatpush.xpose.msra.mxu0 0.0
  %7213 = vmatpush.xpose.msra.mxu0 0.0
  %7214 = vmatpush.xpose.msra.mxu0 0.0
  %7215 = vmatpush.xpose.msra.mxu0 0.0
  %7216 = vmatpush.xpose.msra.mxu0 0.0
  %7217 = vmatpush.xpose.msra.mxu0 0.0
  %7218 = vmatpush.xpose.msra.mxu0 0.0
  %7219 = vmatpush.xpose.msra.mxu0 %v7203
  %7220 = vmatpush.xpose.msra.mxu0 %v7200
  %7221 = vmatmul.f32.gmra.mxu0 %v7135
  %v7222 = vpop.f32.mrf.mxu0
  %v7223 = vadd.f32 %v6944, %v7222
  %7224 = vmatmul.f32.gmra.mxu0 %v7137
  %v7225 = vpop.f32.mrf.mxu0
  %v7226 = vadd.f32 %v6947, %v7225
  %7227 = vmatmul.f32.gmra.mxu0 %v7139
  %v7228 = vpop.f32.mrf.mxu0
  %v7229 = vadd.f32 %v6950, %v7228
  %7230 = vmatmul.f32.gmra.mxu0 %v7141
  %v7231 = vpop.f32.mrf.mxu0
  %v7232 = vadd.f32 %v6953, %v7231
  %7233 = vmatmul.f32.gmra.mxu0 %v7143
  %v7234 = vpop.f32.mrf.mxu0
  %v7235 = vadd.f32 %v6956, %v7234
  %7236 = vmatmul.f32.gmra.mxu0 %v7145
  %v7237 = vpop.f32.mrf.mxu0
  %v7238 = vadd.f32 %v6959, %v7237
  %7239 = vmatmul.f32.gmra.mxu0 %v7147
  %v7240 = vpop.f32.mrf.mxu0
  %v7241 = vadd.f32 %v6962, %v7240
  %7242 = vmatmul.f32.gmra.mxu0 %v7149
  %v7243 = vpop.f32.mrf.mxu0
  %v7244 = vadd.f32 %v6965, %v7243
  %7245 = vmatmul.f32.gmra.mxu0 %v7151
  %v7246 = vpop.f32.mrf.mxu0
  %v7247 = vadd.f32 %v6968, %v7246
  %7248 = vmatmul.f32.gmra.mxu0 %v7153
  %v7249 = vpop.f32.mrf.mxu0
  %v7250 = vadd.f32 %v6971, %v7249
  %7251 = vmatmul.f32.gmra.mxu0 %v7155
  %v7252 = vpop.f32.mrf.mxu0
  %v7253 = vadd.f32 %v6974, %v7252
  %7254 = vmatmul.f32.gmra.mxu0 %v7157
  %v7255 = vpop.f32.mrf.mxu0
  %v7256 = vadd.f32 %v6977, %v7255
  %7257 = vmatmul.f32.gmra.mxu0 %v7159
  %v7258 = vpop.f32.mrf.mxu0
  %v7259 = vadd.f32 %v6980, %v7258
  %7260 = vmatmul.f32.gmra.mxu0 %v7161
  %v7261 = vpop.f32.mrf.mxu0
  %v7262 = vadd.f32 %v6983, %v7261
  %7263 = vmatmul.f32.gmra.mxu0 %v7163
  %v7264 = vpop.f32.mrf.mxu0
  %v7265 = vadd.f32 %v6986, %v7264
  %7266 = vmatmul.f32.gmra.mxu0 %v7165
  %v7267 = vpop.f32.mrf.mxu0
  %v7268 = vadd.f32 %v6989, %v7267
  %7269 = vmatmul.f32.gmra.mxu0 %v7167
  %v7270 = vpop.f32.mrf.mxu0
  %v7271 = vadd.f32 %v6992, %v7270
  %7272 = vmatmul.f32.gmra.mxu0 %v7169
  %v7273 = vpop.f32.mrf.mxu0
  %v7274 = vadd.f32 %v6995, %v7273
  %7275 = vmatmul.f32.gmra.mxu0 %v7171
  %v7276 = vpop.f32.mrf.mxu0
  %v7277 = vadd.f32 %v6998, %v7276
  %7278 = vmatmul.f32.gmra.mxu0 %v7173
  %v7279 = vpop.f32.mrf.mxu0
  %v7280 = vadd.f32 %v7001, %v7279
  %7281 = vmatmul.f32.gmra.mxu0 %v7175
  %v7282 = vpop.f32.mrf.mxu0
  %v7283 = vadd.f32 %v7004, %v7282
  %7284 = vmatmul.f32.gmra.mxu0 %v7177
  %v7285 = vpop.f32.mrf.mxu0
  %v7286 = vadd.f32 %v7007, %v7285
  %7287 = vmatmul.f32.gmra.mxu0 %v7179
  %v7288 = vpop.f32.mrf.mxu0
  %v7289 = vadd.f32 %v7010, %v7288
  %7290 = vmatmul.f32.gmra.mxu0 %v7181
  %v7291 = vpop.f32.mrf.mxu0
  %v7292 = vadd.f32 %v7013, %v7291
  %7293 = vmatmul.f32.gmra.mxu0 %v7183
  %v7294 = vpop.f32.mrf.mxu0
  %v7295 = vadd.f32 %v7016, %v7294
  %7296 = vmatmul.f32.gmra.mxu0 %v7185
  %v7297 = vpop.f32.mrf.mxu0
  %v7298 = vadd.f32 %v7019, %v7297
  %7299 = vmatmul.f32.gmra.mxu0 %v7187
  %v7300 = vpop.f32.mrf.mxu0
  %v7301 = vadd.f32 %v7022, %v7300
  %7302 = vmatmul.f32.gmra.mxu0 %v7189
  %v7303 = vpop.f32.mrf.mxu0
  %v7304 = vadd.f32 %v7025, %v7303
  %7305 = vmatmul.f32.gmra.mxu0 %v7191
  %v7306 = vpop.f32.mrf.mxu0
  %v7307 = vadd.f32 %v7028, %v7306
  %7308 = vmatmul.f32.gmra.mxu0 %v7193
  %v7309 = vpop.f32.mrf.mxu0
  %v7310 = vadd.f32 %v7031, %v7309
  %7311 = vmatmul.f32.gmra.mxu0 %v7195
  %v7312 = vpop.f32.mrf.mxu0
  %v7313 = vadd.f32 %v7034, %v7312
  %7314 = vmatmul.f32.gmra.mxu0 %v7197
  %v7315 = vpop.f32.mrf.mxu0
  %v7316 = vadd.f32 %v7037, %v7315
  %7317 = vdwg.mxu0
  %v7318 = vld [vmem:[%s59] sm:$0x1]
  %s7319 = sld [smem:[#allocation3 + $0x4]]
  %v7320 = vmul.f32 %v7223, 2.0
  %v7321 = vmul.f32 %v7226, 2.0
  %v7322 = vmul.f32 %v7229, 2.0
  %v7323 = vmul.f32 %v7232, 2.0
  %v7324 = vmul.f32 %v7235, 2.0
  %v7325 = vmul.f32 %v7238, 2.0
  %v7326 = vmul.f32 %v7241, 2.0
  %v7327 = vmul.f32 %v7244, 2.0
  %v7328 = vmul.f32 %v7247, 2.0
  %v7329 = vmul.f32 %v7250, 2.0
  %v7330 = vmul.f32 %v7253, 2.0
  %v7331 = vmul.f32 %v7256, 2.0
  %v7332 = vmul.f32 %v7259, 2.0
  %v7333 = vmul.f32 %v7262, 2.0
  %v7334 = vmul.f32 %v7265, 2.0
  %v7335 = vmul.f32 %v7268, 2.0
  %v7336 = vmul.f32 %v7271, 2.0
  %v7337 = vmul.f32 %v7274, 2.0
  %v7338 = vmul.f32 %v7277, 2.0
  %v7339 = vmul.f32 %v7280, 2.0
  %v7340 = vmul.f32 %v7283, 2.0
  %v7341 = vmul.f32 %v7286, 2.0
  %v7342 = vmul.f32 %v7289, 2.0
  %v7343 = vmul.f32 %v7292, 2.0
  %v7344 = vmul.f32 %v7295, 2.0
  %v7345 = vmul.f32 %v7298, 2.0
  %v7346 = vmul.f32 %v7301, 2.0
  %v7347 = vmul.f32 %v7304, 2.0
  %v7348 = vmul.f32 %v7307, 2.0
  %v7349 = vmul.f32 %v7310, 2.0
  %v7350 = vmul.f32 %v7313, 2.0
  %v7351 = vmul.f32 %v7316, 2.0
  %v7352 = vsub.f32 %v6788, %v7320
  %v7353 = vsub.f32 %v6789, %v7321
  %v7354 = vsub.f32 %v6790, %v7322
  %v7355 = vsub.f32 %v6791, %v7323
  %v7356 = vsub.f32 %v6792, %v7324
  %v7357 = vsub.f32 %v6793, %v7325
  %v7358 = vsub.f32 %v6794, %v7326
  %v7359 = vsub.f32 %v6795, %v7327
  %v7360 = vsub.f32 %v6796, %v7328
  %v7361 = vsub.f32 %v6797, %v7329
  %v7362 = vsub.f32 %v6798, %v7330
  %v7363 = vsub.f32 %v6799, %v7331
  %v7364 = vsub.f32 %v6800, %v7332
  %v7365 = vsub.f32 %v6801, %v7333
  %v7366 = vsub.f32 %v6802, %v7334
  %v7367 = vsub.f32 %v6803, %v7335
  %v7368 = vsub.f32 %v6804, %v7336
  %v7369 = vsub.f32 %v6805, %v7337
  %v7370 = vsub.f32 %v6806, %v7338
  %v7371 = vsub.f32 %v6807, %v7339
  %v7372 = vsub.f32 %v6808, %v7340
  %v7373 = vsub.f32 %v6809, %v7341
  %v7374 = vsub.f32 %v6810, %v7342
  %v7375 = vsub.f32 %v6811, %v7343
  %v7376 = vsub.f32 %v6812, %v7344
  %v7377 = vsub.f32 %v6813, %v7345
  %v7378 = vsub.f32 %v6814, %v7346
  %v7379 = vsub.f32 %v6815, %v7347
  %v7380 = vsub.f32 %v6816, %v7348
  %v7381 = vsub.f32 %v6817, %v7349
  %v7382 = vsub.f32 %v6818, %v7350
  %v7383 = vsub.f32 %v6819, %v7351
  %v7385 = vperm.slane %v7318, 0
  %v7387 = vadd.f32 %v7352, %v7385
  %v7388 = vadd.f32 %v7353, %v7385
  %v7389 = vadd.f32 %v7354, %v7385
  %v7390 = vadd.f32 %v7355, %v7385
  %v7391 = vadd.f32 %v7356, %v7385
  %v7392 = vadd.f32 %v7357, %v7385
  %v7393 = vadd.f32 %v7358, %v7385
  %v7394 = vadd.f32 %v7359, %v7385
  %v7395 = vadd.f32 %v7360, %v7385
  %v7396 = vadd.f32 %v7361, %v7385
  %v7397 = vadd.f32 %v7362, %v7385
  %v7398 = vadd.f32 %v7363, %v7385
  %v7399 = vadd.f32 %v7364, %v7385
  %v7400 = vadd.f32 %v7365, %v7385
  %v7401 = vadd.f32 %v7366, %v7385
  %v7402 = vadd.f32 %v7367, %v7385
  %v7403 = vadd.f32 %v7368, %v7385
  %v7404 = vadd.f32 %v7369, %v7385
  %v7405 = vadd.f32 %v7370, %v7385
  %v7406 = vadd.f32 %v7371, %v7385
  %v7407 = vadd.f32 %v7372, %v7385
  %v7408 = vadd.f32 %v7373, %v7385
  %v7409 = vadd.f32 %v7374, %v7385
  %v7410 = vadd.f32 %v7375, %v7385
  %v7411 = vadd.f32 %v7376, %v7385
  %v7412 = vadd.f32 %v7377, %v7385
  %v7413 = vadd.f32 %v7378, %v7385
  %v7414 = vadd.f32 %v7379, %v7385
  %v7415 = vadd.f32 %v7380, %v7385
  %v7416 = vadd.f32 %v7381, %v7385
  %v7417 = vadd.f32 %v7382, %v7385
  %v7418 = vadd.f32 %v7383, %v7385
  %v7419 = vsel %vm3822, %v7387, inf
  %7420 = vmin.xlane.f32.xlu0 %v7419
  %v7421 = vpop.xlane.xlu0 %7420
  %v7422 = vsel %vm3822, %v7388, inf
  %7423 = vmin.xlane.f32.xlu0 %v7422
  %v7424 = vpop.xlane.xlu0 %7423
  %v7425 = vsel %vm3822, %v7389, inf
  %7426 = vmin.xlane.f32.xlu0 %v7425
  %v7427 = vpop.xlane.xlu0 %7426
  %v7428 = vsel %vm3822, %v7390, inf
  %7429 = vmin.xlane.f32.xlu0 %v7428
  %v7430 = vpop.xlane.xlu0 %7429
  %v7431 = vsel %vm3822, %v7391, inf
  %7432 = vmin.xlane.f32.xlu0 %v7431
  %v7433 = vpop.xlane.xlu0 %7432
  %v7434 = vsel %vm3822, %v7392, inf
  %7435 = vmin.xlane.f32.xlu0 %v7434
  %v7436 = vpop.xlane.xlu0 %7435
  %v7437 = vsel %vm3822, %v7393, inf
  %7438 = vmin.xlane.f32.xlu0 %v7437
  %v7439 = vpop.xlane.xlu0 %7438
  %v7440 = vsel %vm3822, %v7394, inf
  %7441 = vmin.xlane.f32.xlu0 %v7440
  %v7442 = vpop.xlane.xlu0 %7441
  %v7443 = vsel %vm3822, %v7395, inf
  %7444 = vmin.xlane.f32.xlu0 %v7443
  %v7445 = vpop.xlane.xlu0 %7444
  %v7446 = vsel %vm3822, %v7396, inf
  %7447 = vmin.xlane.f32.xlu0 %v7446
  %v7448 = vpop.xlane.xlu0 %7447
  %v7449 = vsel %vm3822, %v7397, inf
  %7450 = vmin.xlane.f32.xlu0 %v7449
  %v7451 = vpop.xlane.xlu0 %7450
  %v7452 = vsel %vm3822, %v7398, inf
  %7453 = vmin.xlane.f32.xlu0 %v7452
  %v7454 = vpop.xlane.xlu0 %7453
  %v7455 = vsel %vm3822, %v7399, inf
  %7456 = vmin.xlane.f32.xlu0 %v7455
  %v7457 = vpop.xlane.xlu0 %7456
  %v7458 = vsel %vm3822, %v7400, inf
  %7459 = vmin.xlane.f32.xlu0 %v7458
  %v7460 = vpop.xlane.xlu0 %7459
  %v7461 = vsel %vm3822, %v7401, inf
  %7462 = vmin.xlane.f32.xlu0 %v7461
  %v7463 = vpop.xlane.xlu0 %7462
  %v7464 = vsel %vm3822, %v7402, inf
  %7465 = vmin.xlane.f32.xlu0 %v7464
  %v7466 = vpop.xlane.xlu0 %7465
  %v7467 = vsel %vm3822, %v7403, inf
  %7468 = vmin.xlane.f32.xlu0 %v7467
  %v7469 = vpop.xlane.xlu0 %7468
  %v7470 = vsel %vm3822, %v7404, inf
  %7471 = vmin.xlane.f32.xlu0 %v7470
  %v7472 = vpop.xlane.xlu0 %7471
  %v7473 = vsel %vm3822, %v7405, inf
  %7474 = vmin.xlane.f32.xlu0 %v7473
  %v7475 = vpop.xlane.xlu0 %7474
  %v7476 = vsel %vm3822, %v7406, inf
  %7477 = vmin.xlane.f32.xlu0 %v7476
  %v7478 = vpop.xlane.xlu0 %7477
  %v7479 = vsel %vm3822, %v7407, inf
  %7480 = vmin.xlane.f32.xlu0 %v7479
  %v7481 = vpop.xlane.xlu0 %7480
  %v7482 = vsel %vm3822, %v7408, inf
  %7483 = vmin.xlane.f32.xlu0 %v7482
  %v7484 = vpop.xlane.xlu0 %7483
  %v7485 = vsel %vm3822, %v7409, inf
  %7486 = vmin.xlane.f32.xlu0 %v7485
  %v7487 = vpop.xlane.xlu0 %7486
  %v7488 = vsel %vm3822, %v7410, inf
  %7489 = vmin.xlane.f32.xlu0 %v7488
  %v7490 = vpop.xlane.xlu0 %7489
  %v7491 = vsel %vm3822, %v7411, inf
  %7492 = vmin.xlane.f32.xlu0 %v7491
  %v7493 = vpop.xlane.xlu0 %7492
  %v7494 = vsel %vm3822, %v7412, inf
  %7495 = vmin.xlane.f32.xlu0 %v7494
  %v7496 = vpop.xlane.xlu0 %7495
  %v7497 = vsel %vm3822, %v7413, inf
  %7498 = vmin.xlane.f32.xlu0 %v7497
  %v7499 = vpop.xlane.xlu0 %7498
  %v7500 = vsel %vm3822, %v7414, inf
  %7501 = vmin.xlane.f32.xlu0 %v7500
  %v7502 = vpop.xlane.xlu0 %7501
  %v7503 = vsel %vm3822, %v7415, inf
  %7504 = vmin.xlane.f32.xlu0 %v7503
  %v7505 = vpop.xlane.xlu0 %7504
  %v7506 = vsel %vm3822, %v7416, inf
  %7507 = vmin.xlane.f32.xlu0 %v7506
  %v7508 = vpop.xlane.xlu0 %7507
  %v7509 = vsel %vm3822, %v7417, inf
  %7510 = vmin.xlane.f32.xlu0 %v7509
  %v7511 = vpop.xlane.xlu0 %7510
  %v7512 = vsel %vm3822, %v7418, inf
  %7513 = vmin.xlane.f32.xlu0 %v7512
  %v7514 = vpop.xlane.xlu0 %7513
  %v7515 = vstv %s7319
  %v7516 = vsub.f32 %v7515, %v7421
  %v7517 = vsub.f32 %v7515, %v7424
  %v7518 = vsub.f32 %v7515, %v7427
  %v7519 = vsub.f32 %v7515, %v7430
  %v7520 = vsub.f32 %v7515, %v7433
  %v7521 = vsub.f32 %v7515, %v7436
  %v7522 = vsub.f32 %v7515, %v7439
  %v7523 = vsub.f32 %v7515, %v7442
  %v7524 = vsub.f32 %v7515, %v7445
  %v7525 = vsub.f32 %v7515, %v7448
  %v7526 = vsub.f32 %v7515, %v7451
  %v7527 = vsub.f32 %v7515, %v7454
  %v7528 = vsub.f32 %v7515, %v7457
  %v7529 = vsub.f32 %v7515, %v7460
  %v7530 = vsub.f32 %v7515, %v7463
  %v7531 = vsub.f32 %v7515, %v7466
  %v7532 = vsub.f32 %v7515, %v7469
  %v7533 = vsub.f32 %v7515, %v7472
  %v7534 = vsub.f32 %v7515, %v7475
  %v7535 = vsub.f32 %v7515, %v7478
  %v7536 = vsub.f32 %v7515, %v7481
  %v7537 = vsub.f32 %v7515, %v7484
  %v7538 = vsub.f32 %v7515, %v7487
  %v7539 = vsub.f32 %v7515, %v7490
  %v7540 = vsub.f32 %v7515, %v7493
  %v7541 = vsub.f32 %v7515, %v7496
  %v7542 = vsub.f32 %v7515, %v7499
  %v7543 = vsub.f32 %v7515, %v7502
  %v7544 = vsub.f32 %v7515, %v7505
  %v7545 = vsub.f32 %v7515, %v7508
  %v7546 = vsub.f32 %v7515, %v7511
  %v7547 = vsub.f32 %v7515, %v7514
  %v7548 = vadd.f32 %v6694, %v4930
  %v7549 = vadd.f32 %v6697, %v4933
  %v7550 = vadd.f32 %v6700, %v4936
  %v7551 = vadd.f32 %v6703, %v4939
  %v7552 = vadd.f32 %v6706, %v4942
  %v7553 = vadd.f32 %v6709, %v4945
  %v7554 = vadd.f32 %v6712, %v4948
  %v7555 = vadd.f32 %v6715, %v4951
  %v7556 = vadd.f32 %v6718, %v4954
  %v7557 = vadd.f32 %v6721, %v4957
  %v7558 = vadd.f32 %v6724, %v4960
  %v7559 = vadd.f32 %v6727, %v4963
  %v7560 = vadd.f32 %v6730, %v4966
  %v7561 = vadd.f32 %v6733, %v4969
  %v7562 = vadd.f32 %v6736, %v4972
  %v7563 = vadd.f32 %v6739, %v4975
  %v7564 = vadd.f32 %v6742, %v4978
  %v7565 = vadd.f32 %v6745, %v4981
  %v7566 = vadd.f32 %v6748, %v4984
  %v7567 = vadd.f32 %v6751, %v4987
  %v7568 = vadd.f32 %v6754, %v4990
  %v7569 = vadd.f32 %v6757, %v4993
  %v7570 = vadd.f32 %v6760, %v4996
  %v7571 = vadd.f32 %v6763, %v4999
  %v7572 = vadd.f32 %v6766, %v5002
  %v7573 = vadd.f32 %v6769, %v5005
  %v7574 = vadd.f32 %v6772, %v5008
  %v7575 = vadd.f32 %v6775, %v5011
  %v7576 = vadd.f32 %v6778, %v5014
  %v7577 = vadd.f32 %v6781, %v5017
  %v7578 = vadd.f32 %v6784, %v5020
  %v7579 = vadd.f32 %v6787, %v5023
  %v7580 = vld [vmem:[%s61] sm:$0xff]
  %v7581 = vld [vmem:[%s61 + $0x8] sm:$0xff]
  %v7582 = vld [vmem:[%s63] sm:$0xff]
  %v7583 = vld [vmem:[%s63 + $0x8] sm:$0xff]
  %v7585 = vsel %vm4927, %v7582, 0
  %v7588 = vsel %vm4927, %v7583, 0
  %7590 = vmatpush.xpose.msra.mxu0 0.0
  %7591 = vmatpush.xpose.msra.mxu0 0.0
  %7592 = vmatpush.xpose.msra.mxu0 0.0
  %7593 = vmatpush.xpose.msra.mxu0 0.0
  %7594 = vmatpush.xpose.msra.mxu0 0.0
  %7595 = vmatpush.xpose.msra.mxu0 0.0
  %7596 = vmatpush.xpose.msra.mxu0 0.0
  %7597 = vmatpush.xpose.msra.mxu0 0.0
  %7598 = vmatpush.xpose.msra.mxu0 0.0
  %7599 = vmatpush.xpose.msra.mxu0 0.0
  %7600 = vmatpush.xpose.msra.mxu0 0.0
  %7601 = vmatpush.xpose.msra.mxu0 0.0
  %7602 = vmatpush.xpose.msra.mxu0 0.0
  %7603 = vmatpush.xpose.msra.mxu0 0.0
  %7604 = vmatpush.xpose.msra.mxu0 %v7588
  %7605 = vmatpush.xpose.msra.mxu0 %v7585
  %7606 = vmatmul.f32.gmra.mxu0 %v5960
  %v7607 = vpop.f32.mrf.mxu0
  %v7608 = vadd.f32 0.0, %v7607
  %7609 = vmatmul.f32.gmra.mxu0 %v5963
  %v7610 = vpop.f32.mrf.mxu0
  %v7611 = vadd.f32 0.0, %v7610
  %7612 = vmatmul.f32.gmra.mxu0 %v5966
  %v7613 = vpop.f32.mrf.mxu0
  %v7614 = vadd.f32 0.0, %v7613
  %7615 = vmatmul.f32.gmra.mxu0 %v5969
  %v7616 = vpop.f32.mrf.mxu0
  %v7617 = vadd.f32 0.0, %v7616
  %7618 = vmatmul.f32.gmra.mxu0 %v5972
  %v7619 = vpop.f32.mrf.mxu0
  %v7620 = vadd.f32 0.0, %v7619
  %7621 = vmatmul.f32.gmra.mxu0 %v5975
  %v7622 = vpop.f32.mrf.mxu0
  %v7623 = vadd.f32 0.0, %v7622
  %7624 = vmatmul.f32.gmra.mxu0 %v5978
  %v7625 = vpop.f32.mrf.mxu0
  %v7626 = vadd.f32 0.0, %v7625
  %7627 = vmatmul.f32.gmra.mxu0 %v5981
  %v7628 = vpop.f32.mrf.mxu0
  %v7629 = vadd.f32 0.0, %v7628
  %7630 = vmatmul.f32.gmra.mxu0 %v5984
  %v7631 = vpop.f32.mrf.mxu0
  %v7632 = vadd.f32 0.0, %v7631
  %7633 = vmatmul.f32.gmra.mxu0 %v5987
  %v7634 = vpop.f32.mrf.mxu0
  %v7635 = vadd.f32 0.0, %v7634
  %7636 = vmatmul.f32.gmra.mxu0 %v5990
  %v7637 = vpop.f32.mrf.mxu0
  %v7638 = vadd.f32 0.0, %v7637
  %7639 = vmatmul.f32.gmra.mxu0 %v5993
  %v7640 = vpop.f32.mrf.mxu0
  %v7641 = vadd.f32 0.0, %v7640
  %7642 = vmatmul.f32.gmra.mxu0 %v5996
  %v7643 = vpop.f32.mrf.mxu0
  %v7644 = vadd.f32 0.0, %v7643
  %7645 = vmatmul.f32.gmra.mxu0 %v5999
  %v7646 = vpop.f32.mrf.mxu0
  %v7647 = vadd.f32 0.0, %v7646
  %7648 = vmatmul.f32.gmra.mxu0 %v6002
  %v7649 = vpop.f32.mrf.mxu0
  %v7650 = vadd.f32 0.0, %v7649
  %7651 = vmatmul.f32.gmra.mxu0 %v6005
  %v7652 = vpop.f32.mrf.mxu0
  %v7653 = vadd.f32 0.0, %v7652
  %7654 = vmatmul.f32.gmra.mxu0 %v6008
  %v7655 = vpop.f32.mrf.mxu0
  %v7656 = vadd.f32 0.0, %v7655
  %7657 = vmatmul.f32.gmra.mxu0 %v6011
  %v7658 = vpop.f32.mrf.mxu0
  %v7659 = vadd.f32 0.0, %v7658
  %7660 = vmatmul.f32.gmra.mxu0 %v6014
  %v7661 = vpop.f32.mrf.mxu0
  %v7662 = vadd.f32 0.0, %v7661
  %7663 = vmatmul.f32.gmra.mxu0 %v6017
  %v7664 = vpop.f32.mrf.mxu0
  %v7665 = vadd.f32 0.0, %v7664
  %7666 = vmatmul.f32.gmra.mxu0 %v6020
  %v7667 = vpop.f32.mrf.mxu0
  %v7668 = vadd.f32 0.0, %v7667
  %7669 = vmatmul.f32.gmra.mxu0 %v6023
  %v7670 = vpop.f32.mrf.mxu0
  %v7671 = vadd.f32 0.0, %v7670
  %7672 = vmatmul.f32.gmra.mxu0 %v6026
  %v7673 = vpop.f32.mrf.mxu0
  %v7674 = vadd.f32 0.0, %v7673
  %7675 = vmatmul.f32.gmra.mxu0 %v6029
  %v7676 = vpop.f32.mrf.mxu0
  %v7677 = vadd.f32 0.0, %v7676
  %7678 = vmatmul.f32.gmra.mxu0 %v6032
  %v7679 = vpop.f32.mrf.mxu0
  %v7680 = vadd.f32 0.0, %v7679
  %7681 = vmatmul.f32.gmra.mxu0 %v6035
  %v7682 = vpop.f32.mrf.mxu0
  %v7683 = vadd.f32 0.0, %v7682
  %7684 = vmatmul.f32.gmra.mxu0 %v6038
  %v7685 = vpop.f32.mrf.mxu0
  %v7686 = vadd.f32 0.0, %v7685
  %7687 = vmatmul.f32.gmra.mxu0 %v6041
  %v7688 = vpop.f32.mrf.mxu0
  %v7689 = vadd.f32 0.0, %v7688
  %7690 = vmatmul.f32.gmra.mxu0 %v6044
  %v7691 = vpop.f32.mrf.mxu0
  %v7692 = vadd.f32 0.0, %v7691
  %7693 = vmatmul.f32.gmra.mxu0 %v6047
  %v7694 = vpop.f32.mrf.mxu0
  %v7695 = vadd.f32 0.0, %v7694
  %7696 = vmatmul.f32.gmra.mxu0 %v6050
  %v7697 = vpop.f32.mrf.mxu0
  %v7698 = vadd.f32 0.0, %v7697
  %7699 = vmatmul.f32.gmra.mxu0 %v6053
  %v7700 = vpop.f32.mrf.mxu0
  %v7701 = vadd.f32 0.0, %v7700
  %7702 = vdwg.mxu0
  %v7704 = vsel %vm4927, %v7580, 0
  %v7707 = vsel %vm4927, %v7581, 0
  %7709 = vmatpush.xpose.msra.mxu0 0.0
  %7710 = vmatpush.xpose.msra.mxu0 0.0
  %7711 = vmatpush.xpose.msra.mxu0 0.0
  %7712 = vmatpush.xpose.msra.mxu0 0.0
  %7713 = vmatpush.xpose.msra.mxu0 0.0
  %7714 = vmatpush.xpose.msra.mxu0 0.0
  %7715 = vmatpush.xpose.msra.mxu0 0.0
  %7716 = vmatpush.xpose.msra.mxu0 0.0
  %7717 = vmatpush.xpose.msra.mxu0 0.0
  %7718 = vmatpush.xpose.msra.mxu0 0.0
  %7719 = vmatpush.xpose.msra.mxu0 0.0
  %7720 = vmatpush.xpose.msra.mxu0 0.0
  %7721 = vmatpush.xpose.msra.mxu0 0.0
  %7722 = vmatpush.xpose.msra.mxu0 0.0
  %7723 = vmatpush.xpose.msra.mxu0 %v7707
  %7724 = vmatpush.xpose.msra.mxu0 %v7704
  %7725 = vmatmul.f32.gmra.mxu0 %v6825
  %v7726 = vpop.f32.mrf.mxu0
  %v7727 = vadd.f32 %v7608, %v7726
  %7728 = vmatmul.f32.gmra.mxu0 %v6828
  %v7729 = vpop.f32.mrf.mxu0
  %v7730 = vadd.f32 %v7611, %v7729
  %7731 = vmatmul.f32.gmra.mxu0 %v6831
  %v7732 = vpop.f32.mrf.mxu0
  %v7733 = vadd.f32 %v7614, %v7732
  %7734 = vmatmul.f32.gmra.mxu0 %v6834
  %v7735 = vpop.f32.mrf.mxu0
  %v7736 = vadd.f32 %v7617, %v7735
  %7737 = vmatmul.f32.gmra.mxu0 %v6837
  %v7738 = vpop.f32.mrf.mxu0
  %v7739 = vadd.f32 %v7620, %v7738
  %7740 = vmatmul.f32.gmra.mxu0 %v6840
  %v7741 = vpop.f32.mrf.mxu0
  %v7742 = vadd.f32 %v7623, %v7741
  %7743 = vmatmul.f32.gmra.mxu0 %v6843
  %v7744 = vpop.f32.mrf.mxu0
  %v7745 = vadd.f32 %v7626, %v7744
  %7746 = vmatmul.f32.gmra.mxu0 %v6846
  %v7747 = vpop.f32.mrf.mxu0
  %v7748 = vadd.f32 %v7629, %v7747
  %7749 = vmatmul.f32.gmra.mxu0 %v6849
  %v7750 = vpop.f32.mrf.mxu0
  %v7751 = vadd.f32 %v7632, %v7750
  %7752 = vmatmul.f32.gmra.mxu0 %v6852
  %v7753 = vpop.f32.mrf.mxu0
  %v7754 = vadd.f32 %v7635, %v7753
  %7755 = vmatmul.f32.gmra.mxu0 %v6855
  %v7756 = vpop.f32.mrf.mxu0
  %v7757 = vadd.f32 %v7638, %v7756
  %7758 = vmatmul.f32.gmra.mxu0 %v6858
  %v7759 = vpop.f32.mrf.mxu0
  %v7760 = vadd.f32 %v7641, %v7759
  %7761 = vmatmul.f32.gmra.mxu0 %v6861
  %v7762 = vpop.f32.mrf.mxu0
  %v7763 = vadd.f32 %v7644, %v7762
  %7764 = vmatmul.f32.gmra.mxu0 %v6864
  %v7765 = vpop.f32.mrf.mxu0
  %v7766 = vadd.f32 %v7647, %v7765
  %7767 = vmatmul.f32.gmra.mxu0 %v6867
  %v7768 = vpop.f32.mrf.mxu0
  %v7769 = vadd.f32 %v7650, %v7768
  %7770 = vmatmul.f32.gmra.mxu0 %v6870
  %v7771 = vpop.f32.mrf.mxu0
  %v7772 = vadd.f32 %v7653, %v7771
  %7773 = vmatmul.f32.gmra.mxu0 %v6873
  %v7774 = vpop.f32.mrf.mxu0
  %v7775 = vadd.f32 %v7656, %v7774
  %7776 = vmatmul.f32.gmra.mxu0 %v6876
  %v7777 = vpop.f32.mrf.mxu0
  %v7778 = vadd.f32 %v7659, %v7777
  %7779 = vmatmul.f32.gmra.mxu0 %v6879
  %v7780 = vpop.f32.mrf.mxu0
  %v7781 = vadd.f32 %v7662, %v7780
  %7782 = vmatmul.f32.gmra.mxu0 %v6882
  %v7783 = vpop.f32.mrf.mxu0
  %v7784 = vadd.f32 %v7665, %v7783
  %7785 = vmatmul.f32.gmra.mxu0 %v6885
  %v7786 = vpop.f32.mrf.mxu0
  %v7787 = vadd.f32 %v7668, %v7786
  %7788 = vmatmul.f32.gmra.mxu0 %v6888
  %v7789 = vpop.f32.mrf.mxu0
  %v7790 = vadd.f32 %v7671, %v7789
  %7791 = vmatmul.f32.gmra.mxu0 %v6891
  %v7792 = vpop.f32.mrf.mxu0
  %v7793 = vadd.f32 %v7674, %v7792
  %7794 = vmatmul.f32.gmra.mxu0 %v6894
  %v7795 = vpop.f32.mrf.mxu0
  %v7796 = vadd.f32 %v7677, %v7795
  %7797 = vmatmul.f32.gmra.mxu0 %v6897
  %v7798 = vpop.f32.mrf.mxu0
  %v7799 = vadd.f32 %v7680, %v7798
  %7800 = vmatmul.f32.gmra.mxu0 %v6900
  %v7801 = vpop.f32.mrf.mxu0
  %v7802 = vadd.f32 %v7683, %v7801
  %7803 = vmatmul.f32.gmra.mxu0 %v6903
  %v7804 = vpop.f32.mrf.mxu0
  %v7805 = vadd.f32 %v7686, %v7804
  %7806 = vmatmul.f32.gmra.mxu0 %v6906
  %v7807 = vpop.f32.mrf.mxu0
  %v7808 = vadd.f32 %v7689, %v7807
  %7809 = vmatmul.f32.gmra.mxu0 %v6909
  %v7810 = vpop.f32.mrf.mxu0
  %v7811 = vadd.f32 %v7692, %v7810
  %7812 = vmatmul.f32.gmra.mxu0 %v6912
  %v7813 = vpop.f32.mrf.mxu0
  %v7814 = vadd.f32 %v7695, %v7813
  %7815 = vmatmul.f32.gmra.mxu0 %v6915
  %v7816 = vpop.f32.mrf.mxu0
  %v7817 = vadd.f32 %v7698, %v7816
  %7818 = vmatmul.f32.gmra.mxu0 %v6918
  %v7819 = vpop.f32.mrf.mxu0
  %v7820 = vadd.f32 %v7701, %v7819
  %7821 = vdwg.mxu0
  %v7822 = vld [vmem:[%s65] sm:$0x1]
  %s7823 = sld [smem:[#allocation3 + $0x5]]
  %v7824 = vmul.f32 %v7727, 2.0
  %v7825 = vmul.f32 %v7730, 2.0
  %v7826 = vmul.f32 %v7733, 2.0
  %v7827 = vmul.f32 %v7736, 2.0
  %v7828 = vmul.f32 %v7739, 2.0
  %v7829 = vmul.f32 %v7742, 2.0
  %v7830 = vmul.f32 %v7745, 2.0
  %v7831 = vmul.f32 %v7748, 2.0
  %v7832 = vmul.f32 %v7751, 2.0
  %v7833 = vmul.f32 %v7754, 2.0
  %v7834 = vmul.f32 %v7757, 2.0
  %v7835 = vmul.f32 %v7760, 2.0
  %v7836 = vmul.f32 %v7763, 2.0
  %v7837 = vmul.f32 %v7766, 2.0
  %v7838 = vmul.f32 %v7769, 2.0
  %v7839 = vmul.f32 %v7772, 2.0
  %v7840 = vmul.f32 %v7775, 2.0
  %v7841 = vmul.f32 %v7778, 2.0
  %v7842 = vmul.f32 %v7781, 2.0
  %v7843 = vmul.f32 %v7784, 2.0
  %v7844 = vmul.f32 %v7787, 2.0
  %v7845 = vmul.f32 %v7790, 2.0
  %v7846 = vmul.f32 %v7793, 2.0
  %v7847 = vmul.f32 %v7796, 2.0
  %v7848 = vmul.f32 %v7799, 2.0
  %v7849 = vmul.f32 %v7802, 2.0
  %v7850 = vmul.f32 %v7805, 2.0
  %v7851 = vmul.f32 %v7808, 2.0
  %v7852 = vmul.f32 %v7811, 2.0
  %v7853 = vmul.f32 %v7814, 2.0
  %v7854 = vmul.f32 %v7817, 2.0
  %v7855 = vmul.f32 %v7820, 2.0
  %v7856 = vsub.f32 %v7548, %v7824
  %v7857 = vsub.f32 %v7549, %v7825
  %v7858 = vsub.f32 %v7550, %v7826
  %v7859 = vsub.f32 %v7551, %v7827
  %v7860 = vsub.f32 %v7552, %v7828
  %v7861 = vsub.f32 %v7553, %v7829
  %v7862 = vsub.f32 %v7554, %v7830
  %v7863 = vsub.f32 %v7555, %v7831
  %v7864 = vsub.f32 %v7556, %v7832
  %v7865 = vsub.f32 %v7557, %v7833
  %v7866 = vsub.f32 %v7558, %v7834
  %v7867 = vsub.f32 %v7559, %v7835
  %v7868 = vsub.f32 %v7560, %v7836
  %v7869 = vsub.f32 %v7561, %v7837
  %v7870 = vsub.f32 %v7562, %v7838
  %v7871 = vsub.f32 %v7563, %v7839
  %v7872 = vsub.f32 %v7564, %v7840
  %v7873 = vsub.f32 %v7565, %v7841
  %v7874 = vsub.f32 %v7566, %v7842
  %v7875 = vsub.f32 %v7567, %v7843
  %v7876 = vsub.f32 %v7568, %v7844
  %v7877 = vsub.f32 %v7569, %v7845
  %v7878 = vsub.f32 %v7570, %v7846
  %v7879 = vsub.f32 %v7571, %v7847
  %v7880 = vsub.f32 %v7572, %v7848
  %v7881 = vsub.f32 %v7573, %v7849
  %v7882 = vsub.f32 %v7574, %v7850
  %v7883 = vsub.f32 %v7575, %v7851
  %v7884 = vsub.f32 %v7576, %v7852
  %v7885 = vsub.f32 %v7577, %v7853
  %v7886 = vsub.f32 %v7578, %v7854
  %v7887 = vsub.f32 %v7579, %v7855
  %v7889 = vperm.slane %v7822, 0
  %v7891 = vadd.f32 %v7856, %v7889
  %v7892 = vadd.f32 %v7857, %v7889
  %v7893 = vadd.f32 %v7858, %v7889
  %v7894 = vadd.f32 %v7859, %v7889
  %v7895 = vadd.f32 %v7860, %v7889
  %v7896 = vadd.f32 %v7861, %v7889
  %v7897 = vadd.f32 %v7862, %v7889
  %v7898 = vadd.f32 %v7863, %v7889
  %v7899 = vadd.f32 %v7864, %v7889
  %v7900 = vadd.f32 %v7865, %v7889
  %v7901 = vadd.f32 %v7866, %v7889
  %v7902 = vadd.f32 %v7867, %v7889
  %v7903 = vadd.f32 %v7868, %v7889
  %v7904 = vadd.f32 %v7869, %v7889
  %v7905 = vadd.f32 %v7870, %v7889
  %v7906 = vadd.f32 %v7871, %v7889
  %v7907 = vadd.f32 %v7872, %v7889
  %v7908 = vadd.f32 %v7873, %v7889
  %v7909 = vadd.f32 %v7874, %v7889
  %v7910 = vadd.f32 %v7875, %v7889
  %v7911 = vadd.f32 %v7876, %v7889
  %v7912 = vadd.f32 %v7877, %v7889
  %v7913 = vadd.f32 %v7878, %v7889
  %v7914 = vadd.f32 %v7879, %v7889
  %v7915 = vadd.f32 %v7880, %v7889
  %v7916 = vadd.f32 %v7881, %v7889
  %v7917 = vadd.f32 %v7882, %v7889
  %v7918 = vadd.f32 %v7883, %v7889
  %v7919 = vadd.f32 %v7884, %v7889
  %v7920 = vadd.f32 %v7885, %v7889
  %v7921 = vadd.f32 %v7886, %v7889
  %v7922 = vadd.f32 %v7887, %v7889
  %v7923 = vsel %vm3822, %v7891, inf
  %7924 = vmin.xlane.f32.xlu0 %v7923
  %v7925 = vpop.xlane.xlu0 %7924
  %v7926 = vsel %vm3822, %v7892, inf
  %7927 = vmin.xlane.f32.xlu0 %v7926
  %v7928 = vpop.xlane.xlu0 %7927
  %v7929 = vsel %vm3822, %v7893, inf
  %7930 = vmin.xlane.f32.xlu0 %v7929
  %v7931 = vpop.xlane.xlu0 %7930
  %v7932 = vsel %vm3822, %v7894, inf
  %7933 = vmin.xlane.f32.xlu0 %v7932
  %v7934 = vpop.xlane.xlu0 %7933
  %v7935 = vsel %vm3822, %v7895, inf
  %7936 = vmin.xlane.f32.xlu0 %v7935
  %v7937 = vpop.xlane.xlu0 %7936
  %v7938 = vsel %vm3822, %v7896, inf
  %7939 = vmin.xlane.f32.xlu0 %v7938
  %v7940 = vpop.xlane.xlu0 %7939
  %v7941 = vsel %vm3822, %v7897, inf
  %7942 = vmin.xlane.f32.xlu0 %v7941
  %v7943 = vpop.xlane.xlu0 %7942
  %v7944 = vsel %vm3822, %v7898, inf
  %7945 = vmin.xlane.f32.xlu0 %v7944
  %v7946 = vpop.xlane.xlu0 %7945
  %v7947 = vsel %vm3822, %v7899, inf
  %7948 = vmin.xlane.f32.xlu0 %v7947
  %v7949 = vpop.xlane.xlu0 %7948
  %v7950 = vsel %vm3822, %v7900, inf
  %7951 = vmin.xlane.f32.xlu0 %v7950
  %v7952 = vpop.xlane.xlu0 %7951
  %v7953 = vsel %vm3822, %v7901, inf
  %7954 = vmin.xlane.f32.xlu0 %v7953
  %v7955 = vpop.xlane.xlu0 %7954
  %v7956 = vsel %vm3822, %v7902, inf
  %7957 = vmin.xlane.f32.xlu0 %v7956
  %v7958 = vpop.xlane.xlu0 %7957
  %v7959 = vsel %vm3822, %v7903, inf
  %7960 = vmin.xlane.f32.xlu0 %v7959
  %v7961 = vpop.xlane.xlu0 %7960
  %v7962 = vsel %vm3822, %v7904, inf
  %7963 = vmin.xlane.f32.xlu0 %v7962
  %v7964 = vpop.xlane.xlu0 %7963
  %v7965 = vsel %vm3822, %v7905, inf
  %7966 = vmin.xlane.f32.xlu0 %v7965
  %v7967 = vpop.xlane.xlu0 %7966
  %v7968 = vsel %vm3822, %v7906, inf
  %7969 = vmin.xlane.f32.xlu0 %v7968
  %v7970 = vpop.xlane.xlu0 %7969
  %v7971 = vsel %vm3822, %v7907, inf
  %7972 = vmin.xlane.f32.xlu0 %v7971
  %v7973 = vpop.xlane.xlu0 %7972
  %v7974 = vsel %vm3822, %v7908, inf
  %7975 = vmin.xlane.f32.xlu0 %v7974
  %v7976 = vpop.xlane.xlu0 %7975
  %v7977 = vsel %vm3822, %v7909, inf
  %7978 = vmin.xlane.f32.xlu0 %v7977
  %v7979 = vpop.xlane.xlu0 %7978
  %v7980 = vsel %vm3822, %v7910, inf
  %7981 = vmin.xlane.f32.xlu0 %v7980
  %v7982 = vpop.xlane.xlu0 %7981
  %v7983 = vsel %vm3822, %v7911, inf
  %7984 = vmin.xlane.f32.xlu0 %v7983
  %v7985 = vpop.xlane.xlu0 %7984
  %v7986 = vsel %vm3822, %v7912, inf
  %7987 = vmin.xlane.f32.xlu0 %v7986
  %v7988 = vpop.xlane.xlu0 %7987
  %v7989 = vsel %vm3822, %v7913, inf
  %7990 = vmin.xlane.f32.xlu0 %v7989
  %v7991 = vpop.xlane.xlu0 %7990
  %v7992 = vsel %vm3822, %v7914, inf
  %7993 = vmin.xlane.f32.xlu0 %v7992
  %v7994 = vpop.xlane.xlu0 %7993
  %v7995 = vsel %vm3822, %v7915, inf
  %7996 = vmin.xlane.f32.xlu0 %v7995
  %v7997 = vpop.xlane.xlu0 %7996
  %v7998 = vsel %vm3822, %v7916, inf
  %7999 = vmin.xlane.f32.xlu0 %v7998
  %v8000 = vpop.xlane.xlu0 %7999
  %v8001 = vsel %vm3822, %v7917, inf
  %8002 = vmin.xlane.f32.xlu0 %v8001
  %v8003 = vpop.xlane.xlu0 %8002
  %v8004 = vsel %vm3822, %v7918, inf
  %8005 = vmin.xlane.f32.xlu0 %v8004
  %v8006 = vpop.xlane.xlu0 %8005
  %v8007 = vsel %vm3822, %v7919, inf
  %8008 = vmin.xlane.f32.xlu0 %v8007
  %v8009 = vpop.xlane.xlu0 %8008
  %v8010 = vsel %vm3822, %v7920, inf
  %8011 = vmin.xlane.f32.xlu0 %v8010
  %v8012 = vpop.xlane.xlu0 %8011
  %v8013 = vsel %vm3822, %v7921, inf
  %8014 = vmin.xlane.f32.xlu0 %v8013
  %v8015 = vpop.xlane.xlu0 %8014
  %v8016 = vsel %vm3822, %v7922, inf
  %8017 = vmin.xlane.f32.xlu0 %v8016
  %v8018 = vpop.xlane.xlu0 %8017
  %v8019 = vstv %s7823
  %v8020 = vsub.f32 %v8019, %v7925
  %v8021 = vsub.f32 %v8019, %v7928
  %v8022 = vsub.f32 %v8019, %v7931
  %v8023 = vsub.f32 %v8019, %v7934
  %v8024 = vsub.f32 %v8019, %v7937
  %v8025 = vsub.f32 %v8019, %v7940
  %v8026 = vsub.f32 %v8019, %v7943
  %v8027 = vsub.f32 %v8019, %v7946
  %v8028 = vsub.f32 %v8019, %v7949
  %v8029 = vsub.f32 %v8019, %v7952
  %v8030 = vsub.f32 %v8019, %v7955
  %v8031 = vsub.f32 %v8019, %v7958
  %v8032 = vsub.f32 %v8019, %v7961
  %v8033 = vsub.f32 %v8019, %v7964
  %v8034 = vsub.f32 %v8019, %v7967
  %v8035 = vsub.f32 %v8019, %v7970
  %v8036 = vsub.f32 %v8019, %v7973
  %v8037 = vsub.f32 %v8019, %v7976
  %v8038 = vsub.f32 %v8019, %v7979
  %v8039 = vsub.f32 %v8019, %v7982
  %v8040 = vsub.f32 %v8019, %v7985
  %v8041 = vsub.f32 %v8019, %v7988
  %v8042 = vsub.f32 %v8019, %v7991
  %v8043 = vsub.f32 %v8019, %v7994
  %v8044 = vsub.f32 %v8019, %v7997
  %v8045 = vsub.f32 %v8019, %v8000
  %v8046 = vsub.f32 %v8019, %v8003
  %v8047 = vsub.f32 %v8019, %v8006
  %v8048 = vsub.f32 %v8019, %v8009
  %v8049 = vsub.f32 %v8019, %v8012
  %v8050 = vsub.f32 %v8019, %v8015
  %v8051 = vsub.f32 %v8019, %v8018
  %s8052 = sld [smem:[#allocation5]]
  %s8053 = sld [smem:[#allocation4]]
  %v8054 = vstv %s8053
  %v8055 = vmul.f32 %v8054, %v3919
  %v8056 = vmul.f32 %v8054, %v3920
  %v8057 = vmul.f32 %v8054, %v3921
  %v8058 = vmul.f32 %v8054, %v3922
  %v8059 = vmul.f32 %v8054, %v3923
  %v8060 = vmul.f32 %v8054, %v3924
  %v8061 = vmul.f32 %v8054, %v3925
  %v8062 = vmul.f32 %v8054, %v3926
  %v8063 = vmul.f32 %v8054, %v3927
  %v8064 = vmul.f32 %v8054, %v3928
  %v8065 = vmul.f32 %v8054, %v3929
  %v8066 = vmul.f32 %v8054, %v3930
  %v8067 = vmul.f32 %v8054, %v3931
  %v8068 = vmul.f32 %v8054, %v3932
  %v8069 = vmul.f32 %v8054, %v3933
  %v8070 = vmul.f32 %v8054, %v3934
  %v8071 = vmul.f32 %v8054, %v3935
  %v8072 = vmul.f32 %v8054, %v3936
  %v8073 = vmul.f32 %v8054, %v3937
  %v8074 = vmul.f32 %v8054, %v3938
  %v8075 = vmul.f32 %v8054, %v3939
  %v8076 = vmul.f32 %v8054, %v3940
  %v8077 = vmul.f32 %v8054, %v3941
  %v8078 = vmul.f32 %v8054, %v3942
  %v8079 = vmul.f32 %v8054, %v3943
  %v8080 = vmul.f32 %v8054, %v3944
  %v8081 = vmul.f32 %v8054, %v3945
  %v8082 = vmul.f32 %v8054, %v3946
  %v8083 = vmul.f32 %v8054, %v3947
  %v8084 = vmul.f32 %v8054, %v3948
  %v8085 = vmul.f32 %v8054, %v3949
  %v8086 = vmul.f32 %v8054, %v3950
  %v8087 = vstv %s8052
  %v8088 = vadd.f32 %v8087, %v8055
  %v8089 = vadd.f32 %v8087, %v8056
  %v8090 = vadd.f32 %v8087, %v8057
  %v8091 = vadd.f32 %v8087, %v8058
  %v8092 = vadd.f32 %v8087, %v8059
  %v8093 = vadd.f32 %v8087, %v8060
  %v8094 = vadd.f32 %v8087, %v8061
  %v8095 = vadd.f32 %v8087, %v8062
  %v8096 = vadd.f32 %v8087, %v8063
  %v8097 = vadd.f32 %v8087, %v8064
  %v8098 = vadd.f32 %v8087, %v8065
  %v8099 = vadd.f32 %v8087, %v8066
  %v8100 = vadd.f32 %v8087, %v8067
  %v8101 = vadd.f32 %v8087, %v8068
  %v8102 = vadd.f32 %v8087, %v8069
  %v8103 = vadd.f32 %v8087, %v8070
  %v8104 = vadd.f32 %v8087, %v8071
  %v8105 = vadd.f32 %v8087, %v8072
  %v8106 = vadd.f32 %v8087, %v8073
  %v8107 = vadd.f32 %v8087, %v8074
  %v8108 = vadd.f32 %v8087, %v8075
  %v8109 = vadd.f32 %v8087, %v8076
  %v8110 = vadd.f32 %v8087, %v8077
  %v8111 = vadd.f32 %v8087, %v8078
  %v8112 = vadd.f32 %v8087, %v8079
  %v8113 = vadd.f32 %v8087, %v8080
  %v8114 = vadd.f32 %v8087, %v8081
  %v8115 = vadd.f32 %v8087, %v8082
  %v8116 = vadd.f32 %v8087, %v8083
  %v8117 = vadd.f32 %v8087, %v8084
  %v8118 = vadd.f32 %v8087, %v8085
  %v8119 = vadd.f32 %v8087, %v8086
  %s8120 = sld [smem:[#allocation4 + $0x1]]
  %v8121 = vstv %s8120
  %v8122 = vmul.f32 %v8121, %v5478
  %v8123 = vmul.f32 %v8121, %v5479
  %v8124 = vmul.f32 %v8121, %v5480
  %v8125 = vmul.f32 %v8121, %v5481
  %v8126 = vmul.f32 %v8121, %v5482
  %v8127 = vmul.f32 %v8121, %v5483
  %v8128 = vmul.f32 %v8121, %v5484
  %v8129 = vmul.f32 %v8121, %v5485
  %v8130 = vmul.f32 %v8121, %v5486
  %v8131 = vmul.f32 %v8121, %v5487
  %v8132 = vmul.f32 %v8121, %v5488
  %v8133 = vmul.f32 %v8121, %v5489
  %v8134 = vmul.f32 %v8121, %v5490
  %v8135 = vmul.f32 %v8121, %v5491
  %v8136 = vmul.f32 %v8121, %v5492
  %v8137 = vmul.f32 %v8121, %v5493
  %v8138 = vmul.f32 %v8121, %v5494
  %v8139 = vmul.f32 %v8121, %v5495
  %v8140 = vmul.f32 %v8121, %v5496
  %v8141 = vmul.f32 %v8121, %v5497
  %v8142 = vmul.f32 %v8121, %v5498
  %v8143 = vmul.f32 %v8121, %v5499
  %v8144 = vmul.f32 %v8121, %v5500
  %v8145 = vmul.f32 %v8121, %v5501
  %v8146 = vmul.f32 %v8121, %v5502
  %v8147 = vmul.f32 %v8121, %v5503
  %v8148 = vmul.f32 %v8121, %v5504
  %v8149 = vmul.f32 %v8121, %v5505
  %v8150 = vmul.f32 %v8121, %v5506
  %v8151 = vmul.f32 %v8121, %v5507
  %v8152 = vmul.f32 %v8121, %v5508
  %v8153 = vmul.f32 %v8121, %v5509
  %v8154 = vadd.f32 %v8088, %v8122
  %v8155 = vadd.f32 %v8089, %v8123
  %v8156 = vadd.f32 %v8090, %v8124
  %v8157 = vadd.f32 %v8091, %v8125
  %v8158 = vadd.f32 %v8092, %v8126
  %v8159 = vadd.f32 %v8093, %v8127
  %v8160 = vadd.f32 %v8094, %v8128
  %v8161 = vadd.f32 %v8095, %v8129
  %v8162 = vadd.f32 %v8096, %v8130
  %v8163 = vadd.f32 %v8097, %v8131
  %v8164 = vadd.f32 %v8098, %v8132
  %v8165 = vadd.f32 %v8099, %v8133
  %v8166 = vadd.f32 %v8100, %v8134
  %v8167 = vadd.f32 %v8101, %v8135
  %v8168 = vadd.f32 %v8102, %v8136
  %v8169 = vadd.f32 %v8103, %v8137
  %v8170 = vadd.f32 %v8104, %v8138
  %v8171 = vadd.f32 %v8105, %v8139
  %v8172 = vadd.f32 %v8106, %v8140
  %v8173 = vadd.f32 %v8107, %v8141
  %v8174 = vadd.f32 %v8108, %v8142
  %v8175 = vadd.f32 %v8109, %v8143
  %v8176 = vadd.f32 %v8110, %v8144
  %v8177 = vadd.f32 %v8111, %v8145
  %v8178 = vadd.f32 %v8112, %v8146
  %v8179 = vadd.f32 %v8113, %v8147
  %v8180 = vadd.f32 %v8114, %v8148
  %v8181 = vadd.f32 %v8115, %v8149
  %v8182 = vadd.f32 %v8116, %v8150
  %v8183 = vadd.f32 %v8117, %v8151
  %v8184 = vadd.f32 %v8118, %v8152
  %v8185 = vadd.f32 %v8119, %v8153
  %s8186 = sld [smem:[#allocation4 + $0x2]]
  %v8187 = vstv %s8186
  %v8188 = vmul.f32 %v8187, %v5925
  %v8189 = vmul.f32 %v8187, %v5926
  %v8190 = vmul.f32 %v8187, %v5927
  %v8191 = vmul.f32 %v8187, %v5928
  %v8192 = vmul.f32 %v8187, %v5929
  %v8193 = vmul.f32 %v8187, %v5930
  %v8194 = vmul.f32 %v8187, %v5931
  %v8195 = vmul.f32 %v8187, %v5932
  %v8196 = vmul.f32 %v8187, %v5933
  %v8197 = vmul.f32 %v8187, %v5934
  %v8198 = vmul.f32 %v8187, %v5935
  %v8199 = vmul.f32 %v8187, %v5936
  %v8200 = vmul.f32 %v8187, %v5937
  %v8201 = vmul.f32 %v8187, %v5938
  %v8202 = vmul.f32 %v8187, %v5939
  %v8203 = vmul.f32 %v8187, %v5940
  %v8204 = vmul.f32 %v8187, %v5941
  %v8205 = vmul.f32 %v8187, %v5942
  %v8206 = vmul.f32 %v8187, %v5943
  %v8207 = vmul.f32 %v8187, %v5944
  %v8208 = vmul.f32 %v8187, %v5945
  %v8209 = vmul.f32 %v8187, %v5946
  %v8210 = vmul.f32 %v8187, %v5947
  %v8211 = vmul.f32 %v8187, %v5948
  %v8212 = vmul.f32 %v8187, %v5949
  %v8213 = vmul.f32 %v8187, %v5950
  %v8214 = vmul.f32 %v8187, %v5951
  %v8215 = vmul.f32 %v8187, %v5952
  %v8216 = vmul.f32 %v8187, %v5953
  %v8217 = vmul.f32 %v8187, %v5954
  %v8218 = vmul.f32 %v8187, %v5955
  %v8219 = vmul.f32 %v8187, %v5956
  %v8220 = vadd.f32 %v8154, %v8188
  %v8221 = vadd.f32 %v8155, %v8189
  %v8222 = vadd.f32 %v8156, %v8190
  %v8223 = vadd.f32 %v8157, %v8191
  %v8224 = vadd.f32 %v8158, %v8192
  %v8225 = vadd.f32 %v8159, %v8193
  %v8226 = vadd.f32 %v8160, %v8194
  %v8227 = vadd.f32 %v8161, %v8195
  %v8228 = vadd.f32 %v8162, %v8196
  %v8229 = vadd.f32 %v8163, %v8197
  %v8230 = vadd.f32 %v8164, %v8198
  %v8231 = vadd.f32 %v8165, %v8199
  %v8232 = vadd.f32 %v8166, %v8200
  %v8233 = vadd.f32 %v8167, %v8201
  %v8234 = vadd.f32 %v8168, %v8202
  %v8235 = vadd.f32 %v8169, %v8203
  %v8236 = vadd.f32 %v8170, %v8204
  %v8237 = vadd.f32 %v8171, %v8205
  %v8238 = vadd.f32 %v8172, %v8206
  %v8239 = vadd.f32 %v8173, %v8207
  %v8240 = vadd.f32 %v8174, %v8208
  %v8241 = vadd.f32 %v8175, %v8209
  %v8242 = vadd.f32 %v8176, %v8210
  %v8243 = vadd.f32 %v8177, %v8211
  %v8244 = vadd.f32 %v8178, %v8212
  %v8245 = vadd.f32 %v8179, %v8213
  %v8246 = vadd.f32 %v8180, %v8214
  %v8247 = vadd.f32 %v8181, %v8215
  %v8248 = vadd.f32 %v8182, %v8216
  %v8249 = vadd.f32 %v8183, %v8217
  %v8250 = vadd.f32 %v8184, %v8218
  %v8251 = vadd.f32 %v8185, %v8219
  %s8252 = sld [smem:[#allocation4 + $0x3]]
  %v8253 = vstv %s8252
  %v8254 = vmul.f32 %v8253, %v6372
  %v8255 = vmul.f32 %v8253, %v6373
  %v8256 = vmul.f32 %v8253, %v6374
  %v8257 = vmul.f32 %v8253, %v6375
  %v8258 = vmul.f32 %v8253, %v6376
  %v8259 = vmul.f32 %v8253, %v6377
  %v8260 = vmul.f32 %v8253, %v6378
  %v8261 = vmul.f32 %v8253, %v6379
  %v8262 = vmul.f32 %v8253, %v6380
  %v8263 = vmul.f32 %v8253, %v6381
  %v8264 = vmul.f32 %v8253, %v6382
  %v8265 = vmul.f32 %v8253, %v6383
  %v8266 = vmul.f32 %v8253, %v6384
  %v8267 = vmul.f32 %v8253, %v6385
  %v8268 = vmul.f32 %v8253, %v6386
  %v8269 = vmul.f32 %v8253, %v6387
  %v8270 = vmul.f32 %v8253, %v6388
  %v8271 = vmul.f32 %v8253, %v6389
  %v8272 = vmul.f32 %v8253, %v6390
  %v8273 = vmul.f32 %v8253, %v6391
  %v8274 = vmul.f32 %v8253, %v6392
  %v8275 = vmul.f32 %v8253, %v6393
  %v8276 = vmul.f32 %v8253, %v6394
  %v8277 = vmul.f32 %v8253, %v6395
  %v8278 = vmul.f32 %v8253, %v6396
  %v8279 = vmul.f32 %v8253, %v6397
  %v8280 = vmul.f32 %v8253, %v6398
  %v8281 = vmul.f32 %v8253, %v6399
  %v8282 = vmul.f32 %v8253, %v6400
  %v8283 = vmul.f32 %v8253, %v6401
  %v8284 = vmul.f32 %v8253, %v6402
  %v8285 = vmul.f32 %v8253, %v6403
  %v8286 = vadd.f32 %v8220, %v8254
  %v8287 = vadd.f32 %v8221, %v8255
  %v8288 = vadd.f32 %v8222, %v8256
  %v8289 = vadd.f32 %v8223, %v8257
  %v8290 = vadd.f32 %v8224, %v8258
  %v8291 = vadd.f32 %v8225, %v8259
  %v8292 = vadd.f32 %v8226, %v8260
  %v8293 = vadd.f32 %v8227, %v8261
  %v8294 = vadd.f32 %v8228, %v8262
  %v8295 = vadd.f32 %v8229, %v8263
  %v8296 = vadd.f32 %v8230, %v8264
  %v8297 = vadd.f32 %v8231, %v8265
  %v8298 = vadd.f32 %v8232, %v8266
  %v8299 = vadd.f32 %v8233, %v8267
  %v8300 = vadd.f32 %v8234, %v8268
  %v8301 = vadd.f32 %v8235, %v8269
  %v8302 = vadd.f32 %v8236, %v8270
  %v8303 = vadd.f32 %v8237, %v8271
  %v8304 = vadd.f32 %v8238, %v8272
  %v8305 = vadd.f32 %v8239, %v8273
  %v8306 = vadd.f32 %v8240, %v8274
  %v8307 = vadd.f32 %v8241, %v8275
  %v8308 = vadd.f32 %v8242, %v8276
  %v8309 = vadd.f32 %v8243, %v8277
  %v8310 = vadd.f32 %v8244, %v8278
  %v8311 = vadd.f32 %v8245, %v8279
  %v8312 = vadd.f32 %v8246, %v8280
  %v8313 = vadd.f32 %v8247, %v8281
  %v8314 = vadd.f32 %v8248, %v8282
  %v8315 = vadd.f32 %v8249, %v8283
  %v8316 = vadd.f32 %v8250, %v8284
  %v8317 = vadd.f32 %v8251, %v8285
  %s8318 = sld [smem:[#allocation4 + $0x4]]
  %v8319 = vstv %s8318
  %v8320 = vmul.f32 %v8319, %v7516
  %v8321 = vmul.f32 %v8319, %v7517
  %v8322 = vmul.f32 %v8319, %v7518
  %v8323 = vmul.f32 %v8319, %v7519
  %v8324 = vmul.f32 %v8319, %v7520
  %v8325 = vmul.f32 %v8319, %v7521
  %v8326 = vmul.f32 %v8319, %v7522
  %v8327 = vmul.f32 %v8319, %v7523
  %v8328 = vmul.f32 %v8319, %v7524
  %v8329 = vmul.f32 %v8319, %v7525
  %v8330 = vmul.f32 %v8319, %v7526
  %v8331 = vmul.f32 %v8319, %v7527
  %v8332 = vmul.f32 %v8319, %v7528
  %v8333 = vmul.f32 %v8319, %v7529
  %v8334 = vmul.f32 %v8319, %v7530
  %v8335 = vmul.f32 %v8319, %v7531
  %v8336 = vmul.f32 %v8319, %v7532
  %v8337 = vmul.f32 %v8319, %v7533
  %v8338 = vmul.f32 %v8319, %v7534
  %v8339 = vmul.f32 %v8319, %v7535
  %v8340 = vmul.f32 %v8319, %v7536
  %v8341 = vmul.f32 %v8319, %v7537
  %v8342 = vmul.f32 %v8319, %v7538
  %v8343 = vmul.f32 %v8319, %v7539
  %v8344 = vmul.f32 %v8319, %v7540
  %v8345 = vmul.f32 %v8319, %v7541
  %v8346 = vmul.f32 %v8319, %v7542
  %v8347 = vmul.f32 %v8319, %v7543
  %v8348 = vmul.f32 %v8319, %v7544
  %v8349 = vmul.f32 %v8319, %v7545
  %v8350 = vmul.f32 %v8319, %v7546
  %v8351 = vmul.f32 %v8319, %v7547
  %v8352 = vadd.f32 %v8286, %v8320
  %v8353 = vadd.f32 %v8287, %v8321
  %v8354 = vadd.f32 %v8288, %v8322
  %v8355 = vadd.f32 %v8289, %v8323
  %v8356 = vadd.f32 %v8290, %v8324
  %v8357 = vadd.f32 %v8291, %v8325
  %v8358 = vadd.f32 %v8292, %v8326
  %v8359 = vadd.f32 %v8293, %v8327
  %v8360 = vadd.f32 %v8294, %v8328
  %v8361 = vadd.f32 %v8295, %v8329
  %v8362 = vadd.f32 %v8296, %v8330
  %v8363 = vadd.f32 %v8297, %v8331
  %v8364 = vadd.f32 %v8298, %v8332
  %v8365 = vadd.f32 %v8299, %v8333
  %v8366 = vadd.f32 %v8300, %v8334
  %v8367 = vadd.f32 %v8301, %v8335
  %v8368 = vadd.f32 %v8302, %v8336
  %v8369 = vadd.f32 %v8303, %v8337
  %v8370 = vadd.f32 %v8304, %v8338
  %v8371 = vadd.f32 %v8305, %v8339
  %v8372 = vadd.f32 %v8306, %v8340
  %v8373 = vadd.f32 %v8307, %v8341
  %v8374 = vadd.f32 %v8308, %v8342
  %v8375 = vadd.f32 %v8309, %v8343
  %v8376 = vadd.f32 %v8310, %v8344
  %v8377 = vadd.f32 %v8311, %v8345
  %v8378 = vadd.f32 %v8312, %v8346
  %v8379 = vadd.f32 %v8313, %v8347
  %v8380 = vadd.f32 %v8314, %v8348
  %v8381 = vadd.f32 %v8315, %v8349
  %v8382 = vadd.f32 %v8316, %v8350
  %v8383 = vadd.f32 %v8317, %v8351
  %s8384 = sld [smem:[#allocation4 + $0x5]]
  %v8385 = vstv %s8384
  %v8386 = vmul.f32 %v8385, %v8020
  %v8387 = vmul.f32 %v8385, %v8021
  %v8388 = vmul.f32 %v8385, %v8022
  %v8389 = vmul.f32 %v8385, %v8023
  %v8390 = vmul.f32 %v8385, %v8024
  %v8391 = vmul.f32 %v8385, %v8025
  %v8392 = vmul.f32 %v8385, %v8026
  %v8393 = vmul.f32 %v8385, %v8027
  %v8394 = vmul.f32 %v8385, %v8028
  %v8395 = vmul.f32 %v8385, %v8029
  %v8396 = vmul.f32 %v8385, %v8030
  %v8397 = vmul.f32 %v8385, %v8031
  %v8398 = vmul.f32 %v8385, %v8032
  %v8399 = vmul.f32 %v8385, %v8033
  %v8400 = vmul.f32 %v8385, %v8034
  %v8401 = vmul.f32 %v8385, %v8035
  %v8402 = vmul.f32 %v8385, %v8036
  %v8403 = vmul.f32 %v8385, %v8037
  %v8404 = vmul.f32 %v8385, %v8038
  %v8405 = vmul.f32 %v8385, %v8039
  %v8406 = vmul.f32 %v8385, %v8040
  %v8407 = vmul.f32 %v8385, %v8041
  %v8408 = vmul.f32 %v8385, %v8042
  %v8409 = vmul.f32 %v8385, %v8043
  %v8410 = vmul.f32 %v8385, %v8044
  %v8411 = vmul.f32 %v8385, %v8045
  %v8412 = vmul.f32 %v8385, %v8046
  %v8413 = vmul.f32 %v8385, %v8047
  %v8414 = vmul.f32 %v8385, %v8048
  %v8415 = vmul.f32 %v8385, %v8049
  %v8416 = vmul.f32 %v8385, %v8050
  %v8417 = vmul.f32 %v8385, %v8051
  %v8418 = vadd.f32 %v8352, %v8386
  %v8419 = vadd.f32 %v8353, %v8387
  %v8420 = vadd.f32 %v8354, %v8388
  %v8421 = vadd.f32 %v8355, %v8389
  %v8422 = vadd.f32 %v8356, %v8390
  %v8423 = vadd.f32 %v8357, %v8391
  %v8424 = vadd.f32 %v8358, %v8392
  %v8425 = vadd.f32 %v8359, %v8393
  %v8426 = vadd.f32 %v8360, %v8394
  %v8427 = vadd.f32 %v8361, %v8395
  %v8428 = vadd.f32 %v8362, %v8396
  %v8429 = vadd.f32 %v8363, %v8397
  %v8430 = vadd.f32 %v8364, %v8398
  %v8431 = vadd.f32 %v8365, %v8399
  %v8432 = vadd.f32 %v8366, %v8400
  %v8433 = vadd.f32 %v8367, %v8401
  %v8434 = vadd.f32 %v8368, %v8402
  %v8435 = vadd.f32 %v8369, %v8403
  %v8436 = vadd.f32 %v8370, %v8404
  %v8437 = vadd.f32 %v8371, %v8405
  %v8438 = vadd.f32 %v8372, %v8406
  %v8439 = vadd.f32 %v8373, %v8407
  %v8440 = vadd.f32 %v8374, %v8408
  %v8441 = vadd.f32 %v8375, %v8409
  %v8442 = vadd.f32 %v8376, %v8410
  %v8443 = vadd.f32 %v8377, %v8411
  %v8444 = vadd.f32 %v8378, %v8412
  %v8445 = vadd.f32 %v8379, %v8413
  %v8446 = vadd.f32 %v8380, %v8414
  %v8447 = vadd.f32 %v8381, %v8415
  %v8448 = vadd.f32 %v8382, %v8416
  %v8449 = vadd.f32 %v8383, %v8417
  %vm8450 = vcmask 7168
  %8451 = vst.msk [vmem:[%s67] sm:$0xff] %vm8450, %v8418
  %8452 = vst.msk [vmem:[%s67 + $0x8] sm:$0xff] %vm8450, %v8419
  %8453 = vst.msk [vmem:[%s67 + $0x10] sm:$0xff] %vm8450, %v8420
  %8454 = vst.msk [vmem:[%s67 + $0x18] sm:$0xff] %vm8450, %v8421
  %8455 = vst.msk [vmem:[%s67 + $0x20] sm:$0xff] %vm8450, %v8422
  %8456 = vst.msk [vmem:[%s67 + $0x28] sm:$0xff] %vm8450, %v8423
  %8457 = vst.msk [vmem:[%s67 + $0x30] sm:$0xff] %vm8450, %v8424
  %8458 = vst.msk [vmem:[%s67 + $0x38] sm:$0xff] %vm8450, %v8425
  %8459 = vst.msk [vmem:[%s67 + $0x40] sm:$0xff] %vm8450, %v8426
  %8460 = vst.msk [vmem:[%s67 + $0x48] sm:$0xff] %vm8450, %v8427
  %8461 = vst.msk [vmem:[%s67 + $0x50] sm:$0xff] %vm8450, %v8428
  %8462 = vst.msk [vmem:[%s67 + $0x58] sm:$0xff] %vm8450, %v8429
  %8463 = vst.msk [vmem:[%s67 + $0x60] sm:$0xff] %vm8450, %v8430
  %8464 = vst.msk [vmem:[%s67 + $0x68] sm:$0xff] %vm8450, %v8431
  %8465 = vst.msk [vmem:[%s67 + $0x70] sm:$0xff] %vm8450, %v8432
  %8466 = vst.msk [vmem:[%s67 + $0x78] sm:$0xff] %vm8450, %v8433
  %8467 = vst.msk [vmem:[%s67 + $0x80] sm:$0xff] %vm8450, %v8434
  %8468 = vst.msk [vmem:[%s67 + $0x88] sm:$0xff] %vm8450, %v8435
  %8469 = vst.msk [vmem:[%s67 + $0x90] sm:$0xff] %vm8450, %v8436
  %8470 = vst.msk [vmem:[%s67 + $0x98] sm:$0xff] %vm8450, %v8437
  %8471 = vst.msk [vmem:[%s67 + $0xa0] sm:$0xff] %vm8450, %v8438
  %8472 = vst.msk [vmem:[%s67 + $0xa8] sm:$0xff] %vm8450, %v8439
  %8473 = vst.msk [vmem:[%s67 + $0xb0] sm:$0xff] %vm8450, %v8440
  %8474 = vst.msk [vmem:[%s67 + $0xb8] sm:$0xff] %vm8450, %v8441
  %8475 = vst.msk [vmem:[%s67 + $0xc0] sm:$0xff] %vm8450, %v8442
  %8476 = vst.msk [vmem:[%s67 + $0xc8] sm:$0xff] %vm8450, %v8443
  %8477 = vst.msk [vmem:[%s67 + $0xd0] sm:$0xff] %vm8450, %v8444
  %8478 = vst.msk [vmem:[%s67 + $0xd8] sm:$0xff] %vm8450, %v8445
  %8479 = vst.msk [vmem:[%s67 + $0xe0] sm:$0xff] %vm8450, %v8446
  %8480 = vst.msk [vmem:[%s67 + $0xe8] sm:$0xff] %vm8450, %v8447
  %8481 = vst.msk [vmem:[%s67 + $0xf0] sm:$0xff] %vm8450, %v8448
  %8482 = vst.msk [vmem:[%s67 + $0xf8] sm:$0xff] %vm8450, %v8449
  // Predicated region
  $region122: #{nic_forward.1} parent=0 // pred_check
    _
  $region123: #{nic_forward.1} parent=0 // pred_check_branch
    %8484 = sbr.rel (0) target = $region125
  $region124: #{nic_forward.1} parent=0 // pred_region
    _
  $region125: #{nic_forward.1} parent=0 // pred_fallthru
    _
  // Predicated region
  $region126: #{nic_forward.1} parent=0 // pred_check
    _
  $region127: #{nic_forward.1} parent=0 // pred_check_branch
    %8486 = sbr.rel (0) target = $region129
  $region128: #{nic_forward.1} parent=0 // pred_region
    _
  $region129: #{nic_forward.1} parent=0 // pred_fallthru
    _

</llo_original>
